<compile_context>
chip_gen: v7x
topology: tpu7x:2x2x1
jax: 0.10.0
libtpu: 0.0.40
codegen_flags: <defaults>
</compile_context>

<pallas_src>
import functools

import jax
import jax.numpy as jnp
import numpy as np
from jax.experimental import pallas as pl
from jax.experimental.pallas import tpu as pltpu

CIN_PAD = 8   # conv1 input channels zero-padded 1 -> 8 (lane friendly, exact)


# ----------------------------------------------------------------------------
# Kernel 1: fused conv1 + conv2 + conv3 (3x3, stride 1, pad 1, ReLU), NHWC.
# Everything lives in VMEM; each conv is one im2col matmul on the MXU.
# ----------------------------------------------------------------------------
def _conv_stack_kernel(xp_ref, w1_ref, b1_ref, w2_ref, b2_ref, w3_ref, b3_ref,
                       o_ref, pad_ref, *, B, H, W, C):
    BHW = B * H * W

    def conv3x3_relu(xpad, w_col, b, cin):
        # xpad: (B, H+2, W+2, cin); w_col: (9*cin, C); b: (1, C)
        cols = []
        for kh in range(3):
            for kw in range(3):
                cols.append(xpad[:, kh:kh + H, kw:kw + W, :].reshape(BHW, cin))
        col = jnp.concatenate(cols, axis=-1)              # (BHW, 9*cin) im2col
        y = jnp.dot(col, w_col, preferred_element_type=jnp.float32) + b
        return jnp.maximum(y, 0.0)                        # (BHW, C) f32

    # conv1 (input already spatially + channel padded on the host side)
    y = conv3x3_relu(xp_ref[...], w1_ref[...], b1_ref[...], CIN_PAD)

    # conv2 / conv3: spatial zero-padding through a VMEM scratch buffer.
    pad_ref[...] = jnp.zeros_like(pad_ref)                # border zeros, once
    for w_r, b_r in ((w2_ref, b2_ref), (w3_ref, b3_ref)):
        pad_ref[:, 1:H + 1, 1:W + 1, :] = y.reshape(B, H, W, C)
        y = conv3x3_relu(pad_ref[...], w_r[...], b_r[...], C)

    # Row = b*H*W + h*W + w, col = c  ->  matches the NHWC-permuted fc weight.
    o_ref[...] = y.astype(o_ref.dtype)


def conv_stack(xp, w1c, b1, w2c, b2, w3c, b3):
    B, Hp, Wp, _ = xp.shape
    H, W = Hp - 2, Wp - 2
    C = w1c.shape[-1]
    kernel = functools.partial(_conv_stack_kernel, B=B, H=H, W=W, C=C)
    return pl.pallas_call(
        kernel,
        out_shape=jax.ShapeDtypeStruct((B * H * W, C), jnp.bfloat16),
        grid=(1,),
        in_specs=[
            pl.BlockSpec((B, Hp, Wp, CIN_PAD), lambda i: (0, 0, 0, 0)),
            pl.BlockSpec((9 * CIN_PAD, C), lambda i: (0, 0)),
            pl.BlockSpec((1, C), lambda i: (0, 0)),
            pl.BlockSpec((9 * C, C), lambda i: (0, 0)),
            pl.BlockSpec((1, C), lambda i: (0, 0)),
            pl.BlockSpec((9 * C, C), lambda i: (0, 0)),
            pl.BlockSpec((1, C), lambda i: (0, 0)),
        ],
        out_specs=pl.BlockSpec((B * H * W, C), lambda i: (0, 0)),
        scratch_shapes=[pltpu.VMEM((B, Hp, Wp, C), jnp.float32)],
        compiler_params=pltpu.CompilerParams(
            dimension_semantics=("arbitrary",),
            vmem_limit_bytes=32 * 1024 * 1024),
    )(xp, w1c, b1, w2c, b2, w3c, b3)


# ----------------------------------------------------------------------------
# Kernel 2: fc1.  bf16 weight streamed in large K tiles; the partial products
# accumulate directly into the resident (B, N) output block (bias at k == 0).
# ----------------------------------------------------------------------------
def _fc_kernel(a_ref, w_ref, b_ref, o_ref):
    k = pl.program_id(0)

    @pl.when(k == 0)
    def _():
        o_ref[...] = jnp.broadcast_to(b_ref[...], o_ref.shape)

    o_ref[...] += jnp.dot(a_ref[...], w_ref[...],
                          preferred_element_type=jnp.float32)


def fc(a, w, b, *, tk=4096):
    B, K = a.shape
    N = w.shape[1]
    assert K % tk == 0
    return pl.pallas_call(
        _fc_kernel,
        out_shape=jax.ShapeDtypeStruct((B, N), jnp.float32),
        grid=(K // tk,),
        in_specs=[
            pl.BlockSpec((B, tk), lambda k: (0, k)),
            pl.BlockSpec((tk, N), lambda k: (k, 0)),
            pl.BlockSpec((1, N), lambda k: (0, 0)),
        ],
        out_specs=pl.BlockSpec((B, N), lambda k: (0, 0)),
        compiler_params=pltpu.CompilerParams(
            dimension_semantics=("arbitrary",),
            vmem_limit_bytes=32 * 1024 * 1024),
    )(a, w, b)


# ----------------------------------------------------------------------------
# One-time parameter repack (done once, outside the per-call path):
#   * conv weights -> im2col layout (9*Cin, Cout); conv1 Cin zero-padded to 8
#   * fc weight rows permuted from NCHW-flatten (c*H*W + h*W + w) order to the
#     kernel's NHWC-flatten (h*W*C + w*C + c) order and cast to bf16.
# ----------------------------------------------------------------------------
def prepare_params(params, *, H=16, W=16):
    C = params["b1"].shape[0]
    N = params["fcb"].shape[0]
    w1 = jnp.pad(params["w1"], ((0, 0), (0, 0), (0, CIN_PAD - 1), (0, 0)))
    fcw = params["fcw"].reshape(C, H, W, N).transpose(1, 2, 0, 3)
    return {
        "w1c": w1.reshape(9 * CIN_PAD, C),
        "w2c": params["w2"].reshape(9 * C, C),
        "w3c": params["w3"].reshape(9 * C, C),
        "b1": params["b1"].reshape(1, C),
        "b2": params["b2"].reshape(1, C),
        "b3": params["b3"].reshape(1, C),
        "fcw": fcw.reshape(H * W * C, N).astype(jnp.bfloat16),
        "fcb": params["fcb"].reshape(1, N),
    }


def cnn_forward(x, prep):
    # x: (B, 16, 16)  ==  PyTorch input before x.unsqueeze(1)
    B, H, W = x.shape
    # unsqueeze(1) + "same" spatial pad + channel pad 1 -> 8 (zeros; exact).
    xp = jnp.pad(x[:, :, :, None], ((0, 0), (1, 1), (1, 1), (0, CIN_PAD - 1)))
    act = conv_stack(xp, prep["w1c"], prep["b1"], prep["w2c"], prep["b2"],
                     prep["w3c"], prep["b3"])             # (B*H*W, C) bf16
    # Transpose-free flatten: row-major (B*H*W, C) -> (B, H*W*C) matches the
    # permuted fc weight row order (64 KB bf16, negligible).
    act = act.reshape(B, -1)
    return fc(act, prep["fcw"], prep["fcb"])


# Pure-JAX reference (original PyTorch-equivalent layouts, f32 throughout).
def reference_forward(x, params):
    h = x[:, :, :, None]

    def conv(h, w, b):
        y = jax.lax.conv_general_dilated(
            h, w, window_strides=(1, 1), padding="SAME",
            dimension_numbers=("NHWC", "HWIO", "NHWC"))
        return jnp.maximum(y + b, 0.0)

    h = conv(h, params["w1"], params["b1"])
    h = conv(h, params["w2"], params["b2"])
    h = conv(h, params["w3"], params["b3"])
    h = jnp.transpose(h, (0, 3, 1, 2)).reshape(x.shape[0], -1)   # NCHW flatten
    return h @ params["fcw"] + params["fcb"]


if __name__ == "__main__":
    B, H, W = 2, 16, 16
    C, NOUT = 64, 128         # fc1 = Linear(64*16*16, 128) fixes C=64

    key = jax.random.PRNGKey(0)
    ks = jax.random.split(key, 9)
    # Deterministic synthetic parameters (PyTorch layouts transposed to HWIO
    # for the convs and (K, N) NCHW-flatten row order for the linear layer).
    params = {
        "w1": jax.random.normal(ks[0], (3, 3, 1, C), jnp.float32) / np.sqrt(9.0),
        "b1": 0.01 * jax.random.normal(ks[1], (C,), jnp.float32),
        "w2": jax.random.normal(ks[2], (3, 3, C, C), jnp.float32) / np.sqrt(9.0 * C),
        "b2": 0.01 * jax.random.normal(ks[3], (C,), jnp.float32),
        "w3": jax.random.normal(ks[4], (3, 3, C, C), jnp.float32) / np.sqrt(9.0 * C),
        "b3": 0.01 * jax.random.normal(ks[5], (C,), jnp.float32),
        "fcw": jax.random.normal(ks[6], (C * H * W, NOUT), jnp.float32) / np.sqrt(C * H * W),
        "fcb": 0.01 * jax.random.normal(ks[7], (NOUT,), jnp.float32),
    }
    x = jax.random.normal(ks[8], (B, H, W), jnp.float32)

    prep = prepare_params(params, H=H, W=W)       # one-time weight repack
    out = jax.jit(cnn_forward)(x, prep)
    out = jax.block_until_ready(out)
    assert out.shape == (B, NOUT) and out.dtype == jnp.float32

    ref = reference_forward(x, params)
    np.testing.assert_allclose(np.asarray(out), np.asarray(ref),
                               rtol=5e-2, atol=5e-2)
    print("KERNEL_OK")
</pallas_src>

<mosaic_0001>
module attributes {stable_mosaic.version = 11 : i64} {
  func.func @_fc_kernel(%arg0: i32, %arg1: memref<2x4096xbf16, #tpu.memory_space<vmem>>, %arg2: memref<4096x128xbf16, #tpu.memory_space<vmem>>, %arg3: memref<1x128xf32, #tpu.memory_space<vmem>>, %arg4: memref<2x128xf32, #tpu.memory_space<vmem>>) attributes {dimension_semantics = [#tpu.dimension_semantics<arbitrary>], iteration_bounds = array<i64: 4>, scalar_prefetch = 0 : i64, scratch_operands = 0 : i64, tpu.core_type = #tpu.core_type<tc>, window_params = [{transform_indices = @transform_0, window_bounds = array<i64: 2, 4096>}, {transform_indices = @transform_1, window_bounds = array<i64: 4096, 128>}, {pipeline_mode = #tpu.pipeline_mode<synchronous>, transform_indices = @transform_2, window_bounds = array<i64: 1, 128>}, {pipeline_mode = #tpu.pipeline_mode<synchronous>, transform_indices = @transform_3, window_bounds = array<i64: 2, 128>}]} {
    %c0_i32 = arith.constant 0 : i32
    %0 = arith.cmpi eq, %arg0, %c0_i32 : i32
    %1 = arith.extui %0 : i1 to i32
    %c0_i32_0 = arith.constant 0 : i32
    %2 = arith.cmpi ne, %1, %c0_i32_0 : i32
    scf.if %2 {
      %c0_8 = arith.constant 0 : index
      %c0_9 = arith.constant 0 : index
      %9 = vector.load %arg3[%c0_8, %c0_9] : memref<1x128xf32, #tpu.memory_space<vmem>>, vector<1x128xf32>
      %10 = vector.shape_cast %9 : vector<1x128xf32> to vector<1x128xf32>
      %11 = vector.broadcast %10 : vector<1x128xf32> to vector<2x128xf32>
      %c0_10 = arith.constant 0 : index
      %c0_11 = arith.constant 0 : index
      %12 = vector.load %arg4[%c0_10, %c0_11] : memref<2x128xf32, #tpu.memory_space<vmem>>, vector<2x128xf32>
      tpu.vector_store %arg4[%c0_10, %c0_11], %11 {strides = array<i32>} : memref<2x128xf32, #tpu.memory_space<vmem>>, vector<2x128xf32>,
    } else {
    }
    %c0 = arith.constant 0 : index
    %c0_1 = arith.constant 0 : index
    %3 = vector.load %arg4[%c0, %c0_1] : memref<2x128xf32, #tpu.memory_space<vmem>>, vector<2x128xf32>
    %c0_2 = arith.constant 0 : index
    %c0_3 = arith.constant 0 : index
    %4 = vector.load %arg1[%c0_2, %c0_3] : memref<2x4096xbf16, #tpu.memory_space<vmem>>, vector<2x4096xbf16>
    %c0_4 = arith.constant 0 : index
    %c0_5 = arith.constant 0 : index
    %5 = vector.load %arg2[%c0_4, %c0_5] : memref<4096x128xbf16, #tpu.memory_space<vmem>>, vector<4096x128xbf16>
    %cst = arith.constant dense<0.000000e+00> : vector<2x128xf32>
    %6 = tpu.matmul %4, %5, %cst {dimension_numbers = #tpu.dot_dimension_numbers<[1], [0], [0], [1], [0, 0, 1, 1], [], []>} : vector<2x4096xbf16>, vector<4096x128xbf16>, vector<2x128xf32> -> vector<2x128xf32>
    %7 = arith.addf %3, %6 : vector<2x128xf32>
    %c0_6 = arith.constant 0 : index
    %c0_7 = arith.constant 0 : index
    %8 = vector.load %arg4[%c0_6, %c0_7] : memref<2x128xf32, #tpu.memory_space<vmem>>, vector<2x128xf32>
    tpu.vector_store %arg4[%c0_6, %c0_7], %7 {strides = array<i32>} : memref<2x128xf32, #tpu.memory_space<vmem>>, vector<2x128xf32>,
    return
  }
  func.func @transform_0(%arg0: i32) -> (i32, i32) {
    %c0_i32 = arith.constant 0 : i32
    %c0_i32_0 = arith.constant 0 : i32
    return %c0_i32, %arg0 : i32, i32
  }
  func.func @transform_1(%arg0: i32) -> (i32, i32) {
    %c0_i32 = arith.constant 0 : i32
    %c0_i32_0 = arith.constant 0 : i32
    return %arg0, %c0_i32 : i32, i32
  }
  func.func @transform_2(%arg0: i32) -> (i32, i32) {
    %c0_i32 = arith.constant 0 : i32
    %c0_i32_0 = arith.constant 0 : i32
    %c0_i32_1 = arith.constant 0 : i32
    return %c0_i32, %c0_i32_0 : i32, i32
  }
  func.func @transform_3(%arg0: i32) -> (i32, i32) {
    %c0_i32 = arith.constant 0 : i32
    %c0_i32_0 = arith.constant 0 : i32
    %c0_i32_1 = arith.constant 0 : i32
    return %c0_i32, %c0_i32_0 : i32, i32
  }
}

module attributes {stable_mosaic.version = 11 : i64} {
  func.func @_conv_stack_kernel(%arg0: i32, %arg1: memref<2x18x18x8xf32, #tpu.memory_space<vmem>>, %arg2: memref<72x64xf32, #tpu.memory_space<vmem>>, %arg3: memref<1x64xf32, #tpu.memory_space<vmem>>, %arg4: memref<576x64xf32, #tpu.memory_space<vmem>>, %arg5: memref<1x64xf32, #tpu.memory_space<vmem>>, %arg6: memref<576x64xf32, #tpu.memory_space<vmem>>, %arg7: memref<1x64xf32, #tpu.memory_space<vmem>>, %arg8: memref<512x64xbf16, #tpu.memory_space<vmem>>, %arg9: memref<2x18x18x64xf32, #tpu.memory_space<vmem>>) attributes {dimension_semantics = [#tpu.dimension_semantics<arbitrary>], iteration_bounds = array<i64: 1>, scalar_prefetch = 0 : i64, scratch_operands = 1 : i64, tpu.core_type = #tpu.core_type<tc>, window_params = [{pipeline_mode = #tpu.pipeline_mode<synchronous>, transform_indices = @transform_0, window_bounds = array<i64: 2, 18, 18, 8>}, {pipeline_mode = #tpu.pipeline_mode<synchronous>, transform_indices = @transform_1, window_bounds = array<i64: 72, 64>}, {pipeline_mode = #tpu.pipeline_mode<synchronous>, transform_indices = @transform_2, window_bounds = array<i64: 1, 64>}, {pipeline_mode = #tpu.pipeline_mode<synchronous>, transform_indices = @transform_3, window_bounds = array<i64: 576, 64>}, {pipeline_mode = #tpu.pipeline_mode<synchronous>, transform_indices = @transform_4, window_bounds = array<i64: 1, 64>}, {pipeline_mode = #tpu.pipeline_mode<synchronous>, transform_indices = @transform_5, window_bounds = array<i64: 576, 64>}, {pipeline_mode = #tpu.pipeline_mode<synchronous>, transform_indices = @transform_6, window_bounds = array<i64: 1, 64>}, {pipeline_mode = #tpu.pipeline_mode<synchronous>, transform_indices = @transform_7, window_bounds = array<i64: 512, 64>}]} {
    %c0 = arith.constant 0 : index
    %c0_0 = arith.constant 0 : index
    %c0_1 = arith.constant 0 : index
    %c0_2 = arith.constant 0 : index
    %0 = vector.load %arg1[%c0, %c0_0, %c0_1, %c0_2] : memref<2x18x18x8xf32, #tpu.memory_space<vmem>>, vector<2x18x18x8xf32>
    %c0_3 = arith.constant 0 : index
    %c0_4 = arith.constant 0 : index
    %1 = vector.load %arg2[%c0_3, %c0_4] : memref<72x64xf32, #tpu.memory_space<vmem>>, vector<72x64xf32>
    %c0_5 = arith.constant 0 : index
    %c0_6 = arith.constant 0 : index
    %2 = vector.load %arg3[%c0_5, %c0_6] : memref<1x64xf32, #tpu.memory_space<vmem>>, vector<1x64xf32>
    %3 = vector.extract_strided_slice %0 {offsets = [0, 0, 0, 0], sizes = [2, 16, 16, 8], strides = [1, 1, 1, 1]} : vector<2x18x18x8xf32> to vector<2x16x16x8xf32>
    %4 = vector.shape_cast %3 : vector<2x16x16x8xf32> to vector<512x8xf32>
    %5 = vector.extract_strided_slice %0 {offsets = [0, 0, 1, 0], sizes = [2, 16, 16, 8], strides = [1, 1, 1, 1]} : vector<2x18x18x8xf32> to vector<2x16x16x8xf32>
    %6 = vector.shape_cast %5 : vector<2x16x16x8xf32> to vector<512x8xf32>
    %7 = vector.extract_strided_slice %0 {offsets = [0, 0, 2, 0], sizes = [2, 16, 16, 8], strides = [1, 1, 1, 1]} : vector<2x18x18x8xf32> to vector<2x16x16x8xf32>
    %8 = vector.shape_cast %7 : vector<2x16x16x8xf32> to vector<512x8xf32>
    %9 = vector.extract_strided_slice %0 {offsets = [0, 1, 0, 0], sizes = [2, 16, 16, 8], strides = [1, 1, 1, 1]} : vector<2x18x18x8xf32> to vector<2x16x16x8xf32>
    %10 = vector.shape_cast %9 : vector<2x16x16x8xf32> to vector<512x8xf32>
    %11 = vector.extract_strided_slice %0 {offsets = [0, 1, 1, 0], sizes = [2, 16, 16, 8], strides = [1, 1, 1, 1]} : vector<2x18x18x8xf32> to vector<2x16x16x8xf32>
    %12 = vector.shape_cast %11 : vector<2x16x16x8xf32> to vector<512x8xf32>
    %13 = vector.extract_strided_slice %0 {offsets = [0, 1, 2, 0], sizes = [2, 16, 16, 8], strides = [1, 1, 1, 1]} : vector<2x18x18x8xf32> to vector<2x16x16x8xf32>
    %14 = vector.shape_cast %13 : vector<2x16x16x8xf32> to vector<512x8xf32>
    %15 = vector.extract_strided_slice %0 {offsets = [0, 2, 0, 0], sizes = [2, 16, 16, 8], strides = [1, 1, 1, 1]} : vector<2x18x18x8xf32> to vector<2x16x16x8xf32>
    %16 = vector.shape_cast %15 : vector<2x16x16x8xf32> to vector<512x8xf32>
    %17 = vector.extract_strided_slice %0 {offsets = [0, 2, 1, 0], sizes = [2, 16, 16, 8], strides = [1, 1, 1, 1]} : vector<2x18x18x8xf32> to vector<2x16x16x8xf32>
    %18 = vector.shape_cast %17 : vector<2x16x16x8xf32> to vector<512x8xf32>
    %19 = vector.extract_strided_slice %0 {offsets = [0, 2, 2, 0], sizes = [2, 16, 16, 8], strides = [1, 1, 1, 1]} : vector<2x18x18x8xf32> to vector<2x16x16x8xf32>
    %20 = vector.shape_cast %19 : vector<2x16x16x8xf32> to vector<512x8xf32>
    %21 = tpu.concatenate %4, %6, %8, %10, %12, %14, %16, %18, %20 in 1 : vector<512x8xf32>, vector<512x8xf32>, vector<512x8xf32>, vector<512x8xf32>, vector<512x8xf32>, vector<512x8xf32>, vector<512x8xf32>, vector<512x8xf32>, vector<512x8xf32> -> vector<512x72xf32>
    %cst = arith.constant dense<0.000000e+00> : vector<512x64xf32>
    %22 = tpu.matmul %21, %1, %cst {dimension_numbers = #tpu.dot_dimension_numbers<[1], [0], [0], [1], [0, 0, 1, 1], [], []>} : vector<512x72xf32>, vector<72x64xf32>, vector<512x64xf32> -> vector<512x64xf32>
    %23 = vector.broadcast %2 : vector<1x64xf32> to vector<512x64xf32>
    %24 = arith.addf %22, %23 : vector<512x64xf32>
    %cst_7 = arith.constant 0.000000e+00 : f32
    %25 = vector.broadcast %cst_7 : f32 to vector<512x64xf32>
    %26 = arith.maximumf %24, %25 : vector<512x64xf32>
    %cst_8 = arith.constant 0.000000e+00 : f32
    %27 = vector.broadcast %cst_8 : f32 to vector<2x18x18x64xf32>
    %c0_9 = arith.constant 0 : index
    %c0_10 = arith.constant 0 : index
    %c0_11 = arith.constant 0 : index
    %c0_12 = arith.constant 0 : index
    %28 = vector.load %arg9[%c0_9, %c0_10, %c0_11, %c0_12] : memref<2x18x18x64xf32, #tpu.memory_space<vmem>>, vector<2x18x18x64xf32>
    tpu.vector_store %arg9[%c0_9, %c0_10, %c0_11, %c0_12], %27 {strides = array<i32>} : memref<2x18x18x64xf32, #tpu.memory_space<vmem>>, vector<2x18x18x64xf32>,
    %29 = vector.shape_cast %26 : vector<512x64xf32> to vector<2x16x16x64xf32>
    %c0_13 = arith.constant 0 : index
    %c1 = arith.constant 1 : index
    %c1_14 = arith.constant 1 : index
    %c0_15 = arith.constant 0 : index
    %30 = vector.load %arg9[%c0_13, %c1, %c1_14, %c0_15] : memref<2x18x18x64xf32, #tpu.memory_space<vmem>>, vector<2x16x16x64xf32>
    tpu.vector_store %arg9[%c0_13, %c1, %c1_14, %c0_15], %29 {strides = array<i32>} : memref<2x18x18x64xf32, #tpu.memory_space<vmem>>, vector<2x16x16x64xf32>,
    %c0_16 = arith.constant 0 : index
    %c0_17 = arith.constant 0 : index
    %c0_18 = arith.constant 0 : index
    %c0_19 = arith.constant 0 : index
    %31 = vector.load %arg9[%c0_16, %c0_17, %c0_18, %c0_19] : memref<2x18x18x64xf32, #tpu.memory_space<vmem>>, vector<2x18x18x64xf32>
    %c0_20 = arith.constant 0 : index
    %c0_21 = arith.constant 0 : index
    %32 = vector.load %arg4[%c0_20, %c0_21] : memref<576x64xf32, #tpu.memory_space<vmem>>, vector<576x64xf32>
    %c0_22 = arith.constant 0 : index
    %c0_23 = arith.constant 0 : index
    %33 = vector.load %arg5[%c0_22, %c0_23] : memref<1x64xf32, #tpu.memory_space<vmem>>, vector<1x64xf32>
    %34 = vector.extract_strided_slice %31 {offsets = [0, 0, 0, 0], sizes = [2, 16, 16, 64], strides = [1, 1, 1, 1]} : vector<2x18x18x64xf32> to vector<2x16x16x64xf32>
    %35 = vector.shape_cast %34 : vector<2x16x16x64xf32> to vector<512x64xf32>
    %36 = vector.extract_strided_slice %31 {offsets = [0, 0, 1, 0], sizes = [2, 16, 16, 64], strides = [1, 1, 1, 1]} : vector<2x18x18x64xf32> to vector<2x16x16x64xf32>
    %37 = vector.shape_cast %36 : vector<2x16x16x64xf32> to vector<512x64xf32>
    %38 = vector.extract_strided_slice %31 {offsets = [0, 0, 2, 0], sizes = [2, 16, 16, 64], strides = [1, 1, 1, 1]} : vector<2x18x18x64xf32> to vector<2x16x16x64xf32>
    %39 = vector.shape_cast %38 : vector<2x16x16x64xf32> to vector<512x64xf32>
    %40 = vector.extract_strided_slice %31 {offsets = [0, 1, 0, 0], sizes = [2, 16, 16, 64], strides = [1, 1, 1, 1]} : vector<2x18x18x64xf32> to vector<2x16x16x64xf32>
    %41 = vector.shape_cast %40 : vector<2x16x16x64xf32> to vector<512x64xf32>
    %42 = vector.extract_strided_slice %31 {offsets = [0, 1, 1, 0], sizes = [2, 16, 16, 64], strides = [1, 1, 1, 1]} : vector<2x18x18x64xf32> to vector<2x16x16x64xf32>
    %43 = vector.shape_cast %42 : vector<2x16x16x64xf32> to vector<512x64xf32>
    %44 = vector.extract_strided_slice %31 {offsets = [0, 1, 2, 0], sizes = [2, 16, 16, 64], strides = [1, 1, 1, 1]} : vector<2x18x18x64xf32> to vector<2x16x16x64xf32>
    %45 = vector.shape_cast %44 : vector<2x16x16x64xf32> to vector<512x64xf32>
    %46 = vector.extract_strided_slice %31 {offsets = [0, 2, 0, 0], sizes = [2, 16, 16, 64], strides = [1, 1, 1, 1]} : vector<2x18x18x64xf32> to vector<2x16x16x64xf32>
    %47 = vector.shape_cast %46 : vector<2x16x16x64xf32> to vector<512x64xf32>
    %48 = vector.extract_strided_slice %31 {offsets = [0, 2, 1, 0], sizes = [2, 16, 16, 64], strides = [1, 1, 1, 1]} : vector<2x18x18x64xf32> to vector<2x16x16x64xf32>
    %49 = vector.shape_cast %48 : vector<2x16x16x64xf32> to vector<512x64xf32>
    %50 = vector.extract_strided_slice %31 {offsets = [0, 2, 2, 0], sizes = [2, 16, 16, 64], strides = [1, 1, 1, 1]} : vector<2x18x18x64xf32> to vector<2x16x16x64xf32>
    %51 = vector.shape_cast %50 : vector<2x16x16x64xf32> to vector<512x64xf32>
    %52 = tpu.concatenate %35, %37, %39, %41, %43, %45, %47, %49, %51 in 1 : vector<512x64xf32>, vector<512x64xf32>, vector<512x64xf32>, vector<512x64xf32>, vector<512x64xf32>, vector<512x64xf32>, vector<512x64xf32>, vector<512x64xf32>, vector<512x64xf32> -> vector<512x576xf32>
    %cst_24 = arith.constant dense<0.000000e+00> : vector<512x64xf32>
    %53 = tpu.matmul %52, %32, %cst_24 {dimension_numbers = #tpu.dot_dimension_numbers<[1], [0], [0], [1], [0, 0, 1, 1], [], []>} : vector<512x576xf32>, vector<576x64xf32>, vector<512x64xf32> -> vector<512x64xf32>
    %54 = vector.broadcast %33 : vector<1x64xf32> to vector<512x64xf32>
    %55 = arith.addf %53, %54 : vector<512x64xf32>
    %cst_25 = arith.constant 0.000000e+00 : f32
    %56 = vector.broadcast %cst_25 : f32 to vector<512x64xf32>
    %57 = arith.maximumf %55, %56 : vector<512x64xf32>
    %58 = vector.shape_cast %57 : vector<512x64xf32> to vector<2x16x16x64xf32>
    %c0_26 = arith.constant 0 : index
    %c1_27 = arith.constant 1 : index
    %c1_28 = arith.constant 1 : index
    %c0_29 = arith.constant 0 : index
    %59 = vector.load %arg9[%c0_26, %c1_27, %c1_28, %c0_29] : memref<2x18x18x64xf32, #tpu.memory_space<vmem>>, vector<2x16x16x64xf32>
    tpu.vector_store %arg9[%c0_26, %c1_27, %c1_28, %c0_29], %58 {strides = array<i32>} : memref<2x18x18x64xf32, #tpu.memory_space<vmem>>, vector<2x16x16x64xf32>,
    %c0_30 = arith.constant 0 : index
    %c0_31 = arith.constant 0 : index
    %c0_32 = arith.constant 0 : index
    %c0_33 = arith.constant 0 : index
    %60 = vector.load %arg9[%c0_30, %c0_31, %c0_32, %c0_33] : memref<2x18x18x64xf32, #tpu.memory_space<vmem>>, vector<2x18x18x64xf32>
    %c0_34 = arith.constant 0 : index
    %c0_35 = arith.constant 0 : index
    %61 = vector.load %arg6[%c0_34, %c0_35] : memref<576x64xf32, #tpu.memory_space<vmem>>, vector<576x64xf32>
    %c0_36 = arith.constant 0 : index
    %c0_37 = arith.constant 0 : index
    %62 = vector.load %arg7[%c0_36, %c0_37] : memref<1x64xf32, #tpu.memory_space<vmem>>, vector<1x64xf32>
    %63 = vector.extract_strided_slice %60 {offsets = [0, 0, 0, 0], sizes = [2, 16, 16, 64], strides = [1, 1, 1, 1]} : vector<2x18x18x64xf32> to vector<2x16x16x64xf32>
    %64 = vector.shape_cast %63 : vector<2x16x16x64xf32> to vector<512x64xf32>
    %65 = vector.extract_strided_slice %60 {offsets = [0, 0, 1, 0], sizes = [2, 16, 16, 64], strides = [1, 1, 1, 1]} : vector<2x18x18x64xf32> to vector<2x16x16x64xf32>
    %66 = vector.shape_cast %65 : vector<2x16x16x64xf32> to vector<512x64xf32>
    %67 = vector.extract_strided_slice %60 {offsets = [0, 0, 2, 0], sizes = [2, 16, 16, 64], strides = [1, 1, 1, 1]} : vector<2x18x18x64xf32> to vector<2x16x16x64xf32>
    %68 = vector.shape_cast %67 : vector<2x16x16x64xf32> to vector<512x64xf32>
    %69 = vector.extract_strided_slice %60 {offsets = [0, 1, 0, 0], sizes = [2, 16, 16, 64], strides = [1, 1, 1, 1]} : vector<2x18x18x64xf32> to vector<2x16x16x64xf32>
    %70 = vector.shape_cast %69 : vector<2x16x16x64xf32> to vector<512x64xf32>
    %71 = vector.extract_strided_slice %60 {offsets = [0, 1, 1, 0], sizes = [2, 16, 16, 64], strides = [1, 1, 1, 1]} : vector<2x18x18x64xf32> to vector<2x16x16x64xf32>
    %72 = vector.shape_cast %71 : vector<2x16x16x64xf32> to vector<512x64xf32>
    %73 = vector.extract_strided_slice %60 {offsets = [0, 1, 2, 0], sizes = [2, 16, 16, 64], strides = [1, 1, 1, 1]} : vector<2x18x18x64xf32> to vector<2x16x16x64xf32>
    %74 = vector.shape_cast %73 : vector<2x16x16x64xf32> to vector<512x64xf32>
    %75 = vector.extract_strided_slice %60 {offsets = [0, 2, 0, 0], sizes = [2, 16, 16, 64], strides = [1, 1, 1, 1]} : vector<2x18x18x64xf32> to vector<2x16x16x64xf32>
    %76 = vector.shape_cast %75 : vector<2x16x16x64xf32> to vector<512x64xf32>
    %77 = vector.extract_strided_slice %60 {offsets = [0, 2, 1, 0], sizes = [2, 16, 16, 64], strides = [1, 1, 1, 1]} : vector<2x18x18x64xf32> to vector<2x16x16x64xf32>
    %78 = vector.shape_cast %77 : vector<2x16x16x64xf32> to vector<512x64xf32>
    %79 = vector.extract_strided_slice %60 {offsets = [0, 2, 2, 0], sizes = [2, 16, 16, 64], strides = [1, 1, 1, 1]} : vector<2x18x18x64xf32> to vector<2x16x16x64xf32>
    %80 = vector.shape_cast %79 : vector<2x16x16x64xf32> to vector<512x64xf32>
    %81 = tpu.concatenate %64, %66, %68, %70, %72, %74, %76, %78, %80 in 1 : vector<512x64xf32>, vector<512x64xf32>, vector<512x64xf32>, vector<512x64xf32>, vector<512x64xf32>, vector<512x64xf32>, vector<512x64xf32>, vector<512x64xf32>, vector<512x64xf32> -> vector<512x576xf32>
    %cst_38 = arith.constant dense<0.000000e+00> : vector<512x64xf32>
    %82 = tpu.matmul %81, %61, %cst_38 {dimension_numbers = #tpu.dot_dimension_numbers<[1], [0], [0], [1], [0, 0, 1, 1], [], []>} : vector<512x576xf32>, vector<576x64xf32>, vector<512x64xf32> -> vector<512x64xf32>
    %83 = vector.broadcast %62 : vector<1x64xf32> to vector<512x64xf32>
    %84 = arith.addf %82, %83 : vector<512x64xf32>
    %cst_39 = arith.constant 0.000000e+00 : f32
    %85 = vector.broadcast %cst_39 : f32 to vector<512x64xf32>
    %86 = arith.maximumf %84, %85 : vector<512x64xf32>
    %87 = arith.truncf %86 : vector<512x64xf32> to vector<512x64xbf16>
    %c0_40 = arith.constant 0 : index
    %c0_41 = arith.constant 0 : index
    %88 = vector.load %arg8[%c0_40, %c0_41] : memref<512x64xbf16, #tpu.memory_space<vmem>>, vector<512x64xbf16>
    tpu.vector_store %arg8[%c0_40, %c0_41], %87 {strides = array<i32>} : memref<512x64xbf16, #tpu.memory_space<vmem>>, vector<512x64xbf16>,
    return
  }
  func.func @transform_0(%arg0: i32) -> (i32, i32, i32, i32) {
    %c0_i32 = arith.constant 0 : i32
    %c0_i32_0 = arith.constant 0 : i32
    %c0_i32_1 = arith.constant 0 : i32
    %c0_i32_2 = arith.constant 0 : i32
    %c0_i32_3 = arith.constant 0 : i32
    return %c0_i32, %c0_i32_0, %c0_i32_1, %c0_i32_2 : i32, i32, i32, i32
  }
  func.func @transform_1(%arg0: i32) -> (i32, i32) {
    %c0_i32 = arith.constant 0 : i32
    %c0_i32_0 = arith.constant 0 : i32
    %c0_i32_1 = arith.constant 0 : i32
    return %c0_i32, %c0_i32_0 : i32, i32
  }
  func.func @transform_2(%arg0: i32) -> (i32, i32) {
    %c0_i32 = arith.constant 0 : i32
    %c0_i32_0 = arith.constant 0 : i32
    %c0_i32_1 = arith.constant 0 : i32
    return %c0_i32, %c0_i32_0 : i32, i32
  }
  func.func @transform_3(%arg0: i32) -> (i32, i32) {
    %c0_i32 = arith.constant 0 : i32
    %c0_i32_0 = arith.constant 0 : i32
    %c0_i32_1 = arith.constant 0 : i32
    return %c0_i32, %c0_i32_0 : i32, i32
  }
  func.func @transform_4(%arg0: i32) -> (i32, i32) {
    %c0_i32 = arith.constant 0 : i32
    %c0_i32_0 = arith.constant 0 : i32
    %c0_i32_1 = arith.constant 0 : i32
    return %c0_i32, %c0_i32_0 : i32, i32
  }
  func.func @transform_5(%arg0: i32) -> (i32, i32) {
    %c0_i32 = arith.constant 0 : i32
    %c0_i32_0 = arith.constant 0 : i32
    %c0_i32_1 = arith.constant 0 : i32
    return %c0_i32, %c0_i32_0 : i32, i32
  }
  func.func @transform_6(%arg0: i32) -> (i32, i32) {
    %c0_i32 = arith.constant 0 : i32
    %c0_i32_0 = arith.constant 0 : i32
    %c0_i32_1 = arith.constant 0 : i32
    return %c0_i32, %c0_i32_0 : i32, i32
  }
  func.func @transform_7(%arg0: i32) -> (i32, i32) {
    %c0_i32 = arith.constant 0 : i32
    %c0_i32_0 = arith.constant 0 : i32
    %c0_i32_1 = arith.constant 0 : i32
    return %c0_i32, %c0_i32_0 : i32, i32
  }
}

</mosaic_0001>

<llo_original>
// kernel: cnn_forward.3
$region0: #{cnn_forward.3}
  #allocation0 [shape = 'u32[]', space=smem, size = 0x4, offset = 0x4, fixed_abs, tag = 'smem constant byte address 0x4 - core index']
  #allocation1 [shape = 'u32[144,128]{1,0:T(1,128)}', space=vmem, size = 0x12000, scoped, tag = 'internal scratch']
  %s0 = inlined_call_operand.vmem [shape: bf16[2,16384], index: 0, kind: input, shape index: {}]
  %s1 = inlined_call_operand.hbm [shape: bf16[16384,128], index: 1, kind: input, shape index: {}]
  %s2 = inlined_call_operand.hbm [shape: f32[1,128], index: 2, kind: input, shape index: {}]
  %s3 = inlined_call_operand.hbm [shape: f32[2,128], index: 3, kind: output, shape index: {}]
  %s4 = sld [smem:[#allocation0]]
  $region57: #{cnn_forward.3} parent=0
    _
  %s6 = ssub.s32 1, %s4
  %s7 = scalar_select 0, %s6, %s4
  $region1: #{cnn_forward.3} parent=0
    #allocation2 [shape = 'u8[2097152]{0}', space=vmem, size = 0x200000, scoped, tag = 'input window, operand 1']
    #allocation3 [shape = 's32[2]{0}', space=sflag, size = 0x8, scoped, tag = 'scoped memory for cnn_forward.3']
    #allocation4 [shape = 's32[2]{0}', space=sflag, size = 0x8, scoped, tag = 'scoped memory for cnn_forward.3']
    #allocation5 [shape = 'u8[512]{0}', space=vmem, size = 0x400, scoped, tag = 'input window, operand 2, single buffered']
    #allocation6 [shape = 's32[1]{0}', space=sflag, size = 0x4, scoped, tag = 'scoped memory for cnn_forward.3']
    #allocation7 [shape = 'u8[1024]{0}', space=vmem, size = 0x400, scoped, tag = 'output window, operand 0, single buffered']
    %8 = vsyncpa [#allocation3], 0
    %s9 = scalar_lea.sflag [#allocation3], 1
    %10 = vsyncpa %s9, 0
    %11 = vsyncpa [#allocation6], 0
    %12 = vsyncpa [#allocation4], 0
    loop: start=0, step=1, limit=6
    $region2: #{cnn_forward.3} parent=1 // loop_pre_header
      _
    $region3: #{cnn_forward.3} parent=1 // loop_header
      %s14 = sphi 0, %s18
      %p15 = scmp.ge.s32.totalorder %s14, 6
      %s24 = sphi 0, %s26
      %s27 = sphi 0, %s24
      %s28 = sphi 0, %s27
      %s44 = sphi 0, %s28
      %s50 = sphi 0, %s52
      %s53 = sphi 0, %s50
      %s54 = sphi 0, %s53
      %s70 = sphi 0, %s54
      %s74 = sphi 0, %s74
      %s76 = sphi 0, %s74
      %s77 = sphi 0, %s76
      %s91 = sphi 0, %s77
      %s95 = sphi 0, %s95
      %s97 = sphi 0, %s95
      %s98 = sphi 0, %s97
      %s112 = sphi 0, %s98
    $region4: #{cnn_forward.3} parent=1 // loop_header_branch
      %17 = sbr.rel (%p15) target = $region8
    $region5: #{cnn_forward.3} parent=1 // loop_body
      %s19 = ssub.s32 %s14, 1
      %s20 = ssub.s32 %s14, 2
      %s21 = sadd.s32 %s14, 1
      %s22 = ssub.s32 %s14, %s21
      %p23 = scmp.eq.s32.totalorder %s22, 0
      %s25 = sadd.s32 %s24, 1
      %s26 = scalar_select %p23, %s24, %s25
      %p29 = pneg %p23
      %p30 = scmp.eq.s32.totalorder %s14, 3
      %p31 = por %p29, %p30
      %p32 = scmp.ne.s32.totalorder %s24, %s27
      %p33 = scmp.eq.s32.totalorder %s14, 0
      %p34 = por %p32, %p33
      %p35 = scmp.ne.s32.totalorder %s24, %s27
      %p36 = scmp.eq.s32.totalorder %s19, 3
      %p37 = por %p35, %p36
      %p38 = scmp.ne.s32.totalorder %s27, %s28
      %p39 = scmp.eq.s32.totalorder %s19, 0
      %p40 = por %p38, %p39
      %p41 = scmp.ne.s32.totalorder %s27, %s28
      %p42 = scmp.eq.s32.totalorder %s20, 3
      %p43 = por %p41, %p42
      %p45 = scmp.ne.s32.totalorder %s28, %s44
      %p46 = scmp.eq.s32.totalorder %s20, 0
      %p47 = por %p45, %p46
      %s48 = ssub.s32 %s14, %s21
      %p49 = scmp.eq.s32.totalorder %s48, 0
      %s51 = sadd.s32 %s50, 1
      %s52 = scalar_select %p49, %s50, %s51
      %p55 = pneg %p49
      %p56 = scmp.eq.s32.totalorder %s14, 3
      %p57 = por %p55, %p56
      %p58 = scmp.ne.s32.totalorder %s50, %s53
      %p59 = scmp.eq.s32.totalorder %s14, 0
      %p60 = por %p58, %p59
      %p61 = scmp.ne.s32.totalorder %s50, %s53
      %p62 = scmp.eq.s32.totalorder %s19, 3
      %p63 = por %p61, %p62
      %p64 = scmp.ne.s32.totalorder %s53, %s54
      %p65 = scmp.eq.s32.totalorder %s19, 0
      %p66 = por %p64, %p65
      %p67 = scmp.ne.s32.totalorder %s53, %s54
      %p68 = scmp.eq.s32.totalorder %s20, 3
      %p69 = por %p67, %p68
      %p71 = scmp.ne.s32.totalorder %s54, %s70
      %p72 = scmp.eq.s32.totalorder %s20, 0
      %p73 = por %p71, %p72
      %s75 = sadd.s32 %s74, 1
      %p78 = scmp.eq.s32.totalorder %s14, 3
      %p79 = scmp.ne.s32.totalorder %s74, %s76
      %p80 = scmp.eq.s32.totalorder %s14, 0
      %p81 = por %p79, %p80
      %p82 = scmp.ne.s32.totalorder %s74, %s76
      %p83 = scmp.eq.s32.totalorder %s19, 3
      %p84 = por %p82, %p83
      %p85 = scmp.ne.s32.totalorder %s76, %s77
      %p86 = scmp.eq.s32.totalorder %s19, 0
      %p87 = por %p85, %p86
      %p88 = scmp.ne.s32.totalorder %s76, %s77
      %p89 = scmp.eq.s32.totalorder %s20, 3
      %p90 = por %p88, %p89
      %p92 = scmp.ne.s32.totalorder %s77, %s91
      %p93 = scmp.eq.s32.totalorder %s20, 0
      %p94 = por %p92, %p93
      %s96 = sadd.s32 %s95, 1
      %p99 = scmp.eq.s32.totalorder %s14, 3
      %p100 = scmp.ne.s32.totalorder %s95, %s97
      %p101 = scmp.eq.s32.totalorder %s14, 0
      %p102 = por %p100, %p101
      %p103 = scmp.ne.s32.totalorder %s95, %s97
      %p104 = scmp.eq.s32.totalorder %s19, 3
      %p105 = por %p103, %p104
      %p106 = scmp.ne.s32.totalorder %s97, %s98
      %p107 = scmp.eq.s32.totalorder %s19, 0
      %p108 = por %p106, %p107
      %p109 = scmp.ne.s32.totalorder %s97, %s98
      %p110 = scmp.eq.s32.totalorder %s20, 3
      %p111 = por %p109, %p110
      %p113 = scmp.ne.s32.totalorder %s98, %s112
      %p114 = scmp.eq.s32.totalorder %s20, 0
      %p115 = por %p113, %p114
      %p116 = scmp.le.s32.totalorder 1, %s14
      %p117 = scmp.lt.s32.totalorder %s14, 5
      %p118 = pnand %p116, %p117
      %p119 = pneg %p118
      // Predicated region
      $region9: #{cnn_forward.3} parent=5 // pred_check
        _
      $region10: #{cnn_forward.3} parent=5 // pred_check_branch
        %121 = sbr.rel (%p118) target = $region12
      $region11: #{cnn_forward.3} parent=5 // pred_region
        %s122 = ssub.s32 %s14, 1
        // Predicated region
        $region13: #{cnn_forward.3} parent=11 // pred_check
          %p123 = pneg %p87
        $region14: #{cnn_forward.3} parent=11 // pred_check_branch
          %125 = sbr.rel (%p123) target = $region16
        $region15: #{cnn_forward.3} parent=11 // pred_region
          %s127 = ssub.s32 16, 16
          %128 = vsyncadd [#allocation6], %s127
          %s130 = sshll.u32 [#allocation5], 4
          %s131 = int_to_ptr.vmem [resolvable:$true] %s130
          %133 = dma.hbm_to_vmem [thread:$0]  %s2, 16, %s131, [#allocation6]
        $region16: #{cnn_forward.3} parent=11 // pred_fallthru
          _
      $region12: #{cnn_forward.3} parent=5 // pred_fallthru
        _
      %p134 = scmp.lt.s32.totalorder %s14, 4
      // Predicated region
      $region17: #{cnn_forward.3} parent=5 // pred_check
        %p135 = pneg %p134
      $region18: #{cnn_forward.3} parent=5 // pred_check_branch
        %137 = sbr.rel (%p135) target = $region20
      $region19: #{cnn_forward.3} parent=5 // pred_region
        // Predicated region
        $region21: #{cnn_forward.3} parent=19 // pred_check
          %p138 = pneg %p34
        $region22: #{cnn_forward.3} parent=19 // pred_check_branch
          %140 = sbr.rel (%p138) target = $region24
        $region23: #{cnn_forward.3} parent=19 // pred_region
          %s141 = smul.u32 32, %s14
          %p142 = scmp.lt.s32.totalorder %s141, 127
          %s143 = scalar_select %p142, %s141, 127
          %s144 = scalar_lea.vmem %s0, %s143
          %s145 = smul.u32 32, %s14
        $region24: #{cnn_forward.3} parent=19 // pred_fallthru
          _
        // Predicated region
        $region25: #{cnn_forward.3} parent=19 // pred_check
          %p146 = pneg %p60
        $region26: #{cnn_forward.3} parent=19 // pred_check_branch
          %148 = sbr.rel (%p146) target = $region28
        $region27: #{cnn_forward.3} parent=19 // pred_region
          %s149 = sand.u32 %s50, 1
          %s150 = scalar_lea.sflag [#allocation3], %s149
          %s151 = sand.u32 %s50, 1
          %s152 = smul.addr %s151, 2048
          %s153 = scalar_lea.vmem [#allocation2], %s152
          %s154 = smul.u32 512, %s14
          %s156 = ssub.s32 32768, 32768
          %157 = vsyncadd %s150, %s156
          %s158 = smul.addr %s154, 64
          %s159 = scalar_lea.hbm %s1, %s158
          %s160 = sshll.u32 %s153, 4
          %s161 = int_to_ptr.vmem [resolvable:$true] %s160
          %166 = dma.hbm_to_vmem [thread:$0]  %s159, 32768, %s161, %s150, 64, 64, 4
        $region28: #{cnn_forward.3} parent=19 // pred_fallthru
          _
      $region20: #{cnn_forward.3} parent=5 // pred_fallthru
        _
      %p167 = scmp.le.s32.totalorder 1, %s14
      %p168 = scmp.lt.s32.totalorder %s14, 5
      %p169 = pnand %p167, %p168
      %p170 = pneg %p169
      // Predicated region
      $region29: #{cnn_forward.3} parent=5 // pred_check
        _
      $region30: #{cnn_forward.3} parent=5 // pred_check_branch
        %172 = sbr.rel (%p169) target = $region32
      $region31: #{cnn_forward.3} parent=5 // pred_region
        %s173 = ssub.s32 %s14, 1
        %s174 = sand.u32 %s53, 1
        %s175 = scalar_lea.sflag [#allocation3], %s174
        %s176 = sand.u32 %s53, 1
        %s177 = smul.addr %s176, 2048
        %s178 = scalar_lea.vmem [#allocation2], %s177
        // Predicated region
        $region33: #{cnn_forward.3} parent=31 // pred_check
          %p179 = pneg %p66
        $region34: #{cnn_forward.3} parent=31 // pred_check_branch
          %181 = sbr.rel (%p179) target = $region36
        $region35: #{cnn_forward.3} parent=31 // pred_region
          %182 = dma.done %s175, 32768
        $region36: #{cnn_forward.3} parent=31 // pred_fallthru
          _
        // Predicated region
        $region37: #{cnn_forward.3} parent=31 // pred_check
          %p183 = pneg %p87
        $region38: #{cnn_forward.3} parent=31 // pred_check_branch
          %185 = sbr.rel (%p183) target = $region40
        $region39: #{cnn_forward.3} parent=31 // pred_region
          %186 = dma.done [#allocation6], 16
        $region40: #{cnn_forward.3} parent=31 // pred_fallthru
          _
        %s187 = smul.u32 32, %s19
        %p188 = scmp.lt.s32.totalorder %s187, 127
        %s189 = scalar_select %p188, %s187, 127
        %s190 = scalar_lea.vmem %s0, %s189
        %p191 = pneg %p40
        %p192 = pneg %p37
        %s193 = sand.u32 %s53, 1
        %s194 = scalar_lea.sflag [#allocation3], %s193
        %s195 = sand.u32 %s53, 1
        %s196 = smul.addr %s195, 2048
        %s197 = scalar_lea.vmem [#allocation2], %s196
        %p198 = pneg %p66
        %p199 = pneg %p63
        %p200 = pneg %p87
        %p201 = pneg %p84
        %p202 = pneg %p108
        %p203 = pneg %p105
        %s204 = smul.u32 32, %s19
        %p205 = scmp.lt.s32.totalorder %s204, 127
        %s206 = scalar_select %p205, %s204, 127
        %s207 = scalar_lea.vmem %s0, %s206
        %s208 = smul.u32 32, %s19
        %s209 = smul.u32 512, %s19
        %p211 = scmp.eq.s32.totalorder %s19, 0
        // Predicated region
        $region41: #{cnn_forward.3} parent=31 // pred_check
          %p212 = pneg %p211
        $region42: #{cnn_forward.3} parent=31 // pred_check_branch
          %214 = sbr.rel (%p212) target = $region44
        $region43: #{cnn_forward.3} parent=31 // pred_region
          %v215 = vld [vmem:[#allocation5] sm:$0x1]
          %v217 = vlaneseq
          %v218 = vshrl.u32 %v217, 7
          %v219 = vsub.s32 0, %v218
          %v220 = vrot.slane %v215, %v219
          %222 = vst [vmem:[#allocation7] sm:$0x3] %v220
        $region44: #{cnn_forward.3} parent=31 // pred_fallthru
          _
        %v223 = vld [vmem:[#allocation7] sm:$0x3]
        %v224 = vld [vmem:[%s207] sm:$0xff]
        %v225 = vld [vmem:[%s207 + $0x8] sm:$0xff]
        %v226 = vld [vmem:[%s207 + $0x10] sm:$0xff]
        %v227 = vld [vmem:[%s207 + $0x18] sm:$0xff]
        %v228 = vld [vmem:[%s178] sm:$0xf]
        %v229 = vld [vmem:[%s178 + $0x4] sm:$0xf]
        %v230 = vld [vmem:[%s178 + $0x8] sm:$0xf]
        %v231 = vld [vmem:[%s178 + $0xc] sm:$0xf]
        %v232 = vld [vmem:[%s178 + $0x10] sm:$0xf]
        %v233 = vld [vmem:[%s178 + $0x14] sm:$0xf]
        %v234 = vld [vmem:[%s178 + $0x18] sm:$0xf]
        %v235 = vld [vmem:[%s178 + $0x1c] sm:$0xf]
        %v236 = vld [vmem:[%s178 + $0x20] sm:$0xf]
        %v237 = vld [vmem:[%s178 + $0x24] sm:$0xf]
        %v238 = vld [vmem:[%s178 + $0x28] sm:$0xf]
        %v239 = vld [vmem:[%s178 + $0x2c] sm:$0xf]
        %v240 = vld [vmem:[%s178 + $0x30] sm:$0xf]
        %v241 = vld [vmem:[%s178 + $0x34] sm:$0xf]
        %v242 = vld [vmem:[%s178 + $0x38] sm:$0xf]
        %v243 = vld [vmem:[%s178 + $0x3c] sm:$0xf]
        %v244 = vld [vmem:[%s178 + $0x40] sm:$0xf]
        %v245 = vld [vmem:[%s178 + $0x44] sm:$0xf]
        %v246 = vld [vmem:[%s178 + $0x48] sm:$0xf]
        %v247 = vld [vmem:[%s178 + $0x4c] sm:$0xf]
        %v248 = vld [vmem:[%s178 + $0x50] sm:$0xf]
        %v249 = vld [vmem:[%s178 + $0x54] sm:$0xf]
        %v250 = vld [vmem:[%s178 + $0x58] sm:$0xf]
        %v251 = vld [vmem:[%s178 + $0x5c] sm:$0xf]
        %v252 = vld [vmem:[%s178 + $0x60] sm:$0xf]
        %v253 = vld [vmem:[%s178 + $0x64] sm:$0xf]
        %v254 = vld [vmem:[%s178 + $0x68] sm:$0xf]
        %v255 = vld [vmem:[%s178 + $0x6c] sm:$0xf]
        %v256 = vld [vmem:[%s178 + $0x70] sm:$0xf]
        %v257 = vld [vmem:[%s178 + $0x74] sm:$0xf]
        %v258 = vld [vmem:[%s178 + $0x78] sm:$0xf]
        %v259 = vld [vmem:[%s178 + $0x7c] sm:$0xf]
        %v260 = vld [vmem:[%s178 + $0x80] sm:$0xf]
        %v261 = vld [vmem:[%s178 + $0x84] sm:$0xf]
        %v262 = vld [vmem:[%s178 + $0x88] sm:$0xf]
        %v263 = vld [vmem:[%s178 + $0x8c] sm:$0xf]
        %v264 = vld [vmem:[%s178 + $0x90] sm:$0xf]
        %v265 = vld [vmem:[%s178 + $0x94] sm:$0xf]
        %v266 = vld [vmem:[%s178 + $0x98] sm:$0xf]
        %v267 = vld [vmem:[%s178 + $0x9c] sm:$0xf]
        %v268 = vld [vmem:[%s178 + $0xa0] sm:$0xf]
        %v269 = vld [vmem:[%s178 + $0xa4] sm:$0xf]
        %v270 = vld [vmem:[%s178 + $0xa8] sm:$0xf]
        %v271 = vld [vmem:[%s178 + $0xac] sm:$0xf]
        %v272 = vld [vmem:[%s178 + $0xb0] sm:$0xf]
        %v273 = vld [vmem:[%s178 + $0xb4] sm:$0xf]
        %v274 = vld [vmem:[%s178 + $0xb8] sm:$0xf]
        %v275 = vld [vmem:[%s178 + $0xbc] sm:$0xf]
        %v276 = vld [vmem:[%s178 + $0xc0] sm:$0xf]
        %v277 = vld [vmem:[%s178 + $0xc4] sm:$0xf]
        %v278 = vld [vmem:[%s178 + $0xc8] sm:$0xf]
        %v279 = vld [vmem:[%s178 + $0xcc] sm:$0xf]
        %v280 = vld [vmem:[%s178 + $0xd0] sm:$0xf]
        %v281 = vld [vmem:[%s178 + $0xd4] sm:$0xf]
        %v282 = vld [vmem:[%s178 + $0xd8] sm:$0xf]
        %v283 = vld [vmem:[%s178 + $0xdc] sm:$0xf]
        %v284 = vld [vmem:[%s178 + $0xe0] sm:$0xf]
        %v285 = vld [vmem:[%s178 + $0xe4] sm:$0xf]
        %v286 = vld [vmem:[%s178 + $0xe8] sm:$0xf]
        %v287 = vld [vmem:[%s178 + $0xec] sm:$0xf]
        %v288 = vld [vmem:[%s178 + $0xf0] sm:$0xf]
        %v289 = vld [vmem:[%s178 + $0xf4] sm:$0xf]
        %v290 = vld [vmem:[%s178 + $0xf8] sm:$0xf]
        %v291 = vld [vmem:[%s178 + $0xfc] sm:$0xf]
        %v292 = vld [vmem:[%s178 + $0x100] sm:$0xf]
        %v293 = vld [vmem:[%s178 + $0x104] sm:$0xf]
        %v294 = vld [vmem:[%s178 + $0x108] sm:$0xf]
        %v295 = vld [vmem:[%s178 + $0x10c] sm:$0xf]
        %v296 = vld [vmem:[%s178 + $0x110] sm:$0xf]
        %v297 = vld [vmem:[%s178 + $0x114] sm:$0xf]
        %v298 = vld [vmem:[%s178 + $0x118] sm:$0xf]
        %v299 = vld [vmem:[%s178 + $0x11c] sm:$0xf]
        %v300 = vld [vmem:[%s178 + $0x120] sm:$0xf]
        %v301 = vld [vmem:[%s178 + $0x124] sm:$0xf]
        %v302 = vld [vmem:[%s178 + $0x128] sm:$0xf]
        %v303 = vld [vmem:[%s178 + $0x12c] sm:$0xf]
        %v304 = vld [vmem:[%s178 + $0x130] sm:$0xf]
        %v305 = vld [vmem:[%s178 + $0x134] sm:$0xf]
        %v306 = vld [vmem:[%s178 + $0x138] sm:$0xf]
        %v307 = vld [vmem:[%s178 + $0x13c] sm:$0xf]
        %v308 = vld [vmem:[%s178 + $0x140] sm:$0xf]
        %v309 = vld [vmem:[%s178 + $0x144] sm:$0xf]
        %v310 = vld [vmem:[%s178 + $0x148] sm:$0xf]
        %v311 = vld [vmem:[%s178 + $0x14c] sm:$0xf]
        %v312 = vld [vmem:[%s178 + $0x150] sm:$0xf]
        %v313 = vld [vmem:[%s178 + $0x154] sm:$0xf]
        %v314 = vld [vmem:[%s178 + $0x158] sm:$0xf]
        %v315 = vld [vmem:[%s178 + $0x15c] sm:$0xf]
        %v316 = vld [vmem:[%s178 + $0x160] sm:$0xf]
        %v317 = vld [vmem:[%s178 + $0x164] sm:$0xf]
        %v318 = vld [vmem:[%s178 + $0x168] sm:$0xf]
        %v319 = vld [vmem:[%s178 + $0x16c] sm:$0xf]
        %v320 = vld [vmem:[%s178 + $0x170] sm:$0xf]
        %v321 = vld [vmem:[%s178 + $0x174] sm:$0xf]
        %v322 = vld [vmem:[%s178 + $0x178] sm:$0xf]
        %v323 = vld [vmem:[%s178 + $0x17c] sm:$0xf]
        %v324 = vld [vmem:[%s178 + $0x180] sm:$0xf]
        %v325 = vld [vmem:[%s178 + $0x184] sm:$0xf]
        %v326 = vld [vmem:[%s178 + $0x188] sm:$0xf]
        %v327 = vld [vmem:[%s178 + $0x18c] sm:$0xf]
        %v328 = vld [vmem:[%s178 + $0x190] sm:$0xf]
        %v329 = vld [vmem:[%s178 + $0x194] sm:$0xf]
        %v330 = vld [vmem:[%s178 + $0x198] sm:$0xf]
        %v331 = vld [vmem:[%s178 + $0x19c] sm:$0xf]
        %v332 = vld [vmem:[%s178 + $0x1a0] sm:$0xf]
        %v333 = vld [vmem:[%s178 + $0x1a4] sm:$0xf]
        %v334 = vld [vmem:[%s178 + $0x1a8] sm:$0xf]
        %v335 = vld [vmem:[%s178 + $0x1ac] sm:$0xf]
        %v336 = vld [vmem:[%s178 + $0x1b0] sm:$0xf]
        %v337 = vld [vmem:[%s178 + $0x1b4] sm:$0xf]
        %v338 = vld [vmem:[%s178 + $0x1b8] sm:$0xf]
        %v339 = vld [vmem:[%s178 + $0x1bc] sm:$0xf]
        %v340 = vld [vmem:[%s178 + $0x1c0] sm:$0xf]
        %v341 = vld [vmem:[%s178 + $0x1c4] sm:$0xf]
        %v342 = vld [vmem:[%s178 + $0x1c8] sm:$0xf]
        %v343 = vld [vmem:[%s178 + $0x1cc] sm:$0xf]
        %v344 = vld [vmem:[%s178 + $0x1d0] sm:$0xf]
        %v345 = vld [vmem:[%s178 + $0x1d4] sm:$0xf]
        %v346 = vld [vmem:[%s178 + $0x1d8] sm:$0xf]
        %v347 = vld [vmem:[%s178 + $0x1dc] sm:$0xf]
        %v348 = vld [vmem:[%s178 + $0x1e0] sm:$0xf]
        %v349 = vld [vmem:[%s178 + $0x1e4] sm:$0xf]
        %v350 = vld [vmem:[%s178 + $0x1e8] sm:$0xf]
        %v351 = vld [vmem:[%s178 + $0x1ec] sm:$0xf]
        %v352 = vld [vmem:[%s178 + $0x1f0] sm:$0xf]
        %v353 = vld [vmem:[%s178 + $0x1f4] sm:$0xf]
        %v354 = vld [vmem:[%s178 + $0x1f8] sm:$0xf]
        %v355 = vld [vmem:[%s178 + $0x1fc] sm:$0xf]
        %v356 = vld [vmem:[%s178 + $0x200] sm:$0xf]
        %v357 = vld [vmem:[%s178 + $0x204] sm:$0xf]
        %v358 = vld [vmem:[%s178 + $0x208] sm:$0xf]
        %v359 = vld [vmem:[%s178 + $0x20c] sm:$0xf]
        %v360 = vld [vmem:[%s178 + $0x210] sm:$0xf]
        %v361 = vld [vmem:[%s178 + $0x214] sm:$0xf]
        %v362 = vld [vmem:[%s178 + $0x218] sm:$0xf]
        %v363 = vld [vmem:[%s178 + $0x21c] sm:$0xf]
        %v364 = vld [vmem:[%s178 + $0x220] sm:$0xf]
        %v365 = vld [vmem:[%s178 + $0x224] sm:$0xf]
        %v366 = vld [vmem:[%s178 + $0x228] sm:$0xf]
        %v367 = vld [vmem:[%s178 + $0x22c] sm:$0xf]
        %v368 = vld [vmem:[%s178 + $0x230] sm:$0xf]
        %v369 = vld [vmem:[%s178 + $0x234] sm:$0xf]
        %v370 = vld [vmem:[%s178 + $0x238] sm:$0xf]
        %v371 = vld [vmem:[%s178 + $0x23c] sm:$0xf]
        %v372 = vld [vmem:[%s178 + $0x240] sm:$0xf]
        %v373 = vld [vmem:[%s178 + $0x244] sm:$0xf]
        %v374 = vld [vmem:[%s178 + $0x248] sm:$0xf]
        %v375 = vld [vmem:[%s178 + $0x24c] sm:$0xf]
        %v376 = vld [vmem:[%s178 + $0x250] sm:$0xf]
        %v377 = vld [vmem:[%s178 + $0x254] sm:$0xf]
        %v378 = vld [vmem:[%s178 + $0x258] sm:$0xf]
        %v379 = vld [vmem:[%s178 + $0x25c] sm:$0xf]
        %v380 = vld [vmem:[%s178 + $0x260] sm:$0xf]
        %v381 = vld [vmem:[%s178 + $0x264] sm:$0xf]
        %v382 = vld [vmem:[%s178 + $0x268] sm:$0xf]
        %v383 = vld [vmem:[%s178 + $0x26c] sm:$0xf]
        %v384 = vld [vmem:[%s178 + $0x270] sm:$0xf]
        %v385 = vld [vmem:[%s178 + $0x274] sm:$0xf]
        %v386 = vld [vmem:[%s178 + $0x278] sm:$0xf]
        %v387 = vld [vmem:[%s178 + $0x27c] sm:$0xf]
        %v388 = vld [vmem:[%s178 + $0x280] sm:$0xf]
        %v389 = vld [vmem:[%s178 + $0x284] sm:$0xf]
        %v390 = vld [vmem:[%s178 + $0x288] sm:$0xf]
        %v391 = vld [vmem:[%s178 + $0x28c] sm:$0xf]
        %v392 = vld [vmem:[%s178 + $0x290] sm:$0xf]
        %v393 = vld [vmem:[%s178 + $0x294] sm:$0xf]
        %v394 = vld [vmem:[%s178 + $0x298] sm:$0xf]
        %v395 = vld [vmem:[%s178 + $0x29c] sm:$0xf]
        %v396 = vld [vmem:[%s178 + $0x2a0] sm:$0xf]
        %v397 = vld [vmem:[%s178 + $0x2a4] sm:$0xf]
        %v398 = vld [vmem:[%s178 + $0x2a8] sm:$0xf]
        %v399 = vld [vmem:[%s178 + $0x2ac] sm:$0xf]
        %v400 = vld [vmem:[%s178 + $0x2b0] sm:$0xf]
        %v401 = vld [vmem:[%s178 + $0x2b4] sm:$0xf]
        %v402 = vld [vmem:[%s178 + $0x2b8] sm:$0xf]
        %v403 = vld [vmem:[%s178 + $0x2bc] sm:$0xf]
        %v404 = vld [vmem:[%s178 + $0x2c0] sm:$0xf]
        %v405 = vld [vmem:[%s178 + $0x2c4] sm:$0xf]
        %v406 = vld [vmem:[%s178 + $0x2c8] sm:$0xf]
        %v407 = vld [vmem:[%s178 + $0x2cc] sm:$0xf]
        %v408 = vld [vmem:[%s178 + $0x2d0] sm:$0xf]
        %v409 = vld [vmem:[%s178 + $0x2d4] sm:$0xf]
        %v410 = vld [vmem:[%s178 + $0x2d8] sm:$0xf]
        %v411 = vld [vmem:[%s178 + $0x2dc] sm:$0xf]
        %v412 = vld [vmem:[%s178 + $0x2e0] sm:$0xf]
        %v413 = vld [vmem:[%s178 + $0x2e4] sm:$0xf]
        %v414 = vld [vmem:[%s178 + $0x2e8] sm:$0xf]
        %v415 = vld [vmem:[%s178 + $0x2ec] sm:$0xf]
        %v416 = vld [vmem:[%s178 + $0x2f0] sm:$0xf]
        %v417 = vld [vmem:[%s178 + $0x2f4] sm:$0xf]
        %v418 = vld [vmem:[%s178 + $0x2f8] sm:$0xf]
        %v419 = vld [vmem:[%s178 + $0x2fc] sm:$0xf]
        %v420 = vld [vmem:[%s178 + $0x300] sm:$0xf]
        %v421 = vld [vmem:[%s178 + $0x304] sm:$0xf]
        %v422 = vld [vmem:[%s178 + $0x308] sm:$0xf]
        %v423 = vld [vmem:[%s178 + $0x30c] sm:$0xf]
        %v424 = vld [vmem:[%s178 + $0x310] sm:$0xf]
        %v425 = vld [vmem:[%s178 + $0x314] sm:$0xf]
        %v426 = vld [vmem:[%s178 + $0x318] sm:$0xf]
        %v427 = vld [vmem:[%s178 + $0x31c] sm:$0xf]
        %v428 = vld [vmem:[%s178 + $0x320] sm:$0xf]
        %v429 = vld [vmem:[%s178 + $0x324] sm:$0xf]
        %v430 = vld [vmem:[%s178 + $0x328] sm:$0xf]
        %v431 = vld [vmem:[%s178 + $0x32c] sm:$0xf]
        %v432 = vld [vmem:[%s178 + $0x330] sm:$0xf]
        %v433 = vld [vmem:[%s178 + $0x334] sm:$0xf]
        %v434 = vld [vmem:[%s178 + $0x338] sm:$0xf]
        %v435 = vld [vmem:[%s178 + $0x33c] sm:$0xf]
        %v436 = vld [vmem:[%s178 + $0x340] sm:$0xf]
        %v437 = vld [vmem:[%s178 + $0x344] sm:$0xf]
        %v438 = vld [vmem:[%s178 + $0x348] sm:$0xf]
        %v439 = vld [vmem:[%s178 + $0x34c] sm:$0xf]
        %v440 = vld [vmem:[%s178 + $0x350] sm:$0xf]
        %v441 = vld [vmem:[%s178 + $0x354] sm:$0xf]
        %v442 = vld [vmem:[%s178 + $0x358] sm:$0xf]
        %v443 = vld [vmem:[%s178 + $0x35c] sm:$0xf]
        %v444 = vld [vmem:[%s178 + $0x360] sm:$0xf]
        %v445 = vld [vmem:[%s178 + $0x364] sm:$0xf]
        %v446 = vld [vmem:[%s178 + $0x368] sm:$0xf]
        %v447 = vld [vmem:[%s178 + $0x36c] sm:$0xf]
        %v448 = vld [vmem:[%s178 + $0x370] sm:$0xf]
        %v449 = vld [vmem:[%s178 + $0x374] sm:$0xf]
        %v450 = vld [vmem:[%s178 + $0x378] sm:$0xf]
        %v451 = vld [vmem:[%s178 + $0x37c] sm:$0xf]
        %v452 = vld [vmem:[%s178 + $0x380] sm:$0xf]
        %v453 = vld [vmem:[%s178 + $0x384] sm:$0xf]
        %v454 = vld [vmem:[%s178 + $0x388] sm:$0xf]
        %v455 = vld [vmem:[%s178 + $0x38c] sm:$0xf]
        %v456 = vld [vmem:[%s178 + $0x390] sm:$0xf]
        %v457 = vld [vmem:[%s178 + $0x394] sm:$0xf]
        %v458 = vld [vmem:[%s178 + $0x398] sm:$0xf]
        %v459 = vld [vmem:[%s178 + $0x39c] sm:$0xf]
        %v460 = vld [vmem:[%s178 + $0x3a0] sm:$0xf]
        %v461 = vld [vmem:[%s178 + $0x3a4] sm:$0xf]
        %v462 = vld [vmem:[%s178 + $0x3a8] sm:$0xf]
        %v463 = vld [vmem:[%s178 + $0x3ac] sm:$0xf]
        %v464 = vld [vmem:[%s178 + $0x3b0] sm:$0xf]
        %v465 = vld [vmem:[%s178 + $0x3b4] sm:$0xf]
        %v466 = vld [vmem:[%s178 + $0x3b8] sm:$0xf]
        %v467 = vld [vmem:[%s178 + $0x3bc] sm:$0xf]
        %v468 = vld [vmem:[%s178 + $0x3c0] sm:$0xf]
        %v469 = vld [vmem:[%s178 + $0x3c4] sm:$0xf]
        %v470 = vld [vmem:[%s178 + $0x3c8] sm:$0xf]
        %v471 = vld [vmem:[%s178 + $0x3cc] sm:$0xf]
        %v472 = vld [vmem:[%s178 + $0x3d0] sm:$0xf]
        %v473 = vld [vmem:[%s178 + $0x3d4] sm:$0xf]
        %v474 = vld [vmem:[%s178 + $0x3d8] sm:$0xf]
        %v475 = vld [vmem:[%s178 + $0x3dc] sm:$0xf]
        %v476 = vld [vmem:[%s178 + $0x3e0] sm:$0xf]
        %v477 = vld [vmem:[%s178 + $0x3e4] sm:$0xf]
        %v478 = vld [vmem:[%s178 + $0x3e8] sm:$0xf]
        %v479 = vld [vmem:[%s178 + $0x3ec] sm:$0xf]
        %v480 = vld [vmem:[%s178 + $0x3f0] sm:$0xf]
        %v481 = vld [vmem:[%s178 + $0x3f4] sm:$0xf]
        %v482 = vld [vmem:[%s178 + $0x3f8] sm:$0xf]
        %v483 = vld [vmem:[%s178 + $0x3fc] sm:$0xf]
        %v484 = vld [vmem:[%s178 + $0x400] sm:$0xf]
        %v485 = vld [vmem:[%s178 + $0x404] sm:$0xf]
        %v486 = vld [vmem:[%s178 + $0x408] sm:$0xf]
        %v487 = vld [vmem:[%s178 + $0x40c] sm:$0xf]
        %v488 = vld [vmem:[%s178 + $0x410] sm:$0xf]
        %v489 = vld [vmem:[%s178 + $0x414] sm:$0xf]
        %v490 = vld [vmem:[%s178 + $0x418] sm:$0xf]
        %v491 = vld [vmem:[%s178 + $0x41c] sm:$0xf]
        %v492 = vld [vmem:[%s178 + $0x420] sm:$0xf]
        %v493 = vld [vmem:[%s178 + $0x424] sm:$0xf]
        %v494 = vld [vmem:[%s178 + $0x428] sm:$0xf]
        %v495 = vld [vmem:[%s178 + $0x42c] sm:$0xf]
        %v496 = vld [vmem:[%s178 + $0x430] sm:$0xf]
        %v497 = vld [vmem:[%s178 + $0x434] sm:$0xf]
        %v498 = vld [vmem:[%s178 + $0x438] sm:$0xf]
        %v499 = vld [vmem:[%s178 + $0x43c] sm:$0xf]
        %v500 = vld [vmem:[%s178 + $0x440] sm:$0xf]
        %v501 = vld [vmem:[%s178 + $0x444] sm:$0xf]
        %v502 = vld [vmem:[%s178 + $0x448] sm:$0xf]
        %v503 = vld [vmem:[%s178 + $0x44c] sm:$0xf]
        %v504 = vld [vmem:[%s178 + $0x450] sm:$0xf]
        %v505 = vld [vmem:[%s178 + $0x454] sm:$0xf]
        %v506 = vld [vmem:[%s178 + $0x458] sm:$0xf]
        %v507 = vld [vmem:[%s178 + $0x45c] sm:$0xf]
        %v508 = vld [vmem:[%s178 + $0x460] sm:$0xf]
        %v509 = vld [vmem:[%s178 + $0x464] sm:$0xf]
        %v510 = vld [vmem:[%s178 + $0x468] sm:$0xf]
        %v511 = vld [vmem:[%s178 + $0x46c] sm:$0xf]
        %v512 = vld [vmem:[%s178 + $0x470] sm:$0xf]
        %v513 = vld [vmem:[%s178 + $0x474] sm:$0xf]
        %v514 = vld [vmem:[%s178 + $0x478] sm:$0xf]
        %v515 = vld [vmem:[%s178 + $0x47c] sm:$0xf]
        %v516 = vld [vmem:[%s178 + $0x480] sm:$0xf]
        %v517 = vld [vmem:[%s178 + $0x484] sm:$0xf]
        %v518 = vld [vmem:[%s178 + $0x488] sm:$0xf]
        %v519 = vld [vmem:[%s178 + $0x48c] sm:$0xf]
        %v520 = vld [vmem:[%s178 + $0x490] sm:$0xf]
        %v521 = vld [vmem:[%s178 + $0x494] sm:$0xf]
        %v522 = vld [vmem:[%s178 + $0x498] sm:$0xf]
        %v523 = vld [vmem:[%s178 + $0x49c] sm:$0xf]
        %v524 = vld [vmem:[%s178 + $0x4a0] sm:$0xf]
        %v525 = vld [vmem:[%s178 + $0x4a4] sm:$0xf]
        %v526 = vld [vmem:[%s178 + $0x4a8] sm:$0xf]
        %v527 = vld [vmem:[%s178 + $0x4ac] sm:$0xf]
        %v528 = vld [vmem:[%s178 + $0x4b0] sm:$0xf]
        %v529 = vld [vmem:[%s178 + $0x4b4] sm:$0xf]
        %v530 = vld [vmem:[%s178 + $0x4b8] sm:$0xf]
        %v531 = vld [vmem:[%s178 + $0x4bc] sm:$0xf]
        %v532 = vld [vmem:[%s178 + $0x4c0] sm:$0xf]
        %v533 = vld [vmem:[%s178 + $0x4c4] sm:$0xf]
        %v534 = vld [vmem:[%s178 + $0x4c8] sm:$0xf]
        %v535 = vld [vmem:[%s178 + $0x4cc] sm:$0xf]
        %v536 = vld [vmem:[%s178 + $0x4d0] sm:$0xf]
        %v537 = vld [vmem:[%s178 + $0x4d4] sm:$0xf]
        %v538 = vld [vmem:[%s178 + $0x4d8] sm:$0xf]
        %v539 = vld [vmem:[%s178 + $0x4dc] sm:$0xf]
        %v540 = vld [vmem:[%s178 + $0x4e0] sm:$0xf]
        %v541 = vld [vmem:[%s178 + $0x4e4] sm:$0xf]
        %v542 = vld [vmem:[%s178 + $0x4e8] sm:$0xf]
        %v543 = vld [vmem:[%s178 + $0x4ec] sm:$0xf]
        %v544 = vld [vmem:[%s178 + $0x4f0] sm:$0xf]
        %v545 = vld [vmem:[%s178 + $0x4f4] sm:$0xf]
        %v546 = vld [vmem:[%s178 + $0x4f8] sm:$0xf]
        %v547 = vld [vmem:[%s178 + $0x4fc] sm:$0xf]
        %v548 = vld [vmem:[%s178 + $0x500] sm:$0xf]
        %v549 = vld [vmem:[%s178 + $0x504] sm:$0xf]
        %v550 = vld [vmem:[%s178 + $0x508] sm:$0xf]
        %v551 = vld [vmem:[%s178 + $0x50c] sm:$0xf]
        %v552 = vld [vmem:[%s178 + $0x510] sm:$0xf]
        %v553 = vld [vmem:[%s178 + $0x514] sm:$0xf]
        %v554 = vld [vmem:[%s178 + $0x518] sm:$0xf]
        %v555 = vld [vmem:[%s178 + $0x51c] sm:$0xf]
        %v556 = vld [vmem:[%s178 + $0x520] sm:$0xf]
        %v557 = vld [vmem:[%s178 + $0x524] sm:$0xf]
        %v558 = vld [vmem:[%s178 + $0x528] sm:$0xf]
        %v559 = vld [vmem:[%s178 + $0x52c] sm:$0xf]
        %v560 = vld [vmem:[%s178 + $0x530] sm:$0xf]
        %v561 = vld [vmem:[%s178 + $0x534] sm:$0xf]
        %v562 = vld [vmem:[%s178 + $0x538] sm:$0xf]
        %v563 = vld [vmem:[%s178 + $0x53c] sm:$0xf]
        %v564 = vld [vmem:[%s178 + $0x540] sm:$0xf]
        %v565 = vld [vmem:[%s178 + $0x544] sm:$0xf]
        %v566 = vld [vmem:[%s178 + $0x548] sm:$0xf]
        %v567 = vld [vmem:[%s178 + $0x54c] sm:$0xf]
        %v568 = vld [vmem:[%s178 + $0x550] sm:$0xf]
        %v569 = vld [vmem:[%s178 + $0x554] sm:$0xf]
        %v570 = vld [vmem:[%s178 + $0x558] sm:$0xf]
        %v571 = vld [vmem:[%s178 + $0x55c] sm:$0xf]
        %v572 = vld [vmem:[%s178 + $0x560] sm:$0xf]
        %v573 = vld [vmem:[%s178 + $0x564] sm:$0xf]
        %v574 = vld [vmem:[%s178 + $0x568] sm:$0xf]
        %v575 = vld [vmem:[%s178 + $0x56c] sm:$0xf]
        %v576 = vld [vmem:[%s178 + $0x570] sm:$0xf]
        %v577 = vld [vmem:[%s178 + $0x574] sm:$0xf]
        %v578 = vld [vmem:[%s178 + $0x578] sm:$0xf]
        %v579 = vld [vmem:[%s178 + $0x57c] sm:$0xf]
        %v580 = vld [vmem:[%s178 + $0x580] sm:$0xf]
        %v581 = vld [vmem:[%s178 + $0x584] sm:$0xf]
        %v582 = vld [vmem:[%s178 + $0x588] sm:$0xf]
        %v583 = vld [vmem:[%s178 + $0x58c] sm:$0xf]
        %v584 = vld [vmem:[%s178 + $0x590] sm:$0xf]
        %v585 = vld [vmem:[%s178 + $0x594] sm:$0xf]
        %v586 = vld [vmem:[%s178 + $0x598] sm:$0xf]
        %v587 = vld [vmem:[%s178 + $0x59c] sm:$0xf]
        %v588 = vld [vmem:[%s178 + $0x5a0] sm:$0xf]
        %v589 = vld [vmem:[%s178 + $0x5a4] sm:$0xf]
        %v590 = vld [vmem:[%s178 + $0x5a8] sm:$0xf]
        %v591 = vld [vmem:[%s178 + $0x5ac] sm:$0xf]
        %v592 = vld [vmem:[%s178 + $0x5b0] sm:$0xf]
        %v593 = vld [vmem:[%s178 + $0x5b4] sm:$0xf]
        %v594 = vld [vmem:[%s178 + $0x5b8] sm:$0xf]
        %v595 = vld [vmem:[%s178 + $0x5bc] sm:$0xf]
        %v596 = vld [vmem:[%s178 + $0x5c0] sm:$0xf]
        %v597 = vld [vmem:[%s178 + $0x5c4] sm:$0xf]
        %v598 = vld [vmem:[%s178 + $0x5c8] sm:$0xf]
        %v599 = vld [vmem:[%s178 + $0x5cc] sm:$0xf]
        %v600 = vld [vmem:[%s178 + $0x5d0] sm:$0xf]
        %v601 = vld [vmem:[%s178 + $0x5d4] sm:$0xf]
        %v602 = vld [vmem:[%s178 + $0x5d8] sm:$0xf]
        %v603 = vld [vmem:[%s178 + $0x5dc] sm:$0xf]
        %v604 = vld [vmem:[%s178 + $0x5e0] sm:$0xf]
        %v605 = vld [vmem:[%s178 + $0x5e4] sm:$0xf]
        %v606 = vld [vmem:[%s178 + $0x5e8] sm:$0xf]
        %v607 = vld [vmem:[%s178 + $0x5ec] sm:$0xf]
        %v608 = vld [vmem:[%s178 + $0x5f0] sm:$0xf]
        %v609 = vld [vmem:[%s178 + $0x5f4] sm:$0xf]
        %v610 = vld [vmem:[%s178 + $0x5f8] sm:$0xf]
        %v611 = vld [vmem:[%s178 + $0x5fc] sm:$0xf]
        %v612 = vld [vmem:[%s178 + $0x600] sm:$0xf]
        %v613 = vld [vmem:[%s178 + $0x604] sm:$0xf]
        %v614 = vld [vmem:[%s178 + $0x608] sm:$0xf]
        %v615 = vld [vmem:[%s178 + $0x60c] sm:$0xf]
        %v616 = vld [vmem:[%s178 + $0x610] sm:$0xf]
        %v617 = vld [vmem:[%s178 + $0x614] sm:$0xf]
        %v618 = vld [vmem:[%s178 + $0x618] sm:$0xf]
        %v619 = vld [vmem:[%s178 + $0x61c] sm:$0xf]
        %v620 = vld [vmem:[%s178 + $0x620] sm:$0xf]
        %v621 = vld [vmem:[%s178 + $0x624] sm:$0xf]
        %v622 = vld [vmem:[%s178 + $0x628] sm:$0xf]
        %v623 = vld [vmem:[%s178 + $0x62c] sm:$0xf]
        %v624 = vld [vmem:[%s178 + $0x630] sm:$0xf]
        %v625 = vld [vmem:[%s178 + $0x634] sm:$0xf]
        %v626 = vld [vmem:[%s178 + $0x638] sm:$0xf]
        %v627 = vld [vmem:[%s178 + $0x63c] sm:$0xf]
        %v628 = vld [vmem:[%s178 + $0x640] sm:$0xf]
        %v629 = vld [vmem:[%s178 + $0x644] sm:$0xf]
        %v630 = vld [vmem:[%s178 + $0x648] sm:$0xf]
        %v631 = vld [vmem:[%s178 + $0x64c] sm:$0xf]
        %v632 = vld [vmem:[%s178 + $0x650] sm:$0xf]
        %v633 = vld [vmem:[%s178 + $0x654] sm:$0xf]
        %v634 = vld [vmem:[%s178 + $0x658] sm:$0xf]
        %v635 = vld [vmem:[%s178 + $0x65c] sm:$0xf]
        %v636 = vld [vmem:[%s178 + $0x660] sm:$0xf]
        %v637 = vld [vmem:[%s178 + $0x664] sm:$0xf]
        %v638 = vld [vmem:[%s178 + $0x668] sm:$0xf]
        %v639 = vld [vmem:[%s178 + $0x66c] sm:$0xf]
        %v640 = vld [vmem:[%s178 + $0x670] sm:$0xf]
        %v641 = vld [vmem:[%s178 + $0x674] sm:$0xf]
        %v642 = vld [vmem:[%s178 + $0x678] sm:$0xf]
        %v643 = vld [vmem:[%s178 + $0x67c] sm:$0xf]
        %v644 = vld [vmem:[%s178 + $0x680] sm:$0xf]
        %v645 = vld [vmem:[%s178 + $0x684] sm:$0xf]
        %v646 = vld [vmem:[%s178 + $0x688] sm:$0xf]
        %v647 = vld [vmem:[%s178 + $0x68c] sm:$0xf]
        %v648 = vld [vmem:[%s178 + $0x690] sm:$0xf]
        %v649 = vld [vmem:[%s178 + $0x694] sm:$0xf]
        %v650 = vld [vmem:[%s178 + $0x698] sm:$0xf]
        %v651 = vld [vmem:[%s178 + $0x69c] sm:$0xf]
        %v652 = vld [vmem:[%s178 + $0x6a0] sm:$0xf]
        %v653 = vld [vmem:[%s178 + $0x6a4] sm:$0xf]
        %v654 = vld [vmem:[%s178 + $0x6a8] sm:$0xf]
        %v655 = vld [vmem:[%s178 + $0x6ac] sm:$0xf]
        %v656 = vld [vmem:[%s178 + $0x6b0] sm:$0xf]
        %v657 = vld [vmem:[%s178 + $0x6b4] sm:$0xf]
        %v658 = vld [vmem:[%s178 + $0x6b8] sm:$0xf]
        %v659 = vld [vmem:[%s178 + $0x6bc] sm:$0xf]
        %v660 = vld [vmem:[%s178 + $0x6c0] sm:$0xf]
        %v661 = vld [vmem:[%s178 + $0x6c4] sm:$0xf]
        %v662 = vld [vmem:[%s178 + $0x6c8] sm:$0xf]
        %v663 = vld [vmem:[%s178 + $0x6cc] sm:$0xf]
        %v664 = vld [vmem:[%s178 + $0x6d0] sm:$0xf]
        %v665 = vld [vmem:[%s178 + $0x6d4] sm:$0xf]
        %v666 = vld [vmem:[%s178 + $0x6d8] sm:$0xf]
        %v667 = vld [vmem:[%s178 + $0x6dc] sm:$0xf]
        %v668 = vld [vmem:[%s178 + $0x6e0] sm:$0xf]
        %v669 = vld [vmem:[%s178 + $0x6e4] sm:$0xf]
        %v670 = vld [vmem:[%s178 + $0x6e8] sm:$0xf]
        %v671 = vld [vmem:[%s178 + $0x6ec] sm:$0xf]
        %v672 = vld [vmem:[%s178 + $0x6f0] sm:$0xf]
        %v673 = vld [vmem:[%s178 + $0x6f4] sm:$0xf]
        %v674 = vld [vmem:[%s178 + $0x6f8] sm:$0xf]
        %v675 = vld [vmem:[%s178 + $0x6fc] sm:$0xf]
        %v676 = vld [vmem:[%s178 + $0x700] sm:$0xf]
        %v677 = vld [vmem:[%s178 + $0x704] sm:$0xf]
        %v678 = vld [vmem:[%s178 + $0x708] sm:$0xf]
        %v679 = vld [vmem:[%s178 + $0x70c] sm:$0xf]
        %v680 = vld [vmem:[%s178 + $0x710] sm:$0xf]
        %v681 = vld [vmem:[%s178 + $0x714] sm:$0xf]
        %v682 = vld [vmem:[%s178 + $0x718] sm:$0xf]
        %v683 = vld [vmem:[%s178 + $0x71c] sm:$0xf]
        %v684 = vld [vmem:[%s178 + $0x720] sm:$0xf]
        %v685 = vld [vmem:[%s178 + $0x724] sm:$0xf]
        %v686 = vld [vmem:[%s178 + $0x728] sm:$0xf]
        %v687 = vld [vmem:[%s178 + $0x72c] sm:$0xf]
        %v688 = vld [vmem:[%s178 + $0x730] sm:$0xf]
        %v689 = vld [vmem:[%s178 + $0x734] sm:$0xf]
        %v690 = vld [vmem:[%s178 + $0x738] sm:$0xf]
        %v691 = vld [vmem:[%s178 + $0x73c] sm:$0xf]
        %v692 = vld [vmem:[%s178 + $0x740] sm:$0xf]
        %v693 = vld [vmem:[%s178 + $0x744] sm:$0xf]
        %v694 = vld [vmem:[%s178 + $0x748] sm:$0xf]
        %v695 = vld [vmem:[%s178 + $0x74c] sm:$0xf]
        %v696 = vld [vmem:[%s178 + $0x750] sm:$0xf]
        %v697 = vld [vmem:[%s178 + $0x754] sm:$0xf]
        %v698 = vld [vmem:[%s178 + $0x758] sm:$0xf]
        %v699 = vld [vmem:[%s178 + $0x75c] sm:$0xf]
        %v700 = vld [vmem:[%s178 + $0x760] sm:$0xf]
        %v701 = vld [vmem:[%s178 + $0x764] sm:$0xf]
        %v702 = vld [vmem:[%s178 + $0x768] sm:$0xf]
        %v703 = vld [vmem:[%s178 + $0x76c] sm:$0xf]
        %v704 = vld [vmem:[%s178 + $0x770] sm:$0xf]
        %v705 = vld [vmem:[%s178 + $0x774] sm:$0xf]
        %v706 = vld [vmem:[%s178 + $0x778] sm:$0xf]
        %v707 = vld [vmem:[%s178 + $0x77c] sm:$0xf]
        %v708 = vld [vmem:[%s178 + $0x780] sm:$0xf]
        %v709 = vld [vmem:[%s178 + $0x784] sm:$0xf]
        %v710 = vld [vmem:[%s178 + $0x788] sm:$0xf]
        %v711 = vld [vmem:[%s178 + $0x78c] sm:$0xf]
        %v712 = vld [vmem:[%s178 + $0x790] sm:$0xf]
        %v713 = vld [vmem:[%s178 + $0x794] sm:$0xf]
        %v714 = vld [vmem:[%s178 + $0x798] sm:$0xf]
        %v715 = vld [vmem:[%s178 + $0x79c] sm:$0xf]
        %v716 = vld [vmem:[%s178 + $0x7a0] sm:$0xf]
        %v717 = vld [vmem:[%s178 + $0x7a4] sm:$0xf]
        %v718 = vld [vmem:[%s178 + $0x7a8] sm:$0xf]
        %v719 = vld [vmem:[%s178 + $0x7ac] sm:$0xf]
        %v720 = vld [vmem:[%s178 + $0x7b0] sm:$0xf]
        %v721 = vld [vmem:[%s178 + $0x7b4] sm:$0xf]
        %v722 = vld [vmem:[%s178 + $0x7b8] sm:$0xf]
        %v723 = vld [vmem:[%s178 + $0x7bc] sm:$0xf]
        %v724 = vld [vmem:[%s178 + $0x7c0] sm:$0xf]
        %v725 = vld [vmem:[%s178 + $0x7c4] sm:$0xf]
        %v726 = vld [vmem:[%s178 + $0x7c8] sm:$0xf]
        %v727 = vld [vmem:[%s178 + $0x7cc] sm:$0xf]
        %v728 = vld [vmem:[%s178 + $0x7d0] sm:$0xf]
        %v729 = vld [vmem:[%s178 + $0x7d4] sm:$0xf]
        %v730 = vld [vmem:[%s178 + $0x7d8] sm:$0xf]
        %v731 = vld [vmem:[%s178 + $0x7dc] sm:$0xf]
        %v732 = vld [vmem:[%s178 + $0x7e0] sm:$0xf]
        %v733 = vld [vmem:[%s178 + $0x7e4] sm:$0xf]
        %v734 = vld [vmem:[%s178 + $0x7e8] sm:$0xf]
        %v735 = vld [vmem:[%s178 + $0x7ec] sm:$0xf]
        %v736 = vld [vmem:[%s178 + $0x7f0] sm:$0xf]
        %v737 = vld [vmem:[%s178 + $0x7f4] sm:$0xf]
        %v738 = vld [vmem:[%s178 + $0x7f8] sm:$0xf]
        %v739 = vld [vmem:[%s178 + $0x7fc] sm:$0xf]
        %v744 = vcombine.high %v224, %v224
        %v746 = vunpack.c.l.s4 1966171168
        %v747 = vunpack.c.0.s8 %v746
        %v748 = vlaneseq
        %v749 = vshrl.u32 %v748, 7
        %v750 = vsub.s32 %v747, %v749
        %v751 = vrot.slane %v224, %v750
        %v753 = vunpack.c.l.s4 1966171168
        %v754 = vunpack.c.0.s8 %v753
        %v755 = vlaneseq
        %v756 = vshrl.u32 %v755, 7
        %v757 = vsub.s32 %v754, %v756
        %v758 = vrot.slane %v744, %v757
        %v759 = vcombine.high %v751, %v751
        %v760 = vcombine.high %v758, %v758
        %v762 = vunpack.c.l.s4 1966171168
        %v763 = vunpack.c.0.s8 %v762
        %v764 = vlaneseq
        %v765 = vshrl.u32 %v764, 7
        %v766 = vsub.s32 %v763, %v765
        %v767 = vrot.slane %v751, %v766
        %v769 = vunpack.c.l.s4 1966171168
        %v770 = vunpack.c.0.s8 %v769
        %v771 = vlaneseq
        %v772 = vshrl.u32 %v771, 7
        %v773 = vsub.s32 %v770, %v772
        %v774 = vrot.slane %v758, %v773
        %v776 = vunpack.c.l.s4 1966171168
        %v777 = vunpack.c.0.s8 %v776
        %v778 = vlaneseq
        %v779 = vshrl.u32 %v778, 7
        %v780 = vsub.s32 %v777, %v779
        %v781 = vrot.slane %v759, %v780
        %v783 = vunpack.c.l.s4 1966171168
        %v784 = vunpack.c.0.s8 %v783
        %v785 = vlaneseq
        %v786 = vshrl.u32 %v785, 7
        %v787 = vsub.s32 %v784, %v786
        %v788 = vrot.slane %v760, %v787
        %v789 = vcombine.high %v767, %v767
        %v790 = vcombine.high %v774, %v774
        %v791 = vcombine.high %v781, %v781
        %v792 = vcombine.high %v788, %v788
        %v793 = vcombine.high %v225, %v225
        %v795 = vunpack.c.l.s4 1966171168
        %v796 = vunpack.c.0.s8 %v795
        %v797 = vlaneseq
        %v798 = vshrl.u32 %v797, 7
        %v799 = vsub.s32 %v796, %v798
        %v800 = vrot.slane %v225, %v799
        %v802 = vunpack.c.l.s4 1966171168
        %v803 = vunpack.c.0.s8 %v802
        %v804 = vlaneseq
        %v805 = vshrl.u32 %v804, 7
        %v806 = vsub.s32 %v803, %v805
        %v807 = vrot.slane %v793, %v806
        %v808 = vcombine.high %v800, %v800
        %v809 = vcombine.high %v807, %v807
        %v811 = vunpack.c.l.s4 1966171168
        %v812 = vunpack.c.0.s8 %v811
        %v813 = vlaneseq
        %v814 = vshrl.u32 %v813, 7
        %v815 = vsub.s32 %v812, %v814
        %v816 = vrot.slane %v800, %v815
        %v818 = vunpack.c.l.s4 1966171168
        %v819 = vunpack.c.0.s8 %v818
        %v820 = vlaneseq
        %v821 = vshrl.u32 %v820, 7
        %v822 = vsub.s32 %v819, %v821
        %v823 = vrot.slane %v807, %v822
        %v825 = vunpack.c.l.s4 1966171168
        %v826 = vunpack.c.0.s8 %v825
        %v827 = vlaneseq
        %v828 = vshrl.u32 %v827, 7
        %v829 = vsub.s32 %v826, %v828
        %v830 = vrot.slane %v808, %v829
        %v832 = vunpack.c.l.s4 1966171168
        %v833 = vunpack.c.0.s8 %v832
        %v834 = vlaneseq
        %v835 = vshrl.u32 %v834, 7
        %v836 = vsub.s32 %v833, %v835
        %v837 = vrot.slane %v809, %v836
        %v838 = vcombine.high %v816, %v816
        %v839 = vcombine.high %v823, %v823
        %v840 = vcombine.high %v830, %v830
        %v841 = vcombine.high %v837, %v837
        %v842 = vcombine.high %v226, %v226
        %v844 = vunpack.c.l.s4 1966171168
        %v845 = vunpack.c.0.s8 %v844
        %v846 = vlaneseq
        %v847 = vshrl.u32 %v846, 7
        %v848 = vsub.s32 %v845, %v847
        %v849 = vrot.slane %v226, %v848
        %v851 = vunpack.c.l.s4 1966171168
        %v852 = vunpack.c.0.s8 %v851
        %v853 = vlaneseq
        %v854 = vshrl.u32 %v853, 7
        %v855 = vsub.s32 %v852, %v854
        %v856 = vrot.slane %v842, %v855
        %v857 = vcombine.high %v849, %v849
        %v858 = vcombine.high %v856, %v856
        %v860 = vunpack.c.l.s4 1966171168
        %v861 = vunpack.c.0.s8 %v860
        %v862 = vlaneseq
        %v863 = vshrl.u32 %v862, 7
        %v864 = vsub.s32 %v861, %v863
        %v865 = vrot.slane %v849, %v864
        %v867 = vunpack.c.l.s4 1966171168
        %v868 = vunpack.c.0.s8 %v867
        %v869 = vlaneseq
        %v870 = vshrl.u32 %v869, 7
        %v871 = vsub.s32 %v868, %v870
        %v872 = vrot.slane %v856, %v871
        %v874 = vunpack.c.l.s4 1966171168
        %v875 = vunpack.c.0.s8 %v874
        %v876 = vlaneseq
        %v877 = vshrl.u32 %v876, 7
        %v878 = vsub.s32 %v875, %v877
        %v879 = vrot.slane %v857, %v878
        %v881 = vunpack.c.l.s4 1966171168
        %v882 = vunpack.c.0.s8 %v881
        %v883 = vlaneseq
        %v884 = vshrl.u32 %v883, 7
        %v885 = vsub.s32 %v882, %v884
        %v886 = vrot.slane %v858, %v885
        %v887 = vcombine.high %v865, %v865
        %v888 = vcombine.high %v872, %v872
        %v889 = vcombine.high %v879, %v879
        %v890 = vcombine.high %v886, %v886
        %v891 = vcombine.high %v227, %v227
        %v893 = vunpack.c.l.s4 1966171168
        %v894 = vunpack.c.0.s8 %v893
        %v895 = vlaneseq
        %v896 = vshrl.u32 %v895, 7
        %v897 = vsub.s32 %v894, %v896
        %v898 = vrot.slane %v227, %v897
        %v900 = vunpack.c.l.s4 1966171168
        %v901 = vunpack.c.0.s8 %v900
        %v902 = vlaneseq
        %v903 = vshrl.u32 %v902, 7
        %v904 = vsub.s32 %v901, %v903
        %v905 = vrot.slane %v891, %v904
        %v906 = vcombine.high %v898, %v898
        %v907 = vcombine.high %v905, %v905
        %v909 = vunpack.c.l.s4 1966171168
        %v910 = vunpack.c.0.s8 %v909
        %v911 = vlaneseq
        %v912 = vshrl.u32 %v911, 7
        %v913 = vsub.s32 %v910, %v912
        %v914 = vrot.slane %v898, %v913
        %v916 = vunpack.c.l.s4 1966171168
        %v917 = vunpack.c.0.s8 %v916
        %v918 = vlaneseq
        %v919 = vshrl.u32 %v918, 7
        %v920 = vsub.s32 %v917, %v919
        %v921 = vrot.slane %v905, %v920
        %v923 = vunpack.c.l.s4 1966171168
        %v924 = vunpack.c.0.s8 %v923
        %v925 = vlaneseq
        %v926 = vshrl.u32 %v925, 7
        %v927 = vsub.s32 %v924, %v926
        %v928 = vrot.slane %v906, %v927
        %v930 = vunpack.c.l.s4 1966171168
        %v931 = vunpack.c.0.s8 %v930
        %v932 = vlaneseq
        %v933 = vshrl.u32 %v932, 7
        %v934 = vsub.s32 %v931, %v933
        %v935 = vrot.slane %v907, %v934
        %v936 = vcombine.high %v914, %v914
        %v937 = vcombine.high %v921, %v921
        %v938 = vcombine.high %v928, %v928
        %v939 = vcombine.high %v935, %v935
        %v1484 = vunpack.c.l.b16 %v228
        %v1485 = vunpack.c.l.b16 %v229
        %v1486 = vunpack.c.l.b16 %v230
        %v1487 = vunpack.c.l.b16 %v231
        %v1488 = vunpack.c.l.b16 %v232
        %v1489 = vunpack.c.l.b16 %v233
        %v1490 = vunpack.c.l.b16 %v234
        %v1491 = vunpack.c.l.b16 %v235
        %v1492 = vunpack.c.l.b16 %v236
        %v1493 = vunpack.c.l.b16 %v237
        %v1494 = vunpack.c.l.b16 %v238
        %v1495 = vunpack.c.l.b16 %v239
        %v1496 = vunpack.c.l.b16 %v240
        %v1497 = vunpack.c.l.b16 %v241
        %v1498 = vunpack.c.l.b16 %v242
        %v1499 = vunpack.c.l.b16 %v243
        %v1500 = vunpack.c.l.b16 %v244
        %v1501 = vunpack.c.l.b16 %v245
        %v1502 = vunpack.c.l.b16 %v246
        %v1503 = vunpack.c.l.b16 %v247
        %v1504 = vunpack.c.l.b16 %v248
        %v1505 = vunpack.c.l.b16 %v249
        %v1506 = vunpack.c.l.b16 %v250
        %v1507 = vunpack.c.l.b16 %v251
        %v1508 = vunpack.c.l.b16 %v252
        %v1509 = vunpack.c.l.b16 %v253
        %v1510 = vunpack.c.l.b16 %v254
        %v1511 = vunpack.c.l.b16 %v255
        %v1512 = vunpack.c.l.b16 %v256
        %v1513 = vunpack.c.l.b16 %v257
        %v1514 = vunpack.c.l.b16 %v258
        %v1515 = vunpack.c.l.b16 %v259
        %v1516 = vunpack.c.l.b16 %v260
        %v1517 = vunpack.c.l.b16 %v261
        %v1518 = vunpack.c.l.b16 %v262
        %v1519 = vunpack.c.l.b16 %v263
        %v1520 = vunpack.c.l.b16 %v264
        %v1521 = vunpack.c.l.b16 %v265
        %v1522 = vunpack.c.l.b16 %v266
        %v1523 = vunpack.c.l.b16 %v267
        %v1524 = vunpack.c.l.b16 %v268
        %v1525 = vunpack.c.l.b16 %v269
        %v1526 = vunpack.c.l.b16 %v270
        %v1527 = vunpack.c.l.b16 %v271
        %v1528 = vunpack.c.l.b16 %v272
        %v1529 = vunpack.c.l.b16 %v273
        %v1530 = vunpack.c.l.b16 %v274
        %v1531 = vunpack.c.l.b16 %v275
        %v1532 = vunpack.c.l.b16 %v276
        %v1533 = vunpack.c.l.b16 %v277
        %v1534 = vunpack.c.l.b16 %v278
        %v1535 = vunpack.c.l.b16 %v279
        %v1536 = vunpack.c.l.b16 %v280
        %v1537 = vunpack.c.l.b16 %v281
        %v1538 = vunpack.c.l.b16 %v282
        %v1539 = vunpack.c.l.b16 %v283
        %v1540 = vunpack.c.l.b16 %v284
        %v1541 = vunpack.c.l.b16 %v285
        %v1542 = vunpack.c.l.b16 %v286
        %v1543 = vunpack.c.l.b16 %v287
        %v1544 = vunpack.c.l.b16 %v288
        %v1545 = vunpack.c.l.b16 %v289
        %v1546 = vunpack.c.l.b16 %v290
        %v1547 = vunpack.c.l.b16 %v291
        %v1548 = vunpack.c.l.b16 %v292
        %v1549 = vunpack.c.l.b16 %v293
        %v1550 = vunpack.c.l.b16 %v294
        %v1551 = vunpack.c.l.b16 %v295
        %v1552 = vunpack.c.l.b16 %v296
        %v1553 = vunpack.c.l.b16 %v297
        %v1554 = vunpack.c.l.b16 %v298
        %v1555 = vunpack.c.l.b16 %v299
        %v1556 = vunpack.c.l.b16 %v300
        %v1557 = vunpack.c.l.b16 %v301
        %v1558 = vunpack.c.l.b16 %v302
        %v1559 = vunpack.c.l.b16 %v303
        %v1560 = vunpack.c.l.b16 %v304
        %v1561 = vunpack.c.l.b16 %v305
        %v1562 = vunpack.c.l.b16 %v306
        %v1563 = vunpack.c.l.b16 %v307
        %v1564 = vunpack.c.l.b16 %v308
        %v1565 = vunpack.c.l.b16 %v309
        %v1566 = vunpack.c.l.b16 %v310
        %v1567 = vunpack.c.l.b16 %v311
        %v1568 = vunpack.c.l.b16 %v312
        %v1569 = vunpack.c.l.b16 %v313
        %v1570 = vunpack.c.l.b16 %v314
        %v1571 = vunpack.c.l.b16 %v315
        %v1572 = vunpack.c.l.b16 %v316
        %v1573 = vunpack.c.l.b16 %v317
        %v1574 = vunpack.c.l.b16 %v318
        %v1575 = vunpack.c.l.b16 %v319
        %v1576 = vunpack.c.l.b16 %v320
        %v1577 = vunpack.c.l.b16 %v321
        %v1578 = vunpack.c.l.b16 %v322
        %v1579 = vunpack.c.l.b16 %v323
        %v1580 = vunpack.c.l.b16 %v324
        %v1581 = vunpack.c.l.b16 %v325
        %v1582 = vunpack.c.l.b16 %v326
        %v1583 = vunpack.c.l.b16 %v327
        %v1584 = vunpack.c.l.b16 %v328
        %v1585 = vunpack.c.l.b16 %v329
        %v1586 = vunpack.c.l.b16 %v330
        %v1587 = vunpack.c.l.b16 %v331
        %v1588 = vunpack.c.l.b16 %v332
        %v1589 = vunpack.c.l.b16 %v333
        %v1590 = vunpack.c.l.b16 %v334
        %v1591 = vunpack.c.l.b16 %v335
        %v1592 = vunpack.c.l.b16 %v336
        %v1593 = vunpack.c.l.b16 %v337
        %v1594 = vunpack.c.l.b16 %v338
        %v1595 = vunpack.c.l.b16 %v339
        %v1596 = vunpack.c.l.b16 %v340
        %v1597 = vunpack.c.l.b16 %v341
        %v1598 = vunpack.c.l.b16 %v342
        %v1599 = vunpack.c.l.b16 %v343
        %v1600 = vunpack.c.l.b16 %v344
        %v1601 = vunpack.c.l.b16 %v345
        %v1602 = vunpack.c.l.b16 %v346
        %v1603 = vunpack.c.l.b16 %v347
        %v1604 = vunpack.c.l.b16 %v348
        %v1605 = vunpack.c.l.b16 %v349
        %v1606 = vunpack.c.l.b16 %v350
        %v1607 = vunpack.c.l.b16 %v351
        %v1608 = vunpack.c.l.b16 %v352
        %v1609 = vunpack.c.l.b16 %v353
        %v1610 = vunpack.c.l.b16 %v354
        %v1611 = vunpack.c.l.b16 %v355
        %v1612 = vunpack.c.l.b16 %v356
        %v1613 = vunpack.c.l.b16 %v357
        %v1614 = vunpack.c.l.b16 %v358
        %v1615 = vunpack.c.l.b16 %v359
        %v1616 = vunpack.c.l.b16 %v360
        %v1617 = vunpack.c.l.b16 %v361
        %v1618 = vunpack.c.l.b16 %v362
        %v1619 = vunpack.c.l.b16 %v363
        %v1620 = vunpack.c.l.b16 %v364
        %v1621 = vunpack.c.l.b16 %v365
        %v1622 = vunpack.c.l.b16 %v366
        %v1623 = vunpack.c.l.b16 %v367
        %v1624 = vunpack.c.l.b16 %v368
        %v1625 = vunpack.c.l.b16 %v369
        %v1626 = vunpack.c.l.b16 %v370
        %v1627 = vunpack.c.l.b16 %v371
        %v1628 = vunpack.c.l.b16 %v372
        %v1629 = vunpack.c.l.b16 %v373
        %v1630 = vunpack.c.l.b16 %v374
        %v1631 = vunpack.c.l.b16 %v375
        %v1632 = vunpack.c.l.b16 %v376
        %v1633 = vunpack.c.l.b16 %v377
        %v1634 = vunpack.c.l.b16 %v378
        %v1635 = vunpack.c.l.b16 %v379
        %v1636 = vunpack.c.l.b16 %v380
        %v1637 = vunpack.c.l.b16 %v381
        %v1638 = vunpack.c.l.b16 %v382
        %v1639 = vunpack.c.l.b16 %v383
        %v1640 = vunpack.c.l.b16 %v384
        %v1641 = vunpack.c.l.b16 %v385
        %v1642 = vunpack.c.l.b16 %v386
        %v1643 = vunpack.c.l.b16 %v387
        %v1644 = vunpack.c.l.b16 %v388
        %v1645 = vunpack.c.l.b16 %v389
        %v1646 = vunpack.c.l.b16 %v390
        %v1647 = vunpack.c.l.b16 %v391
        %v1648 = vunpack.c.l.b16 %v392
        %v1649 = vunpack.c.l.b16 %v393
        %v1650 = vunpack.c.l.b16 %v394
        %v1651 = vunpack.c.l.b16 %v395
        %v1652 = vunpack.c.l.b16 %v396
        %v1653 = vunpack.c.l.b16 %v397
        %v1654 = vunpack.c.l.b16 %v398
        %v1655 = vunpack.c.l.b16 %v399
        %v1656 = vunpack.c.l.b16 %v400
        %v1657 = vunpack.c.l.b16 %v401
        %v1658 = vunpack.c.l.b16 %v402
        %v1659 = vunpack.c.l.b16 %v403
        %v1660 = vunpack.c.l.b16 %v404
        %v1661 = vunpack.c.l.b16 %v405
        %v1662 = vunpack.c.l.b16 %v406
        %v1663 = vunpack.c.l.b16 %v407
        %v1664 = vunpack.c.l.b16 %v408
        %v1665 = vunpack.c.l.b16 %v409
        %v1666 = vunpack.c.l.b16 %v410
        %v1667 = vunpack.c.l.b16 %v411
        %v1668 = vunpack.c.l.b16 %v412
        %v1669 = vunpack.c.l.b16 %v413
        %v1670 = vunpack.c.l.b16 %v414
        %v1671 = vunpack.c.l.b16 %v415
        %v1672 = vunpack.c.l.b16 %v416
        %v1673 = vunpack.c.l.b16 %v417
        %v1674 = vunpack.c.l.b16 %v418
        %v1675 = vunpack.c.l.b16 %v419
        %v1676 = vunpack.c.l.b16 %v420
        %v1677 = vunpack.c.l.b16 %v421
        %v1678 = vunpack.c.l.b16 %v422
        %v1679 = vunpack.c.l.b16 %v423
        %v1680 = vunpack.c.l.b16 %v424
        %v1681 = vunpack.c.l.b16 %v425
        %v1682 = vunpack.c.l.b16 %v426
        %v1683 = vunpack.c.l.b16 %v427
        %v1684 = vunpack.c.l.b16 %v428
        %v1685 = vunpack.c.l.b16 %v429
        %v1686 = vunpack.c.l.b16 %v430
        %v1687 = vunpack.c.l.b16 %v431
        %v1688 = vunpack.c.l.b16 %v432
        %v1689 = vunpack.c.l.b16 %v433
        %v1690 = vunpack.c.l.b16 %v434
        %v1691 = vunpack.c.l.b16 %v435
        %v1692 = vunpack.c.l.b16 %v436
        %v1693 = vunpack.c.l.b16 %v437
        %v1694 = vunpack.c.l.b16 %v438
        %v1695 = vunpack.c.l.b16 %v439
        %v1696 = vunpack.c.l.b16 %v440
        %v1697 = vunpack.c.l.b16 %v441
        %v1698 = vunpack.c.l.b16 %v442
        %v1699 = vunpack.c.l.b16 %v443
        %v1700 = vunpack.c.l.b16 %v444
        %v1701 = vunpack.c.l.b16 %v445
        %v1702 = vunpack.c.l.b16 %v446
        %v1703 = vunpack.c.l.b16 %v447
        %v1704 = vunpack.c.l.b16 %v448
        %v1705 = vunpack.c.l.b16 %v449
        %v1706 = vunpack.c.l.b16 %v450
        %v1707 = vunpack.c.l.b16 %v451
        %v1708 = vunpack.c.l.b16 %v452
        %v1709 = vunpack.c.l.b16 %v453
        %v1710 = vunpack.c.l.b16 %v454
        %v1711 = vunpack.c.l.b16 %v455
        %v1712 = vunpack.c.l.b16 %v456
        %v1713 = vunpack.c.l.b16 %v457
        %v1714 = vunpack.c.l.b16 %v458
        %v1715 = vunpack.c.l.b16 %v459
        %v1716 = vunpack.c.l.b16 %v460
        %v1717 = vunpack.c.l.b16 %v461
        %v1718 = vunpack.c.l.b16 %v462
        %v1719 = vunpack.c.l.b16 %v463
        %v1720 = vunpack.c.l.b16 %v464
        %v1721 = vunpack.c.l.b16 %v465
        %v1722 = vunpack.c.l.b16 %v466
        %v1723 = vunpack.c.l.b16 %v467
        %v1724 = vunpack.c.l.b16 %v468
        %v1725 = vunpack.c.l.b16 %v469
        %v1726 = vunpack.c.l.b16 %v470
        %v1727 = vunpack.c.l.b16 %v471
        %v1728 = vunpack.c.l.b16 %v472
        %v1729 = vunpack.c.l.b16 %v473
        %v1730 = vunpack.c.l.b16 %v474
        %v1731 = vunpack.c.l.b16 %v475
        %v1732 = vunpack.c.l.b16 %v476
        %v1733 = vunpack.c.l.b16 %v477
        %v1734 = vunpack.c.l.b16 %v478
        %v1735 = vunpack.c.l.b16 %v479
        %v1736 = vunpack.c.l.b16 %v480
        %v1737 = vunpack.c.l.b16 %v481
        %v1738 = vunpack.c.l.b16 %v482
        %v1739 = vunpack.c.l.b16 %v483
        %v1740 = vunpack.c.l.b16 %v484
        %v1741 = vunpack.c.l.b16 %v485
        %v1742 = vunpack.c.l.b16 %v486
        %v1743 = vunpack.c.l.b16 %v487
        %v1744 = vunpack.c.l.b16 %v488
        %v1745 = vunpack.c.l.b16 %v489
        %v1746 = vunpack.c.l.b16 %v490
        %v1747 = vunpack.c.l.b16 %v491
        %v1748 = vunpack.c.l.b16 %v492
        %v1749 = vunpack.c.l.b16 %v493
        %v1750 = vunpack.c.l.b16 %v494
        %v1751 = vunpack.c.l.b16 %v495
        %v1752 = vunpack.c.l.b16 %v496
        %v1753 = vunpack.c.l.b16 %v497
        %v1754 = vunpack.c.l.b16 %v498
        %v1755 = vunpack.c.l.b16 %v499
        %v1756 = vunpack.c.l.b16 %v500
        %v1757 = vunpack.c.l.b16 %v501
        %v1758 = vunpack.c.l.b16 %v502
        %v1759 = vunpack.c.l.b16 %v503
        %v1760 = vunpack.c.l.b16 %v504
        %v1761 = vunpack.c.l.b16 %v505
        %v1762 = vunpack.c.l.b16 %v506
        %v1763 = vunpack.c.l.b16 %v507
        %v1764 = vunpack.c.l.b16 %v508
        %v1765 = vunpack.c.l.b16 %v509
        %v1766 = vunpack.c.l.b16 %v510
        %v1767 = vunpack.c.l.b16 %v511
        %v1768 = vunpack.c.l.b16 %v512
        %v1769 = vunpack.c.l.b16 %v513
        %v1770 = vunpack.c.l.b16 %v514
        %v1771 = vunpack.c.l.b16 %v515
        %v1772 = vunpack.c.l.b16 %v516
        %v1773 = vunpack.c.l.b16 %v517
        %v1774 = vunpack.c.l.b16 %v518
        %v1775 = vunpack.c.l.b16 %v519
        %v1776 = vunpack.c.l.b16 %v520
        %v1777 = vunpack.c.l.b16 %v521
        %v1778 = vunpack.c.l.b16 %v522
        %v1779 = vunpack.c.l.b16 %v523
        %v1780 = vunpack.c.l.b16 %v524
        %v1781 = vunpack.c.l.b16 %v525
        %v1782 = vunpack.c.l.b16 %v526
        %v1783 = vunpack.c.l.b16 %v527
        %v1784 = vunpack.c.l.b16 %v528
        %v1785 = vunpack.c.l.b16 %v529
        %v1786 = vunpack.c.l.b16 %v530
        %v1787 = vunpack.c.l.b16 %v531
        %v1788 = vunpack.c.l.b16 %v532
        %v1789 = vunpack.c.l.b16 %v533
        %v1790 = vunpack.c.l.b16 %v534
        %v1791 = vunpack.c.l.b16 %v535
        %v1792 = vunpack.c.l.b16 %v536
        %v1793 = vunpack.c.l.b16 %v537
        %v1794 = vunpack.c.l.b16 %v538
        %v1795 = vunpack.c.l.b16 %v539
        %v1796 = vunpack.c.l.b16 %v540
        %v1797 = vunpack.c.l.b16 %v541
        %v1798 = vunpack.c.l.b16 %v542
        %v1799 = vunpack.c.l.b16 %v543
        %v1800 = vunpack.c.l.b16 %v544
        %v1801 = vunpack.c.l.b16 %v545
        %v1802 = vunpack.c.l.b16 %v546
        %v1803 = vunpack.c.l.b16 %v547
        %v1804 = vunpack.c.l.b16 %v548
        %v1805 = vunpack.c.l.b16 %v549
        %v1806 = vunpack.c.l.b16 %v550
        %v1807 = vunpack.c.l.b16 %v551
        %v1808 = vunpack.c.l.b16 %v552
        %v1809 = vunpack.c.l.b16 %v553
        %v1810 = vunpack.c.l.b16 %v554
        %v1811 = vunpack.c.l.b16 %v555
        %v1812 = vunpack.c.l.b16 %v556
        %v1813 = vunpack.c.l.b16 %v557
        %v1814 = vunpack.c.l.b16 %v558
        %v1815 = vunpack.c.l.b16 %v559
        %v1816 = vunpack.c.l.b16 %v560
        %v1817 = vunpack.c.l.b16 %v561
        %v1818 = vunpack.c.l.b16 %v562
        %v1819 = vunpack.c.l.b16 %v563
        %v1820 = vunpack.c.l.b16 %v564
        %v1821 = vunpack.c.l.b16 %v565
        %v1822 = vunpack.c.l.b16 %v566
        %v1823 = vunpack.c.l.b16 %v567
        %v1824 = vunpack.c.l.b16 %v568
        %v1825 = vunpack.c.l.b16 %v569
        %v1826 = vunpack.c.l.b16 %v570
        %v1827 = vunpack.c.l.b16 %v571
        %v1828 = vunpack.c.l.b16 %v572
        %v1829 = vunpack.c.l.b16 %v573
        %v1830 = vunpack.c.l.b16 %v574
        %v1831 = vunpack.c.l.b16 %v575
        %v1832 = vunpack.c.l.b16 %v576
        %v1833 = vunpack.c.l.b16 %v577
        %v1834 = vunpack.c.l.b16 %v578
        %v1835 = vunpack.c.l.b16 %v579
        %v1836 = vunpack.c.l.b16 %v580
        %v1837 = vunpack.c.l.b16 %v581
        %v1838 = vunpack.c.l.b16 %v582
        %v1839 = vunpack.c.l.b16 %v583
        %v1840 = vunpack.c.l.b16 %v584
        %v1841 = vunpack.c.l.b16 %v585
        %v1842 = vunpack.c.l.b16 %v586
        %v1843 = vunpack.c.l.b16 %v587
        %v1844 = vunpack.c.l.b16 %v588
        %v1845 = vunpack.c.l.b16 %v589
        %v1846 = vunpack.c.l.b16 %v590
        %v1847 = vunpack.c.l.b16 %v591
        %v1848 = vunpack.c.l.b16 %v592
        %v1849 = vunpack.c.l.b16 %v593
        %v1850 = vunpack.c.l.b16 %v594
        %v1851 = vunpack.c.l.b16 %v595
        %v1852 = vunpack.c.l.b16 %v596
        %v1853 = vunpack.c.l.b16 %v597
        %v1854 = vunpack.c.l.b16 %v598
        %v1855 = vunpack.c.l.b16 %v599
        %v1856 = vunpack.c.l.b16 %v600
        %v1857 = vunpack.c.l.b16 %v601
        %v1858 = vunpack.c.l.b16 %v602
        %v1859 = vunpack.c.l.b16 %v603
        %v1860 = vunpack.c.l.b16 %v604
        %v1861 = vunpack.c.l.b16 %v605
        %v1862 = vunpack.c.l.b16 %v606
        %v1863 = vunpack.c.l.b16 %v607
        %v1864 = vunpack.c.l.b16 %v608
        %v1865 = vunpack.c.l.b16 %v609
        %v1866 = vunpack.c.l.b16 %v610
        %v1867 = vunpack.c.l.b16 %v611
        %v1868 = vunpack.c.l.b16 %v612
        %v1869 = vunpack.c.l.b16 %v613
        %v1870 = vunpack.c.l.b16 %v614
        %v1871 = vunpack.c.l.b16 %v615
        %v1872 = vunpack.c.l.b16 %v616
        %v1873 = vunpack.c.l.b16 %v617
        %v1874 = vunpack.c.l.b16 %v618
        %v1875 = vunpack.c.l.b16 %v619
        %v1876 = vunpack.c.l.b16 %v620
        %v1877 = vunpack.c.l.b16 %v621
        %v1878 = vunpack.c.l.b16 %v622
        %v1879 = vunpack.c.l.b16 %v623
        %v1880 = vunpack.c.l.b16 %v624
        %v1881 = vunpack.c.l.b16 %v625
        %v1882 = vunpack.c.l.b16 %v626
        %v1883 = vunpack.c.l.b16 %v627
        %v1884 = vunpack.c.l.b16 %v628
        %v1885 = vunpack.c.l.b16 %v629
        %v1886 = vunpack.c.l.b16 %v630
        %v1887 = vunpack.c.l.b16 %v631
        %v1888 = vunpack.c.l.b16 %v632
        %v1889 = vunpack.c.l.b16 %v633
        %v1890 = vunpack.c.l.b16 %v634
        %v1891 = vunpack.c.l.b16 %v635
        %v1892 = vunpack.c.l.b16 %v636
        %v1893 = vunpack.c.l.b16 %v637
        %v1894 = vunpack.c.l.b16 %v638
        %v1895 = vunpack.c.l.b16 %v639
        %v1896 = vunpack.c.l.b16 %v640
        %v1897 = vunpack.c.l.b16 %v641
        %v1898 = vunpack.c.l.b16 %v642
        %v1899 = vunpack.c.l.b16 %v643
        %v1900 = vunpack.c.l.b16 %v644
        %v1901 = vunpack.c.l.b16 %v645
        %v1902 = vunpack.c.l.b16 %v646
        %v1903 = vunpack.c.l.b16 %v647
        %v1904 = vunpack.c.l.b16 %v648
        %v1905 = vunpack.c.l.b16 %v649
        %v1906 = vunpack.c.l.b16 %v650
        %v1907 = vunpack.c.l.b16 %v651
        %v1908 = vunpack.c.l.b16 %v652
        %v1909 = vunpack.c.l.b16 %v653
        %v1910 = vunpack.c.l.b16 %v654
        %v1911 = vunpack.c.l.b16 %v655
        %v1912 = vunpack.c.l.b16 %v656
        %v1913 = vunpack.c.l.b16 %v657
        %v1914 = vunpack.c.l.b16 %v658
        %v1915 = vunpack.c.l.b16 %v659
        %v1916 = vunpack.c.l.b16 %v660
        %v1917 = vunpack.c.l.b16 %v661
        %v1918 = vunpack.c.l.b16 %v662
        %v1919 = vunpack.c.l.b16 %v663
        %v1920 = vunpack.c.l.b16 %v664
        %v1921 = vunpack.c.l.b16 %v665
        %v1922 = vunpack.c.l.b16 %v666
        %v1923 = vunpack.c.l.b16 %v667
        %v1924 = vunpack.c.l.b16 %v668
        %v1925 = vunpack.c.l.b16 %v669
        %v1926 = vunpack.c.l.b16 %v670
        %v1927 = vunpack.c.l.b16 %v671
        %v1928 = vunpack.c.l.b16 %v672
        %v1929 = vunpack.c.l.b16 %v673
        %v1930 = vunpack.c.l.b16 %v674
        %v1931 = vunpack.c.l.b16 %v675
        %v1932 = vunpack.c.l.b16 %v676
        %v1933 = vunpack.c.l.b16 %v677
        %v1934 = vunpack.c.l.b16 %v678
        %v1935 = vunpack.c.l.b16 %v679
        %v1936 = vunpack.c.l.b16 %v680
        %v1937 = vunpack.c.l.b16 %v681
        %v1938 = vunpack.c.l.b16 %v682
        %v1939 = vunpack.c.l.b16 %v683
        %v1940 = vunpack.c.l.b16 %v684
        %v1941 = vunpack.c.l.b16 %v685
        %v1942 = vunpack.c.l.b16 %v686
        %v1943 = vunpack.c.l.b16 %v687
        %v1944 = vunpack.c.l.b16 %v688
        %v1945 = vunpack.c.l.b16 %v689
        %v1946 = vunpack.c.l.b16 %v690
        %v1947 = vunpack.c.l.b16 %v691
        %v1948 = vunpack.c.l.b16 %v692
        %v1949 = vunpack.c.l.b16 %v693
        %v1950 = vunpack.c.l.b16 %v694
        %v1951 = vunpack.c.l.b16 %v695
        %v1952 = vunpack.c.l.b16 %v696
        %v1953 = vunpack.c.l.b16 %v697
        %v1954 = vunpack.c.l.b16 %v698
        %v1955 = vunpack.c.l.b16 %v699
        %v1956 = vunpack.c.l.b16 %v700
        %v1957 = vunpack.c.l.b16 %v701
        %v1958 = vunpack.c.l.b16 %v702
        %v1959 = vunpack.c.l.b16 %v703
        %v1960 = vunpack.c.l.b16 %v704
        %v1961 = vunpack.c.l.b16 %v705
        %v1962 = vunpack.c.l.b16 %v706
        %v1963 = vunpack.c.l.b16 %v707
        %v1964 = vunpack.c.l.b16 %v708
        %v1965 = vunpack.c.l.b16 %v709
        %v1966 = vunpack.c.l.b16 %v710
        %v1967 = vunpack.c.l.b16 %v711
        %v1968 = vunpack.c.l.b16 %v712
        %v1969 = vunpack.c.l.b16 %v713
        %v1970 = vunpack.c.l.b16 %v714
        %v1971 = vunpack.c.l.b16 %v715
        %v1972 = vunpack.c.l.b16 %v716
        %v1973 = vunpack.c.l.b16 %v717
        %v1974 = vunpack.c.l.b16 %v718
        %v1975 = vunpack.c.l.b16 %v719
        %v1976 = vunpack.c.l.b16 %v720
        %v1977 = vunpack.c.l.b16 %v721
        %v1978 = vunpack.c.l.b16 %v722
        %v1979 = vunpack.c.l.b16 %v723
        %v1980 = vunpack.c.l.b16 %v724
        %v1981 = vunpack.c.l.b16 %v725
        %v1982 = vunpack.c.l.b16 %v726
        %v1983 = vunpack.c.l.b16 %v727
        %v1984 = vunpack.c.l.b16 %v728
        %v1985 = vunpack.c.l.b16 %v729
        %v1986 = vunpack.c.l.b16 %v730
        %v1987 = vunpack.c.l.b16 %v731
        %v1988 = vunpack.c.l.b16 %v732
        %v1989 = vunpack.c.l.b16 %v733
        %v1990 = vunpack.c.l.b16 %v734
        %v1991 = vunpack.c.l.b16 %v735
        %v1992 = vunpack.c.l.b16 %v736
        %v1993 = vunpack.c.l.b16 %v737
        %v1994 = vunpack.c.l.b16 %v738
        %v1995 = vunpack.c.l.b16 %v739
        %v1996 = vpack.c.b16 %v1485, %v1484
        %v1997 = vpack.c.b16 %v1487, %v1486
        %v1998 = vpack.c.b16 %v1489, %v1488
        %v1999 = vpack.c.b16 %v1491, %v1490
        %v2000 = vpack.c.b16 %v1493, %v1492
        %v2001 = vpack.c.b16 %v1495, %v1494
        %v2002 = vpack.c.b16 %v1497, %v1496
        %v2003 = vpack.c.b16 %v1499, %v1498
        %v2004 = vpack.c.b16 %v1501, %v1500
        %v2005 = vpack.c.b16 %v1503, %v1502
        %v2006 = vpack.c.b16 %v1505, %v1504
        %v2007 = vpack.c.b16 %v1507, %v1506
        %v2008 = vpack.c.b16 %v1509, %v1508
        %v2009 = vpack.c.b16 %v1511, %v1510
        %v2010 = vpack.c.b16 %v1513, %v1512
        %v2011 = vpack.c.b16 %v1515, %v1514
        %v2012 = vpack.c.b16 %v1517, %v1516
        %v2013 = vpack.c.b16 %v1519, %v1518
        %v2014 = vpack.c.b16 %v1521, %v1520
        %v2015 = vpack.c.b16 %v1523, %v1522
        %v2016 = vpack.c.b16 %v1525, %v1524
        %v2017 = vpack.c.b16 %v1527, %v1526
        %v2018 = vpack.c.b16 %v1529, %v1528
        %v2019 = vpack.c.b16 %v1531, %v1530
        %v2020 = vpack.c.b16 %v1533, %v1532
        %v2021 = vpack.c.b16 %v1535, %v1534
        %v2022 = vpack.c.b16 %v1537, %v1536
        %v2023 = vpack.c.b16 %v1539, %v1538
        %v2024 = vpack.c.b16 %v1541, %v1540
        %v2025 = vpack.c.b16 %v1543, %v1542
        %v2026 = vpack.c.b16 %v1545, %v1544
        %v2027 = vpack.c.b16 %v1547, %v1546
        %v2028 = vpack.c.b16 %v1549, %v1548
        %v2029 = vpack.c.b16 %v1551, %v1550
        %v2030 = vpack.c.b16 %v1553, %v1552
        %v2031 = vpack.c.b16 %v1555, %v1554
        %v2032 = vpack.c.b16 %v1557, %v1556
        %v2033 = vpack.c.b16 %v1559, %v1558
        %v2034 = vpack.c.b16 %v1561, %v1560
        %v2035 = vpack.c.b16 %v1563, %v1562
        %v2036 = vpack.c.b16 %v1565, %v1564
        %v2037 = vpack.c.b16 %v1567, %v1566
        %v2038 = vpack.c.b16 %v1569, %v1568
        %v2039 = vpack.c.b16 %v1571, %v1570
        %v2040 = vpack.c.b16 %v1573, %v1572
        %v2041 = vpack.c.b16 %v1575, %v1574
        %v2042 = vpack.c.b16 %v1577, %v1576
        %v2043 = vpack.c.b16 %v1579, %v1578
        %v2044 = vpack.c.b16 %v1581, %v1580
        %v2045 = vpack.c.b16 %v1583, %v1582
        %v2046 = vpack.c.b16 %v1585, %v1584
        %v2047 = vpack.c.b16 %v1587, %v1586
        %v2048 = vpack.c.b16 %v1589, %v1588
        %v2049 = vpack.c.b16 %v1591, %v1590
        %v2050 = vpack.c.b16 %v1593, %v1592
        %v2051 = vpack.c.b16 %v1595, %v1594
        %v2052 = vpack.c.b16 %v1597, %v1596
        %v2053 = vpack.c.b16 %v1599, %v1598
        %v2054 = vpack.c.b16 %v1601, %v1600
        %v2055 = vpack.c.b16 %v1603, %v1602
        %v2056 = vpack.c.b16 %v1605, %v1604
        %v2057 = vpack.c.b16 %v1607, %v1606
        %v2058 = vpack.c.b16 %v1609, %v1608
        %v2059 = vpack.c.b16 %v1611, %v1610
        %v2060 = vpack.c.b16 %v1613, %v1612
        %v2061 = vpack.c.b16 %v1615, %v1614
        %v2062 = vpack.c.b16 %v1617, %v1616
        %v2063 = vpack.c.b16 %v1619, %v1618
        %v2064 = vpack.c.b16 %v1621, %v1620
        %v2065 = vpack.c.b16 %v1623, %v1622
        %v2066 = vpack.c.b16 %v1625, %v1624
        %v2067 = vpack.c.b16 %v1627, %v1626
        %v2068 = vpack.c.b16 %v1629, %v1628
        %v2069 = vpack.c.b16 %v1631, %v1630
        %v2070 = vpack.c.b16 %v1633, %v1632
        %v2071 = vpack.c.b16 %v1635, %v1634
        %v2072 = vpack.c.b16 %v1637, %v1636
        %v2073 = vpack.c.b16 %v1639, %v1638
        %v2074 = vpack.c.b16 %v1641, %v1640
        %v2075 = vpack.c.b16 %v1643, %v1642
        %v2076 = vpack.c.b16 %v1645, %v1644
        %v2077 = vpack.c.b16 %v1647, %v1646
        %v2078 = vpack.c.b16 %v1649, %v1648
        %v2079 = vpack.c.b16 %v1651, %v1650
        %v2080 = vpack.c.b16 %v1653, %v1652
        %v2081 = vpack.c.b16 %v1655, %v1654
        %v2082 = vpack.c.b16 %v1657, %v1656
        %v2083 = vpack.c.b16 %v1659, %v1658
        %v2084 = vpack.c.b16 %v1661, %v1660
        %v2085 = vpack.c.b16 %v1663, %v1662
        %v2086 = vpack.c.b16 %v1665, %v1664
        %v2087 = vpack.c.b16 %v1667, %v1666
        %v2088 = vpack.c.b16 %v1669, %v1668
        %v2089 = vpack.c.b16 %v1671, %v1670
        %v2090 = vpack.c.b16 %v1673, %v1672
        %v2091 = vpack.c.b16 %v1675, %v1674
        %v2092 = vpack.c.b16 %v1677, %v1676
        %v2093 = vpack.c.b16 %v1679, %v1678
        %v2094 = vpack.c.b16 %v1681, %v1680
        %v2095 = vpack.c.b16 %v1683, %v1682
        %v2096 = vpack.c.b16 %v1685, %v1684
        %v2097 = vpack.c.b16 %v1687, %v1686
        %v2098 = vpack.c.b16 %v1689, %v1688
        %v2099 = vpack.c.b16 %v1691, %v1690
        %v2100 = vpack.c.b16 %v1693, %v1692
        %v2101 = vpack.c.b16 %v1695, %v1694
        %v2102 = vpack.c.b16 %v1697, %v1696
        %v2103 = vpack.c.b16 %v1699, %v1698
        %v2104 = vpack.c.b16 %v1701, %v1700
        %v2105 = vpack.c.b16 %v1703, %v1702
        %v2106 = vpack.c.b16 %v1705, %v1704
        %v2107 = vpack.c.b16 %v1707, %v1706
        %v2108 = vpack.c.b16 %v1709, %v1708
        %v2109 = vpack.c.b16 %v1711, %v1710
        %v2110 = vpack.c.b16 %v1713, %v1712
        %v2111 = vpack.c.b16 %v1715, %v1714
        %v2112 = vpack.c.b16 %v1717, %v1716
        %v2113 = vpack.c.b16 %v1719, %v1718
        %v2114 = vpack.c.b16 %v1721, %v1720
        %v2115 = vpack.c.b16 %v1723, %v1722
        %v2116 = vpack.c.b16 %v1725, %v1724
        %v2117 = vpack.c.b16 %v1727, %v1726
        %v2118 = vpack.c.b16 %v1729, %v1728
        %v2119 = vpack.c.b16 %v1731, %v1730
        %v2120 = vpack.c.b16 %v1733, %v1732
        %v2121 = vpack.c.b16 %v1735, %v1734
        %v2122 = vpack.c.b16 %v1737, %v1736
        %v2123 = vpack.c.b16 %v1739, %v1738
        %v2124 = vpack.c.b16 %v1741, %v1740
        %v2125 = vpack.c.b16 %v1743, %v1742
        %v2126 = vpack.c.b16 %v1745, %v1744
        %v2127 = vpack.c.b16 %v1747, %v1746
        %v2128 = vpack.c.b16 %v1749, %v1748
        %v2129 = vpack.c.b16 %v1751, %v1750
        %v2130 = vpack.c.b16 %v1753, %v1752
        %v2131 = vpack.c.b16 %v1755, %v1754
        %v2132 = vpack.c.b16 %v1757, %v1756
        %v2133 = vpack.c.b16 %v1759, %v1758
        %v2134 = vpack.c.b16 %v1761, %v1760
        %v2135 = vpack.c.b16 %v1763, %v1762
        %v2136 = vpack.c.b16 %v1765, %v1764
        %v2137 = vpack.c.b16 %v1767, %v1766
        %v2138 = vpack.c.b16 %v1769, %v1768
        %v2139 = vpack.c.b16 %v1771, %v1770
        %v2140 = vpack.c.b16 %v1773, %v1772
        %v2141 = vpack.c.b16 %v1775, %v1774
        %v2142 = vpack.c.b16 %v1777, %v1776
        %v2143 = vpack.c.b16 %v1779, %v1778
        %v2144 = vpack.c.b16 %v1781, %v1780
        %v2145 = vpack.c.b16 %v1783, %v1782
        %v2146 = vpack.c.b16 %v1785, %v1784
        %v2147 = vpack.c.b16 %v1787, %v1786
        %v2148 = vpack.c.b16 %v1789, %v1788
        %v2149 = vpack.c.b16 %v1791, %v1790
        %v2150 = vpack.c.b16 %v1793, %v1792
        %v2151 = vpack.c.b16 %v1795, %v1794
        %v2152 = vpack.c.b16 %v1797, %v1796
        %v2153 = vpack.c.b16 %v1799, %v1798
        %v2154 = vpack.c.b16 %v1801, %v1800
        %v2155 = vpack.c.b16 %v1803, %v1802
        %v2156 = vpack.c.b16 %v1805, %v1804
        %v2157 = vpack.c.b16 %v1807, %v1806
        %v2158 = vpack.c.b16 %v1809, %v1808
        %v2159 = vpack.c.b16 %v1811, %v1810
        %v2160 = vpack.c.b16 %v1813, %v1812
        %v2161 = vpack.c.b16 %v1815, %v1814
        %v2162 = vpack.c.b16 %v1817, %v1816
        %v2163 = vpack.c.b16 %v1819, %v1818
        %v2164 = vpack.c.b16 %v1821, %v1820
        %v2165 = vpack.c.b16 %v1823, %v1822
        %v2166 = vpack.c.b16 %v1825, %v1824
        %v2167 = vpack.c.b16 %v1827, %v1826
        %v2168 = vpack.c.b16 %v1829, %v1828
        %v2169 = vpack.c.b16 %v1831, %v1830
        %v2170 = vpack.c.b16 %v1833, %v1832
        %v2171 = vpack.c.b16 %v1835, %v1834
        %v2172 = vpack.c.b16 %v1837, %v1836
        %v2173 = vpack.c.b16 %v1839, %v1838
        %v2174 = vpack.c.b16 %v1841, %v1840
        %v2175 = vpack.c.b16 %v1843, %v1842
        %v2176 = vpack.c.b16 %v1845, %v1844
        %v2177 = vpack.c.b16 %v1847, %v1846
        %v2178 = vpack.c.b16 %v1849, %v1848
        %v2179 = vpack.c.b16 %v1851, %v1850
        %v2180 = vpack.c.b16 %v1853, %v1852
        %v2181 = vpack.c.b16 %v1855, %v1854
        %v2182 = vpack.c.b16 %v1857, %v1856
        %v2183 = vpack.c.b16 %v1859, %v1858
        %v2184 = vpack.c.b16 %v1861, %v1860
        %v2185 = vpack.c.b16 %v1863, %v1862
        %v2186 = vpack.c.b16 %v1865, %v1864
        %v2187 = vpack.c.b16 %v1867, %v1866
        %v2188 = vpack.c.b16 %v1869, %v1868
        %v2189 = vpack.c.b16 %v1871, %v1870
        %v2190 = vpack.c.b16 %v1873, %v1872
        %v2191 = vpack.c.b16 %v1875, %v1874
        %v2192 = vpack.c.b16 %v1877, %v1876
        %v2193 = vpack.c.b16 %v1879, %v1878
        %v2194 = vpack.c.b16 %v1881, %v1880
        %v2195 = vpack.c.b16 %v1883, %v1882
        %v2196 = vpack.c.b16 %v1885, %v1884
        %v2197 = vpack.c.b16 %v1887, %v1886
        %v2198 = vpack.c.b16 %v1889, %v1888
        %v2199 = vpack.c.b16 %v1891, %v1890
        %v2200 = vpack.c.b16 %v1893, %v1892
        %v2201 = vpack.c.b16 %v1895, %v1894
        %v2202 = vpack.c.b16 %v1897, %v1896
        %v2203 = vpack.c.b16 %v1899, %v1898
        %v2204 = vpack.c.b16 %v1901, %v1900
        %v2205 = vpack.c.b16 %v1903, %v1902
        %v2206 = vpack.c.b16 %v1905, %v1904
        %v2207 = vpack.c.b16 %v1907, %v1906
        %v2208 = vpack.c.b16 %v1909, %v1908
        %v2209 = vpack.c.b16 %v1911, %v1910
        %v2210 = vpack.c.b16 %v1913, %v1912
        %v2211 = vpack.c.b16 %v1915, %v1914
        %v2212 = vpack.c.b16 %v1917, %v1916
        %v2213 = vpack.c.b16 %v1919, %v1918
        %v2214 = vpack.c.b16 %v1921, %v1920
        %v2215 = vpack.c.b16 %v1923, %v1922
        %v2216 = vpack.c.b16 %v1925, %v1924
        %v2217 = vpack.c.b16 %v1927, %v1926
        %v2218 = vpack.c.b16 %v1929, %v1928
        %v2219 = vpack.c.b16 %v1931, %v1930
        %v2220 = vpack.c.b16 %v1933, %v1932
        %v2221 = vpack.c.b16 %v1935, %v1934
        %v2222 = vpack.c.b16 %v1937, %v1936
        %v2223 = vpack.c.b16 %v1939, %v1938
        %v2224 = vpack.c.b16 %v1941, %v1940
        %v2225 = vpack.c.b16 %v1943, %v1942
        %v2226 = vpack.c.b16 %v1945, %v1944
        %v2227 = vpack.c.b16 %v1947, %v1946
        %v2228 = vpack.c.b16 %v1949, %v1948
        %v2229 = vpack.c.b16 %v1951, %v1950
        %v2230 = vpack.c.b16 %v1953, %v1952
        %v2231 = vpack.c.b16 %v1955, %v1954
        %v2232 = vpack.c.b16 %v1957, %v1956
        %v2233 = vpack.c.b16 %v1959, %v1958
        %v2234 = vpack.c.b16 %v1961, %v1960
        %v2235 = vpack.c.b16 %v1963, %v1962
        %v2236 = vpack.c.b16 %v1965, %v1964
        %v2237 = vpack.c.b16 %v1967, %v1966
        %v2238 = vpack.c.b16 %v1969, %v1968
        %v2239 = vpack.c.b16 %v1971, %v1970
        %v2240 = vpack.c.b16 %v1973, %v1972
        %v2241 = vpack.c.b16 %v1975, %v1974
        %v2242 = vpack.c.b16 %v1977, %v1976
        %v2243 = vpack.c.b16 %v1979, %v1978
        %v2244 = vpack.c.b16 %v1981, %v1980
        %v2245 = vpack.c.b16 %v1983, %v1982
        %v2246 = vpack.c.b16 %v1985, %v1984
        %v2247 = vpack.c.b16 %v1987, %v1986
        %v2248 = vpack.c.b16 %v1989, %v1988
        %v2249 = vpack.c.b16 %v1991, %v1990
        %v2250 = vpack.c.b16 %v1993, %v1992
        %v2251 = vpack.c.b16 %v1995, %v1994
        %2508 = vmatprep.subr.bf16.mxu0 0
        %2509 = vmatpush1.bf16.msra.mxu0 %v1996
        %2510 = vmatprep.subr.bf16.mxu0 0
        %2511 = vmatpush1.bf16.msra.mxu0 %v1997
        %2512 = vmatprep.subr.bf16.mxu0 0
        %2513 = vmatpush1.bf16.msra.mxu0 %v1998
        %2514 = vmatprep.subr.bf16.mxu0 0
        %2515 = vmatpush1.bf16.msra.mxu0 %v1999
        %2516 = vmatprep.subr.bf16.mxu0 0
        %2517 = vmatpush1.bf16.msra.mxu0 %v2000
        %2518 = vmatprep.subr.bf16.mxu0 0
        %2519 = vmatpush1.bf16.msra.mxu0 %v2001
        %2520 = vmatprep.subr.bf16.mxu0 0
        %2521 = vmatpush1.bf16.msra.mxu0 %v2002
        %2522 = vmatprep.subr.bf16.mxu0 0
        %2523 = vmatpush1.bf16.msra.mxu0 %v2003
        %2524 = vmatprep.subr.bf16.mxu0 0
        %2525 = vmatpush1.bf16.msra.mxu0 %v2004
        %2526 = vmatprep.subr.bf16.mxu0 0
        %2527 = vmatpush1.bf16.msra.mxu0 %v2005
        %2528 = vmatprep.subr.bf16.mxu0 0
        %2529 = vmatpush1.bf16.msra.mxu0 %v2006
        %2530 = vmatprep.subr.bf16.mxu0 0
        %2531 = vmatpush1.bf16.msra.mxu0 %v2007
        %2532 = vmatprep.subr.bf16.mxu0 0
        %2533 = vmatpush1.bf16.msra.mxu0 %v2008
        %2534 = vmatprep.subr.bf16.mxu0 0
        %2535 = vmatpush1.bf16.msra.mxu0 %v2009
        %2536 = vmatprep.subr.bf16.mxu0 0
        %2537 = vmatpush1.bf16.msra.mxu0 %v2010
        %2538 = vmatprep.subr.bf16.mxu0 0
        %2539 = vmatpush1.bf16.msra.mxu0 %v2011
        %2540 = vmatprep.mubr.bf16.mxu0 %v781
        %2541 = vmatmul.mubr.bf16.gmra.mrb[0].mxu0 %v767
        %v2542 = vpop.f32.mrb[0].mxu0
        %v2543 = vadd.f32 0.0, %v2542
        %v2544 = vpop.f32.mrb[0].mxu0
        %v2545 = vpop.f32.mrb[0].mxu0
        %v2546 = vpop.f32.mrb[0].mxu0
        %2547 = vdwg.mxu0
        %2548 = vmatprep.subr.bf16.mxu0 0
        %2549 = vmatpush1.bf16.msra.mxu0 %v2012
        %2550 = vmatprep.subr.bf16.mxu0 0
        %2551 = vmatpush1.bf16.msra.mxu0 %v2013
        %2552 = vmatprep.subr.bf16.mxu0 0
        %2553 = vmatpush1.bf16.msra.mxu0 %v2014
        %2554 = vmatprep.subr.bf16.mxu0 0
        %2555 = vmatpush1.bf16.msra.mxu0 %v2015
        %2556 = vmatprep.subr.bf16.mxu0 0
        %2557 = vmatpush1.bf16.msra.mxu0 %v2016
        %2558 = vmatprep.subr.bf16.mxu0 0
        %2559 = vmatpush1.bf16.msra.mxu0 %v2017
        %2560 = vmatprep.subr.bf16.mxu0 0
        %2561 = vmatpush1.bf16.msra.mxu0 %v2018
        %2562 = vmatprep.subr.bf16.mxu0 0
        %2563 = vmatpush1.bf16.msra.mxu0 %v2019
        %2564 = vmatprep.subr.bf16.mxu0 0
        %2565 = vmatpush1.bf16.msra.mxu0 %v2020
        %2566 = vmatprep.subr.bf16.mxu0 0
        %2567 = vmatpush1.bf16.msra.mxu0 %v2021
        %2568 = vmatprep.subr.bf16.mxu0 0
        %2569 = vmatpush1.bf16.msra.mxu0 %v2022
        %2570 = vmatprep.subr.bf16.mxu0 0
        %2571 = vmatpush1.bf16.msra.mxu0 %v2023
        %2572 = vmatprep.subr.bf16.mxu0 0
        %2573 = vmatpush1.bf16.msra.mxu0 %v2024
        %2574 = vmatprep.subr.bf16.mxu0 0
        %2575 = vmatpush1.bf16.msra.mxu0 %v2025
        %2576 = vmatprep.subr.bf16.mxu0 0
        %2577 = vmatpush1.bf16.msra.mxu0 %v2026
        %2578 = vmatprep.subr.bf16.mxu0 0
        %2579 = vmatpush1.bf16.msra.mxu0 %v2027
        %2580 = vmatprep.mubr.bf16.mxu0 %v791
        %2581 = vmatmul.mubr.bf16.gmra.mrb[0].mxu0 %v789
        %v2582 = vpop.f32.mrb[0].mxu0
        %v2583 = vadd.f32 %v2543, %v2582
        %v2584 = vpop.f32.mrb[0].mxu0
        %v2585 = vpop.f32.mrb[0].mxu0
        %v2586 = vpop.f32.mrb[0].mxu0
        %2587 = vdwg.mxu0
        %2588 = vmatprep.subr.bf16.mxu0 0
        %2589 = vmatpush1.bf16.msra.mxu0 %v2028
        %2590 = vmatprep.subr.bf16.mxu0 0
        %2591 = vmatpush1.bf16.msra.mxu0 %v2029
        %2592 = vmatprep.subr.bf16.mxu0 0
        %2593 = vmatpush1.bf16.msra.mxu0 %v2030
        %2594 = vmatprep.subr.bf16.mxu0 0
        %2595 = vmatpush1.bf16.msra.mxu0 %v2031
        %2596 = vmatprep.subr.bf16.mxu0 0
        %2597 = vmatpush1.bf16.msra.mxu0 %v2032
        %2598 = vmatprep.subr.bf16.mxu0 0
        %2599 = vmatpush1.bf16.msra.mxu0 %v2033
        %2600 = vmatprep.subr.bf16.mxu0 0
        %2601 = vmatpush1.bf16.msra.mxu0 %v2034
        %2602 = vmatprep.subr.bf16.mxu0 0
        %2603 = vmatpush1.bf16.msra.mxu0 %v2035
        %2604 = vmatprep.subr.bf16.mxu0 0
        %2605 = vmatpush1.bf16.msra.mxu0 %v2036
        %2606 = vmatprep.subr.bf16.mxu0 0
        %2607 = vmatpush1.bf16.msra.mxu0 %v2037
        %2608 = vmatprep.subr.bf16.mxu0 0
        %2609 = vmatpush1.bf16.msra.mxu0 %v2038
        %2610 = vmatprep.subr.bf16.mxu0 0
        %2611 = vmatpush1.bf16.msra.mxu0 %v2039
        %2612 = vmatprep.subr.bf16.mxu0 0
        %2613 = vmatpush1.bf16.msra.mxu0 %v2040
        %2614 = vmatprep.subr.bf16.mxu0 0
        %2615 = vmatpush1.bf16.msra.mxu0 %v2041
        %2616 = vmatprep.subr.bf16.mxu0 0
        %2617 = vmatpush1.bf16.msra.mxu0 %v2042
        %2618 = vmatprep.subr.bf16.mxu0 0
        %2619 = vmatpush1.bf16.msra.mxu0 %v2043
        %2620 = vmatprep.mubr.bf16.mxu0 %v788
        %2621 = vmatmul.mubr.bf16.gmra.mrb[0].mxu0 %v774
        %v2622 = vpop.f32.mrb[0].mxu0
        %v2623 = vadd.f32 %v2583, %v2622
        %v2624 = vpop.f32.mrb[0].mxu0
        %v2625 = vpop.f32.mrb[0].mxu0
        %v2626 = vpop.f32.mrb[0].mxu0
        %2627 = vdwg.mxu0
        %2628 = vmatprep.subr.bf16.mxu0 0
        %2629 = vmatpush1.bf16.msra.mxu0 %v2044
        %2630 = vmatprep.subr.bf16.mxu0 0
        %2631 = vmatpush1.bf16.msra.mxu0 %v2045
        %2632 = vmatprep.subr.bf16.mxu0 0
        %2633 = vmatpush1.bf16.msra.mxu0 %v2046
        %2634 = vmatprep.subr.bf16.mxu0 0
        %2635 = vmatpush1.bf16.msra.mxu0 %v2047
        %2636 = vmatprep.subr.bf16.mxu0 0
        %2637 = vmatpush1.bf16.msra.mxu0 %v2048
        %2638 = vmatprep.subr.bf16.mxu0 0
        %2639 = vmatpush1.bf16.msra.mxu0 %v2049
        %2640 = vmatprep.subr.bf16.mxu0 0
        %2641 = vmatpush1.bf16.msra.mxu0 %v2050
        %2642 = vmatprep.subr.bf16.mxu0 0
        %2643 = vmatpush1.bf16.msra.mxu0 %v2051
        %2644 = vmatprep.subr.bf16.mxu0 0
        %2645 = vmatpush1.bf16.msra.mxu0 %v2052
        %2646 = vmatprep.subr.bf16.mxu0 0
        %2647 = vmatpush1.bf16.msra.mxu0 %v2053
        %2648 = vmatprep.subr.bf16.mxu0 0
        %2649 = vmatpush1.bf16.msra.mxu0 %v2054
        %2650 = vmatprep.subr.bf16.mxu0 0
        %2651 = vmatpush1.bf16.msra.mxu0 %v2055
        %2652 = vmatprep.subr.bf16.mxu0 0
        %2653 = vmatpush1.bf16.msra.mxu0 %v2056
        %2654 = vmatprep.subr.bf16.mxu0 0
        %2655 = vmatpush1.bf16.msra.mxu0 %v2057
        %2656 = vmatprep.subr.bf16.mxu0 0
        %2657 = vmatpush1.bf16.msra.mxu0 %v2058
        %2658 = vmatprep.subr.bf16.mxu0 0
        %2659 = vmatpush1.bf16.msra.mxu0 %v2059
        %2660 = vmatprep.mubr.bf16.mxu0 %v792
        %2661 = vmatmul.mubr.bf16.gmra.mrb[0].mxu0 %v790
        %v2662 = vpop.f32.mrb[0].mxu0
        %v2663 = vadd.f32 %v2623, %v2662
        %v2664 = vpop.f32.mrb[0].mxu0
        %v2665 = vpop.f32.mrb[0].mxu0
        %v2666 = vpop.f32.mrb[0].mxu0
        %2667 = vdwg.mxu0
        %2668 = vmatprep.subr.bf16.mxu0 0
        %2669 = vmatpush1.bf16.msra.mxu0 %v2060
        %2670 = vmatprep.subr.bf16.mxu0 0
        %2671 = vmatpush1.bf16.msra.mxu0 %v2061
        %2672 = vmatprep.subr.bf16.mxu0 0
        %2673 = vmatpush1.bf16.msra.mxu0 %v2062
        %2674 = vmatprep.subr.bf16.mxu0 0
        %2675 = vmatpush1.bf16.msra.mxu0 %v2063
        %2676 = vmatprep.subr.bf16.mxu0 0
        %2677 = vmatpush1.bf16.msra.mxu0 %v2064
        %2678 = vmatprep.subr.bf16.mxu0 0
        %2679 = vmatpush1.bf16.msra.mxu0 %v2065
        %2680 = vmatprep.subr.bf16.mxu0 0
        %2681 = vmatpush1.bf16.msra.mxu0 %v2066
        %2682 = vmatprep.subr.bf16.mxu0 0
        %2683 = vmatpush1.bf16.msra.mxu0 %v2067
        %2684 = vmatprep.subr.bf16.mxu0 0
        %2685 = vmatpush1.bf16.msra.mxu0 %v2068
        %2686 = vmatprep.subr.bf16.mxu0 0
        %2687 = vmatpush1.bf16.msra.mxu0 %v2069
        %2688 = vmatprep.subr.bf16.mxu0 0
        %2689 = vmatpush1.bf16.msra.mxu0 %v2070
        %2690 = vmatprep.subr.bf16.mxu0 0
        %2691 = vmatpush1.bf16.msra.mxu0 %v2071
        %2692 = vmatprep.subr.bf16.mxu0 0
        %2693 = vmatpush1.bf16.msra.mxu0 %v2072
        %2694 = vmatprep.subr.bf16.mxu0 0
        %2695 = vmatpush1.bf16.msra.mxu0 %v2073
        %2696 = vmatprep.subr.bf16.mxu0 0
        %2697 = vmatpush1.bf16.msra.mxu0 %v2074
        %2698 = vmatprep.subr.bf16.mxu0 0
        %2699 = vmatpush1.bf16.msra.mxu0 %v2075
        %2700 = vmatprep.mubr.bf16.mxu0 %v830
        %2701 = vmatmul.mubr.bf16.gmra.mrb[0].mxu0 %v816
        %v2702 = vpop.f32.mrb[0].mxu0
        %v2703 = vadd.f32 %v2663, %v2702
        %v2704 = vpop.f32.mrb[0].mxu0
        %v2705 = vpop.f32.mrb[0].mxu0
        %v2706 = vpop.f32.mrb[0].mxu0
        %2707 = vdwg.mxu0
        %2708 = vmatprep.subr.bf16.mxu0 0
        %2709 = vmatpush1.bf16.msra.mxu0 %v2076
        %2710 = vmatprep.subr.bf16.mxu0 0
        %2711 = vmatpush1.bf16.msra.mxu0 %v2077
        %2712 = vmatprep.subr.bf16.mxu0 0
        %2713 = vmatpush1.bf16.msra.mxu0 %v2078
        %2714 = vmatprep.subr.bf16.mxu0 0
        %2715 = vmatpush1.bf16.msra.mxu0 %v2079
        %2716 = vmatprep.subr.bf16.mxu0 0
        %2717 = vmatpush1.bf16.msra.mxu0 %v2080
        %2718 = vmatprep.subr.bf16.mxu0 0
        %2719 = vmatpush1.bf16.msra.mxu0 %v2081
        %2720 = vmatprep.subr.bf16.mxu0 0
        %2721 = vmatpush1.bf16.msra.mxu0 %v2082
        %2722 = vmatprep.subr.bf16.mxu0 0
        %2723 = vmatpush1.bf16.msra.mxu0 %v2083
        %2724 = vmatprep.subr.bf16.mxu0 0
        %2725 = vmatpush1.bf16.msra.mxu0 %v2084
        %2726 = vmatprep.subr.bf16.mxu0 0
        %2727 = vmatpush1.bf16.msra.mxu0 %v2085
        %2728 = vmatprep.subr.bf16.mxu0 0
        %2729 = vmatpush1.bf16.msra.mxu0 %v2086
        %2730 = vmatprep.subr.bf16.mxu0 0
        %2731 = vmatpush1.bf16.msra.mxu0 %v2087
        %2732 = vmatprep.subr.bf16.mxu0 0
        %2733 = vmatpush1.bf16.msra.mxu0 %v2088
        %2734 = vmatprep.subr.bf16.mxu0 0
        %2735 = vmatpush1.bf16.msra.mxu0 %v2089
        %2736 = vmatprep.subr.bf16.mxu0 0
        %2737 = vmatpush1.bf16.msra.mxu0 %v2090
        %2738 = vmatprep.subr.bf16.mxu0 0
        %2739 = vmatpush1.bf16.msra.mxu0 %v2091
        %2740 = vmatprep.mubr.bf16.mxu0 %v840
        %2741 = vmatmul.mubr.bf16.gmra.mrb[0].mxu0 %v838
        %v2742 = vpop.f32.mrb[0].mxu0
        %v2743 = vadd.f32 %v2703, %v2742
        %v2744 = vpop.f32.mrb[0].mxu0
        %v2745 = vpop.f32.mrb[0].mxu0
        %v2746 = vpop.f32.mrb[0].mxu0
        %2747 = vdwg.mxu0
        %2748 = vmatprep.subr.bf16.mxu0 0
        %2749 = vmatpush1.bf16.msra.mxu0 %v2092
        %2750 = vmatprep.subr.bf16.mxu0 0
        %2751 = vmatpush1.bf16.msra.mxu0 %v2093
        %2752 = vmatprep.subr.bf16.mxu0 0
        %2753 = vmatpush1.bf16.msra.mxu0 %v2094
        %2754 = vmatprep.subr.bf16.mxu0 0
        %2755 = vmatpush1.bf16.msra.mxu0 %v2095
        %2756 = vmatprep.subr.bf16.mxu0 0
        %2757 = vmatpush1.bf16.msra.mxu0 %v2096
        %2758 = vmatprep.subr.bf16.mxu0 0
        %2759 = vmatpush1.bf16.msra.mxu0 %v2097
        %2760 = vmatprep.subr.bf16.mxu0 0
        %2761 = vmatpush1.bf16.msra.mxu0 %v2098
        %2762 = vmatprep.subr.bf16.mxu0 0
        %2763 = vmatpush1.bf16.msra.mxu0 %v2099
        %2764 = vmatprep.subr.bf16.mxu0 0
        %2765 = vmatpush1.bf16.msra.mxu0 %v2100
        %2766 = vmatprep.subr.bf16.mxu0 0
        %2767 = vmatpush1.bf16.msra.mxu0 %v2101
        %2768 = vmatprep.subr.bf16.mxu0 0
        %2769 = vmatpush1.bf16.msra.mxu0 %v2102
        %2770 = vmatprep.subr.bf16.mxu0 0
        %2771 = vmatpush1.bf16.msra.mxu0 %v2103
        %2772 = vmatprep.subr.bf16.mxu0 0
        %2773 = vmatpush1.bf16.msra.mxu0 %v2104
        %2774 = vmatprep.subr.bf16.mxu0 0
        %2775 = vmatpush1.bf16.msra.mxu0 %v2105
        %2776 = vmatprep.subr.bf16.mxu0 0
        %2777 = vmatpush1.bf16.msra.mxu0 %v2106
        %2778 = vmatprep.subr.bf16.mxu0 0
        %2779 = vmatpush1.bf16.msra.mxu0 %v2107
        %2780 = vmatprep.mubr.bf16.mxu0 %v837
        %2781 = vmatmul.mubr.bf16.gmra.mrb[0].mxu0 %v823
        %v2782 = vpop.f32.mrb[0].mxu0
        %v2783 = vadd.f32 %v2743, %v2782
        %v2784 = vpop.f32.mrb[0].mxu0
        %v2785 = vpop.f32.mrb[0].mxu0
        %v2786 = vpop.f32.mrb[0].mxu0
        %2787 = vdwg.mxu0
        %2788 = vmatprep.subr.bf16.mxu0 0
        %2789 = vmatpush1.bf16.msra.mxu0 %v2108
        %2790 = vmatprep.subr.bf16.mxu0 0
        %2791 = vmatpush1.bf16.msra.mxu0 %v2109
        %2792 = vmatprep.subr.bf16.mxu0 0
        %2793 = vmatpush1.bf16.msra.mxu0 %v2110
        %2794 = vmatprep.subr.bf16.mxu0 0
        %2795 = vmatpush1.bf16.msra.mxu0 %v2111
        %2796 = vmatprep.subr.bf16.mxu0 0
        %2797 = vmatpush1.bf16.msra.mxu0 %v2112
        %2798 = vmatprep.subr.bf16.mxu0 0
        %2799 = vmatpush1.bf16.msra.mxu0 %v2113
        %2800 = vmatprep.subr.bf16.mxu0 0
        %2801 = vmatpush1.bf16.msra.mxu0 %v2114
        %2802 = vmatprep.subr.bf16.mxu0 0
        %2803 = vmatpush1.bf16.msra.mxu0 %v2115
        %2804 = vmatprep.subr.bf16.mxu0 0
        %2805 = vmatpush1.bf16.msra.mxu0 %v2116
        %2806 = vmatprep.subr.bf16.mxu0 0
        %2807 = vmatpush1.bf16.msra.mxu0 %v2117
        %2808 = vmatprep.subr.bf16.mxu0 0
        %2809 = vmatpush1.bf16.msra.mxu0 %v2118
        %2810 = vmatprep.subr.bf16.mxu0 0
        %2811 = vmatpush1.bf16.msra.mxu0 %v2119
        %2812 = vmatprep.subr.bf16.mxu0 0
        %2813 = vmatpush1.bf16.msra.mxu0 %v2120
        %2814 = vmatprep.subr.bf16.mxu0 0
        %2815 = vmatpush1.bf16.msra.mxu0 %v2121
        %2816 = vmatprep.subr.bf16.mxu0 0
        %2817 = vmatpush1.bf16.msra.mxu0 %v2122
        %2818 = vmatprep.subr.bf16.mxu0 0
        %2819 = vmatpush1.bf16.msra.mxu0 %v2123
        %2820 = vmatprep.mubr.bf16.mxu0 %v841
        %2821 = vmatmul.mubr.bf16.gmra.mrb[0].mxu0 %v839
        %v2822 = vpop.f32.mrb[0].mxu0
        %v2823 = vadd.f32 %v2783, %v2822
        %v2824 = vpop.f32.mrb[0].mxu0
        %v2825 = vpop.f32.mrb[0].mxu0
        %v2826 = vpop.f32.mrb[0].mxu0
        %2827 = vdwg.mxu0
        %2828 = vmatprep.subr.bf16.mxu0 0
        %2829 = vmatpush1.bf16.msra.mxu0 %v2124
        %2830 = vmatprep.subr.bf16.mxu0 0
        %2831 = vmatpush1.bf16.msra.mxu0 %v2125
        %2832 = vmatprep.subr.bf16.mxu0 0
        %2833 = vmatpush1.bf16.msra.mxu0 %v2126
        %2834 = vmatprep.subr.bf16.mxu0 0
        %2835 = vmatpush1.bf16.msra.mxu0 %v2127
        %2836 = vmatprep.subr.bf16.mxu0 0
        %2837 = vmatpush1.bf16.msra.mxu0 %v2128
        %2838 = vmatprep.subr.bf16.mxu0 0
        %2839 = vmatpush1.bf16.msra.mxu0 %v2129
        %2840 = vmatprep.subr.bf16.mxu0 0
        %2841 = vmatpush1.bf16.msra.mxu0 %v2130
        %2842 = vmatprep.subr.bf16.mxu0 0
        %2843 = vmatpush1.bf16.msra.mxu0 %v2131
        %2844 = vmatprep.subr.bf16.mxu0 0
        %2845 = vmatpush1.bf16.msra.mxu0 %v2132
        %2846 = vmatprep.subr.bf16.mxu0 0
        %2847 = vmatpush1.bf16.msra.mxu0 %v2133
        %2848 = vmatprep.subr.bf16.mxu0 0
        %2849 = vmatpush1.bf16.msra.mxu0 %v2134
        %2850 = vmatprep.subr.bf16.mxu0 0
        %2851 = vmatpush1.bf16.msra.mxu0 %v2135
        %2852 = vmatprep.subr.bf16.mxu0 0
        %2853 = vmatpush1.bf16.msra.mxu0 %v2136
        %2854 = vmatprep.subr.bf16.mxu0 0
        %2855 = vmatpush1.bf16.msra.mxu0 %v2137
        %2856 = vmatprep.subr.bf16.mxu0 0
        %2857 = vmatpush1.bf16.msra.mxu0 %v2138
        %2858 = vmatprep.subr.bf16.mxu0 0
        %2859 = vmatpush1.bf16.msra.mxu0 %v2139
        %2860 = vmatprep.mubr.bf16.mxu0 %v879
        %2861 = vmatmul.mubr.bf16.gmra.mrb[0].mxu0 %v865
        %v2862 = vpop.f32.mrb[0].mxu0
        %v2863 = vadd.f32 %v2823, %v2862
        %v2864 = vpop.f32.mrb[0].mxu0
        %v2865 = vpop.f32.mrb[0].mxu0
        %v2866 = vpop.f32.mrb[0].mxu0
        %2867 = vdwg.mxu0
        %2868 = vmatprep.subr.bf16.mxu0 0
        %2869 = vmatpush1.bf16.msra.mxu0 %v2140
        %2870 = vmatprep.subr.bf16.mxu0 0
        %2871 = vmatpush1.bf16.msra.mxu0 %v2141
        %2872 = vmatprep.subr.bf16.mxu0 0
        %2873 = vmatpush1.bf16.msra.mxu0 %v2142
        %2874 = vmatprep.subr.bf16.mxu0 0
        %2875 = vmatpush1.bf16.msra.mxu0 %v2143
        %2876 = vmatprep.subr.bf16.mxu0 0
        %2877 = vmatpush1.bf16.msra.mxu0 %v2144
        %2878 = vmatprep.subr.bf16.mxu0 0
        %2879 = vmatpush1.bf16.msra.mxu0 %v2145
        %2880 = vmatprep.subr.bf16.mxu0 0
        %2881 = vmatpush1.bf16.msra.mxu0 %v2146
        %2882 = vmatprep.subr.bf16.mxu0 0
        %2883 = vmatpush1.bf16.msra.mxu0 %v2147
        %2884 = vmatprep.subr.bf16.mxu0 0
        %2885 = vmatpush1.bf16.msra.mxu0 %v2148
        %2886 = vmatprep.subr.bf16.mxu0 0
        %2887 = vmatpush1.bf16.msra.mxu0 %v2149
        %2888 = vmatprep.subr.bf16.mxu0 0
        %2889 = vmatpush1.bf16.msra.mxu0 %v2150
        %2890 = vmatprep.subr.bf16.mxu0 0
        %2891 = vmatpush1.bf16.msra.mxu0 %v2151
        %2892 = vmatprep.subr.bf16.mxu0 0
        %2893 = vmatpush1.bf16.msra.mxu0 %v2152
        %2894 = vmatprep.subr.bf16.mxu0 0
        %2895 = vmatpush1.bf16.msra.mxu0 %v2153
        %2896 = vmatprep.subr.bf16.mxu0 0
        %2897 = vmatpush1.bf16.msra.mxu0 %v2154
        %2898 = vmatprep.subr.bf16.mxu0 0
        %2899 = vmatpush1.bf16.msra.mxu0 %v2155
        %2900 = vmatprep.mubr.bf16.mxu0 %v889
        %2901 = vmatmul.mubr.bf16.gmra.mrb[0].mxu0 %v887
        %v2902 = vpop.f32.mrb[0].mxu0
        %v2903 = vadd.f32 %v2863, %v2902
        %v2904 = vpop.f32.mrb[0].mxu0
        %v2905 = vpop.f32.mrb[0].mxu0
        %v2906 = vpop.f32.mrb[0].mxu0
        %2907 = vdwg.mxu0
        %2908 = vmatprep.subr.bf16.mxu0 0
        %2909 = vmatpush1.bf16.msra.mxu0 %v2156
        %2910 = vmatprep.subr.bf16.mxu0 0
        %2911 = vmatpush1.bf16.msra.mxu0 %v2157
        %2912 = vmatprep.subr.bf16.mxu0 0
        %2913 = vmatpush1.bf16.msra.mxu0 %v2158
        %2914 = vmatprep.subr.bf16.mxu0 0
        %2915 = vmatpush1.bf16.msra.mxu0 %v2159
        %2916 = vmatprep.subr.bf16.mxu0 0
        %2917 = vmatpush1.bf16.msra.mxu0 %v2160
        %2918 = vmatprep.subr.bf16.mxu0 0
        %2919 = vmatpush1.bf16.msra.mxu0 %v2161
        %2920 = vmatprep.subr.bf16.mxu0 0
        %2921 = vmatpush1.bf16.msra.mxu0 %v2162
        %2922 = vmatprep.subr.bf16.mxu0 0
        %2923 = vmatpush1.bf16.msra.mxu0 %v2163
        %2924 = vmatprep.subr.bf16.mxu0 0
        %2925 = vmatpush1.bf16.msra.mxu0 %v2164
        %2926 = vmatprep.subr.bf16.mxu0 0
        %2927 = vmatpush1.bf16.msra.mxu0 %v2165
        %2928 = vmatprep.subr.bf16.mxu0 0
        %2929 = vmatpush1.bf16.msra.mxu0 %v2166
        %2930 = vmatprep.subr.bf16.mxu0 0
        %2931 = vmatpush1.bf16.msra.mxu0 %v2167
        %2932 = vmatprep.subr.bf16.mxu0 0
        %2933 = vmatpush1.bf16.msra.mxu0 %v2168
        %2934 = vmatprep.subr.bf16.mxu0 0
        %2935 = vmatpush1.bf16.msra.mxu0 %v2169
        %2936 = vmatprep.subr.bf16.mxu0 0
        %2937 = vmatpush1.bf16.msra.mxu0 %v2170
        %2938 = vmatprep.subr.bf16.mxu0 0
        %2939 = vmatpush1.bf16.msra.mxu0 %v2171
        %2940 = vmatprep.mubr.bf16.mxu0 %v886
        %2941 = vmatmul.mubr.bf16.gmra.mrb[0].mxu0 %v872
        %v2942 = vpop.f32.mrb[0].mxu0
        %v2943 = vadd.f32 %v2903, %v2942
        %v2944 = vpop.f32.mrb[0].mxu0
        %v2945 = vpop.f32.mrb[0].mxu0
        %v2946 = vpop.f32.mrb[0].mxu0
        %2947 = vdwg.mxu0
        %2948 = vmatprep.subr.bf16.mxu0 0
        %2949 = vmatpush1.bf16.msra.mxu0 %v2172
        %2950 = vmatprep.subr.bf16.mxu0 0
        %2951 = vmatpush1.bf16.msra.mxu0 %v2173
        %2952 = vmatprep.subr.bf16.mxu0 0
        %2953 = vmatpush1.bf16.msra.mxu0 %v2174
        %2954 = vmatprep.subr.bf16.mxu0 0
        %2955 = vmatpush1.bf16.msra.mxu0 %v2175
        %2956 = vmatprep.subr.bf16.mxu0 0
        %2957 = vmatpush1.bf16.msra.mxu0 %v2176
        %2958 = vmatprep.subr.bf16.mxu0 0
        %2959 = vmatpush1.bf16.msra.mxu0 %v2177
        %2960 = vmatprep.subr.bf16.mxu0 0
        %2961 = vmatpush1.bf16.msra.mxu0 %v2178
        %2962 = vmatprep.subr.bf16.mxu0 0
        %2963 = vmatpush1.bf16.msra.mxu0 %v2179
        %2964 = vmatprep.subr.bf16.mxu0 0
        %2965 = vmatpush1.bf16.msra.mxu0 %v2180
        %2966 = vmatprep.subr.bf16.mxu0 0
        %2967 = vmatpush1.bf16.msra.mxu0 %v2181
        %2968 = vmatprep.subr.bf16.mxu0 0
        %2969 = vmatpush1.bf16.msra.mxu0 %v2182
        %2970 = vmatprep.subr.bf16.mxu0 0
        %2971 = vmatpush1.bf16.msra.mxu0 %v2183
        %2972 = vmatprep.subr.bf16.mxu0 0
        %2973 = vmatpush1.bf16.msra.mxu0 %v2184
        %2974 = vmatprep.subr.bf16.mxu0 0
        %2975 = vmatpush1.bf16.msra.mxu0 %v2185
        %2976 = vmatprep.subr.bf16.mxu0 0
        %2977 = vmatpush1.bf16.msra.mxu0 %v2186
        %2978 = vmatprep.subr.bf16.mxu0 0
        %2979 = vmatpush1.bf16.msra.mxu0 %v2187
        %2980 = vmatprep.mubr.bf16.mxu0 %v890
        %2981 = vmatmul.mubr.bf16.gmra.mrb[0].mxu0 %v888
        %v2982 = vpop.f32.mrb[0].mxu0
        %v2983 = vadd.f32 %v2943, %v2982
        %v2984 = vpop.f32.mrb[0].mxu0
        %v2985 = vpop.f32.mrb[0].mxu0
        %v2986 = vpop.f32.mrb[0].mxu0
        %2987 = vdwg.mxu0
        %2988 = vmatprep.subr.bf16.mxu0 0
        %2989 = vmatpush1.bf16.msra.mxu0 %v2188
        %2990 = vmatprep.subr.bf16.mxu0 0
        %2991 = vmatpush1.bf16.msra.mxu0 %v2189
        %2992 = vmatprep.subr.bf16.mxu0 0
        %2993 = vmatpush1.bf16.msra.mxu0 %v2190
        %2994 = vmatprep.subr.bf16.mxu0 0
        %2995 = vmatpush1.bf16.msra.mxu0 %v2191
        %2996 = vmatprep.subr.bf16.mxu0 0
        %2997 = vmatpush1.bf16.msra.mxu0 %v2192
        %2998 = vmatprep.subr.bf16.mxu0 0
        %2999 = vmatpush1.bf16.msra.mxu0 %v2193
        %3000 = vmatprep.subr.bf16.mxu0 0
        %3001 = vmatpush1.bf16.msra.mxu0 %v2194
        %3002 = vmatprep.subr.bf16.mxu0 0
        %3003 = vmatpush1.bf16.msra.mxu0 %v2195
        %3004 = vmatprep.subr.bf16.mxu0 0
        %3005 = vmatpush1.bf16.msra.mxu0 %v2196
        %3006 = vmatprep.subr.bf16.mxu0 0
        %3007 = vmatpush1.bf16.msra.mxu0 %v2197
        %3008 = vmatprep.subr.bf16.mxu0 0
        %3009 = vmatpush1.bf16.msra.mxu0 %v2198
        %3010 = vmatprep.subr.bf16.mxu0 0
        %3011 = vmatpush1.bf16.msra.mxu0 %v2199
        %3012 = vmatprep.subr.bf16.mxu0 0
        %3013 = vmatpush1.bf16.msra.mxu0 %v2200
        %3014 = vmatprep.subr.bf16.mxu0 0
        %3015 = vmatpush1.bf16.msra.mxu0 %v2201
        %3016 = vmatprep.subr.bf16.mxu0 0
        %3017 = vmatpush1.bf16.msra.mxu0 %v2202
        %3018 = vmatprep.subr.bf16.mxu0 0
        %3019 = vmatpush1.bf16.msra.mxu0 %v2203
        %3020 = vmatprep.mubr.bf16.mxu0 %v928
        %3021 = vmatmul.mubr.bf16.gmra.mrb[0].mxu0 %v914
        %v3022 = vpop.f32.mrb[0].mxu0
        %v3023 = vadd.f32 %v2983, %v3022
        %v3024 = vpop.f32.mrb[0].mxu0
        %v3025 = vpop.f32.mrb[0].mxu0
        %v3026 = vpop.f32.mrb[0].mxu0
        %3027 = vdwg.mxu0
        %3028 = vmatprep.subr.bf16.mxu0 0
        %3029 = vmatpush1.bf16.msra.mxu0 %v2204
        %3030 = vmatprep.subr.bf16.mxu0 0
        %3031 = vmatpush1.bf16.msra.mxu0 %v2205
        %3032 = vmatprep.subr.bf16.mxu0 0
        %3033 = vmatpush1.bf16.msra.mxu0 %v2206
        %3034 = vmatprep.subr.bf16.mxu0 0
        %3035 = vmatpush1.bf16.msra.mxu0 %v2207
        %3036 = vmatprep.subr.bf16.mxu0 0
        %3037 = vmatpush1.bf16.msra.mxu0 %v2208
        %3038 = vmatprep.subr.bf16.mxu0 0
        %3039 = vmatpush1.bf16.msra.mxu0 %v2209
        %3040 = vmatprep.subr.bf16.mxu0 0
        %3041 = vmatpush1.bf16.msra.mxu0 %v2210
        %3042 = vmatprep.subr.bf16.mxu0 0
        %3043 = vmatpush1.bf16.msra.mxu0 %v2211
        %3044 = vmatprep.subr.bf16.mxu0 0
        %3045 = vmatpush1.bf16.msra.mxu0 %v2212
        %3046 = vmatprep.subr.bf16.mxu0 0
        %3047 = vmatpush1.bf16.msra.mxu0 %v2213
        %3048 = vmatprep.subr.bf16.mxu0 0
        %3049 = vmatpush1.bf16.msra.mxu0 %v2214
        %3050 = vmatprep.subr.bf16.mxu0 0
        %3051 = vmatpush1.bf16.msra.mxu0 %v2215
        %3052 = vmatprep.subr.bf16.mxu0 0
        %3053 = vmatpush1.bf16.msra.mxu0 %v2216
        %3054 = vmatprep.subr.bf16.mxu0 0
        %3055 = vmatpush1.bf16.msra.mxu0 %v2217
        %3056 = vmatprep.subr.bf16.mxu0 0
        %3057 = vmatpush1.bf16.msra.mxu0 %v2218
        %3058 = vmatprep.subr.bf16.mxu0 0
        %3059 = vmatpush1.bf16.msra.mxu0 %v2219
        %3060 = vmatprep.mubr.bf16.mxu0 %v938
        %3061 = vmatmul.mubr.bf16.gmra.mrb[0].mxu0 %v936
        %v3062 = vpop.f32.mrb[0].mxu0
        %v3063 = vadd.f32 %v3023, %v3062
        %v3064 = vpop.f32.mrb[0].mxu0
        %v3065 = vpop.f32.mrb[0].mxu0
        %v3066 = vpop.f32.mrb[0].mxu0
        %3067 = vdwg.mxu0
        %3068 = vmatprep.subr.bf16.mxu0 0
        %3069 = vmatpush1.bf16.msra.mxu0 %v2220
        %3070 = vmatprep.subr.bf16.mxu0 0
        %3071 = vmatpush1.bf16.msra.mxu0 %v2221
        %3072 = vmatprep.subr.bf16.mxu0 0
        %3073 = vmatpush1.bf16.msra.mxu0 %v2222
        %3074 = vmatprep.subr.bf16.mxu0 0
        %3075 = vmatpush1.bf16.msra.mxu0 %v2223
        %3076 = vmatprep.subr.bf16.mxu0 0
        %3077 = vmatpush1.bf16.msra.mxu0 %v2224
        %3078 = vmatprep.subr.bf16.mxu0 0
        %3079 = vmatpush1.bf16.msra.mxu0 %v2225
        %3080 = vmatprep.subr.bf16.mxu0 0
        %3081 = vmatpush1.bf16.msra.mxu0 %v2226
        %3082 = vmatprep.subr.bf16.mxu0 0
        %3083 = vmatpush1.bf16.msra.mxu0 %v2227
        %3084 = vmatprep.subr.bf16.mxu0 0
        %3085 = vmatpush1.bf16.msra.mxu0 %v2228
        %3086 = vmatprep.subr.bf16.mxu0 0
        %3087 = vmatpush1.bf16.msra.mxu0 %v2229
        %3088 = vmatprep.subr.bf16.mxu0 0
        %3089 = vmatpush1.bf16.msra.mxu0 %v2230
        %3090 = vmatprep.subr.bf16.mxu0 0
        %3091 = vmatpush1.bf16.msra.mxu0 %v2231
        %3092 = vmatprep.subr.bf16.mxu0 0
        %3093 = vmatpush1.bf16.msra.mxu0 %v2232
        %3094 = vmatprep.subr.bf16.mxu0 0
        %3095 = vmatpush1.bf16.msra.mxu0 %v2233
        %3096 = vmatprep.subr.bf16.mxu0 0
        %3097 = vmatpush1.bf16.msra.mxu0 %v2234
        %3098 = vmatprep.subr.bf16.mxu0 0
        %3099 = vmatpush1.bf16.msra.mxu0 %v2235
        %3100 = vmatprep.mubr.bf16.mxu0 %v935
        %3101 = vmatmul.mubr.bf16.gmra.mrb[0].mxu0 %v921
        %v3102 = vpop.f32.mrb[0].mxu0
        %v3103 = vadd.f32 %v3063, %v3102
        %v3104 = vpop.f32.mrb[0].mxu0
        %v3105 = vpop.f32.mrb[0].mxu0
        %v3106 = vpop.f32.mrb[0].mxu0
        %3107 = vdwg.mxu0
        %3108 = vmatprep.subr.bf16.mxu0 0
        %3109 = vmatpush1.bf16.msra.mxu0 %v2236
        %3110 = vmatprep.subr.bf16.mxu0 0
        %3111 = vmatpush1.bf16.msra.mxu0 %v2237
        %3112 = vmatprep.subr.bf16.mxu0 0
        %3113 = vmatpush1.bf16.msra.mxu0 %v2238
        %3114 = vmatprep.subr.bf16.mxu0 0
        %3115 = vmatpush1.bf16.msra.mxu0 %v2239
        %3116 = vmatprep.subr.bf16.mxu0 0
        %3117 = vmatpush1.bf16.msra.mxu0 %v2240
        %3118 = vmatprep.subr.bf16.mxu0 0
        %3119 = vmatpush1.bf16.msra.mxu0 %v2241
        %3120 = vmatprep.subr.bf16.mxu0 0
        %3121 = vmatpush1.bf16.msra.mxu0 %v2242
        %3122 = vmatprep.subr.bf16.mxu0 0
        %3123 = vmatpush1.bf16.msra.mxu0 %v2243
        %3124 = vmatprep.subr.bf16.mxu0 0
        %3125 = vmatpush1.bf16.msra.mxu0 %v2244
        %3126 = vmatprep.subr.bf16.mxu0 0
        %3127 = vmatpush1.bf16.msra.mxu0 %v2245
        %3128 = vmatprep.subr.bf16.mxu0 0
        %3129 = vmatpush1.bf16.msra.mxu0 %v2246
        %3130 = vmatprep.subr.bf16.mxu0 0
        %3131 = vmatpush1.bf16.msra.mxu0 %v2247
        %3132 = vmatprep.subr.bf16.mxu0 0
        %3133 = vmatpush1.bf16.msra.mxu0 %v2248
        %3134 = vmatprep.subr.bf16.mxu0 0
        %3135 = vmatpush1.bf16.msra.mxu0 %v2249
        %3136 = vmatprep.subr.bf16.mxu0 0
        %3137 = vmatpush1.bf16.msra.mxu0 %v2250
        %3138 = vmatprep.subr.bf16.mxu0 0
        %3139 = vmatpush1.bf16.msra.mxu0 %v2251
        %3140 = vmatprep.mubr.bf16.mxu0 %v939
        %3141 = vmatmul.mubr.bf16.gmra.mrb[0].mxu0 %v937
        %v3142 = vpop.f32.mrb[0].mxu0
        %v3143 = vadd.f32 %v3103, %v3142
        %v3144 = vpop.f32.mrb[0].mxu0
        %v3145 = vpop.f32.mrb[0].mxu0
        %v3146 = vpop.f32.mrb[0].mxu0
        %3147 = vdwg.mxu0
        %v3148 = vadd.f32 %v223, %v3143
        %3149 = vst [vmem:[#allocation7] sm:$0x3] %v3148
        // Predicated region
        $region45: #{cnn_forward.3} parent=31 // pred_check
          %p3150 = pneg %p105
        $region46: #{cnn_forward.3} parent=31 // pred_check_branch
          %3152 = sbr.rel (%p3150) target = $region48
        $region47: #{cnn_forward.3} parent=31 // pred_region
          %s3154 = ssub.s32 32, 32
          %3155 = vsyncadd [#allocation4], %s3154
          %s3157 = sshll.u32 [#allocation7], 4
          %s3158 = int_to_ptr.vmem [resolvable:$true] %s3157
          %3160 = dma.vmem_to_hbm [thread:$0]  %s3158, 32, %s3, [#allocation4]
        $region48: #{cnn_forward.3} parent=31 // pred_fallthru
          _
        // Predicated region
        $region49: #{cnn_forward.3} parent=31 // pred_check
          %p3161 = pneg %p105
        $region50: #{cnn_forward.3} parent=31 // pred_check_branch
          %3163 = sbr.rel (%p3161) target = $region52
        $region51: #{cnn_forward.3} parent=31 // pred_region
          %3164 = dma.done [#allocation4], 32
        $region52: #{cnn_forward.3} parent=31 // pred_fallthru
          _
      $region32: #{cnn_forward.3} parent=5 // pred_fallthru
        _
      %p3165 = scmp.le.s32.totalorder 2, %s14
      // Predicated region
      $region53: #{cnn_forward.3} parent=5 // pred_check
        %p3166 = pneg %p3165
      $region54: #{cnn_forward.3} parent=5 // pred_check_branch
        %3168 = sbr.rel (%p3166) target = $region56
      $region55: #{cnn_forward.3} parent=5 // pred_region
        %s3169 = ssub.s32 %s14, 2
      $region56: #{cnn_forward.3} parent=5 // pred_fallthru
        _
    $region6: #{cnn_forward.3} parent=1 // loop_footer
      %s18 = sadd.s32 1, %s14
    $region7: #{cnn_forward.3} parent=1 // loop_footer_branch
      %13 = sbr.rel target = $region3
    $region8: #{cnn_forward.3} parent=1 // loop_exit
      _
    %3170 = vsyncpa [#allocation3], 1
    %s3171 = scalar_lea.sflag [#allocation3], 1
    %3172 = vsyncpa %s3171, 1
    %3173 = vsyncpa [#allocation6], 1
    %3174 = vsyncpa [#allocation4], 1
    %s3175 = scalar_lea.sflag [#allocation4], 1
    %3176 = vsyncpa %s3175, 1

// kernel: cnn_forward.2
$region0: #{cnn_forward.2}
  #allocation0 [shape = 'u32[]', space=smem, size = 0x4, offset = 0x4, fixed_abs, tag = 'smem constant byte address 0x4 - core index']
  #allocation1 [shape = 'u32[144,128]{1,0:T(1,128)}', space=vmem, size = 0x12000, scoped, tag = 'internal scratch']
  #allocation2 [shape = 'f32[2,18,18,64]{3,2,1,0:T(8,128)}', space=vmem, size = 0x6c000, scoped, tag = 'scratch operand']
  %s0 = inlined_call_operand.vmem [shape: f32[2,18,18,8], index: 0, kind: input, shape index: {}]
  %s1 = inlined_call_operand.vmem [shape: f32[72,64], index: 1, kind: input, shape index: {}]
  %s2 = inlined_call_operand.hbm [shape: f32[1,64], index: 2, kind: input, shape index: {}]
  %s3 = inlined_call_operand.vmem [shape: f32[576,64], index: 3, kind: input, shape index: {}]
  %s4 = inlined_call_operand.hbm [shape: f32[1,64], index: 4, kind: input, shape index: {}]
  %s5 = inlined_call_operand.vmem [shape: f32[576,64], index: 5, kind: input, shape index: {}]
  %s6 = inlined_call_operand.hbm [shape: f32[1,64], index: 6, kind: input, shape index: {}]
  %s7 = inlined_call_operand.vmem [shape: bf16[512,64], index: 7, kind: output, shape index: {}]
  %s8 = sld [smem:[#allocation0]]
  $region50: #{cnn_forward.2} parent=0
    _
  %s10 = ssub.s32 1, %s8
  %s11 = scalar_select 0, %s10, %s8
  $region1: #{cnn_forward.2} parent=0
    #allocation3 [shape = 'u8[512]{0}', space=vmem, size = 0x400, scoped, tag = 'input window, operand 2, single buffered']
    #allocation4 [shape = 's32[1]{0}', space=sflag, size = 0x4, scoped, tag = 'scoped memory for cnn_forward.2']
    #allocation5 [shape = 'u8[512]{0}', space=vmem, size = 0x400, scoped, tag = 'input window, operand 4, single buffered']
    #allocation6 [shape = 's32[1]{0}', space=sflag, size = 0x4, scoped, tag = 'scoped memory for cnn_forward.2']
    #allocation7 [shape = 'u8[512]{0}', space=vmem, size = 0x400, scoped, tag = 'input window, operand 6, single buffered']
    %12 = vsyncpa [#allocation4], 0
    %13 = vsyncpa [#allocation6], 0
    // Predicated region
    $region2: #{cnn_forward.2} parent=1 // pred_check
      _
    $region3: #{cnn_forward.2} parent=1 // pred_check_branch
      %15 = sbr.rel (0) target = $region5
    $region4: #{cnn_forward.2} parent=1 // pred_region
      _
    $region5: #{cnn_forward.2} parent=1 // pred_fallthru
      _
    // Predicated region
    $region6: #{cnn_forward.2} parent=1 // pred_check
      _
    $region7: #{cnn_forward.2} parent=1 // pred_check_branch
      %17 = sbr.rel (0) target = $region9
    $region8: #{cnn_forward.2} parent=1 // pred_region
      _
    $region9: #{cnn_forward.2} parent=1 // pred_fallthru
      _
    // Predicated region
    $region10: #{cnn_forward.2} parent=1 // pred_check
      _
    $region11: #{cnn_forward.2} parent=1 // pred_check_branch
      %19 = sbr.rel (0) target = $region13
    $region12: #{cnn_forward.2} parent=1 // pred_region
      %s21 = ssub.s32 16, 16
      %22 = vsyncadd [#allocation4], %s21
      %s24 = sshll.u32 [#allocation3], 4
      %s25 = int_to_ptr.vmem [resolvable:$true] %s24
      %27 = dma.hbm_to_vmem [thread:$0]  %s2, 16, %s25, [#allocation4]
    $region13: #{cnn_forward.2} parent=1 // pred_fallthru
      _
    // Predicated region
    $region14: #{cnn_forward.2} parent=1 // pred_check
      _
    $region15: #{cnn_forward.2} parent=1 // pred_check_branch
      %29 = sbr.rel (0) target = $region17
    $region16: #{cnn_forward.2} parent=1 // pred_region
      _
    $region17: #{cnn_forward.2} parent=1 // pred_fallthru
      _
    // Predicated region
    $region18: #{cnn_forward.2} parent=1 // pred_check
      _
    $region19: #{cnn_forward.2} parent=1 // pred_check_branch
      %31 = sbr.rel (0) target = $region21
    $region20: #{cnn_forward.2} parent=1 // pred_region
      %s33 = ssub.s32 16, 16
      %34 = vsyncadd [#allocation6], %s33
      %s36 = sshll.u32 [#allocation5], 4
      %s37 = int_to_ptr.vmem [resolvable:$true] %s36
      %39 = dma.hbm_to_vmem [thread:$0]  %s4, 16, %s37, [#allocation6]
    $region21: #{cnn_forward.2} parent=1 // pred_fallthru
      _
    // Predicated region
    $region22: #{cnn_forward.2} parent=1 // pred_check
      _
    $region23: #{cnn_forward.2} parent=1 // pred_check_branch
      %41 = sbr.rel (0) target = $region25
    $region24: #{cnn_forward.2} parent=1 // pred_region
      _
    $region25: #{cnn_forward.2} parent=1 // pred_fallthru
      _
    // Predicated region
    $region26: #{cnn_forward.2} parent=1 // pred_check
      _
    $region27: #{cnn_forward.2} parent=1 // pred_check_branch
      %43 = sbr.rel (0) target = $region29
    $region28: #{cnn_forward.2} parent=1 // pred_region
      %s45 = ssub.s32 16, 16
      %46 = vsyncadd [#allocation6], %s45
      %s48 = sshll.u32 [#allocation7], 4
      %s49 = int_to_ptr.vmem [resolvable:$true] %s48
      %51 = dma.hbm_to_vmem [thread:$0]  %s6, 16, %s49, [#allocation6]
    $region29: #{cnn_forward.2} parent=1 // pred_fallthru
      _
    // Predicated region
    $region30: #{cnn_forward.2} parent=1 // pred_check
      _
    $region31: #{cnn_forward.2} parent=1 // pred_check_branch
      %53 = sbr.rel (0) target = $region33
    $region32: #{cnn_forward.2} parent=1 // pred_region
      %54 = dma.done [#allocation4], 16
    $region33: #{cnn_forward.2} parent=1 // pred_fallthru
      _
    // Predicated region
    $region34: #{cnn_forward.2} parent=1 // pred_check
      _
    $region35: #{cnn_forward.2} parent=1 // pred_check_branch
      %56 = sbr.rel (0) target = $region37
    $region36: #{cnn_forward.2} parent=1 // pred_region
      %57 = dma.done [#allocation6], 16
    $region37: #{cnn_forward.2} parent=1 // pred_fallthru
      _
    // Predicated region
    $region38: #{cnn_forward.2} parent=1 // pred_check
      _
    $region39: #{cnn_forward.2} parent=1 // pred_check_branch
      %59 = sbr.rel (0) target = $region41
    $region40: #{cnn_forward.2} parent=1 // pred_region
      %60 = dma.done [#allocation6], 16
    $region41: #{cnn_forward.2} parent=1 // pred_fallthru
      _
    %v61 = vld [vmem:[%s0] sm:$0xff]
    %v62 = vld [vmem:[%s0 + $0x8] sm:$0xff]
    %v63 = vld [vmem:[%s0 + $0x10] sm:$0x3]
    %v64 = vld [vmem:[%s0 + $0x18] sm:$0xff]
    %v65 = vld [vmem:[%s0 + $0x20] sm:$0xff]
    %v66 = vld [vmem:[%s0 + $0x28] sm:$0x3]
    %v67 = vld [vmem:[%s0 + $0x30] sm:$0xff]
    %v68 = vld [vmem:[%s0 + $0x38] sm:$0xff]
    %v69 = vld [vmem:[%s0 + $0x40] sm:$0x3]
    %v70 = vld [vmem:[%s0 + $0x48] sm:$0xff]
    %v71 = vld [vmem:[%s0 + $0x50] sm:$0xff]
    %v72 = vld [vmem:[%s0 + $0x58] sm:$0x3]
    %v73 = vld [vmem:[%s0 + $0x60] sm:$0xff]
    %v74 = vld [vmem:[%s0 + $0x68] sm:$0xff]
    %v75 = vld [vmem:[%s0 + $0x70] sm:$0x3]
    %v76 = vld [vmem:[%s0 + $0x78] sm:$0xff]
    %v77 = vld [vmem:[%s0 + $0x80] sm:$0xff]
    %v78 = vld [vmem:[%s0 + $0x88] sm:$0x3]
    %v79 = vld [vmem:[%s0 + $0x90] sm:$0xff]
    %v80 = vld [vmem:[%s0 + $0x98] sm:$0xff]
    %v81 = vld [vmem:[%s0 + $0xa0] sm:$0x3]
    %v82 = vld [vmem:[%s0 + $0xa8] sm:$0xff]
    %v83 = vld [vmem:[%s0 + $0xb0] sm:$0xff]
    %v84 = vld [vmem:[%s0 + $0xb8] sm:$0x3]
    %v85 = vld [vmem:[%s0 + $0xc0] sm:$0xff]
    %v86 = vld [vmem:[%s0 + $0xc8] sm:$0xff]
    %v87 = vld [vmem:[%s0 + $0xd0] sm:$0x3]
    %v88 = vld [vmem:[%s0 + $0xd8] sm:$0xff]
    %v89 = vld [vmem:[%s0 + $0xe0] sm:$0xff]
    %v90 = vld [vmem:[%s0 + $0xe8] sm:$0x3]
    %v91 = vld [vmem:[%s0 + $0xf0] sm:$0xff]
    %v92 = vld [vmem:[%s0 + $0xf8] sm:$0xff]
    %v93 = vld [vmem:[%s0 + $0x100] sm:$0x3]
    %v94 = vld [vmem:[%s0 + $0x108] sm:$0xff]
    %v95 = vld [vmem:[%s0 + $0x110] sm:$0xff]
    %v96 = vld [vmem:[%s0 + $0x118] sm:$0x3]
    %v97 = vld [vmem:[%s0 + $0x120] sm:$0xff]
    %v98 = vld [vmem:[%s0 + $0x128] sm:$0xff]
    %v99 = vld [vmem:[%s0 + $0x130] sm:$0x3]
    %v100 = vld [vmem:[%s0 + $0x138] sm:$0xff]
    %v101 = vld [vmem:[%s0 + $0x140] sm:$0xff]
    %v102 = vld [vmem:[%s0 + $0x148] sm:$0x3]
    %v103 = vld [vmem:[%s0 + $0x150] sm:$0xff]
    %v104 = vld [vmem:[%s0 + $0x158] sm:$0xff]
    %v105 = vld [vmem:[%s0 + $0x160] sm:$0x3]
    %v106 = vld [vmem:[%s0 + $0x168] sm:$0xff]
    %v107 = vld [vmem:[%s0 + $0x170] sm:$0xff]
    %v108 = vld [vmem:[%s0 + $0x178] sm:$0x3]
    %v109 = vld [vmem:[%s0 + $0x180] sm:$0xff]
    %v110 = vld [vmem:[%s0 + $0x188] sm:$0xff]
    %v111 = vld [vmem:[%s0 + $0x190] sm:$0x3]
    %v112 = vld [vmem:[%s0 + $0x198] sm:$0xff]
    %v113 = vld [vmem:[%s0 + $0x1a0] sm:$0xff]
    %v114 = vld [vmem:[%s0 + $0x1a8] sm:$0x3]
    %v115 = vld [vmem:[%s0 + $0x1b0] sm:$0xff]
    %v116 = vld [vmem:[%s0 + $0x1b8] sm:$0xff]
    %v117 = vld [vmem:[%s0 + $0x1c0] sm:$0x3]
    %v118 = vld [vmem:[%s0 + $0x1c8] sm:$0xff]
    %v119 = vld [vmem:[%s0 + $0x1d0] sm:$0xff]
    %v120 = vld [vmem:[%s0 + $0x1d8] sm:$0x3]
    %v121 = vld [vmem:[%s0 + $0x1e0] sm:$0xff]
    %v122 = vld [vmem:[%s0 + $0x1e8] sm:$0xff]
    %v123 = vld [vmem:[%s0 + $0x1f0] sm:$0x3]
    %v124 = vld [vmem:[%s0 + $0x1f8] sm:$0xff]
    %v125 = vld [vmem:[%s0 + $0x200] sm:$0xff]
    %v126 = vld [vmem:[%s0 + $0x208] sm:$0x3]
    %v127 = vld [vmem:[%s0 + $0x210] sm:$0xff]
    %v128 = vld [vmem:[%s0 + $0x218] sm:$0xff]
    %v129 = vld [vmem:[%s0 + $0x220] sm:$0x3]
    %v130 = vld [vmem:[%s0 + $0x228] sm:$0xff]
    %v131 = vld [vmem:[%s0 + $0x230] sm:$0xff]
    %v132 = vld [vmem:[%s0 + $0x238] sm:$0x3]
    %v133 = vld [vmem:[%s0 + $0x240] sm:$0xff]
    %v134 = vld [vmem:[%s0 + $0x248] sm:$0xff]
    %v135 = vld [vmem:[%s0 + $0x250] sm:$0x3]
    %v136 = vld [vmem:[%s0 + $0x258] sm:$0xff]
    %v137 = vld [vmem:[%s0 + $0x260] sm:$0xff]
    %v138 = vld [vmem:[%s0 + $0x268] sm:$0x3]
    %v139 = vld [vmem:[%s0 + $0x270] sm:$0xff]
    %v140 = vld [vmem:[%s0 + $0x278] sm:$0xff]
    %v141 = vld [vmem:[%s0 + $0x280] sm:$0x3]
    %v142 = vld [vmem:[%s0 + $0x288] sm:$0xff]
    %v143 = vld [vmem:[%s0 + $0x290] sm:$0xff]
    %v144 = vld [vmem:[%s0 + $0x298] sm:$0x3]
    %v145 = vld [vmem:[%s0 + $0x2a0] sm:$0xff]
    %v146 = vld [vmem:[%s0 + $0x2a8] sm:$0xff]
    %v147 = vld [vmem:[%s0 + $0x2b0] sm:$0x3]
    %v148 = vld [vmem:[%s0 + $0x2b8] sm:$0xff]
    %v149 = vld [vmem:[%s0 + $0x2c0] sm:$0xff]
    %v150 = vld [vmem:[%s0 + $0x2c8] sm:$0x3]
    %v151 = vld [vmem:[%s0 + $0x2d0] sm:$0xff]
    %v152 = vld [vmem:[%s0 + $0x2d8] sm:$0xff]
    %v153 = vld [vmem:[%s0 + $0x2e0] sm:$0x3]
    %v154 = vld [vmem:[%s0 + $0x2e8] sm:$0xff]
    %v155 = vld [vmem:[%s0 + $0x2f0] sm:$0xff]
    %v156 = vld [vmem:[%s0 + $0x2f8] sm:$0x3]
    %v157 = vld [vmem:[%s0 + $0x300] sm:$0xff]
    %v158 = vld [vmem:[%s0 + $0x308] sm:$0xff]
    %v159 = vld [vmem:[%s0 + $0x310] sm:$0x3]
    %v160 = vld [vmem:[%s0 + $0x318] sm:$0xff]
    %v161 = vld [vmem:[%s0 + $0x320] sm:$0xff]
    %v162 = vld [vmem:[%s0 + $0x328] sm:$0x3]
    %v163 = vld [vmem:[%s0 + $0x330] sm:$0xff]
    %v164 = vld [vmem:[%s0 + $0x338] sm:$0xff]
    %v165 = vld [vmem:[%s0 + $0x340] sm:$0x3]
    %v166 = vld [vmem:[%s0 + $0x348] sm:$0xff]
    %v167 = vld [vmem:[%s0 + $0x350] sm:$0xff]
    %v168 = vld [vmem:[%s0 + $0x358] sm:$0x3]
    %v169 = vld [vmem:[%s1] sm:$0xff]
    %v170 = vld [vmem:[%s1 + $0x8] sm:$0xff]
    %v171 = vld [vmem:[%s1 + $0x10] sm:$0xff]
    %v172 = vld [vmem:[%s1 + $0x18] sm:$0xff]
    %v173 = vld [vmem:[%s1 + $0x20] sm:$0xff]
    %v174 = vld [vmem:[%s1 + $0x28] sm:$0xff]
    %v175 = vld [vmem:[%s1 + $0x30] sm:$0xff]
    %v176 = vld [vmem:[%s1 + $0x38] sm:$0xff]
    %v177 = vld [vmem:[%s1 + $0x40] sm:$0xff]
    %v178 = vld [vmem:[#allocation3] sm:$0x1]
    %vm275 = vcmask 1046528
    %v276 = vrot.slane %v61, 1
    %v277 = vrot.slane %v62, 1
    %v278 = vsel %vm275, %v276, %v277
    %v279 = vrot.slane %v63, 1
    %v280 = vsel %vm275, %v277, %v279
    %v281 = vrot.slane %v64, 1
    %v282 = vrot.slane %v65, 1
    %v283 = vsel %vm275, %v281, %v282
    %v284 = vrot.slane %v66, 1
    %v285 = vsel %vm275, %v282, %v284
    %v286 = vrot.slane %v67, 1
    %v287 = vrot.slane %v68, 1
    %v288 = vsel %vm275, %v286, %v287
    %v289 = vrot.slane %v69, 1
    %v290 = vsel %vm275, %v287, %v289
    %v291 = vrot.slane %v70, 1
    %v292 = vrot.slane %v71, 1
    %v293 = vsel %vm275, %v291, %v292
    %v294 = vrot.slane %v72, 1
    %v295 = vsel %vm275, %v292, %v294
    %v296 = vrot.slane %v73, 1
    %v297 = vrot.slane %v74, 1
    %v298 = vsel %vm275, %v296, %v297
    %v299 = vrot.slane %v75, 1
    %v300 = vsel %vm275, %v297, %v299
    %v301 = vrot.slane %v76, 1
    %v302 = vrot.slane %v77, 1
    %v303 = vsel %vm275, %v301, %v302
    %v304 = vrot.slane %v78, 1
    %v305 = vsel %vm275, %v302, %v304
    %v306 = vrot.slane %v79, 1
    %v307 = vrot.slane %v80, 1
    %v308 = vsel %vm275, %v306, %v307
    %v309 = vrot.slane %v81, 1
    %v310 = vsel %vm275, %v307, %v309
    %v311 = vrot.slane %v82, 1
    %v312 = vrot.slane %v83, 1
    %v313 = vsel %vm275, %v311, %v312
    %v314 = vrot.slane %v84, 1
    %v315 = vsel %vm275, %v312, %v314
    %v316 = vrot.slane %v85, 1
    %v317 = vrot.slane %v86, 1
    %v318 = vsel %vm275, %v316, %v317
    %v319 = vrot.slane %v87, 1
    %v320 = vsel %vm275, %v317, %v319
    %v321 = vrot.slane %v88, 1
    %v322 = vrot.slane %v89, 1
    %v323 = vsel %vm275, %v321, %v322
    %v324 = vrot.slane %v90, 1
    %v325 = vsel %vm275, %v322, %v324
    %v326 = vrot.slane %v91, 1
    %v327 = vrot.slane %v92, 1
    %v328 = vsel %vm275, %v326, %v327
    %v329 = vrot.slane %v93, 1
    %v330 = vsel %vm275, %v327, %v329
    %v331 = vrot.slane %v94, 1
    %v332 = vrot.slane %v95, 1
    %v333 = vsel %vm275, %v331, %v332
    %v334 = vrot.slane %v96, 1
    %v335 = vsel %vm275, %v332, %v334
    %v336 = vrot.slane %v97, 1
    %v337 = vrot.slane %v98, 1
    %v338 = vsel %vm275, %v336, %v337
    %v339 = vrot.slane %v99, 1
    %v340 = vsel %vm275, %v337, %v339
    %v341 = vrot.slane %v100, 1
    %v342 = vrot.slane %v101, 1
    %v343 = vsel %vm275, %v341, %v342
    %v344 = vrot.slane %v102, 1
    %v345 = vsel %vm275, %v342, %v344
    %v346 = vrot.slane %v103, 1
    %v347 = vrot.slane %v104, 1
    %v348 = vsel %vm275, %v346, %v347
    %v349 = vrot.slane %v105, 1
    %v350 = vsel %vm275, %v347, %v349
    %v351 = vrot.slane %v106, 1
    %v352 = vrot.slane %v107, 1
    %v353 = vsel %vm275, %v351, %v352
    %v354 = vrot.slane %v108, 1
    %v355 = vsel %vm275, %v352, %v354
    %v356 = vrot.slane %v115, 1
    %v357 = vrot.slane %v116, 1
    %v358 = vsel %vm275, %v356, %v357
    %v359 = vrot.slane %v117, 1
    %v360 = vsel %vm275, %v357, %v359
    %v361 = vrot.slane %v118, 1
    %v362 = vrot.slane %v119, 1
    %v363 = vsel %vm275, %v361, %v362
    %v364 = vrot.slane %v120, 1
    %v365 = vsel %vm275, %v362, %v364
    %v366 = vrot.slane %v121, 1
    %v367 = vrot.slane %v122, 1
    %v368 = vsel %vm275, %v366, %v367
    %v369 = vrot.slane %v123, 1
    %v370 = vsel %vm275, %v367, %v369
    %v371 = vrot.slane %v124, 1
    %v372 = vrot.slane %v125, 1
    %v373 = vsel %vm275, %v371, %v372
    %v374 = vrot.slane %v126, 1
    %v375 = vsel %vm275, %v372, %v374
    %v376 = vrot.slane %v127, 1
    %v377 = vrot.slane %v128, 1
    %v378 = vsel %vm275, %v376, %v377
    %v379 = vrot.slane %v129, 1
    %v380 = vsel %vm275, %v377, %v379
    %v381 = vrot.slane %v130, 1
    %v382 = vrot.slane %v131, 1
    %v383 = vsel %vm275, %v381, %v382
    %v384 = vrot.slane %v132, 1
    %v385 = vsel %vm275, %v382, %v384
    %v386 = vrot.slane %v133, 1
    %v387 = vrot.slane %v134, 1
    %v388 = vsel %vm275, %v386, %v387
    %v389 = vrot.slane %v135, 1
    %v390 = vsel %vm275, %v387, %v389
    %v391 = vrot.slane %v136, 1
    %v392 = vrot.slane %v137, 1
    %v393 = vsel %vm275, %v391, %v392
    %v394 = vrot.slane %v138, 1
    %v395 = vsel %vm275, %v392, %v394
    %v396 = vrot.slane %v139, 1
    %v397 = vrot.slane %v140, 1
    %v398 = vsel %vm275, %v396, %v397
    %v399 = vrot.slane %v141, 1
    %v400 = vsel %vm275, %v397, %v399
    %v401 = vrot.slane %v142, 1
    %v402 = vrot.slane %v143, 1
    %v403 = vsel %vm275, %v401, %v402
    %v404 = vrot.slane %v144, 1
    %v405 = vsel %vm275, %v402, %v404
    %v406 = vrot.slane %v145, 1
    %v407 = vrot.slane %v146, 1
    %v408 = vsel %vm275, %v406, %v407
    %v409 = vrot.slane %v147, 1
    %v410 = vsel %vm275, %v407, %v409
    %v411 = vrot.slane %v148, 1
    %v412 = vrot.slane %v149, 1
    %v413 = vsel %vm275, %v411, %v412
    %v414 = vrot.slane %v150, 1
    %v415 = vsel %vm275, %v412, %v414
    %v416 = vrot.slane %v151, 1
    %v417 = vrot.slane %v152, 1
    %v418 = vsel %vm275, %v416, %v417
    %v419 = vrot.slane %v153, 1
    %v420 = vsel %vm275, %v417, %v419
    %v421 = vrot.slane %v154, 1
    %v422 = vrot.slane %v155, 1
    %v423 = vsel %vm275, %v421, %v422
    %v424 = vrot.slane %v156, 1
    %v425 = vsel %vm275, %v422, %v424
    %v426 = vrot.slane %v157, 1
    %v427 = vrot.slane %v158, 1
    %v428 = vsel %vm275, %v426, %v427
    %v429 = vrot.slane %v159, 1
    %v430 = vsel %vm275, %v427, %v429
    %v431 = vrot.slane %v160, 1
    %v432 = vrot.slane %v161, 1
    %v433 = vsel %vm275, %v431, %v432
    %v434 = vrot.slane %v162, 1
    %v435 = vsel %vm275, %v432, %v434
    %vm436 = vcmask 1045504
    %v437 = vrot.slane %v61, 2
    %v438 = vrot.slane %v62, 2
    %v439 = vsel %vm436, %v437, %v438
    %v440 = vrot.slane %v63, 2
    %v441 = vsel %vm436, %v438, %v440
    %v442 = vrot.slane %v64, 2
    %v443 = vrot.slane %v65, 2
    %v444 = vsel %vm436, %v442, %v443
    %v445 = vrot.slane %v66, 2
    %v446 = vsel %vm436, %v443, %v445
    %v447 = vrot.slane %v67, 2
    %v448 = vrot.slane %v68, 2
    %v449 = vsel %vm436, %v447, %v448
    %v450 = vrot.slane %v69, 2
    %v451 = vsel %vm436, %v448, %v450
    %v452 = vrot.slane %v70, 2
    %v453 = vrot.slane %v71, 2
    %v454 = vsel %vm436, %v452, %v453
    %v455 = vrot.slane %v72, 2
    %v456 = vsel %vm436, %v453, %v455
    %v457 = vrot.slane %v73, 2
    %v458 = vrot.slane %v74, 2
    %v459 = vsel %vm436, %v457, %v458
    %v460 = vrot.slane %v75, 2
    %v461 = vsel %vm436, %v458, %v460
    %v462 = vrot.slane %v76, 2
    %v463 = vrot.slane %v77, 2
    %v464 = vsel %vm436, %v462, %v463
    %v465 = vrot.slane %v78, 2
    %v466 = vsel %vm436, %v463, %v465
    %v467 = vrot.slane %v79, 2
    %v468 = vrot.slane %v80, 2
    %v469 = vsel %vm436, %v467, %v468
    %v470 = vrot.slane %v81, 2
    %v471 = vsel %vm436, %v468, %v470
    %v472 = vrot.slane %v82, 2
    %v473 = vrot.slane %v83, 2
    %v474 = vsel %vm436, %v472, %v473
    %v475 = vrot.slane %v84, 2
    %v476 = vsel %vm436, %v473, %v475
    %v477 = vrot.slane %v85, 2
    %v478 = vrot.slane %v86, 2
    %v479 = vsel %vm436, %v477, %v478
    %v480 = vrot.slane %v87, 2
    %v481 = vsel %vm436, %v478, %v480
    %v482 = vrot.slane %v88, 2
    %v483 = vrot.slane %v89, 2
    %v484 = vsel %vm436, %v482, %v483
    %v485 = vrot.slane %v90, 2
    %v486 = vsel %vm436, %v483, %v485
    %v487 = vrot.slane %v91, 2
    %v488 = vrot.slane %v92, 2
    %v489 = vsel %vm436, %v487, %v488
    %v490 = vrot.slane %v93, 2
    %v491 = vsel %vm436, %v488, %v490
    %v492 = vrot.slane %v94, 2
    %v493 = vrot.slane %v95, 2
    %v494 = vsel %vm436, %v492, %v493
    %v495 = vrot.slane %v96, 2
    %v496 = vsel %vm436, %v493, %v495
    %v497 = vrot.slane %v97, 2
    %v498 = vrot.slane %v98, 2
    %v499 = vsel %vm436, %v497, %v498
    %v500 = vrot.slane %v99, 2
    %v501 = vsel %vm436, %v498, %v500
    %v502 = vrot.slane %v100, 2
    %v503 = vrot.slane %v101, 2
    %v504 = vsel %vm436, %v502, %v503
    %v505 = vrot.slane %v102, 2
    %v506 = vsel %vm436, %v503, %v505
    %v507 = vrot.slane %v103, 2
    %v508 = vrot.slane %v104, 2
    %v509 = vsel %vm436, %v507, %v508
    %v510 = vrot.slane %v105, 2
    %v511 = vsel %vm436, %v508, %v510
    %v512 = vrot.slane %v106, 2
    %v513 = vrot.slane %v107, 2
    %v514 = vsel %vm436, %v512, %v513
    %v515 = vrot.slane %v108, 2
    %v516 = vsel %vm436, %v513, %v515
    %v517 = vrot.slane %v115, 2
    %v518 = vrot.slane %v116, 2
    %v519 = vsel %vm436, %v517, %v518
    %v520 = vrot.slane %v117, 2
    %v521 = vsel %vm436, %v518, %v520
    %v522 = vrot.slane %v118, 2
    %v523 = vrot.slane %v119, 2
    %v524 = vsel %vm436, %v522, %v523
    %v525 = vrot.slane %v120, 2
    %v526 = vsel %vm436, %v523, %v525
    %v527 = vrot.slane %v121, 2
    %v528 = vrot.slane %v122, 2
    %v529 = vsel %vm436, %v527, %v528
    %v530 = vrot.slane %v123, 2
    %v531 = vsel %vm436, %v528, %v530
    %v532 = vrot.slane %v124, 2
    %v533 = vrot.slane %v125, 2
    %v534 = vsel %vm436, %v532, %v533
    %v535 = vrot.slane %v126, 2
    %v536 = vsel %vm436, %v533, %v535
    %v537 = vrot.slane %v127, 2
    %v538 = vrot.slane %v128, 2
    %v539 = vsel %vm436, %v537, %v538
    %v540 = vrot.slane %v129, 2
    %v541 = vsel %vm436, %v538, %v540
    %v542 = vrot.slane %v130, 2
    %v543 = vrot.slane %v131, 2
    %v544 = vsel %vm436, %v542, %v543
    %v545 = vrot.slane %v132, 2
    %v546 = vsel %vm436, %v543, %v545
    %v547 = vrot.slane %v133, 2
    %v548 = vrot.slane %v134, 2
    %v549 = vsel %vm436, %v547, %v548
    %v550 = vrot.slane %v135, 2
    %v551 = vsel %vm436, %v548, %v550
    %v552 = vrot.slane %v136, 2
    %v553 = vrot.slane %v137, 2
    %v554 = vsel %vm436, %v552, %v553
    %v555 = vrot.slane %v138, 2
    %v556 = vsel %vm436, %v553, %v555
    %v557 = vrot.slane %v139, 2
    %v558 = vrot.slane %v140, 2
    %v559 = vsel %vm436, %v557, %v558
    %v560 = vrot.slane %v141, 2
    %v561 = vsel %vm436, %v558, %v560
    %v562 = vrot.slane %v142, 2
    %v563 = vrot.slane %v143, 2
    %v564 = vsel %vm436, %v562, %v563
    %v565 = vrot.slane %v144, 2
    %v566 = vsel %vm436, %v563, %v565
    %v567 = vrot.slane %v145, 2
    %v568 = vrot.slane %v146, 2
    %v569 = vsel %vm436, %v567, %v568
    %v570 = vrot.slane %v147, 2
    %v571 = vsel %vm436, %v568, %v570
    %v572 = vrot.slane %v148, 2
    %v573 = vrot.slane %v149, 2
    %v574 = vsel %vm436, %v572, %v573
    %v575 = vrot.slane %v150, 2
    %v576 = vsel %vm436, %v573, %v575
    %v577 = vrot.slane %v151, 2
    %v578 = vrot.slane %v152, 2
    %v579 = vsel %vm436, %v577, %v578
    %v580 = vrot.slane %v153, 2
    %v581 = vsel %vm436, %v578, %v580
    %v582 = vrot.slane %v154, 2
    %v583 = vrot.slane %v155, 2
    %v584 = vsel %vm436, %v582, %v583
    %v585 = vrot.slane %v156, 2
    %v586 = vsel %vm436, %v583, %v585
    %v587 = vrot.slane %v157, 2
    %v588 = vrot.slane %v158, 2
    %v589 = vsel %vm436, %v587, %v588
    %v590 = vrot.slane %v159, 2
    %v591 = vsel %vm436, %v588, %v590
    %v592 = vrot.slane %v160, 2
    %v593 = vrot.slane %v161, 2
    %v594 = vsel %vm436, %v592, %v593
    %v595 = vrot.slane %v162, 2
    %v596 = vsel %vm436, %v593, %v595
    %v603 = vrot.slane %v109, 1
    %v604 = vrot.slane %v110, 1
    %v605 = vsel %vm275, %v603, %v604
    %v606 = vrot.slane %v111, 1
    %v607 = vsel %vm275, %v604, %v606
    %v608 = vrot.slane %v163, 1
    %v609 = vrot.slane %v164, 1
    %v610 = vsel %vm275, %v608, %v609
    %v611 = vrot.slane %v165, 1
    %v612 = vsel %vm275, %v609, %v611
    %v613 = vrot.slane %v109, 2
    %v614 = vrot.slane %v110, 2
    %v615 = vsel %vm436, %v613, %v614
    %v616 = vrot.slane %v111, 2
    %v617 = vsel %vm436, %v614, %v616
    %v618 = vrot.slane %v163, 2
    %v619 = vrot.slane %v164, 2
    %v620 = vsel %vm436, %v618, %v619
    %v621 = vrot.slane %v165, 2
    %v622 = vsel %vm436, %v619, %v621
    %v629 = vrot.slane %v112, 1
    %v630 = vrot.slane %v113, 1
    %v631 = vsel %vm275, %v629, %v630
    %v632 = vrot.slane %v114, 1
    %v633 = vsel %vm275, %v630, %v632
    %v634 = vrot.slane %v166, 1
    %v635 = vrot.slane %v167, 1
    %v636 = vsel %vm275, %v634, %v635
    %v637 = vrot.slane %v168, 1
    %v638 = vsel %vm275, %v635, %v637
    %v639 = vrot.slane %v112, 2
    %v640 = vrot.slane %v113, 2
    %v641 = vsel %vm436, %v639, %v640
    %v642 = vrot.slane %v114, 2
    %v643 = vsel %vm436, %v640, %v642
    %v644 = vrot.slane %v166, 2
    %v645 = vrot.slane %v167, 2
    %v646 = vsel %vm436, %v644, %v645
    %v647 = vrot.slane %v168, 2
    %v648 = vsel %vm436, %v645, %v647
    %649 = vrot.lane.b32.xlu0 %v278, 8
    %v650 = vpop.permute.xlu0 %649
    %651 = vrot.lane.b32.xlu0 %v280, 8
    %v652 = vpop.permute.xlu0 %651
    %653 = vrot.lane.b32.xlu0 %v283, 8
    %v654 = vpop.permute.xlu0 %653
    %655 = vrot.lane.b32.xlu0 %v285, 8
    %v656 = vpop.permute.xlu0 %655
    %657 = vrot.lane.b32.xlu0 %v288, 8
    %v658 = vpop.permute.xlu0 %657
    %659 = vrot.lane.b32.xlu0 %v290, 8
    %v660 = vpop.permute.xlu0 %659
    %661 = vrot.lane.b32.xlu0 %v293, 8
    %v662 = vpop.permute.xlu0 %661
    %663 = vrot.lane.b32.xlu0 %v295, 8
    %v664 = vpop.permute.xlu0 %663
    %665 = vrot.lane.b32.xlu0 %v298, 8
    %v666 = vpop.permute.xlu0 %665
    %667 = vrot.lane.b32.xlu0 %v300, 8
    %v668 = vpop.permute.xlu0 %667
    %669 = vrot.lane.b32.xlu0 %v303, 8
    %v670 = vpop.permute.xlu0 %669
    %671 = vrot.lane.b32.xlu0 %v305, 8
    %v672 = vpop.permute.xlu0 %671
    %673 = vrot.lane.b32.xlu0 %v308, 8
    %v674 = vpop.permute.xlu0 %673
    %675 = vrot.lane.b32.xlu0 %v310, 8
    %v676 = vpop.permute.xlu0 %675
    %677 = vrot.lane.b32.xlu0 %v313, 8
    %v678 = vpop.permute.xlu0 %677
    %679 = vrot.lane.b32.xlu0 %v315, 8
    %v680 = vpop.permute.xlu0 %679
    %681 = vrot.lane.b32.xlu0 %v318, 8
    %v682 = vpop.permute.xlu0 %681
    %683 = vrot.lane.b32.xlu0 %v320, 8
    %v684 = vpop.permute.xlu0 %683
    %685 = vrot.lane.b32.xlu0 %v323, 8
    %v686 = vpop.permute.xlu0 %685
    %687 = vrot.lane.b32.xlu0 %v325, 8
    %v688 = vpop.permute.xlu0 %687
    %689 = vrot.lane.b32.xlu0 %v328, 8
    %v690 = vpop.permute.xlu0 %689
    %691 = vrot.lane.b32.xlu0 %v330, 8
    %v692 = vpop.permute.xlu0 %691
    %693 = vrot.lane.b32.xlu0 %v333, 8
    %v694 = vpop.permute.xlu0 %693
    %695 = vrot.lane.b32.xlu0 %v335, 8
    %v696 = vpop.permute.xlu0 %695
    %697 = vrot.lane.b32.xlu0 %v338, 8
    %v698 = vpop.permute.xlu0 %697
    %699 = vrot.lane.b32.xlu0 %v340, 8
    %v700 = vpop.permute.xlu0 %699
    %701 = vrot.lane.b32.xlu0 %v343, 8
    %v702 = vpop.permute.xlu0 %701
    %703 = vrot.lane.b32.xlu0 %v345, 8
    %v704 = vpop.permute.xlu0 %703
    %705 = vrot.lane.b32.xlu0 %v348, 8
    %v706 = vpop.permute.xlu0 %705
    %707 = vrot.lane.b32.xlu0 %v350, 8
    %v708 = vpop.permute.xlu0 %707
    %709 = vrot.lane.b32.xlu0 %v353, 8
    %v710 = vpop.permute.xlu0 %709
    %711 = vrot.lane.b32.xlu0 %v355, 8
    %v712 = vpop.permute.xlu0 %711
    %713 = vrot.lane.b32.xlu0 %v358, 8
    %v714 = vpop.permute.xlu0 %713
    %715 = vrot.lane.b32.xlu0 %v360, 8
    %v716 = vpop.permute.xlu0 %715
    %717 = vrot.lane.b32.xlu0 %v363, 8
    %v718 = vpop.permute.xlu0 %717
    %719 = vrot.lane.b32.xlu0 %v365, 8
    %v720 = vpop.permute.xlu0 %719
    %721 = vrot.lane.b32.xlu0 %v368, 8
    %v722 = vpop.permute.xlu0 %721
    %723 = vrot.lane.b32.xlu0 %v370, 8
    %v724 = vpop.permute.xlu0 %723
    %725 = vrot.lane.b32.xlu0 %v373, 8
    %v726 = vpop.permute.xlu0 %725
    %727 = vrot.lane.b32.xlu0 %v375, 8
    %v728 = vpop.permute.xlu0 %727
    %729 = vrot.lane.b32.xlu0 %v378, 8
    %v730 = vpop.permute.xlu0 %729
    %731 = vrot.lane.b32.xlu0 %v380, 8
    %v732 = vpop.permute.xlu0 %731
    %733 = vrot.lane.b32.xlu0 %v383, 8
    %v734 = vpop.permute.xlu0 %733
    %735 = vrot.lane.b32.xlu0 %v385, 8
    %v736 = vpop.permute.xlu0 %735
    %737 = vrot.lane.b32.xlu0 %v388, 8
    %v738 = vpop.permute.xlu0 %737
    %739 = vrot.lane.b32.xlu0 %v390, 8
    %v740 = vpop.permute.xlu0 %739
    %741 = vrot.lane.b32.xlu0 %v393, 8
    %v742 = vpop.permute.xlu0 %741
    %743 = vrot.lane.b32.xlu0 %v395, 8
    %v744 = vpop.permute.xlu0 %743
    %745 = vrot.lane.b32.xlu0 %v398, 8
    %v746 = vpop.permute.xlu0 %745
    %747 = vrot.lane.b32.xlu0 %v400, 8
    %v748 = vpop.permute.xlu0 %747
    %749 = vrot.lane.b32.xlu0 %v403, 8
    %v750 = vpop.permute.xlu0 %749
    %751 = vrot.lane.b32.xlu0 %v405, 8
    %v752 = vpop.permute.xlu0 %751
    %753 = vrot.lane.b32.xlu0 %v408, 8
    %v754 = vpop.permute.xlu0 %753
    %755 = vrot.lane.b32.xlu0 %v410, 8
    %v756 = vpop.permute.xlu0 %755
    %757 = vrot.lane.b32.xlu0 %v413, 8
    %v758 = vpop.permute.xlu0 %757
    %759 = vrot.lane.b32.xlu0 %v415, 8
    %v760 = vpop.permute.xlu0 %759
    %761 = vrot.lane.b32.xlu0 %v418, 8
    %v762 = vpop.permute.xlu0 %761
    %763 = vrot.lane.b32.xlu0 %v420, 8
    %v764 = vpop.permute.xlu0 %763
    %765 = vrot.lane.b32.xlu0 %v423, 8
    %v766 = vpop.permute.xlu0 %765
    %767 = vrot.lane.b32.xlu0 %v425, 8
    %v768 = vpop.permute.xlu0 %767
    %769 = vrot.lane.b32.xlu0 %v428, 8
    %v770 = vpop.permute.xlu0 %769
    %771 = vrot.lane.b32.xlu0 %v430, 8
    %v772 = vpop.permute.xlu0 %771
    %773 = vrot.lane.b32.xlu0 %v433, 8
    %v774 = vpop.permute.xlu0 %773
    %775 = vrot.lane.b32.xlu0 %v435, 8
    %v776 = vpop.permute.xlu0 %775
    %841 = vrot.lane.b32.xlu0 %v439, 16
    %v842 = vpop.permute.xlu0 %841
    %843 = vrot.lane.b32.xlu0 %v441, 16
    %v844 = vpop.permute.xlu0 %843
    %845 = vrot.lane.b32.xlu0 %v444, 16
    %v846 = vpop.permute.xlu0 %845
    %847 = vrot.lane.b32.xlu0 %v446, 16
    %v848 = vpop.permute.xlu0 %847
    %849 = vrot.lane.b32.xlu0 %v449, 16
    %v850 = vpop.permute.xlu0 %849
    %851 = vrot.lane.b32.xlu0 %v451, 16
    %v852 = vpop.permute.xlu0 %851
    %853 = vrot.lane.b32.xlu0 %v454, 16
    %v854 = vpop.permute.xlu0 %853
    %855 = vrot.lane.b32.xlu0 %v456, 16
    %v856 = vpop.permute.xlu0 %855
    %857 = vrot.lane.b32.xlu0 %v459, 16
    %v858 = vpop.permute.xlu0 %857
    %859 = vrot.lane.b32.xlu0 %v461, 16
    %v860 = vpop.permute.xlu0 %859
    %861 = vrot.lane.b32.xlu0 %v464, 16
    %v862 = vpop.permute.xlu0 %861
    %863 = vrot.lane.b32.xlu0 %v466, 16
    %v864 = vpop.permute.xlu0 %863
    %865 = vrot.lane.b32.xlu0 %v469, 16
    %v866 = vpop.permute.xlu0 %865
    %867 = vrot.lane.b32.xlu0 %v471, 16
    %v868 = vpop.permute.xlu0 %867
    %869 = vrot.lane.b32.xlu0 %v474, 16
    %v870 = vpop.permute.xlu0 %869
    %871 = vrot.lane.b32.xlu0 %v476, 16
    %v872 = vpop.permute.xlu0 %871
    %873 = vrot.lane.b32.xlu0 %v479, 16
    %v874 = vpop.permute.xlu0 %873
    %875 = vrot.lane.b32.xlu0 %v481, 16
    %v876 = vpop.permute.xlu0 %875
    %877 = vrot.lane.b32.xlu0 %v484, 16
    %v878 = vpop.permute.xlu0 %877
    %879 = vrot.lane.b32.xlu0 %v486, 16
    %v880 = vpop.permute.xlu0 %879
    %881 = vrot.lane.b32.xlu0 %v489, 16
    %v882 = vpop.permute.xlu0 %881
    %883 = vrot.lane.b32.xlu0 %v491, 16
    %v884 = vpop.permute.xlu0 %883
    %885 = vrot.lane.b32.xlu0 %v494, 16
    %v886 = vpop.permute.xlu0 %885
    %887 = vrot.lane.b32.xlu0 %v496, 16
    %v888 = vpop.permute.xlu0 %887
    %889 = vrot.lane.b32.xlu0 %v499, 16
    %v890 = vpop.permute.xlu0 %889
    %891 = vrot.lane.b32.xlu0 %v501, 16
    %v892 = vpop.permute.xlu0 %891
    %893 = vrot.lane.b32.xlu0 %v504, 16
    %v894 = vpop.permute.xlu0 %893
    %895 = vrot.lane.b32.xlu0 %v506, 16
    %v896 = vpop.permute.xlu0 %895
    %897 = vrot.lane.b32.xlu0 %v509, 16
    %v898 = vpop.permute.xlu0 %897
    %899 = vrot.lane.b32.xlu0 %v511, 16
    %v900 = vpop.permute.xlu0 %899
    %901 = vrot.lane.b32.xlu0 %v514, 16
    %v902 = vpop.permute.xlu0 %901
    %903 = vrot.lane.b32.xlu0 %v516, 16
    %v904 = vpop.permute.xlu0 %903
    %905 = vrot.lane.b32.xlu0 %v519, 16
    %v906 = vpop.permute.xlu0 %905
    %907 = vrot.lane.b32.xlu0 %v521, 16
    %v908 = vpop.permute.xlu0 %907
    %909 = vrot.lane.b32.xlu0 %v524, 16
    %v910 = vpop.permute.xlu0 %909
    %911 = vrot.lane.b32.xlu0 %v526, 16
    %v912 = vpop.permute.xlu0 %911
    %913 = vrot.lane.b32.xlu0 %v529, 16
    %v914 = vpop.permute.xlu0 %913
    %915 = vrot.lane.b32.xlu0 %v531, 16
    %v916 = vpop.permute.xlu0 %915
    %917 = vrot.lane.b32.xlu0 %v534, 16
    %v918 = vpop.permute.xlu0 %917
    %919 = vrot.lane.b32.xlu0 %v536, 16
    %v920 = vpop.permute.xlu0 %919
    %921 = vrot.lane.b32.xlu0 %v539, 16
    %v922 = vpop.permute.xlu0 %921
    %923 = vrot.lane.b32.xlu0 %v541, 16
    %v924 = vpop.permute.xlu0 %923
    %925 = vrot.lane.b32.xlu0 %v544, 16
    %v926 = vpop.permute.xlu0 %925
    %927 = vrot.lane.b32.xlu0 %v546, 16
    %v928 = vpop.permute.xlu0 %927
    %929 = vrot.lane.b32.xlu0 %v549, 16
    %v930 = vpop.permute.xlu0 %929
    %931 = vrot.lane.b32.xlu0 %v551, 16
    %v932 = vpop.permute.xlu0 %931
    %933 = vrot.lane.b32.xlu0 %v554, 16
    %v934 = vpop.permute.xlu0 %933
    %935 = vrot.lane.b32.xlu0 %v556, 16
    %v936 = vpop.permute.xlu0 %935
    %937 = vrot.lane.b32.xlu0 %v559, 16
    %v938 = vpop.permute.xlu0 %937
    %939 = vrot.lane.b32.xlu0 %v561, 16
    %v940 = vpop.permute.xlu0 %939
    %941 = vrot.lane.b32.xlu0 %v564, 16
    %v942 = vpop.permute.xlu0 %941
    %943 = vrot.lane.b32.xlu0 %v566, 16
    %v944 = vpop.permute.xlu0 %943
    %945 = vrot.lane.b32.xlu0 %v569, 16
    %v946 = vpop.permute.xlu0 %945
    %947 = vrot.lane.b32.xlu0 %v571, 16
    %v948 = vpop.permute.xlu0 %947
    %949 = vrot.lane.b32.xlu0 %v574, 16
    %v950 = vpop.permute.xlu0 %949
    %951 = vrot.lane.b32.xlu0 %v576, 16
    %v952 = vpop.permute.xlu0 %951
    %953 = vrot.lane.b32.xlu0 %v579, 16
    %v954 = vpop.permute.xlu0 %953
    %955 = vrot.lane.b32.xlu0 %v581, 16
    %v956 = vpop.permute.xlu0 %955
    %957 = vrot.lane.b32.xlu0 %v584, 16
    %v958 = vpop.permute.xlu0 %957
    %959 = vrot.lane.b32.xlu0 %v586, 16
    %v960 = vpop.permute.xlu0 %959
    %961 = vrot.lane.b32.xlu0 %v589, 16
    %v962 = vpop.permute.xlu0 %961
    %963 = vrot.lane.b32.xlu0 %v591, 16
    %v964 = vpop.permute.xlu0 %963
    %965 = vrot.lane.b32.xlu0 %v594, 16
    %v966 = vpop.permute.xlu0 %965
    %967 = vrot.lane.b32.xlu0 %v596, 16
    %v968 = vpop.permute.xlu0 %967
    %1033 = vrot.lane.b32.xlu0 %v64, 24
    %v1034 = vpop.permute.xlu0 %1033
    %1035 = vrot.lane.b32.xlu0 %v65, 24
    %v1036 = vpop.permute.xlu0 %1035
    %1037 = vrot.lane.b32.xlu0 %v67, 24
    %v1038 = vpop.permute.xlu0 %1037
    %1039 = vrot.lane.b32.xlu0 %v68, 24
    %v1040 = vpop.permute.xlu0 %1039
    %1041 = vrot.lane.b32.xlu0 %v70, 24
    %v1042 = vpop.permute.xlu0 %1041
    %1043 = vrot.lane.b32.xlu0 %v71, 24
    %v1044 = vpop.permute.xlu0 %1043
    %1045 = vrot.lane.b32.xlu0 %v73, 24
    %v1046 = vpop.permute.xlu0 %1045
    %1047 = vrot.lane.b32.xlu0 %v74, 24
    %v1048 = vpop.permute.xlu0 %1047
    %1049 = vrot.lane.b32.xlu0 %v76, 24
    %v1050 = vpop.permute.xlu0 %1049
    %1051 = vrot.lane.b32.xlu0 %v77, 24
    %v1052 = vpop.permute.xlu0 %1051
    %1053 = vrot.lane.b32.xlu0 %v79, 24
    %v1054 = vpop.permute.xlu0 %1053
    %1055 = vrot.lane.b32.xlu0 %v80, 24
    %v1056 = vpop.permute.xlu0 %1055
    %1057 = vrot.lane.b32.xlu0 %v82, 24
    %v1058 = vpop.permute.xlu0 %1057
    %1059 = vrot.lane.b32.xlu0 %v83, 24
    %v1060 = vpop.permute.xlu0 %1059
    %1061 = vrot.lane.b32.xlu0 %v85, 24
    %v1062 = vpop.permute.xlu0 %1061
    %1063 = vrot.lane.b32.xlu0 %v86, 24
    %v1064 = vpop.permute.xlu0 %1063
    %1065 = vrot.lane.b32.xlu0 %v88, 24
    %v1066 = vpop.permute.xlu0 %1065
    %1067 = vrot.lane.b32.xlu0 %v89, 24
    %v1068 = vpop.permute.xlu0 %1067
    %1069 = vrot.lane.b32.xlu0 %v91, 24
    %v1070 = vpop.permute.xlu0 %1069
    %1071 = vrot.lane.b32.xlu0 %v92, 24
    %v1072 = vpop.permute.xlu0 %1071
    %1073 = vrot.lane.b32.xlu0 %v94, 24
    %v1074 = vpop.permute.xlu0 %1073
    %1075 = vrot.lane.b32.xlu0 %v95, 24
    %v1076 = vpop.permute.xlu0 %1075
    %1077 = vrot.lane.b32.xlu0 %v97, 24
    %v1078 = vpop.permute.xlu0 %1077
    %1079 = vrot.lane.b32.xlu0 %v98, 24
    %v1080 = vpop.permute.xlu0 %1079
    %1081 = vrot.lane.b32.xlu0 %v100, 24
    %v1082 = vpop.permute.xlu0 %1081
    %1083 = vrot.lane.b32.xlu0 %v101, 24
    %v1084 = vpop.permute.xlu0 %1083
    %1085 = vrot.lane.b32.xlu0 %v103, 24
    %v1086 = vpop.permute.xlu0 %1085
    %1087 = vrot.lane.b32.xlu0 %v104, 24
    %v1088 = vpop.permute.xlu0 %1087
    %1089 = vrot.lane.b32.xlu0 %v106, 24
    %v1090 = vpop.permute.xlu0 %1089
    %1091 = vrot.lane.b32.xlu0 %v107, 24
    %v1092 = vpop.permute.xlu0 %1091
    %1093 = vrot.lane.b32.xlu0 %v109, 24
    %v1094 = vpop.permute.xlu0 %1093
    %1095 = vrot.lane.b32.xlu0 %v110, 24
    %v1096 = vpop.permute.xlu0 %1095
    %1097 = vrot.lane.b32.xlu0 %v118, 24
    %v1098 = vpop.permute.xlu0 %1097
    %1099 = vrot.lane.b32.xlu0 %v119, 24
    %v1100 = vpop.permute.xlu0 %1099
    %1101 = vrot.lane.b32.xlu0 %v121, 24
    %v1102 = vpop.permute.xlu0 %1101
    %1103 = vrot.lane.b32.xlu0 %v122, 24
    %v1104 = vpop.permute.xlu0 %1103
    %1105 = vrot.lane.b32.xlu0 %v124, 24
    %v1106 = vpop.permute.xlu0 %1105
    %1107 = vrot.lane.b32.xlu0 %v125, 24
    %v1108 = vpop.permute.xlu0 %1107
    %1109 = vrot.lane.b32.xlu0 %v127, 24
    %v1110 = vpop.permute.xlu0 %1109
    %1111 = vrot.lane.b32.xlu0 %v128, 24
    %v1112 = vpop.permute.xlu0 %1111
    %1113 = vrot.lane.b32.xlu0 %v130, 24
    %v1114 = vpop.permute.xlu0 %1113
    %1115 = vrot.lane.b32.xlu0 %v131, 24
    %v1116 = vpop.permute.xlu0 %1115
    %1117 = vrot.lane.b32.xlu0 %v133, 24
    %v1118 = vpop.permute.xlu0 %1117
    %1119 = vrot.lane.b32.xlu0 %v134, 24
    %v1120 = vpop.permute.xlu0 %1119
    %1121 = vrot.lane.b32.xlu0 %v136, 24
    %v1122 = vpop.permute.xlu0 %1121
    %1123 = vrot.lane.b32.xlu0 %v137, 24
    %v1124 = vpop.permute.xlu0 %1123
    %1125 = vrot.lane.b32.xlu0 %v139, 24
    %v1126 = vpop.permute.xlu0 %1125
    %1127 = vrot.lane.b32.xlu0 %v140, 24
    %v1128 = vpop.permute.xlu0 %1127
    %1129 = vrot.lane.b32.xlu0 %v142, 24
    %v1130 = vpop.permute.xlu0 %1129
    %1131 = vrot.lane.b32.xlu0 %v143, 24
    %v1132 = vpop.permute.xlu0 %1131
    %1133 = vrot.lane.b32.xlu0 %v145, 24
    %v1134 = vpop.permute.xlu0 %1133
    %1135 = vrot.lane.b32.xlu0 %v146, 24
    %v1136 = vpop.permute.xlu0 %1135
    %1137 = vrot.lane.b32.xlu0 %v148, 24
    %v1138 = vpop.permute.xlu0 %1137
    %1139 = vrot.lane.b32.xlu0 %v149, 24
    %v1140 = vpop.permute.xlu0 %1139
    %1141 = vrot.lane.b32.xlu0 %v151, 24
    %v1142 = vpop.permute.xlu0 %1141
    %1143 = vrot.lane.b32.xlu0 %v152, 24
    %v1144 = vpop.permute.xlu0 %1143
    %1145 = vrot.lane.b32.xlu0 %v154, 24
    %v1146 = vpop.permute.xlu0 %1145
    %1147 = vrot.lane.b32.xlu0 %v155, 24
    %v1148 = vpop.permute.xlu0 %1147
    %1149 = vrot.lane.b32.xlu0 %v157, 24
    %v1150 = vpop.permute.xlu0 %1149
    %1151 = vrot.lane.b32.xlu0 %v158, 24
    %v1152 = vpop.permute.xlu0 %1151
    %1153 = vrot.lane.b32.xlu0 %v160, 24
    %v1154 = vpop.permute.xlu0 %1153
    %1155 = vrot.lane.b32.xlu0 %v161, 24
    %v1156 = vpop.permute.xlu0 %1155
    %1157 = vrot.lane.b32.xlu0 %v163, 24
    %v1158 = vpop.permute.xlu0 %1157
    %1159 = vrot.lane.b32.xlu0 %v164, 24
    %v1160 = vpop.permute.xlu0 %1159
    %1225 = vrot.lane.b32.xlu0 %v283, 32
    %v1226 = vpop.permute.xlu0 %1225
    %1227 = vrot.lane.b32.xlu0 %v285, 32
    %v1228 = vpop.permute.xlu0 %1227
    %1229 = vrot.lane.b32.xlu0 %v288, 32
    %v1230 = vpop.permute.xlu0 %1229
    %1231 = vrot.lane.b32.xlu0 %v290, 32
    %v1232 = vpop.permute.xlu0 %1231
    %1233 = vrot.lane.b32.xlu0 %v293, 32
    %v1234 = vpop.permute.xlu0 %1233
    %1235 = vrot.lane.b32.xlu0 %v295, 32
    %v1236 = vpop.permute.xlu0 %1235
    %1237 = vrot.lane.b32.xlu0 %v298, 32
    %v1238 = vpop.permute.xlu0 %1237
    %1239 = vrot.lane.b32.xlu0 %v300, 32
    %v1240 = vpop.permute.xlu0 %1239
    %1241 = vrot.lane.b32.xlu0 %v303, 32
    %v1242 = vpop.permute.xlu0 %1241
    %1243 = vrot.lane.b32.xlu0 %v305, 32
    %v1244 = vpop.permute.xlu0 %1243
    %1245 = vrot.lane.b32.xlu0 %v308, 32
    %v1246 = vpop.permute.xlu0 %1245
    %1247 = vrot.lane.b32.xlu0 %v310, 32
    %v1248 = vpop.permute.xlu0 %1247
    %1249 = vrot.lane.b32.xlu0 %v313, 32
    %v1250 = vpop.permute.xlu0 %1249
    %1251 = vrot.lane.b32.xlu0 %v315, 32
    %v1252 = vpop.permute.xlu0 %1251
    %1253 = vrot.lane.b32.xlu0 %v318, 32
    %v1254 = vpop.permute.xlu0 %1253
    %1255 = vrot.lane.b32.xlu0 %v320, 32
    %v1256 = vpop.permute.xlu0 %1255
    %1257 = vrot.lane.b32.xlu0 %v323, 32
    %v1258 = vpop.permute.xlu0 %1257
    %1259 = vrot.lane.b32.xlu0 %v325, 32
    %v1260 = vpop.permute.xlu0 %1259
    %1261 = vrot.lane.b32.xlu0 %v328, 32
    %v1262 = vpop.permute.xlu0 %1261
    %1263 = vrot.lane.b32.xlu0 %v330, 32
    %v1264 = vpop.permute.xlu0 %1263
    %1265 = vrot.lane.b32.xlu0 %v333, 32
    %v1266 = vpop.permute.xlu0 %1265
    %1267 = vrot.lane.b32.xlu0 %v335, 32
    %v1268 = vpop.permute.xlu0 %1267
    %1269 = vrot.lane.b32.xlu0 %v338, 32
    %v1270 = vpop.permute.xlu0 %1269
    %1271 = vrot.lane.b32.xlu0 %v340, 32
    %v1272 = vpop.permute.xlu0 %1271
    %1273 = vrot.lane.b32.xlu0 %v343, 32
    %v1274 = vpop.permute.xlu0 %1273
    %1275 = vrot.lane.b32.xlu0 %v345, 32
    %v1276 = vpop.permute.xlu0 %1275
    %1277 = vrot.lane.b32.xlu0 %v348, 32
    %v1278 = vpop.permute.xlu0 %1277
    %1279 = vrot.lane.b32.xlu0 %v350, 32
    %v1280 = vpop.permute.xlu0 %1279
    %1281 = vrot.lane.b32.xlu0 %v353, 32
    %v1282 = vpop.permute.xlu0 %1281
    %1283 = vrot.lane.b32.xlu0 %v355, 32
    %v1284 = vpop.permute.xlu0 %1283
    %1285 = vrot.lane.b32.xlu0 %v605, 32
    %v1286 = vpop.permute.xlu0 %1285
    %1287 = vrot.lane.b32.xlu0 %v607, 32
    %v1288 = vpop.permute.xlu0 %1287
    %1289 = vrot.lane.b32.xlu0 %v363, 32
    %v1290 = vpop.permute.xlu0 %1289
    %1291 = vrot.lane.b32.xlu0 %v365, 32
    %v1292 = vpop.permute.xlu0 %1291
    %1293 = vrot.lane.b32.xlu0 %v368, 32
    %v1294 = vpop.permute.xlu0 %1293
    %1295 = vrot.lane.b32.xlu0 %v370, 32
    %v1296 = vpop.permute.xlu0 %1295
    %1297 = vrot.lane.b32.xlu0 %v373, 32
    %v1298 = vpop.permute.xlu0 %1297
    %1299 = vrot.lane.b32.xlu0 %v375, 32
    %v1300 = vpop.permute.xlu0 %1299
    %1301 = vrot.lane.b32.xlu0 %v378, 32
    %v1302 = vpop.permute.xlu0 %1301
    %1303 = vrot.lane.b32.xlu0 %v380, 32
    %v1304 = vpop.permute.xlu0 %1303
    %1305 = vrot.lane.b32.xlu0 %v383, 32
    %v1306 = vpop.permute.xlu0 %1305
    %1307 = vrot.lane.b32.xlu0 %v385, 32
    %v1308 = vpop.permute.xlu0 %1307
    %1309 = vrot.lane.b32.xlu0 %v388, 32
    %v1310 = vpop.permute.xlu0 %1309
    %1311 = vrot.lane.b32.xlu0 %v390, 32
    %v1312 = vpop.permute.xlu0 %1311
    %1313 = vrot.lane.b32.xlu0 %v393, 32
    %v1314 = vpop.permute.xlu0 %1313
    %1315 = vrot.lane.b32.xlu0 %v395, 32
    %v1316 = vpop.permute.xlu0 %1315
    %1317 = vrot.lane.b32.xlu0 %v398, 32
    %v1318 = vpop.permute.xlu0 %1317
    %1319 = vrot.lane.b32.xlu0 %v400, 32
    %v1320 = vpop.permute.xlu0 %1319
    %1321 = vrot.lane.b32.xlu0 %v403, 32
    %v1322 = vpop.permute.xlu0 %1321
    %1323 = vrot.lane.b32.xlu0 %v405, 32
    %v1324 = vpop.permute.xlu0 %1323
    %1325 = vrot.lane.b32.xlu0 %v408, 32
    %v1326 = vpop.permute.xlu0 %1325
    %1327 = vrot.lane.b32.xlu0 %v410, 32
    %v1328 = vpop.permute.xlu0 %1327
    %1329 = vrot.lane.b32.xlu0 %v413, 32
    %v1330 = vpop.permute.xlu0 %1329
    %1331 = vrot.lane.b32.xlu0 %v415, 32
    %v1332 = vpop.permute.xlu0 %1331
    %1333 = vrot.lane.b32.xlu0 %v418, 32
    %v1334 = vpop.permute.xlu0 %1333
    %1335 = vrot.lane.b32.xlu0 %v420, 32
    %v1336 = vpop.permute.xlu0 %1335
    %1337 = vrot.lane.b32.xlu0 %v423, 32
    %v1338 = vpop.permute.xlu0 %1337
    %1339 = vrot.lane.b32.xlu0 %v425, 32
    %v1340 = vpop.permute.xlu0 %1339
    %1341 = vrot.lane.b32.xlu0 %v428, 32
    %v1342 = vpop.permute.xlu0 %1341
    %1343 = vrot.lane.b32.xlu0 %v430, 32
    %v1344 = vpop.permute.xlu0 %1343
    %1345 = vrot.lane.b32.xlu0 %v433, 32
    %v1346 = vpop.permute.xlu0 %1345
    %1347 = vrot.lane.b32.xlu0 %v435, 32
    %v1348 = vpop.permute.xlu0 %1347
    %1349 = vrot.lane.b32.xlu0 %v610, 32
    %v1350 = vpop.permute.xlu0 %1349
    %1351 = vrot.lane.b32.xlu0 %v612, 32
    %v1352 = vpop.permute.xlu0 %1351
    %1417 = vrot.lane.b32.xlu0 %v444, 40
    %v1418 = vpop.permute.xlu0 %1417
    %1419 = vrot.lane.b32.xlu0 %v446, 40
    %v1420 = vpop.permute.xlu0 %1419
    %1421 = vrot.lane.b32.xlu0 %v449, 40
    %v1422 = vpop.permute.xlu0 %1421
    %1423 = vrot.lane.b32.xlu0 %v451, 40
    %v1424 = vpop.permute.xlu0 %1423
    %1425 = vrot.lane.b32.xlu0 %v454, 40
    %v1426 = vpop.permute.xlu0 %1425
    %1427 = vrot.lane.b32.xlu0 %v456, 40
    %v1428 = vpop.permute.xlu0 %1427
    %1429 = vrot.lane.b32.xlu0 %v459, 40
    %v1430 = vpop.permute.xlu0 %1429
    %1431 = vrot.lane.b32.xlu0 %v461, 40
    %v1432 = vpop.permute.xlu0 %1431
    %1433 = vrot.lane.b32.xlu0 %v464, 40
    %v1434 = vpop.permute.xlu0 %1433
    %1435 = vrot.lane.b32.xlu0 %v466, 40
    %v1436 = vpop.permute.xlu0 %1435
    %1437 = vrot.lane.b32.xlu0 %v469, 40
    %v1438 = vpop.permute.xlu0 %1437
    %1439 = vrot.lane.b32.xlu0 %v471, 40
    %v1440 = vpop.permute.xlu0 %1439
    %1441 = vrot.lane.b32.xlu0 %v474, 40
    %v1442 = vpop.permute.xlu0 %1441
    %1443 = vrot.lane.b32.xlu0 %v476, 40
    %v1444 = vpop.permute.xlu0 %1443
    %1445 = vrot.lane.b32.xlu0 %v479, 40
    %v1446 = vpop.permute.xlu0 %1445
    %1447 = vrot.lane.b32.xlu0 %v481, 40
    %v1448 = vpop.permute.xlu0 %1447
    %1449 = vrot.lane.b32.xlu0 %v484, 40
    %v1450 = vpop.permute.xlu0 %1449
    %1451 = vrot.lane.b32.xlu0 %v486, 40
    %v1452 = vpop.permute.xlu0 %1451
    %1453 = vrot.lane.b32.xlu0 %v489, 40
    %v1454 = vpop.permute.xlu0 %1453
    %1455 = vrot.lane.b32.xlu0 %v491, 40
    %v1456 = vpop.permute.xlu0 %1455
    %1457 = vrot.lane.b32.xlu0 %v494, 40
    %v1458 = vpop.permute.xlu0 %1457
    %1459 = vrot.lane.b32.xlu0 %v496, 40
    %v1460 = vpop.permute.xlu0 %1459
    %1461 = vrot.lane.b32.xlu0 %v499, 40
    %v1462 = vpop.permute.xlu0 %1461
    %1463 = vrot.lane.b32.xlu0 %v501, 40
    %v1464 = vpop.permute.xlu0 %1463
    %1465 = vrot.lane.b32.xlu0 %v504, 40
    %v1466 = vpop.permute.xlu0 %1465
    %1467 = vrot.lane.b32.xlu0 %v506, 40
    %v1468 = vpop.permute.xlu0 %1467
    %1469 = vrot.lane.b32.xlu0 %v509, 40
    %v1470 = vpop.permute.xlu0 %1469
    %1471 = vrot.lane.b32.xlu0 %v511, 40
    %v1472 = vpop.permute.xlu0 %1471
    %1473 = vrot.lane.b32.xlu0 %v514, 40
    %v1474 = vpop.permute.xlu0 %1473
    %1475 = vrot.lane.b32.xlu0 %v516, 40
    %v1476 = vpop.permute.xlu0 %1475
    %1477 = vrot.lane.b32.xlu0 %v615, 40
    %v1478 = vpop.permute.xlu0 %1477
    %1479 = vrot.lane.b32.xlu0 %v617, 40
    %v1480 = vpop.permute.xlu0 %1479
    %1481 = vrot.lane.b32.xlu0 %v524, 40
    %v1482 = vpop.permute.xlu0 %1481
    %1483 = vrot.lane.b32.xlu0 %v526, 40
    %v1484 = vpop.permute.xlu0 %1483
    %1485 = vrot.lane.b32.xlu0 %v529, 40
    %v1486 = vpop.permute.xlu0 %1485
    %1487 = vrot.lane.b32.xlu0 %v531, 40
    %v1488 = vpop.permute.xlu0 %1487
    %1489 = vrot.lane.b32.xlu0 %v534, 40
    %v1490 = vpop.permute.xlu0 %1489
    %1491 = vrot.lane.b32.xlu0 %v536, 40
    %v1492 = vpop.permute.xlu0 %1491
    %1493 = vrot.lane.b32.xlu0 %v539, 40
    %v1494 = vpop.permute.xlu0 %1493
    %1495 = vrot.lane.b32.xlu0 %v541, 40
    %v1496 = vpop.permute.xlu0 %1495
    %1497 = vrot.lane.b32.xlu0 %v544, 40
    %v1498 = vpop.permute.xlu0 %1497
    %1499 = vrot.lane.b32.xlu0 %v546, 40
    %v1500 = vpop.permute.xlu0 %1499
    %1501 = vrot.lane.b32.xlu0 %v549, 40
    %v1502 = vpop.permute.xlu0 %1501
    %1503 = vrot.lane.b32.xlu0 %v551, 40
    %v1504 = vpop.permute.xlu0 %1503
    %1505 = vrot.lane.b32.xlu0 %v554, 40
    %v1506 = vpop.permute.xlu0 %1505
    %1507 = vrot.lane.b32.xlu0 %v556, 40
    %v1508 = vpop.permute.xlu0 %1507
    %1509 = vrot.lane.b32.xlu0 %v559, 40
    %v1510 = vpop.permute.xlu0 %1509
    %1511 = vrot.lane.b32.xlu0 %v561, 40
    %v1512 = vpop.permute.xlu0 %1511
    %1513 = vrot.lane.b32.xlu0 %v564, 40
    %v1514 = vpop.permute.xlu0 %1513
    %1515 = vrot.lane.b32.xlu0 %v566, 40
    %v1516 = vpop.permute.xlu0 %1515
    %1517 = vrot.lane.b32.xlu0 %v569, 40
    %v1518 = vpop.permute.xlu0 %1517
    %1519 = vrot.lane.b32.xlu0 %v571, 40
    %v1520 = vpop.permute.xlu0 %1519
    %1521 = vrot.lane.b32.xlu0 %v574, 40
    %v1522 = vpop.permute.xlu0 %1521
    %1523 = vrot.lane.b32.xlu0 %v576, 40
    %v1524 = vpop.permute.xlu0 %1523
    %1525 = vrot.lane.b32.xlu0 %v579, 40
    %v1526 = vpop.permute.xlu0 %1525
    %1527 = vrot.lane.b32.xlu0 %v581, 40
    %v1528 = vpop.permute.xlu0 %1527
    %1529 = vrot.lane.b32.xlu0 %v584, 40
    %v1530 = vpop.permute.xlu0 %1529
    %1531 = vrot.lane.b32.xlu0 %v586, 40
    %v1532 = vpop.permute.xlu0 %1531
    %1533 = vrot.lane.b32.xlu0 %v589, 40
    %v1534 = vpop.permute.xlu0 %1533
    %1535 = vrot.lane.b32.xlu0 %v591, 40
    %v1536 = vpop.permute.xlu0 %1535
    %1537 = vrot.lane.b32.xlu0 %v594, 40
    %v1538 = vpop.permute.xlu0 %1537
    %1539 = vrot.lane.b32.xlu0 %v596, 40
    %v1540 = vpop.permute.xlu0 %1539
    %1541 = vrot.lane.b32.xlu0 %v620, 40
    %v1542 = vpop.permute.xlu0 %1541
    %1543 = vrot.lane.b32.xlu0 %v622, 40
    %v1544 = vpop.permute.xlu0 %1543
    %1609 = vrot.lane.b32.xlu0 %v67, 48
    %v1610 = vpop.permute.xlu0 %1609
    %1611 = vrot.lane.b32.xlu0 %v68, 48
    %v1612 = vpop.permute.xlu0 %1611
    %1613 = vrot.lane.b32.xlu0 %v70, 48
    %v1614 = vpop.permute.xlu0 %1613
    %1615 = vrot.lane.b32.xlu0 %v71, 48
    %v1616 = vpop.permute.xlu0 %1615
    %1617 = vrot.lane.b32.xlu0 %v73, 48
    %v1618 = vpop.permute.xlu0 %1617
    %1619 = vrot.lane.b32.xlu0 %v74, 48
    %v1620 = vpop.permute.xlu0 %1619
    %1621 = vrot.lane.b32.xlu0 %v76, 48
    %v1622 = vpop.permute.xlu0 %1621
    %1623 = vrot.lane.b32.xlu0 %v77, 48
    %v1624 = vpop.permute.xlu0 %1623
    %1625 = vrot.lane.b32.xlu0 %v79, 48
    %v1626 = vpop.permute.xlu0 %1625
    %1627 = vrot.lane.b32.xlu0 %v80, 48
    %v1628 = vpop.permute.xlu0 %1627
    %1629 = vrot.lane.b32.xlu0 %v82, 48
    %v1630 = vpop.permute.xlu0 %1629
    %1631 = vrot.lane.b32.xlu0 %v83, 48
    %v1632 = vpop.permute.xlu0 %1631
    %1633 = vrot.lane.b32.xlu0 %v85, 48
    %v1634 = vpop.permute.xlu0 %1633
    %1635 = vrot.lane.b32.xlu0 %v86, 48
    %v1636 = vpop.permute.xlu0 %1635
    %1637 = vrot.lane.b32.xlu0 %v88, 48
    %v1638 = vpop.permute.xlu0 %1637
    %1639 = vrot.lane.b32.xlu0 %v89, 48
    %v1640 = vpop.permute.xlu0 %1639
    %1641 = vrot.lane.b32.xlu0 %v91, 48
    %v1642 = vpop.permute.xlu0 %1641
    %1643 = vrot.lane.b32.xlu0 %v92, 48
    %v1644 = vpop.permute.xlu0 %1643
    %1645 = vrot.lane.b32.xlu0 %v94, 48
    %v1646 = vpop.permute.xlu0 %1645
    %1647 = vrot.lane.b32.xlu0 %v95, 48
    %v1648 = vpop.permute.xlu0 %1647
    %1649 = vrot.lane.b32.xlu0 %v97, 48
    %v1650 = vpop.permute.xlu0 %1649
    %1651 = vrot.lane.b32.xlu0 %v98, 48
    %v1652 = vpop.permute.xlu0 %1651
    %1653 = vrot.lane.b32.xlu0 %v100, 48
    %v1654 = vpop.permute.xlu0 %1653
    %1655 = vrot.lane.b32.xlu0 %v101, 48
    %v1656 = vpop.permute.xlu0 %1655
    %1657 = vrot.lane.b32.xlu0 %v103, 48
    %v1658 = vpop.permute.xlu0 %1657
    %1659 = vrot.lane.b32.xlu0 %v104, 48
    %v1660 = vpop.permute.xlu0 %1659
    %1661 = vrot.lane.b32.xlu0 %v106, 48
    %v1662 = vpop.permute.xlu0 %1661
    %1663 = vrot.lane.b32.xlu0 %v107, 48
    %v1664 = vpop.permute.xlu0 %1663
    %1665 = vrot.lane.b32.xlu0 %v109, 48
    %v1666 = vpop.permute.xlu0 %1665
    %1667 = vrot.lane.b32.xlu0 %v110, 48
    %v1668 = vpop.permute.xlu0 %1667
    %1669 = vrot.lane.b32.xlu0 %v112, 48
    %v1670 = vpop.permute.xlu0 %1669
    %1671 = vrot.lane.b32.xlu0 %v113, 48
    %v1672 = vpop.permute.xlu0 %1671
    %1673 = vrot.lane.b32.xlu0 %v121, 48
    %v1674 = vpop.permute.xlu0 %1673
    %1675 = vrot.lane.b32.xlu0 %v122, 48
    %v1676 = vpop.permute.xlu0 %1675
    %1677 = vrot.lane.b32.xlu0 %v124, 48
    %v1678 = vpop.permute.xlu0 %1677
    %1679 = vrot.lane.b32.xlu0 %v125, 48
    %v1680 = vpop.permute.xlu0 %1679
    %1681 = vrot.lane.b32.xlu0 %v127, 48
    %v1682 = vpop.permute.xlu0 %1681
    %1683 = vrot.lane.b32.xlu0 %v128, 48
    %v1684 = vpop.permute.xlu0 %1683
    %1685 = vrot.lane.b32.xlu0 %v130, 48
    %v1686 = vpop.permute.xlu0 %1685
    %1687 = vrot.lane.b32.xlu0 %v131, 48
    %v1688 = vpop.permute.xlu0 %1687
    %1689 = vrot.lane.b32.xlu0 %v133, 48
    %v1690 = vpop.permute.xlu0 %1689
    %1691 = vrot.lane.b32.xlu0 %v134, 48
    %v1692 = vpop.permute.xlu0 %1691
    %1693 = vrot.lane.b32.xlu0 %v136, 48
    %v1694 = vpop.permute.xlu0 %1693
    %1695 = vrot.lane.b32.xlu0 %v137, 48
    %v1696 = vpop.permute.xlu0 %1695
    %1697 = vrot.lane.b32.xlu0 %v139, 48
    %v1698 = vpop.permute.xlu0 %1697
    %1699 = vrot.lane.b32.xlu0 %v140, 48
    %v1700 = vpop.permute.xlu0 %1699
    %1701 = vrot.lane.b32.xlu0 %v142, 48
    %v1702 = vpop.permute.xlu0 %1701
    %1703 = vrot.lane.b32.xlu0 %v143, 48
    %v1704 = vpop.permute.xlu0 %1703
    %1705 = vrot.lane.b32.xlu0 %v145, 48
    %v1706 = vpop.permute.xlu0 %1705
    %1707 = vrot.lane.b32.xlu0 %v146, 48
    %v1708 = vpop.permute.xlu0 %1707
    %1709 = vrot.lane.b32.xlu0 %v148, 48
    %v1710 = vpop.permute.xlu0 %1709
    %1711 = vrot.lane.b32.xlu0 %v149, 48
    %v1712 = vpop.permute.xlu0 %1711
    %1713 = vrot.lane.b32.xlu0 %v151, 48
    %v1714 = vpop.permute.xlu0 %1713
    %1715 = vrot.lane.b32.xlu0 %v152, 48
    %v1716 = vpop.permute.xlu0 %1715
    %1717 = vrot.lane.b32.xlu0 %v154, 48
    %v1718 = vpop.permute.xlu0 %1717
    %1719 = vrot.lane.b32.xlu0 %v155, 48
    %v1720 = vpop.permute.xlu0 %1719
    %1721 = vrot.lane.b32.xlu0 %v157, 48
    %v1722 = vpop.permute.xlu0 %1721
    %1723 = vrot.lane.b32.xlu0 %v158, 48
    %v1724 = vpop.permute.xlu0 %1723
    %1725 = vrot.lane.b32.xlu0 %v160, 48
    %v1726 = vpop.permute.xlu0 %1725
    %1727 = vrot.lane.b32.xlu0 %v161, 48
    %v1728 = vpop.permute.xlu0 %1727
    %1729 = vrot.lane.b32.xlu0 %v163, 48
    %v1730 = vpop.permute.xlu0 %1729
    %1731 = vrot.lane.b32.xlu0 %v164, 48
    %v1732 = vpop.permute.xlu0 %1731
    %1733 = vrot.lane.b32.xlu0 %v166, 48
    %v1734 = vpop.permute.xlu0 %1733
    %1735 = vrot.lane.b32.xlu0 %v167, 48
    %v1736 = vpop.permute.xlu0 %1735
    %1801 = vrot.lane.b32.xlu0 %v288, 56
    %v1802 = vpop.permute.xlu0 %1801
    %1803 = vrot.lane.b32.xlu0 %v290, 56
    %v1804 = vpop.permute.xlu0 %1803
    %1805 = vrot.lane.b32.xlu0 %v293, 56
    %v1806 = vpop.permute.xlu0 %1805
    %1807 = vrot.lane.b32.xlu0 %v295, 56
    %v1808 = vpop.permute.xlu0 %1807
    %1809 = vrot.lane.b32.xlu0 %v298, 56
    %v1810 = vpop.permute.xlu0 %1809
    %1811 = vrot.lane.b32.xlu0 %v300, 56
    %v1812 = vpop.permute.xlu0 %1811
    %1813 = vrot.lane.b32.xlu0 %v303, 56
    %v1814 = vpop.permute.xlu0 %1813
    %1815 = vrot.lane.b32.xlu0 %v305, 56
    %v1816 = vpop.permute.xlu0 %1815
    %1817 = vrot.lane.b32.xlu0 %v308, 56
    %v1818 = vpop.permute.xlu0 %1817
    %1819 = vrot.lane.b32.xlu0 %v310, 56
    %v1820 = vpop.permute.xlu0 %1819
    %1821 = vrot.lane.b32.xlu0 %v313, 56
    %v1822 = vpop.permute.xlu0 %1821
    %1823 = vrot.lane.b32.xlu0 %v315, 56
    %v1824 = vpop.permute.xlu0 %1823
    %1825 = vrot.lane.b32.xlu0 %v318, 56
    %v1826 = vpop.permute.xlu0 %1825
    %1827 = vrot.lane.b32.xlu0 %v320, 56
    %v1828 = vpop.permute.xlu0 %1827
    %1829 = vrot.lane.b32.xlu0 %v323, 56
    %v1830 = vpop.permute.xlu0 %1829
    %1831 = vrot.lane.b32.xlu0 %v325, 56
    %v1832 = vpop.permute.xlu0 %1831
    %1833 = vrot.lane.b32.xlu0 %v328, 56
    %v1834 = vpop.permute.xlu0 %1833
    %1835 = vrot.lane.b32.xlu0 %v330, 56
    %v1836 = vpop.permute.xlu0 %1835
    %1837 = vrot.lane.b32.xlu0 %v333, 56
    %v1838 = vpop.permute.xlu0 %1837
    %1839 = vrot.lane.b32.xlu0 %v335, 56
    %v1840 = vpop.permute.xlu0 %1839
    %1841 = vrot.lane.b32.xlu0 %v338, 56
    %v1842 = vpop.permute.xlu0 %1841
    %1843 = vrot.lane.b32.xlu0 %v340, 56
    %v1844 = vpop.permute.xlu0 %1843
    %1845 = vrot.lane.b32.xlu0 %v343, 56
    %v1846 = vpop.permute.xlu0 %1845
    %1847 = vrot.lane.b32.xlu0 %v345, 56
    %v1848 = vpop.permute.xlu0 %1847
    %1849 = vrot.lane.b32.xlu0 %v348, 56
    %v1850 = vpop.permute.xlu0 %1849
    %1851 = vrot.lane.b32.xlu0 %v350, 56
    %v1852 = vpop.permute.xlu0 %1851
    %1853 = vrot.lane.b32.xlu0 %v353, 56
    %v1854 = vpop.permute.xlu0 %1853
    %1855 = vrot.lane.b32.xlu0 %v355, 56
    %v1856 = vpop.permute.xlu0 %1855
    %1857 = vrot.lane.b32.xlu0 %v605, 56
    %v1858 = vpop.permute.xlu0 %1857
    %1859 = vrot.lane.b32.xlu0 %v607, 56
    %v1860 = vpop.permute.xlu0 %1859
    %1861 = vrot.lane.b32.xlu0 %v631, 56
    %v1862 = vpop.permute.xlu0 %1861
    %1863 = vrot.lane.b32.xlu0 %v633, 56
    %v1864 = vpop.permute.xlu0 %1863
    %1865 = vrot.lane.b32.xlu0 %v368, 56
    %v1866 = vpop.permute.xlu0 %1865
    %1867 = vrot.lane.b32.xlu0 %v370, 56
    %v1868 = vpop.permute.xlu0 %1867
    %1869 = vrot.lane.b32.xlu0 %v373, 56
    %v1870 = vpop.permute.xlu0 %1869
    %1871 = vrot.lane.b32.xlu0 %v375, 56
    %v1872 = vpop.permute.xlu0 %1871
    %1873 = vrot.lane.b32.xlu0 %v378, 56
    %v1874 = vpop.permute.xlu0 %1873
    %1875 = vrot.lane.b32.xlu0 %v380, 56
    %v1876 = vpop.permute.xlu0 %1875
    %1877 = vrot.lane.b32.xlu0 %v383, 56
    %v1878 = vpop.permute.xlu0 %1877
    %1879 = vrot.lane.b32.xlu0 %v385, 56
    %v1880 = vpop.permute.xlu0 %1879
    %1881 = vrot.lane.b32.xlu0 %v388, 56
    %v1882 = vpop.permute.xlu0 %1881
    %1883 = vrot.lane.b32.xlu0 %v390, 56
    %v1884 = vpop.permute.xlu0 %1883
    %1885 = vrot.lane.b32.xlu0 %v393, 56
    %v1886 = vpop.permute.xlu0 %1885
    %1887 = vrot.lane.b32.xlu0 %v395, 56
    %v1888 = vpop.permute.xlu0 %1887
    %1889 = vrot.lane.b32.xlu0 %v398, 56
    %v1890 = vpop.permute.xlu0 %1889
    %1891 = vrot.lane.b32.xlu0 %v400, 56
    %v1892 = vpop.permute.xlu0 %1891
    %1893 = vrot.lane.b32.xlu0 %v403, 56
    %v1894 = vpop.permute.xlu0 %1893
    %1895 = vrot.lane.b32.xlu0 %v405, 56
    %v1896 = vpop.permute.xlu0 %1895
    %1897 = vrot.lane.b32.xlu0 %v408, 56
    %v1898 = vpop.permute.xlu0 %1897
    %1899 = vrot.lane.b32.xlu0 %v410, 56
    %v1900 = vpop.permute.xlu0 %1899
    %1901 = vrot.lane.b32.xlu0 %v413, 56
    %v1902 = vpop.permute.xlu0 %1901
    %1903 = vrot.lane.b32.xlu0 %v415, 56
    %v1904 = vpop.permute.xlu0 %1903
    %1905 = vrot.lane.b32.xlu0 %v418, 56
    %v1906 = vpop.permute.xlu0 %1905
    %1907 = vrot.lane.b32.xlu0 %v420, 56
    %v1908 = vpop.permute.xlu0 %1907
    %1909 = vrot.lane.b32.xlu0 %v423, 56
    %v1910 = vpop.permute.xlu0 %1909
    %1911 = vrot.lane.b32.xlu0 %v425, 56
    %v1912 = vpop.permute.xlu0 %1911
    %1913 = vrot.lane.b32.xlu0 %v428, 56
    %v1914 = vpop.permute.xlu0 %1913
    %1915 = vrot.lane.b32.xlu0 %v430, 56
    %v1916 = vpop.permute.xlu0 %1915
    %1917 = vrot.lane.b32.xlu0 %v433, 56
    %v1918 = vpop.permute.xlu0 %1917
    %1919 = vrot.lane.b32.xlu0 %v435, 56
    %v1920 = vpop.permute.xlu0 %1919
    %1921 = vrot.lane.b32.xlu0 %v610, 56
    %v1922 = vpop.permute.xlu0 %1921
    %1923 = vrot.lane.b32.xlu0 %v612, 56
    %v1924 = vpop.permute.xlu0 %1923
    %1925 = vrot.lane.b32.xlu0 %v636, 56
    %v1926 = vpop.permute.xlu0 %1925
    %1927 = vrot.lane.b32.xlu0 %v638, 56
    %v1928 = vpop.permute.xlu0 %1927
    %1993 = vrot.lane.b32.xlu0 %v449, 64
    %v1994 = vpop.permute.xlu0 %1993
    %1995 = vrot.lane.b32.xlu0 %v451, 64
    %v1996 = vpop.permute.xlu0 %1995
    %1997 = vrot.lane.b32.xlu0 %v454, 64
    %v1998 = vpop.permute.xlu0 %1997
    %1999 = vrot.lane.b32.xlu0 %v456, 64
    %v2000 = vpop.permute.xlu0 %1999
    %2001 = vrot.lane.b32.xlu0 %v459, 64
    %v2002 = vpop.permute.xlu0 %2001
    %2003 = vrot.lane.b32.xlu0 %v461, 64
    %v2004 = vpop.permute.xlu0 %2003
    %2005 = vrot.lane.b32.xlu0 %v464, 64
    %v2006 = vpop.permute.xlu0 %2005
    %2007 = vrot.lane.b32.xlu0 %v466, 64
    %v2008 = vpop.permute.xlu0 %2007
    %2009 = vrot.lane.b32.xlu0 %v469, 64
    %v2010 = vpop.permute.xlu0 %2009
    %2011 = vrot.lane.b32.xlu0 %v471, 64
    %v2012 = vpop.permute.xlu0 %2011
    %2013 = vrot.lane.b32.xlu0 %v474, 64
    %v2014 = vpop.permute.xlu0 %2013
    %2015 = vrot.lane.b32.xlu0 %v476, 64
    %v2016 = vpop.permute.xlu0 %2015
    %2017 = vrot.lane.b32.xlu0 %v479, 64
    %v2018 = vpop.permute.xlu0 %2017
    %2019 = vrot.lane.b32.xlu0 %v481, 64
    %v2020 = vpop.permute.xlu0 %2019
    %2021 = vrot.lane.b32.xlu0 %v484, 64
    %v2022 = vpop.permute.xlu0 %2021
    %2023 = vrot.lane.b32.xlu0 %v486, 64
    %v2024 = vpop.permute.xlu0 %2023
    %2025 = vrot.lane.b32.xlu0 %v489, 64
    %v2026 = vpop.permute.xlu0 %2025
    %2027 = vrot.lane.b32.xlu0 %v491, 64
    %v2028 = vpop.permute.xlu0 %2027
    %2029 = vrot.lane.b32.xlu0 %v494, 64
    %v2030 = vpop.permute.xlu0 %2029
    %2031 = vrot.lane.b32.xlu0 %v496, 64
    %v2032 = vpop.permute.xlu0 %2031
    %2033 = vrot.lane.b32.xlu0 %v499, 64
    %v2034 = vpop.permute.xlu0 %2033
    %2035 = vrot.lane.b32.xlu0 %v501, 64
    %v2036 = vpop.permute.xlu0 %2035
    %2037 = vrot.lane.b32.xlu0 %v504, 64
    %v2038 = vpop.permute.xlu0 %2037
    %2039 = vrot.lane.b32.xlu0 %v506, 64
    %v2040 = vpop.permute.xlu0 %2039
    %2041 = vrot.lane.b32.xlu0 %v509, 64
    %v2042 = vpop.permute.xlu0 %2041
    %2043 = vrot.lane.b32.xlu0 %v511, 64
    %v2044 = vpop.permute.xlu0 %2043
    %2045 = vrot.lane.b32.xlu0 %v514, 64
    %v2046 = vpop.permute.xlu0 %2045
    %2047 = vrot.lane.b32.xlu0 %v516, 64
    %v2048 = vpop.permute.xlu0 %2047
    %2049 = vrot.lane.b32.xlu0 %v615, 64
    %v2050 = vpop.permute.xlu0 %2049
    %2051 = vrot.lane.b32.xlu0 %v617, 64
    %v2052 = vpop.permute.xlu0 %2051
    %2053 = vrot.lane.b32.xlu0 %v641, 64
    %v2054 = vpop.permute.xlu0 %2053
    %2055 = vrot.lane.b32.xlu0 %v643, 64
    %v2056 = vpop.permute.xlu0 %2055
    %2057 = vrot.lane.b32.xlu0 %v529, 64
    %v2058 = vpop.permute.xlu0 %2057
    %2059 = vrot.lane.b32.xlu0 %v531, 64
    %v2060 = vpop.permute.xlu0 %2059
    %2061 = vrot.lane.b32.xlu0 %v534, 64
    %v2062 = vpop.permute.xlu0 %2061
    %2063 = vrot.lane.b32.xlu0 %v536, 64
    %v2064 = vpop.permute.xlu0 %2063
    %2065 = vrot.lane.b32.xlu0 %v539, 64
    %v2066 = vpop.permute.xlu0 %2065
    %2067 = vrot.lane.b32.xlu0 %v541, 64
    %v2068 = vpop.permute.xlu0 %2067
    %2069 = vrot.lane.b32.xlu0 %v544, 64
    %v2070 = vpop.permute.xlu0 %2069
    %2071 = vrot.lane.b32.xlu0 %v546, 64
    %v2072 = vpop.permute.xlu0 %2071
    %2073 = vrot.lane.b32.xlu0 %v549, 64
    %v2074 = vpop.permute.xlu0 %2073
    %2075 = vrot.lane.b32.xlu0 %v551, 64
    %v2076 = vpop.permute.xlu0 %2075
    %2077 = vrot.lane.b32.xlu0 %v554, 64
    %v2078 = vpop.permute.xlu0 %2077
    %2079 = vrot.lane.b32.xlu0 %v556, 64
    %v2080 = vpop.permute.xlu0 %2079
    %2081 = vrot.lane.b32.xlu0 %v559, 64
    %v2082 = vpop.permute.xlu0 %2081
    %2083 = vrot.lane.b32.xlu0 %v561, 64
    %v2084 = vpop.permute.xlu0 %2083
    %2085 = vrot.lane.b32.xlu0 %v564, 64
    %v2086 = vpop.permute.xlu0 %2085
    %2087 = vrot.lane.b32.xlu0 %v566, 64
    %v2088 = vpop.permute.xlu0 %2087
    %2089 = vrot.lane.b32.xlu0 %v569, 64
    %v2090 = vpop.permute.xlu0 %2089
    %2091 = vrot.lane.b32.xlu0 %v571, 64
    %v2092 = vpop.permute.xlu0 %2091
    %2093 = vrot.lane.b32.xlu0 %v574, 64
    %v2094 = vpop.permute.xlu0 %2093
    %2095 = vrot.lane.b32.xlu0 %v576, 64
    %v2096 = vpop.permute.xlu0 %2095
    %2097 = vrot.lane.b32.xlu0 %v579, 64
    %v2098 = vpop.permute.xlu0 %2097
    %2099 = vrot.lane.b32.xlu0 %v581, 64
    %v2100 = vpop.permute.xlu0 %2099
    %2101 = vrot.lane.b32.xlu0 %v584, 64
    %v2102 = vpop.permute.xlu0 %2101
    %2103 = vrot.lane.b32.xlu0 %v586, 64
    %v2104 = vpop.permute.xlu0 %2103
    %2105 = vrot.lane.b32.xlu0 %v589, 64
    %v2106 = vpop.permute.xlu0 %2105
    %2107 = vrot.lane.b32.xlu0 %v591, 64
    %v2108 = vpop.permute.xlu0 %2107
    %2109 = vrot.lane.b32.xlu0 %v594, 64
    %v2110 = vpop.permute.xlu0 %2109
    %2111 = vrot.lane.b32.xlu0 %v596, 64
    %v2112 = vpop.permute.xlu0 %2111
    %2113 = vrot.lane.b32.xlu0 %v620, 64
    %v2114 = vpop.permute.xlu0 %2113
    %2115 = vrot.lane.b32.xlu0 %v622, 64
    %v2116 = vpop.permute.xlu0 %2115
    %2117 = vrot.lane.b32.xlu0 %v646, 64
    %v2118 = vpop.permute.xlu0 %2117
    %2119 = vrot.lane.b32.xlu0 %v648, 64
    %v2120 = vpop.permute.xlu0 %2119
    %vm2185 = vcmask 64512
    %v2186 = vsel %vm2185, %v61, %v650
    %v2187 = vsel %vm2185, %v62, %v652
    %v2188 = vsel %vm2185, %v64, %v654
    %v2189 = vsel %vm2185, %v65, %v656
    %v2190 = vsel %vm2185, %v67, %v658
    %v2191 = vsel %vm2185, %v68, %v660
    %v2192 = vsel %vm2185, %v70, %v662
    %v2193 = vsel %vm2185, %v71, %v664
    %v2194 = vsel %vm2185, %v73, %v666
    %v2195 = vsel %vm2185, %v74, %v668
    %v2196 = vsel %vm2185, %v76, %v670
    %v2197 = vsel %vm2185, %v77, %v672
    %v2198 = vsel %vm2185, %v79, %v674
    %v2199 = vsel %vm2185, %v80, %v676
    %v2200 = vsel %vm2185, %v82, %v678
    %v2201 = vsel %vm2185, %v83, %v680
    %v2202 = vsel %vm2185, %v85, %v682
    %v2203 = vsel %vm2185, %v86, %v684
    %v2204 = vsel %vm2185, %v88, %v686
    %v2205 = vsel %vm2185, %v89, %v688
    %v2206 = vsel %vm2185, %v91, %v690
    %v2207 = vsel %vm2185, %v92, %v692
    %v2208 = vsel %vm2185, %v94, %v694
    %v2209 = vsel %vm2185, %v95, %v696
    %v2210 = vsel %vm2185, %v97, %v698
    %v2211 = vsel %vm2185, %v98, %v700
    %v2212 = vsel %vm2185, %v100, %v702
    %v2213 = vsel %vm2185, %v101, %v704
    %v2214 = vsel %vm2185, %v103, %v706
    %v2215 = vsel %vm2185, %v104, %v708
    %v2216 = vsel %vm2185, %v106, %v710
    %v2217 = vsel %vm2185, %v107, %v712
    %v2218 = vsel %vm2185, %v115, %v714
    %v2219 = vsel %vm2185, %v116, %v716
    %v2220 = vsel %vm2185, %v118, %v718
    %v2221 = vsel %vm2185, %v119, %v720
    %v2222 = vsel %vm2185, %v121, %v722
    %v2223 = vsel %vm2185, %v122, %v724
    %v2224 = vsel %vm2185, %v124, %v726
    %v2225 = vsel %vm2185, %v125, %v728
    %v2226 = vsel %vm2185, %v127, %v730
    %v2227 = vsel %vm2185, %v128, %v732
    %v2228 = vsel %vm2185, %v130, %v734
    %v2229 = vsel %vm2185, %v131, %v736
    %v2230 = vsel %vm2185, %v133, %v738
    %v2231 = vsel %vm2185, %v134, %v740
    %v2232 = vsel %vm2185, %v136, %v742
    %v2233 = vsel %vm2185, %v137, %v744
    %v2234 = vsel %vm2185, %v139, %v746
    %v2235 = vsel %vm2185, %v140, %v748
    %v2236 = vsel %vm2185, %v142, %v750
    %v2237 = vsel %vm2185, %v143, %v752
    %v2238 = vsel %vm2185, %v145, %v754
    %v2239 = vsel %vm2185, %v146, %v756
    %v2240 = vsel %vm2185, %v148, %v758
    %v2241 = vsel %vm2185, %v149, %v760
    %v2242 = vsel %vm2185, %v151, %v762
    %v2243 = vsel %vm2185, %v152, %v764
    %v2244 = vsel %vm2185, %v154, %v766
    %v2245 = vsel %vm2185, %v155, %v768
    %v2246 = vsel %vm2185, %v157, %v770
    %v2247 = vsel %vm2185, %v158, %v772
    %v2248 = vsel %vm2185, %v160, %v774
    %v2249 = vsel %vm2185, %v161, %v776
    %vm2250 = vcmask 130048
    %v2251 = vsel %vm2250, %v2186, %v842
    %v2252 = vsel %vm2250, %v2187, %v844
    %v2253 = vsel %vm2250, %v2188, %v846
    %v2254 = vsel %vm2250, %v2189, %v848
    %v2255 = vsel %vm2250, %v2190, %v850
    %v2256 = vsel %vm2250, %v2191, %v852
    %v2257 = vsel %vm2250, %v2192, %v854
    %v2258 = vsel %vm2250, %v2193, %v856
    %v2259 = vsel %vm2250, %v2194, %v858
    %v2260 = vsel %vm2250, %v2195, %v860
    %v2261 = vsel %vm2250, %v2196, %v862
    %v2262 = vsel %vm2250, %v2197, %v864
    %v2263 = vsel %vm2250, %v2198, %v866
    %v2264 = vsel %vm2250, %v2199, %v868
    %v2265 = vsel %vm2250, %v2200, %v870
    %v2266 = vsel %vm2250, %v2201, %v872
    %v2267 = vsel %vm2250, %v2202, %v874
    %v2268 = vsel %vm2250, %v2203, %v876
    %v2269 = vsel %vm2250, %v2204, %v878
    %v2270 = vsel %vm2250, %v2205, %v880
    %v2271 = vsel %vm2250, %v2206, %v882
    %v2272 = vsel %vm2250, %v2207, %v884
    %v2273 = vsel %vm2250, %v2208, %v886
    %v2274 = vsel %vm2250, %v2209, %v888
    %v2275 = vsel %vm2250, %v2210, %v890
    %v2276 = vsel %vm2250, %v2211, %v892
    %v2277 = vsel %vm2250, %v2212, %v894
    %v2278 = vsel %vm2250, %v2213, %v896
    %v2279 = vsel %vm2250, %v2214, %v898
    %v2280 = vsel %vm2250, %v2215, %v900
    %v2281 = vsel %vm2250, %v2216, %v902
    %v2282 = vsel %vm2250, %v2217, %v904
    %v2283 = vsel %vm2250, %v2218, %v906
    %v2284 = vsel %vm2250, %v2219, %v908
    %v2285 = vsel %vm2250, %v2220, %v910
    %v2286 = vsel %vm2250, %v2221, %v912
    %v2287 = vsel %vm2250, %v2222, %v914
    %v2288 = vsel %vm2250, %v2223, %v916
    %v2289 = vsel %vm2250, %v2224, %v918
    %v2290 = vsel %vm2250, %v2225, %v920
    %v2291 = vsel %vm2250, %v2226, %v922
    %v2292 = vsel %vm2250, %v2227, %v924
    %v2293 = vsel %vm2250, %v2228, %v926
    %v2294 = vsel %vm2250, %v2229, %v928
    %v2295 = vsel %vm2250, %v2230, %v930
    %v2296 = vsel %vm2250, %v2231, %v932
    %v2297 = vsel %vm2250, %v2232, %v934
    %v2298 = vsel %vm2250, %v2233, %v936
    %v2299 = vsel %vm2250, %v2234, %v938
    %v2300 = vsel %vm2250, %v2235, %v940
    %v2301 = vsel %vm2250, %v2236, %v942
    %v2302 = vsel %vm2250, %v2237, %v944
    %v2303 = vsel %vm2250, %v2238, %v946
    %v2304 = vsel %vm2250, %v2239, %v948
    %v2305 = vsel %vm2250, %v2240, %v950
    %v2306 = vsel %vm2250, %v2241, %v952
    %v2307 = vsel %vm2250, %v2242, %v954
    %v2308 = vsel %vm2250, %v2243, %v956
    %v2309 = vsel %vm2250, %v2244, %v958
    %v2310 = vsel %vm2250, %v2245, %v960
    %v2311 = vsel %vm2250, %v2246, %v962
    %v2312 = vsel %vm2250, %v2247, %v964
    %v2313 = vsel %vm2250, %v2248, %v966
    %v2314 = vsel %vm2250, %v2249, %v968
    %vm2315 = vcmask 195584
    %v2316 = vsel %vm2315, %v2251, %v1034
    %v2317 = vsel %vm2315, %v2252, %v1036
    %v2318 = vsel %vm2315, %v2253, %v1038
    %v2319 = vsel %vm2315, %v2254, %v1040
    %v2320 = vsel %vm2315, %v2255, %v1042
    %v2321 = vsel %vm2315, %v2256, %v1044
    %v2322 = vsel %vm2315, %v2257, %v1046
    %v2323 = vsel %vm2315, %v2258, %v1048
    %v2324 = vsel %vm2315, %v2259, %v1050
    %v2325 = vsel %vm2315, %v2260, %v1052
    %v2326 = vsel %vm2315, %v2261, %v1054
    %v2327 = vsel %vm2315, %v2262, %v1056
    %v2328 = vsel %vm2315, %v2263, %v1058
    %v2329 = vsel %vm2315, %v2264, %v1060
    %v2330 = vsel %vm2315, %v2265, %v1062
    %v2331 = vsel %vm2315, %v2266, %v1064
    %v2332 = vsel %vm2315, %v2267, %v1066
    %v2333 = vsel %vm2315, %v2268, %v1068
    %v2334 = vsel %vm2315, %v2269, %v1070
    %v2335 = vsel %vm2315, %v2270, %v1072
    %v2336 = vsel %vm2315, %v2271, %v1074
    %v2337 = vsel %vm2315, %v2272, %v1076
    %v2338 = vsel %vm2315, %v2273, %v1078
    %v2339 = vsel %vm2315, %v2274, %v1080
    %v2340 = vsel %vm2315, %v2275, %v1082
    %v2341 = vsel %vm2315, %v2276, %v1084
    %v2342 = vsel %vm2315, %v2277, %v1086
    %v2343 = vsel %vm2315, %v2278, %v1088
    %v2344 = vsel %vm2315, %v2279, %v1090
    %v2345 = vsel %vm2315, %v2280, %v1092
    %v2346 = vsel %vm2315, %v2281, %v1094
    %v2347 = vsel %vm2315, %v2282, %v1096
    %v2348 = vsel %vm2315, %v2283, %v1098
    %v2349 = vsel %vm2315, %v2284, %v1100
    %v2350 = vsel %vm2315, %v2285, %v1102
    %v2351 = vsel %vm2315, %v2286, %v1104
    %v2352 = vsel %vm2315, %v2287, %v1106
    %v2353 = vsel %vm2315, %v2288, %v1108
    %v2354 = vsel %vm2315, %v2289, %v1110
    %v2355 = vsel %vm2315, %v2290, %v1112
    %v2356 = vsel %vm2315, %v2291, %v1114
    %v2357 = vsel %vm2315, %v2292, %v1116
    %v2358 = vsel %vm2315, %v2293, %v1118
    %v2359 = vsel %vm2315, %v2294, %v1120
    %v2360 = vsel %vm2315, %v2295, %v1122
    %v2361 = vsel %vm2315, %v2296, %v1124
    %v2362 = vsel %vm2315, %v2297, %v1126
    %v2363 = vsel %vm2315, %v2298, %v1128
    %v2364 = vsel %vm2315, %v2299, %v1130
    %v2365 = vsel %vm2315, %v2300, %v1132
    %v2366 = vsel %vm2315, %v2301, %v1134
    %v2367 = vsel %vm2315, %v2302, %v1136
    %v2368 = vsel %vm2315, %v2303, %v1138
    %v2369 = vsel %vm2315, %v2304, %v1140
    %v2370 = vsel %vm2315, %v2305, %v1142
    %v2371 = vsel %vm2315, %v2306, %v1144
    %v2372 = vsel %vm2315, %v2307, %v1146
    %v2373 = vsel %vm2315, %v2308, %v1148
    %v2374 = vsel %vm2315, %v2309, %v1150
    %v2375 = vsel %vm2315, %v2310, %v1152
    %v2376 = vsel %vm2315, %v2311, %v1154
    %v2377 = vsel %vm2315, %v2312, %v1156
    %v2378 = vsel %vm2315, %v2313, %v1158
    %v2379 = vsel %vm2315, %v2314, %v1160
    %vm2380 = vcmask 261120
    %v2381 = vsel %vm2380, %v2316, %v1226
    %v2382 = vsel %vm2380, %v2317, %v1228
    %v2383 = vsel %vm2380, %v2318, %v1230
    %v2384 = vsel %vm2380, %v2319, %v1232
    %v2385 = vsel %vm2380, %v2320, %v1234
    %v2386 = vsel %vm2380, %v2321, %v1236
    %v2387 = vsel %vm2380, %v2322, %v1238
    %v2388 = vsel %vm2380, %v2323, %v1240
    %v2389 = vsel %vm2380, %v2324, %v1242
    %v2390 = vsel %vm2380, %v2325, %v1244
    %v2391 = vsel %vm2380, %v2326, %v1246
    %v2392 = vsel %vm2380, %v2327, %v1248
    %v2393 = vsel %vm2380, %v2328, %v1250
    %v2394 = vsel %vm2380, %v2329, %v1252
    %v2395 = vsel %vm2380, %v2330, %v1254
    %v2396 = vsel %vm2380, %v2331, %v1256
    %v2397 = vsel %vm2380, %v2332, %v1258
    %v2398 = vsel %vm2380, %v2333, %v1260
    %v2399 = vsel %vm2380, %v2334, %v1262
    %v2400 = vsel %vm2380, %v2335, %v1264
    %v2401 = vsel %vm2380, %v2336, %v1266
    %v2402 = vsel %vm2380, %v2337, %v1268
    %v2403 = vsel %vm2380, %v2338, %v1270
    %v2404 = vsel %vm2380, %v2339, %v1272
    %v2405 = vsel %vm2380, %v2340, %v1274
    %v2406 = vsel %vm2380, %v2341, %v1276
    %v2407 = vsel %vm2380, %v2342, %v1278
    %v2408 = vsel %vm2380, %v2343, %v1280
    %v2409 = vsel %vm2380, %v2344, %v1282
    %v2410 = vsel %vm2380, %v2345, %v1284
    %v2411 = vsel %vm2380, %v2346, %v1286
    %v2412 = vsel %vm2380, %v2347, %v1288
    %v2413 = vsel %vm2380, %v2348, %v1290
    %v2414 = vsel %vm2380, %v2349, %v1292
    %v2415 = vsel %vm2380, %v2350, %v1294
    %v2416 = vsel %vm2380, %v2351, %v1296
    %v2417 = vsel %vm2380, %v2352, %v1298
    %v2418 = vsel %vm2380, %v2353, %v1300
    %v2419 = vsel %vm2380, %v2354, %v1302
    %v2420 = vsel %vm2380, %v2355, %v1304
    %v2421 = vsel %vm2380, %v2356, %v1306
    %v2422 = vsel %vm2380, %v2357, %v1308
    %v2423 = vsel %vm2380, %v2358, %v1310
    %v2424 = vsel %vm2380, %v2359, %v1312
    %v2425 = vsel %vm2380, %v2360, %v1314
    %v2426 = vsel %vm2380, %v2361, %v1316
    %v2427 = vsel %vm2380, %v2362, %v1318
    %v2428 = vsel %vm2380, %v2363, %v1320
    %v2429 = vsel %vm2380, %v2364, %v1322
    %v2430 = vsel %vm2380, %v2365, %v1324
    %v2431 = vsel %vm2380, %v2366, %v1326
    %v2432 = vsel %vm2380, %v2367, %v1328
    %v2433 = vsel %vm2380, %v2368, %v1330
    %v2434 = vsel %vm2380, %v2369, %v1332
    %v2435 = vsel %vm2380, %v2370, %v1334
    %v2436 = vsel %vm2380, %v2371, %v1336
    %v2437 = vsel %vm2380, %v2372, %v1338
    %v2438 = vsel %vm2380, %v2373, %v1340
    %v2439 = vsel %vm2380, %v2374, %v1342
    %v2440 = vsel %vm2380, %v2375, %v1344
    %v2441 = vsel %vm2380, %v2376, %v1346
    %v2442 = vsel %vm2380, %v2377, %v1348
    %v2443 = vsel %vm2380, %v2378, %v1350
    %v2444 = vsel %vm2380, %v2379, %v1352
    %vm2445 = vcmask 326656
    %v2446 = vsel %vm2445, %v2381, %v1418
    %v2447 = vsel %vm2445, %v2382, %v1420
    %v2448 = vsel %vm2445, %v2383, %v1422
    %v2449 = vsel %vm2445, %v2384, %v1424
    %v2450 = vsel %vm2445, %v2385, %v1426
    %v2451 = vsel %vm2445, %v2386, %v1428
    %v2452 = vsel %vm2445, %v2387, %v1430
    %v2453 = vsel %vm2445, %v2388, %v1432
    %v2454 = vsel %vm2445, %v2389, %v1434
    %v2455 = vsel %vm2445, %v2390, %v1436
    %v2456 = vsel %vm2445, %v2391, %v1438
    %v2457 = vsel %vm2445, %v2392, %v1440
    %v2458 = vsel %vm2445, %v2393, %v1442
    %v2459 = vsel %vm2445, %v2394, %v1444
    %v2460 = vsel %vm2445, %v2395, %v1446
    %v2461 = vsel %vm2445, %v2396, %v1448
    %v2462 = vsel %vm2445, %v2397, %v1450
    %v2463 = vsel %vm2445, %v2398, %v1452
    %v2464 = vsel %vm2445, %v2399, %v1454
    %v2465 = vsel %vm2445, %v2400, %v1456
    %v2466 = vsel %vm2445, %v2401, %v1458
    %v2467 = vsel %vm2445, %v2402, %v1460
    %v2468 = vsel %vm2445, %v2403, %v1462
    %v2469 = vsel %vm2445, %v2404, %v1464
    %v2470 = vsel %vm2445, %v2405, %v1466
    %v2471 = vsel %vm2445, %v2406, %v1468
    %v2472 = vsel %vm2445, %v2407, %v1470
    %v2473 = vsel %vm2445, %v2408, %v1472
    %v2474 = vsel %vm2445, %v2409, %v1474
    %v2475 = vsel %vm2445, %v2410, %v1476
    %v2476 = vsel %vm2445, %v2411, %v1478
    %v2477 = vsel %vm2445, %v2412, %v1480
    %v2478 = vsel %vm2445, %v2413, %v1482
    %v2479 = vsel %vm2445, %v2414, %v1484
    %v2480 = vsel %vm2445, %v2415, %v1486
    %v2481 = vsel %vm2445, %v2416, %v1488
    %v2482 = vsel %vm2445, %v2417, %v1490
    %v2483 = vsel %vm2445, %v2418, %v1492
    %v2484 = vsel %vm2445, %v2419, %v1494
    %v2485 = vsel %vm2445, %v2420, %v1496
    %v2486 = vsel %vm2445, %v2421, %v1498
    %v2487 = vsel %vm2445, %v2422, %v1500
    %v2488 = vsel %vm2445, %v2423, %v1502
    %v2489 = vsel %vm2445, %v2424, %v1504
    %v2490 = vsel %vm2445, %v2425, %v1506
    %v2491 = vsel %vm2445, %v2426, %v1508
    %v2492 = vsel %vm2445, %v2427, %v1510
    %v2493 = vsel %vm2445, %v2428, %v1512
    %v2494 = vsel %vm2445, %v2429, %v1514
    %v2495 = vsel %vm2445, %v2430, %v1516
    %v2496 = vsel %vm2445, %v2431, %v1518
    %v2497 = vsel %vm2445, %v2432, %v1520
    %v2498 = vsel %vm2445, %v2433, %v1522
    %v2499 = vsel %vm2445, %v2434, %v1524
    %v2500 = vsel %vm2445, %v2435, %v1526
    %v2501 = vsel %vm2445, %v2436, %v1528
    %v2502 = vsel %vm2445, %v2437, %v1530
    %v2503 = vsel %vm2445, %v2438, %v1532
    %v2504 = vsel %vm2445, %v2439, %v1534
    %v2505 = vsel %vm2445, %v2440, %v1536
    %v2506 = vsel %vm2445, %v2441, %v1538
    %v2507 = vsel %vm2445, %v2442, %v1540
    %v2508 = vsel %vm2445, %v2443, %v1542
    %v2509 = vsel %vm2445, %v2444, %v1544
    %vm2510 = vcmask 392192
    %v2511 = vsel %vm2510, %v2446, %v1610
    %v2512 = vsel %vm2510, %v2447, %v1612
    %v2513 = vsel %vm2510, %v2448, %v1614
    %v2514 = vsel %vm2510, %v2449, %v1616
    %v2515 = vsel %vm2510, %v2450, %v1618
    %v2516 = vsel %vm2510, %v2451, %v1620
    %v2517 = vsel %vm2510, %v2452, %v1622
    %v2518 = vsel %vm2510, %v2453, %v1624
    %v2519 = vsel %vm2510, %v2454, %v1626
    %v2520 = vsel %vm2510, %v2455, %v1628
    %v2521 = vsel %vm2510, %v2456, %v1630
    %v2522 = vsel %vm2510, %v2457, %v1632
    %v2523 = vsel %vm2510, %v2458, %v1634
    %v2524 = vsel %vm2510, %v2459, %v1636
    %v2525 = vsel %vm2510, %v2460, %v1638
    %v2526 = vsel %vm2510, %v2461, %v1640
    %v2527 = vsel %vm2510, %v2462, %v1642
    %v2528 = vsel %vm2510, %v2463, %v1644
    %v2529 = vsel %vm2510, %v2464, %v1646
    %v2530 = vsel %vm2510, %v2465, %v1648
    %v2531 = vsel %vm2510, %v2466, %v1650
    %v2532 = vsel %vm2510, %v2467, %v1652
    %v2533 = vsel %vm2510, %v2468, %v1654
    %v2534 = vsel %vm2510, %v2469, %v1656
    %v2535 = vsel %vm2510, %v2470, %v1658
    %v2536 = vsel %vm2510, %v2471, %v1660
    %v2537 = vsel %vm2510, %v2472, %v1662
    %v2538 = vsel %vm2510, %v2473, %v1664
    %v2539 = vsel %vm2510, %v2474, %v1666
    %v2540 = vsel %vm2510, %v2475, %v1668
    %v2541 = vsel %vm2510, %v2476, %v1670
    %v2542 = vsel %vm2510, %v2477, %v1672
    %v2543 = vsel %vm2510, %v2478, %v1674
    %v2544 = vsel %vm2510, %v2479, %v1676
    %v2545 = vsel %vm2510, %v2480, %v1678
    %v2546 = vsel %vm2510, %v2481, %v1680
    %v2547 = vsel %vm2510, %v2482, %v1682
    %v2548 = vsel %vm2510, %v2483, %v1684
    %v2549 = vsel %vm2510, %v2484, %v1686
    %v2550 = vsel %vm2510, %v2485, %v1688
    %v2551 = vsel %vm2510, %v2486, %v1690
    %v2552 = vsel %vm2510, %v2487, %v1692
    %v2553 = vsel %vm2510, %v2488, %v1694
    %v2554 = vsel %vm2510, %v2489, %v1696
    %v2555 = vsel %vm2510, %v2490, %v1698
    %v2556 = vsel %vm2510, %v2491, %v1700
    %v2557 = vsel %vm2510, %v2492, %v1702
    %v2558 = vsel %vm2510, %v2493, %v1704
    %v2559 = vsel %vm2510, %v2494, %v1706
    %v2560 = vsel %vm2510, %v2495, %v1708
    %v2561 = vsel %vm2510, %v2496, %v1710
    %v2562 = vsel %vm2510, %v2497, %v1712
    %v2563 = vsel %vm2510, %v2498, %v1714
    %v2564 = vsel %vm2510, %v2499, %v1716
    %v2565 = vsel %vm2510, %v2500, %v1718
    %v2566 = vsel %vm2510, %v2501, %v1720
    %v2567 = vsel %vm2510, %v2502, %v1722
    %v2568 = vsel %vm2510, %v2503, %v1724
    %v2569 = vsel %vm2510, %v2504, %v1726
    %v2570 = vsel %vm2510, %v2505, %v1728
    %v2571 = vsel %vm2510, %v2506, %v1730
    %v2572 = vsel %vm2510, %v2507, %v1732
    %v2573 = vsel %vm2510, %v2508, %v1734
    %v2574 = vsel %vm2510, %v2509, %v1736
    %vm2575 = vcmask 457728
    %v2576 = vsel %vm2575, %v2511, %v1802
    %v2577 = vsel %vm2575, %v2512, %v1804
    %v2578 = vsel %vm2575, %v2513, %v1806
    %v2579 = vsel %vm2575, %v2514, %v1808
    %v2580 = vsel %vm2575, %v2515, %v1810
    %v2581 = vsel %vm2575, %v2516, %v1812
    %v2582 = vsel %vm2575, %v2517, %v1814
    %v2583 = vsel %vm2575, %v2518, %v1816
    %v2584 = vsel %vm2575, %v2519, %v1818
    %v2585 = vsel %vm2575, %v2520, %v1820
    %v2586 = vsel %vm2575, %v2521, %v1822
    %v2587 = vsel %vm2575, %v2522, %v1824
    %v2588 = vsel %vm2575, %v2523, %v1826
    %v2589 = vsel %vm2575, %v2524, %v1828
    %v2590 = vsel %vm2575, %v2525, %v1830
    %v2591 = vsel %vm2575, %v2526, %v1832
    %v2592 = vsel %vm2575, %v2527, %v1834
    %v2593 = vsel %vm2575, %v2528, %v1836
    %v2594 = vsel %vm2575, %v2529, %v1838
    %v2595 = vsel %vm2575, %v2530, %v1840
    %v2596 = vsel %vm2575, %v2531, %v1842
    %v2597 = vsel %vm2575, %v2532, %v1844
    %v2598 = vsel %vm2575, %v2533, %v1846
    %v2599 = vsel %vm2575, %v2534, %v1848
    %v2600 = vsel %vm2575, %v2535, %v1850
    %v2601 = vsel %vm2575, %v2536, %v1852
    %v2602 = vsel %vm2575, %v2537, %v1854
    %v2603 = vsel %vm2575, %v2538, %v1856
    %v2604 = vsel %vm2575, %v2539, %v1858
    %v2605 = vsel %vm2575, %v2540, %v1860
    %v2606 = vsel %vm2575, %v2541, %v1862
    %v2607 = vsel %vm2575, %v2542, %v1864
    %v2608 = vsel %vm2575, %v2543, %v1866
    %v2609 = vsel %vm2575, %v2544, %v1868
    %v2610 = vsel %vm2575, %v2545, %v1870
    %v2611 = vsel %vm2575, %v2546, %v1872
    %v2612 = vsel %vm2575, %v2547, %v1874
    %v2613 = vsel %vm2575, %v2548, %v1876
    %v2614 = vsel %vm2575, %v2549, %v1878
    %v2615 = vsel %vm2575, %v2550, %v1880
    %v2616 = vsel %vm2575, %v2551, %v1882
    %v2617 = vsel %vm2575, %v2552, %v1884
    %v2618 = vsel %vm2575, %v2553, %v1886
    %v2619 = vsel %vm2575, %v2554, %v1888
    %v2620 = vsel %vm2575, %v2555, %v1890
    %v2621 = vsel %vm2575, %v2556, %v1892
    %v2622 = vsel %vm2575, %v2557, %v1894
    %v2623 = vsel %vm2575, %v2558, %v1896
    %v2624 = vsel %vm2575, %v2559, %v1898
    %v2625 = vsel %vm2575, %v2560, %v1900
    %v2626 = vsel %vm2575, %v2561, %v1902
    %v2627 = vsel %vm2575, %v2562, %v1904
    %v2628 = vsel %vm2575, %v2563, %v1906
    %v2629 = vsel %vm2575, %v2564, %v1908
    %v2630 = vsel %vm2575, %v2565, %v1910
    %v2631 = vsel %vm2575, %v2566, %v1912
    %v2632 = vsel %vm2575, %v2567, %v1914
    %v2633 = vsel %vm2575, %v2568, %v1916
    %v2634 = vsel %vm2575, %v2569, %v1918
    %v2635 = vsel %vm2575, %v2570, %v1920
    %v2636 = vsel %vm2575, %v2571, %v1922
    %v2637 = vsel %vm2575, %v2572, %v1924
    %v2638 = vsel %vm2575, %v2573, %v1926
    %v2639 = vsel %vm2575, %v2574, %v1928
    %vm2640 = vcmask 523264
    %v2641 = vsel %vm2640, %v2576, %v1994
    %v2642 = vsel %vm2640, %v2577, %v1996
    %v2643 = vsel %vm2640, %v2578, %v1998
    %v2644 = vsel %vm2640, %v2579, %v2000
    %v2645 = vsel %vm2640, %v2580, %v2002
    %v2646 = vsel %vm2640, %v2581, %v2004
    %v2647 = vsel %vm2640, %v2582, %v2006
    %v2648 = vsel %vm2640, %v2583, %v2008
    %v2649 = vsel %vm2640, %v2584, %v2010
    %v2650 = vsel %vm2640, %v2585, %v2012
    %v2651 = vsel %vm2640, %v2586, %v2014
    %v2652 = vsel %vm2640, %v2587, %v2016
    %v2653 = vsel %vm2640, %v2588, %v2018
    %v2654 = vsel %vm2640, %v2589, %v2020
    %v2655 = vsel %vm2640, %v2590, %v2022
    %v2656 = vsel %vm2640, %v2591, %v2024
    %v2657 = vsel %vm2640, %v2592, %v2026
    %v2658 = vsel %vm2640, %v2593, %v2028
    %v2659 = vsel %vm2640, %v2594, %v2030
    %v2660 = vsel %vm2640, %v2595, %v2032
    %v2661 = vsel %vm2640, %v2596, %v2034
    %v2662 = vsel %vm2640, %v2597, %v2036
    %v2663 = vsel %vm2640, %v2598, %v2038
    %v2664 = vsel %vm2640, %v2599, %v2040
    %v2665 = vsel %vm2640, %v2600, %v2042
    %v2666 = vsel %vm2640, %v2601, %v2044
    %v2667 = vsel %vm2640, %v2602, %v2046
    %v2668 = vsel %vm2640, %v2603, %v2048
    %v2669 = vsel %vm2640, %v2604, %v2050
    %v2670 = vsel %vm2640, %v2605, %v2052
    %v2671 = vsel %vm2640, %v2606, %v2054
    %v2672 = vsel %vm2640, %v2607, %v2056
    %v2673 = vsel %vm2640, %v2608, %v2058
    %v2674 = vsel %vm2640, %v2609, %v2060
    %v2675 = vsel %vm2640, %v2610, %v2062
    %v2676 = vsel %vm2640, %v2611, %v2064
    %v2677 = vsel %vm2640, %v2612, %v2066
    %v2678 = vsel %vm2640, %v2613, %v2068
    %v2679 = vsel %vm2640, %v2614, %v2070
    %v2680 = vsel %vm2640, %v2615, %v2072
    %v2681 = vsel %vm2640, %v2616, %v2074
    %v2682 = vsel %vm2640, %v2617, %v2076
    %v2683 = vsel %vm2640, %v2618, %v2078
    %v2684 = vsel %vm2640, %v2619, %v2080
    %v2685 = vsel %vm2640, %v2620, %v2082
    %v2686 = vsel %vm2640, %v2621, %v2084
    %v2687 = vsel %vm2640, %v2622, %v2086
    %v2688 = vsel %vm2640, %v2623, %v2088
    %v2689 = vsel %vm2640, %v2624, %v2090
    %v2690 = vsel %vm2640, %v2625, %v2092
    %v2691 = vsel %vm2640, %v2626, %v2094
    %v2692 = vsel %vm2640, %v2627, %v2096
    %v2693 = vsel %vm2640, %v2628, %v2098
    %v2694 = vsel %vm2640, %v2629, %v2100
    %v2695 = vsel %vm2640, %v2630, %v2102
    %v2696 = vsel %vm2640, %v2631, %v2104
    %v2697 = vsel %vm2640, %v2632, %v2106
    %v2698 = vsel %vm2640, %v2633, %v2108
    %v2699 = vsel %vm2640, %v2634, %v2110
    %v2700 = vsel %vm2640, %v2635, %v2112
    %v2701 = vsel %vm2640, %v2636, %v2114
    %v2702 = vsel %vm2640, %v2637, %v2116
    %v2703 = vsel %vm2640, %v2638, %v2118
    %v2704 = vsel %vm2640, %v2639, %v2120
    %v2706 = vlaneseq
    %v2707 = vshrl.u32 %v2706, 7
    %v2708 = vsub.s32 0, %v2707
    %v2709 = vrot.slane %v178, %v2708
    %vm2711 = vcmask 588800
    %v2713 = vsel %vm2711, %v2641, 0
    %v2716 = vsel %vm2711, %v2642, 0
    %v2719 = vsel %vm2711, %v2643, 0
    %v2722 = vsel %vm2711, %v2644, 0
    %v2725 = vsel %vm2711, %v2645, 0
    %v2728 = vsel %vm2711, %v2646, 0
    %v2731 = vsel %vm2711, %v2647, 0
    %v2734 = vsel %vm2711, %v2648, 0
    %v2737 = vsel %vm2711, %v2649, 0
    %v2740 = vsel %vm2711, %v2650, 0
    %v2743 = vsel %vm2711, %v2651, 0
    %v2746 = vsel %vm2711, %v2652, 0
    %v2749 = vsel %vm2711, %v2653, 0
    %v2752 = vsel %vm2711, %v2654, 0
    %v2755 = vsel %vm2711, %v2655, 0
    %v2758 = vsel %vm2711, %v2656, 0
    %v2761 = vsel %vm2711, %v2657, 0
    %v2764 = vsel %vm2711, %v2658, 0
    %v2767 = vsel %vm2711, %v2659, 0
    %v2770 = vsel %vm2711, %v2660, 0
    %v2773 = vsel %vm2711, %v2661, 0
    %v2776 = vsel %vm2711, %v2662, 0
    %v2779 = vsel %vm2711, %v2663, 0
    %v2782 = vsel %vm2711, %v2664, 0
    %v2785 = vsel %vm2711, %v2665, 0
    %v2788 = vsel %vm2711, %v2666, 0
    %v2791 = vsel %vm2711, %v2667, 0
    %v2794 = vsel %vm2711, %v2668, 0
    %v2797 = vsel %vm2711, %v2669, 0
    %v2800 = vsel %vm2711, %v2670, 0
    %v2803 = vsel %vm2711, %v2671, 0
    %v2806 = vsel %vm2711, %v2672, 0
    %v2809 = vsel %vm2711, %v2673, 0
    %v2812 = vsel %vm2711, %v2674, 0
    %v2815 = vsel %vm2711, %v2675, 0
    %v2818 = vsel %vm2711, %v2676, 0
    %v2821 = vsel %vm2711, %v2677, 0
    %v2824 = vsel %vm2711, %v2678, 0
    %v2827 = vsel %vm2711, %v2679, 0
    %v2830 = vsel %vm2711, %v2680, 0
    %v2833 = vsel %vm2711, %v2681, 0
    %v2836 = vsel %vm2711, %v2682, 0
    %v2839 = vsel %vm2711, %v2683, 0
    %v2842 = vsel %vm2711, %v2684, 0
    %v2845 = vsel %vm2711, %v2685, 0
    %v2848 = vsel %vm2711, %v2686, 0
    %v2851 = vsel %vm2711, %v2687, 0
    %v2854 = vsel %vm2711, %v2688, 0
    %v2857 = vsel %vm2711, %v2689, 0
    %v2860 = vsel %vm2711, %v2690, 0
    %v2863 = vsel %vm2711, %v2691, 0
    %v2866 = vsel %vm2711, %v2692, 0
    %v2869 = vsel %vm2711, %v2693, 0
    %v2872 = vsel %vm2711, %v2694, 0
    %v2875 = vsel %vm2711, %v2695, 0
    %v2878 = vsel %vm2711, %v2696, 0
    %v2881 = vsel %vm2711, %v2697, 0
    %v2884 = vsel %vm2711, %v2698, 0
    %v2887 = vsel %vm2711, %v2699, 0
    %v2890 = vsel %vm2711, %v2700, 0
    %v2893 = vsel %vm2711, %v2701, 0
    %v2896 = vsel %vm2711, %v2702, 0
    %v2899 = vsel %vm2711, %v2703, 0
    %v2902 = vsel %vm2711, %v2704, 0
    %2904 = vmatprep.subr.mxu0 0.0
    %2905 = vmatpush1.msra.mxu0 %v169
    %2906 = vmatprep.subr.mxu0 0.0
    %2907 = vmatpush1.msra.mxu0 %v170
    %2908 = vmatprep.subr.mxu0 0.0
    %2909 = vmatpush1.msra.mxu0 %v171
    %2910 = vmatprep.subr.mxu0 0.0
    %2911 = vmatpush1.msra.mxu0 %v172
    %2912 = vmatprep.subr.mxu0 0.0
    %2913 = vmatpush1.msra.mxu0 %v173
    %2914 = vmatprep.subr.mxu0 0.0
    %2915 = vmatpush1.msra.mxu0 %v174
    %2916 = vmatprep.subr.mxu0 0.0
    %2917 = vmatpush1.msra.mxu0 %v175
    %2918 = vmatprep.subr.mxu0 0.0
    %2919 = vmatpush1.msra.mxu0 %v176
    %2920 = vmatprep.subr.mxu0 0.0
    %2921 = vmatpush1.msra.mxu0 %v177
    %2922 = vmatprep.subr.mxu0 0.0
    %2923 = vmatpush1.msra.mxu0 0.0
    %2924 = vmatprep.subr.mxu0 0.0
    %2925 = vmatpush1.msra.mxu0 0.0
    %2926 = vmatprep.subr.mxu0 0.0
    %2927 = vmatpush1.msra.mxu0 0.0
    %2928 = vmatprep.subr.mxu0 0.0
    %2929 = vmatpush1.msra.mxu0 0.0
    %2930 = vmatprep.subr.mxu0 0.0
    %2931 = vmatpush1.msra.mxu0 0.0
    %2932 = vmatprep.subr.mxu0 0.0
    %2933 = vmatpush1.msra.mxu0 0.0
    %2934 = vmatprep.subr.mxu0 0.0
    %2935 = vmatpush1.msra.mxu0 0.0
    %2936 = vmatprep.subr.mxu0 0.0
    %2937 = vmatpush1.msra.mxu0 0.0
    %2938 = vmatprep.subr.mxu0 0.0
    %2939 = vmatpush1.msra.mxu0 0.0
    %2940 = vmatprep.subr.mxu0 0.0
    %2941 = vmatpush1.msra.mxu0 0.0
    %2942 = vmatprep.subr.mxu0 0.0
    %2943 = vmatpush1.msra.mxu0 0.0
    %2944 = vmatprep.subr.mxu0 0.0
    %2945 = vmatpush1.msra.mxu0 0.0
    %2946 = vmatprep.subr.mxu0 0.0
    %2947 = vmatpush1.msra.mxu0 0.0
    %2948 = vmatprep.subr.mxu0 0.0
    %2949 = vmatpush1.msra.mxu0 0.0
    %2950 = vmatprep.subr.mxu0 0.0
    %2951 = vmatpush1.msra.mxu0 0.0
    %2952 = vmatprep.subr.mxu0 0.0
    %2953 = vmatpush1.msra.mxu0 0.0
    %2954 = vmatprep.subr.mxu0 0.0
    %2955 = vmatpush1.msra.mxu0 0.0
    %2956 = vmatprep.subr.mxu0 0.0
    %2957 = vmatpush1.msra.mxu0 0.0
    %2958 = vmatprep.subr.mxu0 0.0
    %2959 = vmatpush1.msra.mxu0 0.0
    %2960 = vmatprep.subr.mxu0 0.0
    %2961 = vmatpush1.msra.mxu0 0.0
    %2962 = vmatprep.subr.mxu0 0.0
    %2963 = vmatpush1.msra.mxu0 0.0
    %2964 = vmatprep.subr.mxu0 0.0
    %2965 = vmatpush1.msra.mxu0 0.0
    %2966 = vmatprep.subr.mxu0 0.0
    %2967 = vmatpush1.msra.mxu0 0.0
    %2968 = vmatprep.mubr.f32.mxu0 0.0
    %2969 = vmatmul.mubr.f32.gmra.mrb[0].mxu0 %v2713
    %v2970 = vpop.f32.mrb[0].mxu0
    %v2971 = vadd.f32 %v2709, %v2970
    %v2972 = vpop.f32.mrb[0].mxu0
    %2973 = vmatprep.mubr.f32.mxu0 0.0
    %2974 = vmatmul.mubr.f32.gmra.mrb[0].mxu0 %v2716
    %v2975 = vpop.f32.mrb[0].mxu0
    %v2976 = vadd.f32 %v2709, %v2975
    %v2977 = vpop.f32.mrb[0].mxu0
    %2978 = vmatprep.mubr.f32.mxu0 0.0
    %2979 = vmatmul.mubr.f32.gmra.mrb[0].mxu0 %v2719
    %v2980 = vpop.f32.mrb[0].mxu0
    %v2981 = vadd.f32 %v2709, %v2980
    %v2982 = vpop.f32.mrb[0].mxu0
    %2983 = vmatprep.mubr.f32.mxu0 0.0
    %2984 = vmatmul.mubr.f32.gmra.mrb[0].mxu0 %v2722
    %v2985 = vpop.f32.mrb[0].mxu0
    %v2986 = vadd.f32 %v2709, %v2985
    %v2987 = vpop.f32.mrb[0].mxu0
    %2988 = vmatprep.mubr.f32.mxu0 0.0
    %2989 = vmatmul.mubr.f32.gmra.mrb[0].mxu0 %v2725
    %v2990 = vpop.f32.mrb[0].mxu0
    %v2991 = vadd.f32 %v2709, %v2990
    %v2992 = vpop.f32.mrb[0].mxu0
    %2993 = vmatprep.mubr.f32.mxu0 0.0
    %2994 = vmatmul.mubr.f32.gmra.mrb[0].mxu0 %v2728
    %v2995 = vpop.f32.mrb[0].mxu0
    %v2996 = vadd.f32 %v2709, %v2995
    %v2997 = vpop.f32.mrb[0].mxu0
    %2998 = vmatprep.mubr.f32.mxu0 0.0
    %2999 = vmatmul.mubr.f32.gmra.mrb[0].mxu0 %v2731
    %v3000 = vpop.f32.mrb[0].mxu0
    %v3001 = vadd.f32 %v2709, %v3000
    %v3002 = vpop.f32.mrb[0].mxu0
    %3003 = vmatprep.mubr.f32.mxu0 0.0
    %3004 = vmatmul.mubr.f32.gmra.mrb[0].mxu0 %v2734
    %v3005 = vpop.f32.mrb[0].mxu0
    %v3006 = vadd.f32 %v2709, %v3005
    %v3007 = vpop.f32.mrb[0].mxu0
    %3008 = vmatprep.mubr.f32.mxu0 0.0
    %3009 = vmatmul.mubr.f32.gmra.mrb[0].mxu0 %v2737
    %v3010 = vpop.f32.mrb[0].mxu0
    %v3011 = vadd.f32 %v2709, %v3010
    %v3012 = vpop.f32.mrb[0].mxu0
    %3013 = vmatprep.mubr.f32.mxu0 0.0
    %3014 = vmatmul.mubr.f32.gmra.mrb[0].mxu0 %v2740
    %v3015 = vpop.f32.mrb[0].mxu0
    %v3016 = vadd.f32 %v2709, %v3015
    %v3017 = vpop.f32.mrb[0].mxu0
    %3018 = vmatprep.mubr.f32.mxu0 0.0
    %3019 = vmatmul.mubr.f32.gmra.mrb[0].mxu0 %v2743
    %v3020 = vpop.f32.mrb[0].mxu0
    %v3021 = vadd.f32 %v2709, %v3020
    %v3022 = vpop.f32.mrb[0].mxu0
    %3023 = vmatprep.mubr.f32.mxu0 0.0
    %3024 = vmatmul.mubr.f32.gmra.mrb[0].mxu0 %v2746
    %v3025 = vpop.f32.mrb[0].mxu0
    %v3026 = vadd.f32 %v2709, %v3025
    %v3027 = vpop.f32.mrb[0].mxu0
    %3028 = vmatprep.mubr.f32.mxu0 0.0
    %3029 = vmatmul.mubr.f32.gmra.mrb[0].mxu0 %v2749
    %v3030 = vpop.f32.mrb[0].mxu0
    %v3031 = vadd.f32 %v2709, %v3030
    %v3032 = vpop.f32.mrb[0].mxu0
    %3033 = vmatprep.mubr.f32.mxu0 0.0
    %3034 = vmatmul.mubr.f32.gmra.mrb[0].mxu0 %v2752
    %v3035 = vpop.f32.mrb[0].mxu0
    %v3036 = vadd.f32 %v2709, %v3035
    %v3037 = vpop.f32.mrb[0].mxu0
    %3038 = vmatprep.mubr.f32.mxu0 0.0
    %3039 = vmatmul.mubr.f32.gmra.mrb[0].mxu0 %v2755
    %v3040 = vpop.f32.mrb[0].mxu0
    %v3041 = vadd.f32 %v2709, %v3040
    %v3042 = vpop.f32.mrb[0].mxu0
    %3043 = vmatprep.mubr.f32.mxu0 0.0
    %3044 = vmatmul.mubr.f32.gmra.mrb[0].mxu0 %v2758
    %v3045 = vpop.f32.mrb[0].mxu0
    %v3046 = vadd.f32 %v2709, %v3045
    %v3047 = vpop.f32.mrb[0].mxu0
    %3048 = vmatprep.mubr.f32.mxu0 0.0
    %3049 = vmatmul.mubr.f32.gmra.mrb[0].mxu0 %v2761
    %v3050 = vpop.f32.mrb[0].mxu0
    %v3051 = vadd.f32 %v2709, %v3050
    %v3052 = vpop.f32.mrb[0].mxu0
    %3053 = vmatprep.mubr.f32.mxu0 0.0
    %3054 = vmatmul.mubr.f32.gmra.mrb[0].mxu0 %v2764
    %v3055 = vpop.f32.mrb[0].mxu0
    %v3056 = vadd.f32 %v2709, %v3055
    %v3057 = vpop.f32.mrb[0].mxu0
    %3058 = vmatprep.mubr.f32.mxu0 0.0
    %3059 = vmatmul.mubr.f32.gmra.mrb[0].mxu0 %v2767
    %v3060 = vpop.f32.mrb[0].mxu0
    %v3061 = vadd.f32 %v2709, %v3060
    %v3062 = vpop.f32.mrb[0].mxu0
    %3063 = vmatprep.mubr.f32.mxu0 0.0
    %3064 = vmatmul.mubr.f32.gmra.mrb[0].mxu0 %v2770
    %v3065 = vpop.f32.mrb[0].mxu0
    %v3066 = vadd.f32 %v2709, %v3065
    %v3067 = vpop.f32.mrb[0].mxu0
    %3068 = vmatprep.mubr.f32.mxu0 0.0
    %3069 = vmatmul.mubr.f32.gmra.mrb[0].mxu0 %v2773
    %v3070 = vpop.f32.mrb[0].mxu0
    %v3071 = vadd.f32 %v2709, %v3070
    %v3072 = vpop.f32.mrb[0].mxu0
    %3073 = vmatprep.mubr.f32.mxu0 0.0
    %3074 = vmatmul.mubr.f32.gmra.mrb[0].mxu0 %v2776
    %v3075 = vpop.f32.mrb[0].mxu0
    %v3076 = vadd.f32 %v2709, %v3075
    %v3077 = vpop.f32.mrb[0].mxu0
    %3078 = vmatprep.mubr.f32.mxu0 0.0
    %3079 = vmatmul.mubr.f32.gmra.mrb[0].mxu0 %v2779
    %v3080 = vpop.f32.mrb[0].mxu0
    %v3081 = vadd.f32 %v2709, %v3080
    %v3082 = vpop.f32.mrb[0].mxu0
    %3083 = vmatprep.mubr.f32.mxu0 0.0
    %3084 = vmatmul.mubr.f32.gmra.mrb[0].mxu0 %v2782
    %v3085 = vpop.f32.mrb[0].mxu0
    %v3086 = vadd.f32 %v2709, %v3085
    %v3087 = vpop.f32.mrb[0].mxu0
    %3088 = vmatprep.mubr.f32.mxu0 0.0
    %3089 = vmatmul.mubr.f32.gmra.mrb[0].mxu0 %v2785
    %v3090 = vpop.f32.mrb[0].mxu0
    %v3091 = vadd.f32 %v2709, %v3090
    %v3092 = vpop.f32.mrb[0].mxu0
    %3093 = vmatprep.mubr.f32.mxu0 0.0
    %3094 = vmatmul.mubr.f32.gmra.mrb[0].mxu0 %v2788
    %v3095 = vpop.f32.mrb[0].mxu0
    %v3096 = vadd.f32 %v2709, %v3095
    %v3097 = vpop.f32.mrb[0].mxu0
    %3098 = vmatprep.mubr.f32.mxu0 0.0
    %3099 = vmatmul.mubr.f32.gmra.mrb[0].mxu0 %v2791
    %v3100 = vpop.f32.mrb[0].mxu0
    %v3101 = vadd.f32 %v2709, %v3100
    %v3102 = vpop.f32.mrb[0].mxu0
    %3103 = vmatprep.mubr.f32.mxu0 0.0
    %3104 = vmatmul.mubr.f32.gmra.mrb[0].mxu0 %v2794
    %v3105 = vpop.f32.mrb[0].mxu0
    %v3106 = vadd.f32 %v2709, %v3105
    %v3107 = vpop.f32.mrb[0].mxu0
    %3108 = vmatprep.mubr.f32.mxu0 0.0
    %3109 = vmatmul.mubr.f32.gmra.mrb[0].mxu0 %v2797
    %v3110 = vpop.f32.mrb[0].mxu0
    %v3111 = vadd.f32 %v2709, %v3110
    %v3112 = vpop.f32.mrb[0].mxu0
    %3113 = vmatprep.mubr.f32.mxu0 0.0
    %3114 = vmatmul.mubr.f32.gmra.mrb[0].mxu0 %v2800
    %v3115 = vpop.f32.mrb[0].mxu0
    %v3116 = vadd.f32 %v2709, %v3115
    %v3117 = vpop.f32.mrb[0].mxu0
    %3118 = vmatprep.mubr.f32.mxu0 0.0
    %3119 = vmatmul.mubr.f32.gmra.mrb[0].mxu0 %v2803
    %v3120 = vpop.f32.mrb[0].mxu0
    %v3121 = vadd.f32 %v2709, %v3120
    %v3122 = vpop.f32.mrb[0].mxu0
    %3123 = vmatprep.mubr.f32.mxu0 0.0
    %3124 = vmatmul.mubr.f32.gmra.mrb[0].mxu0 %v2806
    %v3125 = vpop.f32.mrb[0].mxu0
    %v3126 = vadd.f32 %v2709, %v3125
    %v3127 = vpop.f32.mrb[0].mxu0
    %3128 = vmatprep.mubr.f32.mxu0 0.0
    %3129 = vmatmul.mubr.f32.gmra.mrb[0].mxu0 %v2809
    %v3130 = vpop.f32.mrb[0].mxu0
    %v3131 = vadd.f32 %v2709, %v3130
    %v3132 = vpop.f32.mrb[0].mxu0
    %3133 = vmatprep.mubr.f32.mxu0 0.0
    %3134 = vmatmul.mubr.f32.gmra.mrb[0].mxu0 %v2812
    %v3135 = vpop.f32.mrb[0].mxu0
    %v3136 = vadd.f32 %v2709, %v3135
    %v3137 = vpop.f32.mrb[0].mxu0
    %3138 = vmatprep.mubr.f32.mxu0 0.0
    %3139 = vmatmul.mubr.f32.gmra.mrb[0].mxu0 %v2815
    %v3140 = vpop.f32.mrb[0].mxu0
    %v3141 = vadd.f32 %v2709, %v3140
    %v3142 = vpop.f32.mrb[0].mxu0
    %3143 = vmatprep.mubr.f32.mxu0 0.0
    %3144 = vmatmul.mubr.f32.gmra.mrb[0].mxu0 %v2818
    %v3145 = vpop.f32.mrb[0].mxu0
    %v3146 = vadd.f32 %v2709, %v3145
    %v3147 = vpop.f32.mrb[0].mxu0
    %3148 = vmatprep.mubr.f32.mxu0 0.0
    %3149 = vmatmul.mubr.f32.gmra.mrb[0].mxu0 %v2821
    %v3150 = vpop.f32.mrb[0].mxu0
    %v3151 = vadd.f32 %v2709, %v3150
    %v3152 = vpop.f32.mrb[0].mxu0
    %3153 = vmatprep.mubr.f32.mxu0 0.0
    %3154 = vmatmul.mubr.f32.gmra.mrb[0].mxu0 %v2824
    %v3155 = vpop.f32.mrb[0].mxu0
    %v3156 = vadd.f32 %v2709, %v3155
    %v3157 = vpop.f32.mrb[0].mxu0
    %3158 = vmatprep.mubr.f32.mxu0 0.0
    %3159 = vmatmul.mubr.f32.gmra.mrb[0].mxu0 %v2827
    %v3160 = vpop.f32.mrb[0].mxu0
    %v3161 = vadd.f32 %v2709, %v3160
    %v3162 = vpop.f32.mrb[0].mxu0
    %3163 = vmatprep.mubr.f32.mxu0 0.0
    %3164 = vmatmul.mubr.f32.gmra.mrb[0].mxu0 %v2830
    %v3165 = vpop.f32.mrb[0].mxu0
    %v3166 = vadd.f32 %v2709, %v3165
    %v3167 = vpop.f32.mrb[0].mxu0
    %3168 = vmatprep.mubr.f32.mxu0 0.0
    %3169 = vmatmul.mubr.f32.gmra.mrb[0].mxu0 %v2833
    %v3170 = vpop.f32.mrb[0].mxu0
    %v3171 = vadd.f32 %v2709, %v3170
    %v3172 = vpop.f32.mrb[0].mxu0
    %3173 = vmatprep.mubr.f32.mxu0 0.0
    %3174 = vmatmul.mubr.f32.gmra.mrb[0].mxu0 %v2836
    %v3175 = vpop.f32.mrb[0].mxu0
    %v3176 = vadd.f32 %v2709, %v3175
    %v3177 = vpop.f32.mrb[0].mxu0
    %3178 = vmatprep.mubr.f32.mxu0 0.0
    %3179 = vmatmul.mubr.f32.gmra.mrb[0].mxu0 %v2839
    %v3180 = vpop.f32.mrb[0].mxu0
    %v3181 = vadd.f32 %v2709, %v3180
    %v3182 = vpop.f32.mrb[0].mxu0
    %3183 = vmatprep.mubr.f32.mxu0 0.0
    %3184 = vmatmul.mubr.f32.gmra.mrb[0].mxu0 %v2842
    %v3185 = vpop.f32.mrb[0].mxu0
    %v3186 = vadd.f32 %v2709, %v3185
    %v3187 = vpop.f32.mrb[0].mxu0
    %3188 = vmatprep.mubr.f32.mxu0 0.0
    %3189 = vmatmul.mubr.f32.gmra.mrb[0].mxu0 %v2845
    %v3190 = vpop.f32.mrb[0].mxu0
    %v3191 = vadd.f32 %v2709, %v3190
    %v3192 = vpop.f32.mrb[0].mxu0
    %3193 = vmatprep.mubr.f32.mxu0 0.0
    %3194 = vmatmul.mubr.f32.gmra.mrb[0].mxu0 %v2848
    %v3195 = vpop.f32.mrb[0].mxu0
    %v3196 = vadd.f32 %v2709, %v3195
    %v3197 = vpop.f32.mrb[0].mxu0
    %3198 = vmatprep.mubr.f32.mxu0 0.0
    %3199 = vmatmul.mubr.f32.gmra.mrb[0].mxu0 %v2851
    %v3200 = vpop.f32.mrb[0].mxu0
    %v3201 = vadd.f32 %v2709, %v3200
    %v3202 = vpop.f32.mrb[0].mxu0
    %3203 = vmatprep.mubr.f32.mxu0 0.0
    %3204 = vmatmul.mubr.f32.gmra.mrb[0].mxu0 %v2854
    %v3205 = vpop.f32.mrb[0].mxu0
    %v3206 = vadd.f32 %v2709, %v3205
    %v3207 = vpop.f32.mrb[0].mxu0
    %3208 = vmatprep.mubr.f32.mxu0 0.0
    %3209 = vmatmul.mubr.f32.gmra.mrb[0].mxu0 %v2857
    %v3210 = vpop.f32.mrb[0].mxu0
    %v3211 = vadd.f32 %v2709, %v3210
    %v3212 = vpop.f32.mrb[0].mxu0
    %3213 = vmatprep.mubr.f32.mxu0 0.0
    %3214 = vmatmul.mubr.f32.gmra.mrb[0].mxu0 %v2860
    %v3215 = vpop.f32.mrb[0].mxu0
    %v3216 = vadd.f32 %v2709, %v3215
    %v3217 = vpop.f32.mrb[0].mxu0
    %3218 = vmatprep.mubr.f32.mxu0 0.0
    %3219 = vmatmul.mubr.f32.gmra.mrb[0].mxu0 %v2863
    %v3220 = vpop.f32.mrb[0].mxu0
    %v3221 = vadd.f32 %v2709, %v3220
    %v3222 = vpop.f32.mrb[0].mxu0
    %3223 = vmatprep.mubr.f32.mxu0 0.0
    %3224 = vmatmul.mubr.f32.gmra.mrb[0].mxu0 %v2866
    %v3225 = vpop.f32.mrb[0].mxu0
    %v3226 = vadd.f32 %v2709, %v3225
    %v3227 = vpop.f32.mrb[0].mxu0
    %3228 = vmatprep.mubr.f32.mxu0 0.0
    %3229 = vmatmul.mubr.f32.gmra.mrb[0].mxu0 %v2869
    %v3230 = vpop.f32.mrb[0].mxu0
    %v3231 = vadd.f32 %v2709, %v3230
    %v3232 = vpop.f32.mrb[0].mxu0
    %3233 = vmatprep.mubr.f32.mxu0 0.0
    %3234 = vmatmul.mubr.f32.gmra.mrb[0].mxu0 %v2872
    %v3235 = vpop.f32.mrb[0].mxu0
    %v3236 = vadd.f32 %v2709, %v3235
    %v3237 = vpop.f32.mrb[0].mxu0
    %3238 = vmatprep.mubr.f32.mxu0 0.0
    %3239 = vmatmul.mubr.f32.gmra.mrb[0].mxu0 %v2875
    %v3240 = vpop.f32.mrb[0].mxu0
    %v3241 = vadd.f32 %v2709, %v3240
    %v3242 = vpop.f32.mrb[0].mxu0
    %3243 = vmatprep.mubr.f32.mxu0 0.0
    %3244 = vmatmul.mubr.f32.gmra.mrb[0].mxu0 %v2878
    %v3245 = vpop.f32.mrb[0].mxu0
    %v3246 = vadd.f32 %v2709, %v3245
    %v3247 = vpop.f32.mrb[0].mxu0
    %3248 = vmatprep.mubr.f32.mxu0 0.0
    %3249 = vmatmul.mubr.f32.gmra.mrb[0].mxu0 %v2881
    %v3250 = vpop.f32.mrb[0].mxu0
    %v3251 = vadd.f32 %v2709, %v3250
    %v3252 = vpop.f32.mrb[0].mxu0
    %3253 = vmatprep.mubr.f32.mxu0 0.0
    %3254 = vmatmul.mubr.f32.gmra.mrb[0].mxu0 %v2884
    %v3255 = vpop.f32.mrb[0].mxu0
    %v3256 = vadd.f32 %v2709, %v3255
    %v3257 = vpop.f32.mrb[0].mxu0
    %3258 = vmatprep.mubr.f32.mxu0 0.0
    %3259 = vmatmul.mubr.f32.gmra.mrb[0].mxu0 %v2887
    %v3260 = vpop.f32.mrb[0].mxu0
    %v3261 = vadd.f32 %v2709, %v3260
    %v3262 = vpop.f32.mrb[0].mxu0
    %3263 = vmatprep.mubr.f32.mxu0 0.0
    %3264 = vmatmul.mubr.f32.gmra.mrb[0].mxu0 %v2890
    %v3265 = vpop.f32.mrb[0].mxu0
    %v3266 = vadd.f32 %v2709, %v3265
    %v3267 = vpop.f32.mrb[0].mxu0
    %3268 = vmatprep.mubr.f32.mxu0 0.0
    %3269 = vmatmul.mubr.f32.gmra.mrb[0].mxu0 %v2893
    %v3270 = vpop.f32.mrb[0].mxu0
    %v3271 = vadd.f32 %v2709, %v3270
    %v3272 = vpop.f32.mrb[0].mxu0
    %3273 = vmatprep.mubr.f32.mxu0 0.0
    %3274 = vmatmul.mubr.f32.gmra.mrb[0].mxu0 %v2896
    %v3275 = vpop.f32.mrb[0].mxu0
    %v3276 = vadd.f32 %v2709, %v3275
    %v3277 = vpop.f32.mrb[0].mxu0
    %3278 = vmatprep.mubr.f32.mxu0 0.0
    %3279 = vmatmul.mubr.f32.gmra.mrb[0].mxu0 %v2899
    %v3280 = vpop.f32.mrb[0].mxu0
    %v3281 = vadd.f32 %v2709, %v3280
    %v3282 = vpop.f32.mrb[0].mxu0
    %3283 = vmatprep.mubr.f32.mxu0 0.0
    %3284 = vmatmul.mubr.f32.gmra.mrb[0].mxu0 %v2902
    %v3285 = vpop.f32.mrb[0].mxu0
    %v3286 = vadd.f32 %v2709, %v3285
    %v3287 = vpop.f32.mrb[0].mxu0
    %3288 = vdwg.mxu0
    %v3289 = vmax.f32 %v2971, 0.0
    %v3290 = vmax.f32 %v2976, 0.0
    %v3291 = vmax.f32 %v2981, 0.0
    %v3292 = vmax.f32 %v2986, 0.0
    %v3293 = vmax.f32 %v2991, 0.0
    %v3294 = vmax.f32 %v2996, 0.0
    %v3295 = vmax.f32 %v3001, 0.0
    %v3296 = vmax.f32 %v3006, 0.0
    %v3297 = vmax.f32 %v3011, 0.0
    %v3298 = vmax.f32 %v3016, 0.0
    %v3299 = vmax.f32 %v3021, 0.0
    %v3300 = vmax.f32 %v3026, 0.0
    %v3301 = vmax.f32 %v3031, 0.0
    %v3302 = vmax.f32 %v3036, 0.0
    %v3303 = vmax.f32 %v3041, 0.0
    %v3304 = vmax.f32 %v3046, 0.0
    %v3305 = vmax.f32 %v3051, 0.0
    %v3306 = vmax.f32 %v3056, 0.0
    %v3307 = vmax.f32 %v3061, 0.0
    %v3308 = vmax.f32 %v3066, 0.0
    %v3309 = vmax.f32 %v3071, 0.0
    %v3310 = vmax.f32 %v3076, 0.0
    %v3311 = vmax.f32 %v3081, 0.0
    %v3312 = vmax.f32 %v3086, 0.0
    %v3313 = vmax.f32 %v3091, 0.0
    %v3314 = vmax.f32 %v3096, 0.0
    %v3315 = vmax.f32 %v3101, 0.0
    %v3316 = vmax.f32 %v3106, 0.0
    %v3317 = vmax.f32 %v3111, 0.0
    %v3318 = vmax.f32 %v3116, 0.0
    %v3319 = vmax.f32 %v3121, 0.0
    %v3320 = vmax.f32 %v3126, 0.0
    %v3321 = vmax.f32 %v3131, 0.0
    %v3322 = vmax.f32 %v3136, 0.0
    %v3323 = vmax.f32 %v3141, 0.0
    %v3324 = vmax.f32 %v3146, 0.0
    %v3325 = vmax.f32 %v3151, 0.0
    %v3326 = vmax.f32 %v3156, 0.0
    %v3327 = vmax.f32 %v3161, 0.0
    %v3328 = vmax.f32 %v3166, 0.0
    %v3329 = vmax.f32 %v3171, 0.0
    %v3330 = vmax.f32 %v3176, 0.0
    %v3331 = vmax.f32 %v3181, 0.0
    %v3332 = vmax.f32 %v3186, 0.0
    %v3333 = vmax.f32 %v3191, 0.0
    %v3334 = vmax.f32 %v3196, 0.0
    %v3335 = vmax.f32 %v3201, 0.0
    %v3336 = vmax.f32 %v3206, 0.0
    %v3337 = vmax.f32 %v3211, 0.0
    %v3338 = vmax.f32 %v3216, 0.0
    %v3339 = vmax.f32 %v3221, 0.0
    %v3340 = vmax.f32 %v3226, 0.0
    %v3341 = vmax.f32 %v3231, 0.0
    %v3342 = vmax.f32 %v3236, 0.0
    %v3343 = vmax.f32 %v3241, 0.0
    %v3344 = vmax.f32 %v3246, 0.0
    %v3345 = vmax.f32 %v3251, 0.0
    %v3346 = vmax.f32 %v3256, 0.0
    %v3347 = vmax.f32 %v3261, 0.0
    %v3348 = vmax.f32 %v3266, 0.0
    %v3349 = vmax.f32 %v3271, 0.0
    %v3350 = vmax.f32 %v3276, 0.0
    %v3351 = vmax.f32 %v3281, 0.0
    %v3352 = vmax.f32 %v3286, 0.0
    %3353 = vst.msk [vmem:[#allocation2] sm:$0xff] %vm2640, 0.0
    %3354 = vst.msk [vmem:[#allocation2 + $0x8] sm:$0xff] %vm2640, 0.0
    %vm3355 = vcmask 517120
    %3356 = vst.msk [vmem:[#allocation2 + $0x10] sm:$0x3] %vm3355, 0.0
    %3357 = vst.msk [vmem:[#allocation2 + $0x18] sm:$0xff] %vm2640, 0.0
    %3358 = vst.msk [vmem:[#allocation2 + $0x20] sm:$0xff] %vm2640, 0.0
    %3359 = vst.msk [vmem:[#allocation2 + $0x28] sm:$0x3] %vm3355, 0.0
    %3360 = vst.msk [vmem:[#allocation2 + $0x30] sm:$0xff] %vm2640, 0.0
    %3361 = vst.msk [vmem:[#allocation2 + $0x38] sm:$0xff] %vm2640, 0.0
    %3362 = vst.msk [vmem:[#allocation2 + $0x40] sm:$0x3] %vm3355, 0.0
    %3363 = vst.msk [vmem:[#allocation2 + $0x48] sm:$0xff] %vm2640, 0.0
    %3364 = vst.msk [vmem:[#allocation2 + $0x50] sm:$0xff] %vm2640, 0.0
    %3365 = vst.msk [vmem:[#allocation2 + $0x58] sm:$0x3] %vm3355, 0.0
    %3366 = vst.msk [vmem:[#allocation2 + $0x60] sm:$0xff] %vm2640, 0.0
    %3367 = vst.msk [vmem:[#allocation2 + $0x68] sm:$0xff] %vm2640, 0.0
    %3368 = vst.msk [vmem:[#allocation2 + $0x70] sm:$0x3] %vm3355, 0.0
    %3369 = vst.msk [vmem:[#allocation2 + $0x78] sm:$0xff] %vm2640, 0.0
    %3370 = vst.msk [vmem:[#allocation2 + $0x80] sm:$0xff] %vm2640, 0.0
    %3371 = vst.msk [vmem:[#allocation2 + $0x88] sm:$0x3] %vm3355, 0.0
    %3372 = vst.msk [vmem:[#allocation2 + $0x90] sm:$0xff] %vm2640, 0.0
    %3373 = vst.msk [vmem:[#allocation2 + $0x98] sm:$0xff] %vm2640, 0.0
    %3374 = vst.msk [vmem:[#allocation2 + $0xa0] sm:$0x3] %vm3355, 0.0
    %3375 = vst.msk [vmem:[#allocation2 + $0xa8] sm:$0xff] %vm2640, 0.0
    %3376 = vst.msk [vmem:[#allocation2 + $0xb0] sm:$0xff] %vm2640, 0.0
    %3377 = vst.msk [vmem:[#allocation2 + $0xb8] sm:$0x3] %vm3355, 0.0
    %3378 = vst.msk [vmem:[#allocation2 + $0xc0] sm:$0xff] %vm2640, 0.0
    %3379 = vst.msk [vmem:[#allocation2 + $0xc8] sm:$0xff] %vm2640, 0.0
    %3380 = vst.msk [vmem:[#allocation2 + $0xd0] sm:$0x3] %vm3355, 0.0
    %3381 = vst.msk [vmem:[#allocation2 + $0xd8] sm:$0xff] %vm2640, 0.0
    %3382 = vst.msk [vmem:[#allocation2 + $0xe0] sm:$0xff] %vm2640, 0.0
    %3383 = vst.msk [vmem:[#allocation2 + $0xe8] sm:$0x3] %vm3355, 0.0
    %3384 = vst.msk [vmem:[#allocation2 + $0xf0] sm:$0xff] %vm2640, 0.0
    %3385 = vst.msk [vmem:[#allocation2 + $0xf8] sm:$0xff] %vm2640, 0.0
    %3386 = vst.msk [vmem:[#allocation2 + $0x100] sm:$0x3] %vm3355, 0.0
    %3387 = vst.msk [vmem:[#allocation2 + $0x108] sm:$0xff] %vm2640, 0.0
    %3388 = vst.msk [vmem:[#allocation2 + $0x110] sm:$0xff] %vm2640, 0.0
    %3389 = vst.msk [vmem:[#allocation2 + $0x118] sm:$0x3] %vm3355, 0.0
    %3390 = vst.msk [vmem:[#allocation2 + $0x120] sm:$0xff] %vm2640, 0.0
    %3391 = vst.msk [vmem:[#allocation2 + $0x128] sm:$0xff] %vm2640, 0.0
    %3392 = vst.msk [vmem:[#allocation2 + $0x130] sm:$0x3] %vm3355, 0.0
    %3393 = vst.msk [vmem:[#allocation2 + $0x138] sm:$0xff] %vm2640, 0.0
    %3394 = vst.msk [vmem:[#allocation2 + $0x140] sm:$0xff] %vm2640, 0.0
    %3395 = vst.msk [vmem:[#allocation2 + $0x148] sm:$0x3] %vm3355, 0.0
    %3396 = vst.msk [vmem:[#allocation2 + $0x150] sm:$0xff] %vm2640, 0.0
    %3397 = vst.msk [vmem:[#allocation2 + $0x158] sm:$0xff] %vm2640, 0.0
    %3398 = vst.msk [vmem:[#allocation2 + $0x160] sm:$0x3] %vm3355, 0.0
    %3399 = vst.msk [vmem:[#allocation2 + $0x168] sm:$0xff] %vm2640, 0.0
    %3400 = vst.msk [vmem:[#allocation2 + $0x170] sm:$0xff] %vm2640, 0.0
    %3401 = vst.msk [vmem:[#allocation2 + $0x178] sm:$0x3] %vm3355, 0.0
    %3402 = vst.msk [vmem:[#allocation2 + $0x180] sm:$0xff] %vm2640, 0.0
    %3403 = vst.msk [vmem:[#allocation2 + $0x188] sm:$0xff] %vm2640, 0.0
    %3404 = vst.msk [vmem:[#allocation2 + $0x190] sm:$0x3] %vm3355, 0.0
    %3405 = vst.msk [vmem:[#allocation2 + $0x198] sm:$0xff] %vm2640, 0.0
    %3406 = vst.msk [vmem:[#allocation2 + $0x1a0] sm:$0xff] %vm2640, 0.0
    %3407 = vst.msk [vmem:[#allocation2 + $0x1a8] sm:$0x3] %vm3355, 0.0
    %3408 = vst.msk [vmem:[#allocation2 + $0x1b0] sm:$0xff] %vm2640, 0.0
    %3409 = vst.msk [vmem:[#allocation2 + $0x1b8] sm:$0xff] %vm2640, 0.0
    %3410 = vst.msk [vmem:[#allocation2 + $0x1c0] sm:$0x3] %vm3355, 0.0
    %3411 = vst.msk [vmem:[#allocation2 + $0x1c8] sm:$0xff] %vm2640, 0.0
    %3412 = vst.msk [vmem:[#allocation2 + $0x1d0] sm:$0xff] %vm2640, 0.0
    %3413 = vst.msk [vmem:[#allocation2 + $0x1d8] sm:$0x3] %vm3355, 0.0
    %3414 = vst.msk [vmem:[#allocation2 + $0x1e0] sm:$0xff] %vm2640, 0.0
    %3415 = vst.msk [vmem:[#allocation2 + $0x1e8] sm:$0xff] %vm2640, 0.0
    %3416 = vst.msk [vmem:[#allocation2 + $0x1f0] sm:$0x3] %vm3355, 0.0
    %3417 = vst.msk [vmem:[#allocation2 + $0x1f8] sm:$0xff] %vm2640, 0.0
    %3418 = vst.msk [vmem:[#allocation2 + $0x200] sm:$0xff] %vm2640, 0.0
    %3419 = vst.msk [vmem:[#allocation2 + $0x208] sm:$0x3] %vm3355, 0.0
    %3420 = vst.msk [vmem:[#allocation2 + $0x210] sm:$0xff] %vm2640, 0.0
    %3421 = vst.msk [vmem:[#allocation2 + $0x218] sm:$0xff] %vm2640, 0.0
    %3422 = vst.msk [vmem:[#allocation2 + $0x220] sm:$0x3] %vm3355, 0.0
    %3423 = vst.msk [vmem:[#allocation2 + $0x228] sm:$0xff] %vm2640, 0.0
    %3424 = vst.msk [vmem:[#allocation2 + $0x230] sm:$0xff] %vm2640, 0.0
    %3425 = vst.msk [vmem:[#allocation2 + $0x238] sm:$0x3] %vm3355, 0.0
    %3426 = vst.msk [vmem:[#allocation2 + $0x240] sm:$0xff] %vm2640, 0.0
    %3427 = vst.msk [vmem:[#allocation2 + $0x248] sm:$0xff] %vm2640, 0.0
    %3428 = vst.msk [vmem:[#allocation2 + $0x250] sm:$0x3] %vm3355, 0.0
    %3429 = vst.msk [vmem:[#allocation2 + $0x258] sm:$0xff] %vm2640, 0.0
    %3430 = vst.msk [vmem:[#allocation2 + $0x260] sm:$0xff] %vm2640, 0.0
    %3431 = vst.msk [vmem:[#allocation2 + $0x268] sm:$0x3] %vm3355, 0.0
    %3432 = vst.msk [vmem:[#allocation2 + $0x270] sm:$0xff] %vm2640, 0.0
    %3433 = vst.msk [vmem:[#allocation2 + $0x278] sm:$0xff] %vm2640, 0.0
    %3434 = vst.msk [vmem:[#allocation2 + $0x280] sm:$0x3] %vm3355, 0.0
    %3435 = vst.msk [vmem:[#allocation2 + $0x288] sm:$0xff] %vm2640, 0.0
    %3436 = vst.msk [vmem:[#allocation2 + $0x290] sm:$0xff] %vm2640, 0.0
    %3437 = vst.msk [vmem:[#allocation2 + $0x298] sm:$0x3] %vm3355, 0.0
    %3438 = vst.msk [vmem:[#allocation2 + $0x2a0] sm:$0xff] %vm2640, 0.0
    %3439 = vst.msk [vmem:[#allocation2 + $0x2a8] sm:$0xff] %vm2640, 0.0
    %3440 = vst.msk [vmem:[#allocation2 + $0x2b0] sm:$0x3] %vm3355, 0.0
    %3441 = vst.msk [vmem:[#allocation2 + $0x2b8] sm:$0xff] %vm2640, 0.0
    %3442 = vst.msk [vmem:[#allocation2 + $0x2c0] sm:$0xff] %vm2640, 0.0
    %3443 = vst.msk [vmem:[#allocation2 + $0x2c8] sm:$0x3] %vm3355, 0.0
    %3444 = vst.msk [vmem:[#allocation2 + $0x2d0] sm:$0xff] %vm2640, 0.0
    %3445 = vst.msk [vmem:[#allocation2 + $0x2d8] sm:$0xff] %vm2640, 0.0
    %3446 = vst.msk [vmem:[#allocation2 + $0x2e0] sm:$0x3] %vm3355, 0.0
    %3447 = vst.msk [vmem:[#allocation2 + $0x2e8] sm:$0xff] %vm2640, 0.0
    %3448 = vst.msk [vmem:[#allocation2 + $0x2f0] sm:$0xff] %vm2640, 0.0
    %3449 = vst.msk [vmem:[#allocation2 + $0x2f8] sm:$0x3] %vm3355, 0.0
    %3450 = vst.msk [vmem:[#allocation2 + $0x300] sm:$0xff] %vm2640, 0.0
    %3451 = vst.msk [vmem:[#allocation2 + $0x308] sm:$0xff] %vm2640, 0.0
    %3452 = vst.msk [vmem:[#allocation2 + $0x310] sm:$0x3] %vm3355, 0.0
    %3453 = vst.msk [vmem:[#allocation2 + $0x318] sm:$0xff] %vm2640, 0.0
    %3454 = vst.msk [vmem:[#allocation2 + $0x320] sm:$0xff] %vm2640, 0.0
    %3455 = vst.msk [vmem:[#allocation2 + $0x328] sm:$0x3] %vm3355, 0.0
    %3456 = vst.msk [vmem:[#allocation2 + $0x330] sm:$0xff] %vm2640, 0.0
    %3457 = vst.msk [vmem:[#allocation2 + $0x338] sm:$0xff] %vm2640, 0.0
    %3458 = vst.msk [vmem:[#allocation2 + $0x340] sm:$0x3] %vm3355, 0.0
    %3459 = vst.msk [vmem:[#allocation2 + $0x348] sm:$0xff] %vm2640, 0.0
    %3460 = vst.msk [vmem:[#allocation2 + $0x350] sm:$0xff] %vm2640, 0.0
    %3461 = vst.msk [vmem:[#allocation2 + $0x358] sm:$0x3] %vm3355, 0.0
    %s3462 = scalar_lea.vmem [#allocation2], 24
    %3463 = vst.msk [vmem:[%s3462 + $0x1] sm:$0xff] %vm2640, %v3289
    %3464 = vst.msk [vmem:[%s3462 + $0x9] sm:$0xff] %vm2640, %v3290
    %3465 = vst.msk [vmem:[%s3462 + $0x19] sm:$0xff] %vm2640, %v3291
    %3466 = vst.msk [vmem:[%s3462 + $0x21] sm:$0xff] %vm2640, %v3292
    %3467 = vst.msk [vmem:[%s3462 + $0x31] sm:$0xff] %vm2640, %v3293
    %3468 = vst.msk [vmem:[%s3462 + $0x39] sm:$0xff] %vm2640, %v3294
    %3469 = vst.msk [vmem:[%s3462 + $0x49] sm:$0xff] %vm2640, %v3295
    %3470 = vst.msk [vmem:[%s3462 + $0x51] sm:$0xff] %vm2640, %v3296
    %3471 = vst.msk [vmem:[%s3462 + $0x61] sm:$0xff] %vm2640, %v3297
    %3472 = vst.msk [vmem:[%s3462 + $0x69] sm:$0xff] %vm2640, %v3298
    %3473 = vst.msk [vmem:[%s3462 + $0x79] sm:$0xff] %vm2640, %v3299
    %3474 = vst.msk [vmem:[%s3462 + $0x81] sm:$0xff] %vm2640, %v3300
    %3475 = vst.msk [vmem:[%s3462 + $0x91] sm:$0xff] %vm2640, %v3301
    %3476 = vst.msk [vmem:[%s3462 + $0x99] sm:$0xff] %vm2640, %v3302
    %3477 = vst.msk [vmem:[%s3462 + $0xa9] sm:$0xff] %vm2640, %v3303
    %3478 = vst.msk [vmem:[%s3462 + $0xb1] sm:$0xff] %vm2640, %v3304
    %3479 = vst.msk [vmem:[%s3462 + $0xc1] sm:$0xff] %vm2640, %v3305
    %3480 = vst.msk [vmem:[%s3462 + $0xc9] sm:$0xff] %vm2640, %v3306
    %3481 = vst.msk [vmem:[%s3462 + $0xd9] sm:$0xff] %vm2640, %v3307
    %3482 = vst.msk [vmem:[%s3462 + $0xe1] sm:$0xff] %vm2640, %v3308
    %3483 = vst.msk [vmem:[%s3462 + $0xf1] sm:$0xff] %vm2640, %v3309
    %3484 = vst.msk [vmem:[%s3462 + $0xf9] sm:$0xff] %vm2640, %v3310
    %3485 = vst.msk [vmem:[%s3462 + $0x109] sm:$0xff] %vm2640, %v3311
    %3486 = vst.msk [vmem:[%s3462 + $0x111] sm:$0xff] %vm2640, %v3312
    %3487 = vst.msk [vmem:[%s3462 + $0x121] sm:$0xff] %vm2640, %v3313
    %3488 = vst.msk [vmem:[%s3462 + $0x129] sm:$0xff] %vm2640, %v3314
    %3489 = vst.msk [vmem:[%s3462 + $0x139] sm:$0xff] %vm2640, %v3315
    %3490 = vst.msk [vmem:[%s3462 + $0x141] sm:$0xff] %vm2640, %v3316
    %3491 = vst.msk [vmem:[%s3462 + $0x151] sm:$0xff] %vm2640, %v3317
    %3492 = vst.msk [vmem:[%s3462 + $0x159] sm:$0xff] %vm2640, %v3318
    %3493 = vst.msk [vmem:[%s3462 + $0x169] sm:$0xff] %vm2640, %v3319
    %3494 = vst.msk [vmem:[%s3462 + $0x171] sm:$0xff] %vm2640, %v3320
    %3495 = vst.msk [vmem:[%s3462 + $0x1b1] sm:$0xff] %vm2640, %v3321
    %3496 = vst.msk [vmem:[%s3462 + $0x1b9] sm:$0xff] %vm2640, %v3322
    %3497 = vst.msk [vmem:[%s3462 + $0x1c9] sm:$0xff] %vm2640, %v3323
    %3498 = vst.msk [vmem:[%s3462 + $0x1d1] sm:$0xff] %vm2640, %v3324
    %3499 = vst.msk [vmem:[%s3462 + $0x1e1] sm:$0xff] %vm2640, %v3325
    %3500 = vst.msk [vmem:[%s3462 + $0x1e9] sm:$0xff] %vm2640, %v3326
    %3501 = vst.msk [vmem:[%s3462 + $0x1f9] sm:$0xff] %vm2640, %v3327
    %3502 = vst.msk [vmem:[%s3462 + $0x201] sm:$0xff] %vm2640, %v3328
    %3503 = vst.msk [vmem:[%s3462 + $0x211] sm:$0xff] %vm2640, %v3329
    %3504 = vst.msk [vmem:[%s3462 + $0x219] sm:$0xff] %vm2640, %v3330
    %3505 = vst.msk [vmem:[%s3462 + $0x229] sm:$0xff] %vm2640, %v3331
    %3506 = vst.msk [vmem:[%s3462 + $0x231] sm:$0xff] %vm2640, %v3332
    %3507 = vst.msk [vmem:[%s3462 + $0x241] sm:$0xff] %vm2640, %v3333
    %3508 = vst.msk [vmem:[%s3462 + $0x249] sm:$0xff] %vm2640, %v3334
    %3509 = vst.msk [vmem:[%s3462 + $0x259] sm:$0xff] %vm2640, %v3335
    %3510 = vst.msk [vmem:[%s3462 + $0x261] sm:$0xff] %vm2640, %v3336
    %3511 = vst.msk [vmem:[%s3462 + $0x271] sm:$0xff] %vm2640, %v3337
    %3512 = vst.msk [vmem:[%s3462 + $0x279] sm:$0xff] %vm2640, %v3338
    %3513 = vst.msk [vmem:[%s3462 + $0x289] sm:$0xff] %vm2640, %v3339
    %3514 = vst.msk [vmem:[%s3462 + $0x291] sm:$0xff] %vm2640, %v3340
    %3515 = vst.msk [vmem:[%s3462 + $0x2a1] sm:$0xff] %vm2640, %v3341
    %3516 = vst.msk [vmem:[%s3462 + $0x2a9] sm:$0xff] %vm2640, %v3342
    %3517 = vst.msk [vmem:[%s3462 + $0x2b9] sm:$0xff] %vm2640, %v3343
    %3518 = vst.msk [vmem:[%s3462 + $0x2c1] sm:$0xff] %vm2640, %v3344
    %3519 = vst.msk [vmem:[%s3462 + $0x2d1] sm:$0xff] %vm2640, %v3345
    %3520 = vst.msk [vmem:[%s3462 + $0x2d9] sm:$0xff] %vm2640, %v3346
    %3521 = vst.msk [vmem:[%s3462 + $0x2e9] sm:$0xff] %vm2640, %v3347
    %3522 = vst.msk [vmem:[%s3462 + $0x2f1] sm:$0xff] %vm2640, %v3348
    %3523 = vst.msk [vmem:[%s3462 + $0x301] sm:$0xff] %vm2640, %v3349
    %3524 = vst.msk [vmem:[%s3462 + $0x309] sm:$0xff] %vm2640, %v3350
    %3525 = vst.msk [vmem:[%s3462 + $0x319] sm:$0xff] %vm2640, %v3351
    %3526 = vst.msk [vmem:[%s3462 + $0x321] sm:$0xff] %vm2640, %v3352
    %v3527 = vld [vmem:[#allocation2] sm:$0xff]
    %v3528 = vld [vmem:[#allocation2 + $0x8] sm:$0xff]
    %v3529 = vld [vmem:[#allocation2 + $0x10] sm:$0x3]
    %v3530 = vld [vmem:[#allocation2 + $0x18] sm:$0xff]
    %v3531 = vld [vmem:[#allocation2 + $0x20] sm:$0xff]
    %v3532 = vld [vmem:[#allocation2 + $0x28] sm:$0x3]
    %v3533 = vld [vmem:[#allocation2 + $0x30] sm:$0xff]
    %v3534 = vld [vmem:[#allocation2 + $0x38] sm:$0xff]
    %v3535 = vld [vmem:[#allocation2 + $0x40] sm:$0x3]
    %v3536 = vld [vmem:[#allocation2 + $0x48] sm:$0xff]
    %v3537 = vld [vmem:[#allocation2 + $0x50] sm:$0xff]
    %v3538 = vld [vmem:[#allocation2 + $0x58] sm:$0x3]
    %v3539 = vld [vmem:[#allocation2 + $0x60] sm:$0xff]
    %v3540 = vld [vmem:[#allocation2 + $0x68] sm:$0xff]
    %v3541 = vld [vmem:[#allocation2 + $0x70] sm:$0x3]
    %v3542 = vld [vmem:[#allocation2 + $0x78] sm:$0xff]
    %v3543 = vld [vmem:[#allocation2 + $0x80] sm:$0xff]
    %v3544 = vld [vmem:[#allocation2 + $0x88] sm:$0x3]
    %v3545 = vld [vmem:[#allocation2 + $0x90] sm:$0xff]
    %v3546 = vld [vmem:[#allocation2 + $0x98] sm:$0xff]
    %v3547 = vld [vmem:[#allocation2 + $0xa0] sm:$0x3]
    %v3548 = vld [vmem:[#allocation2 + $0xa8] sm:$0xff]
    %v3549 = vld [vmem:[#allocation2 + $0xb0] sm:$0xff]
    %v3550 = vld [vmem:[#allocation2 + $0xb8] sm:$0x3]
    %v3551 = vld [vmem:[#allocation2 + $0xc0] sm:$0xff]
    %v3552 = vld [vmem:[#allocation2 + $0xc8] sm:$0xff]
    %v3553 = vld [vmem:[#allocation2 + $0xd0] sm:$0x3]
    %v3554 = vld [vmem:[#allocation2 + $0xd8] sm:$0xff]
    %v3555 = vld [vmem:[#allocation2 + $0xe0] sm:$0xff]
    %v3556 = vld [vmem:[#allocation2 + $0xe8] sm:$0x3]
    %v3557 = vld [vmem:[#allocation2 + $0xf0] sm:$0xff]
    %v3558 = vld [vmem:[#allocation2 + $0xf8] sm:$0xff]
    %v3559 = vld [vmem:[#allocation2 + $0x100] sm:$0x3]
    %v3560 = vld [vmem:[#allocation2 + $0x108] sm:$0xff]
    %v3561 = vld [vmem:[#allocation2 + $0x110] sm:$0xff]
    %v3562 = vld [vmem:[#allocation2 + $0x118] sm:$0x3]
    %v3563 = vld [vmem:[#allocation2 + $0x120] sm:$0xff]
    %v3564 = vld [vmem:[#allocation2 + $0x128] sm:$0xff]
    %v3565 = vld [vmem:[#allocation2 + $0x130] sm:$0x3]
    %v3566 = vld [vmem:[#allocation2 + $0x138] sm:$0xff]
    %v3567 = vld [vmem:[#allocation2 + $0x140] sm:$0xff]
    %v3568 = vld [vmem:[#allocation2 + $0x148] sm:$0x3]
    %v3569 = vld [vmem:[#allocation2 + $0x150] sm:$0xff]
    %v3570 = vld [vmem:[#allocation2 + $0x158] sm:$0xff]
    %v3571 = vld [vmem:[#allocation2 + $0x160] sm:$0x3]
    %v3572 = vld [vmem:[#allocation2 + $0x168] sm:$0xff]
    %v3573 = vld [vmem:[#allocation2 + $0x170] sm:$0xff]
    %v3574 = vld [vmem:[#allocation2 + $0x178] sm:$0x3]
    %v3575 = vld [vmem:[#allocation2 + $0x180] sm:$0xff]
    %v3576 = vld [vmem:[#allocation2 + $0x188] sm:$0xff]
    %v3577 = vld [vmem:[#allocation2 + $0x190] sm:$0x3]
    %v3578 = vld [vmem:[#allocation2 + $0x198] sm:$0xff]
    %v3579 = vld [vmem:[#allocation2 + $0x1a0] sm:$0xff]
    %v3580 = vld [vmem:[#allocation2 + $0x1a8] sm:$0x3]
    %v3581 = vld [vmem:[#allocation2 + $0x1b0] sm:$0xff]
    %v3582 = vld [vmem:[#allocation2 + $0x1b8] sm:$0xff]
    %v3583 = vld [vmem:[#allocation2 + $0x1c0] sm:$0x3]
    %v3584 = vld [vmem:[#allocation2 + $0x1c8] sm:$0xff]
    %v3585 = vld [vmem:[#allocation2 + $0x1d0] sm:$0xff]
    %v3586 = vld [vmem:[#allocation2 + $0x1d8] sm:$0x3]
    %v3587 = vld [vmem:[#allocation2 + $0x1e0] sm:$0xff]
    %v3588 = vld [vmem:[#allocation2 + $0x1e8] sm:$0xff]
    %v3589 = vld [vmem:[#allocation2 + $0x1f0] sm:$0x3]
    %v3590 = vld [vmem:[#allocation2 + $0x1f8] sm:$0xff]
    %v3591 = vld [vmem:[#allocation2 + $0x200] sm:$0xff]
    %v3592 = vld [vmem:[#allocation2 + $0x208] sm:$0x3]
    %v3593 = vld [vmem:[#allocation2 + $0x210] sm:$0xff]
    %v3594 = vld [vmem:[#allocation2 + $0x218] sm:$0xff]
    %v3595 = vld [vmem:[#allocation2 + $0x220] sm:$0x3]
    %v3596 = vld [vmem:[#allocation2 + $0x228] sm:$0xff]
    %v3597 = vld [vmem:[#allocation2 + $0x230] sm:$0xff]
    %v3598 = vld [vmem:[#allocation2 + $0x238] sm:$0x3]
    %v3599 = vld [vmem:[#allocation2 + $0x240] sm:$0xff]
    %v3600 = vld [vmem:[#allocation2 + $0x248] sm:$0xff]
    %v3601 = vld [vmem:[#allocation2 + $0x250] sm:$0x3]
    %v3602 = vld [vmem:[#allocation2 + $0x258] sm:$0xff]
    %v3603 = vld [vmem:[#allocation2 + $0x260] sm:$0xff]
    %v3604 = vld [vmem:[#allocation2 + $0x268] sm:$0x3]
    %v3605 = vld [vmem:[#allocation2 + $0x270] sm:$0xff]
    %v3606 = vld [vmem:[#allocation2 + $0x278] sm:$0xff]
    %v3607 = vld [vmem:[#allocation2 + $0x280] sm:$0x3]
    %v3608 = vld [vmem:[#allocation2 + $0x288] sm:$0xff]
    %v3609 = vld [vmem:[#allocation2 + $0x290] sm:$0xff]
    %v3610 = vld [vmem:[#allocation2 + $0x298] sm:$0x3]
    %v3611 = vld [vmem:[#allocation2 + $0x2a0] sm:$0xff]
    %v3612 = vld [vmem:[#allocation2 + $0x2a8] sm:$0xff]
    %v3613 = vld [vmem:[#allocation2 + $0x2b0] sm:$0x3]
    %v3614 = vld [vmem:[#allocation2 + $0x2b8] sm:$0xff]
    %v3615 = vld [vmem:[#allocation2 + $0x2c0] sm:$0xff]
    %v3616 = vld [vmem:[#allocation2 + $0x2c8] sm:$0x3]
    %v3617 = vld [vmem:[#allocation2 + $0x2d0] sm:$0xff]
    %v3618 = vld [vmem:[#allocation2 + $0x2d8] sm:$0xff]
    %v3619 = vld [vmem:[#allocation2 + $0x2e0] sm:$0x3]
    %v3620 = vld [vmem:[#allocation2 + $0x2e8] sm:$0xff]
    %v3621 = vld [vmem:[#allocation2 + $0x2f0] sm:$0xff]
    %v3622 = vld [vmem:[#allocation2 + $0x2f8] sm:$0x3]
    %v3623 = vld [vmem:[#allocation2 + $0x300] sm:$0xff]
    %v3624 = vld [vmem:[#allocation2 + $0x308] sm:$0xff]
    %v3625 = vld [vmem:[#allocation2 + $0x310] sm:$0x3]
    %v3626 = vld [vmem:[#allocation2 + $0x318] sm:$0xff]
    %v3627 = vld [vmem:[#allocation2 + $0x320] sm:$0xff]
    %v3628 = vld [vmem:[#allocation2 + $0x328] sm:$0x3]
    %v3629 = vld [vmem:[#allocation2 + $0x330] sm:$0xff]
    %v3630 = vld [vmem:[#allocation2 + $0x338] sm:$0xff]
    %v3631 = vld [vmem:[#allocation2 + $0x340] sm:$0x3]
    %v3632 = vld [vmem:[#allocation2 + $0x348] sm:$0xff]
    %v3633 = vld [vmem:[#allocation2 + $0x350] sm:$0xff]
    %v3634 = vld [vmem:[#allocation2 + $0x358] sm:$0x3]
    %v3635 = vld [vmem:[%s3] sm:$0xff]
    %v3636 = vld [vmem:[%s3 + $0x8] sm:$0xff]
    %v3637 = vld [vmem:[%s3 + $0x10] sm:$0xff]
    %v3638 = vld [vmem:[%s3 + $0x18] sm:$0xff]
    %v3639 = vld [vmem:[%s3 + $0x20] sm:$0xff]
    %v3640 = vld [vmem:[%s3 + $0x28] sm:$0xff]
    %v3641 = vld [vmem:[%s3 + $0x30] sm:$0xff]
    %v3642 = vld [vmem:[%s3 + $0x38] sm:$0xff]
    %v3643 = vld [vmem:[%s3 + $0x40] sm:$0xff]
    %v3644 = vld [vmem:[%s3 + $0x48] sm:$0xff]
    %v3645 = vld [vmem:[%s3 + $0x50] sm:$0xff]
    %v3646 = vld [vmem:[%s3 + $0x58] sm:$0xff]
    %v3647 = vld [vmem:[%s3 + $0x60] sm:$0xff]
    %v3648 = vld [vmem:[%s3 + $0x68] sm:$0xff]
    %v3649 = vld [vmem:[%s3 + $0x70] sm:$0xff]
    %v3650 = vld [vmem:[%s3 + $0x78] sm:$0xff]
    %v3651 = vld [vmem:[%s3 + $0x80] sm:$0xff]
    %v3652 = vld [vmem:[%s3 + $0x88] sm:$0xff]
    %v3653 = vld [vmem:[%s3 + $0x90] sm:$0xff]
    %v3654 = vld [vmem:[%s3 + $0x98] sm:$0xff]
    %v3655 = vld [vmem:[%s3 + $0xa0] sm:$0xff]
    %v3656 = vld [vmem:[%s3 + $0xa8] sm:$0xff]
    %v3657 = vld [vmem:[%s3 + $0xb0] sm:$0xff]
    %v3658 = vld [vmem:[%s3 + $0xb8] sm:$0xff]
    %v3659 = vld [vmem:[%s3 + $0xc0] sm:$0xff]
    %v3660 = vld [vmem:[%s3 + $0xc8] sm:$0xff]
    %v3661 = vld [vmem:[%s3 + $0xd0] sm:$0xff]
    %v3662 = vld [vmem:[%s3 + $0xd8] sm:$0xff]
    %v3663 = vld [vmem:[%s3 + $0xe0] sm:$0xff]
    %v3664 = vld [vmem:[%s3 + $0xe8] sm:$0xff]
    %v3665 = vld [vmem:[%s3 + $0xf0] sm:$0xff]
    %v3666 = vld [vmem:[%s3 + $0xf8] sm:$0xff]
    %v3667 = vld [vmem:[%s3 + $0x100] sm:$0xff]
    %v3668 = vld [vmem:[%s3 + $0x108] sm:$0xff]
    %v3669 = vld [vmem:[%s3 + $0x110] sm:$0xff]
    %v3670 = vld [vmem:[%s3 + $0x118] sm:$0xff]
    %v3671 = vld [vmem:[%s3 + $0x120] sm:$0xff]
    %v3672 = vld [vmem:[%s3 + $0x128] sm:$0xff]
    %v3673 = vld [vmem:[%s3 + $0x130] sm:$0xff]
    %v3674 = vld [vmem:[%s3 + $0x138] sm:$0xff]
    %v3675 = vld [vmem:[%s3 + $0x140] sm:$0xff]
    %v3676 = vld [vmem:[%s3 + $0x148] sm:$0xff]
    %v3677 = vld [vmem:[%s3 + $0x150] sm:$0xff]
    %v3678 = vld [vmem:[%s3 + $0x158] sm:$0xff]
    %v3679 = vld [vmem:[%s3 + $0x160] sm:$0xff]
    %v3680 = vld [vmem:[%s3 + $0x168] sm:$0xff]
    %v3681 = vld [vmem:[%s3 + $0x170] sm:$0xff]
    %v3682 = vld [vmem:[%s3 + $0x178] sm:$0xff]
    %v3683 = vld [vmem:[%s3 + $0x180] sm:$0xff]
    %v3684 = vld [vmem:[%s3 + $0x188] sm:$0xff]
    %v3685 = vld [vmem:[%s3 + $0x190] sm:$0xff]
    %v3686 = vld [vmem:[%s3 + $0x198] sm:$0xff]
    %v3687 = vld [vmem:[%s3 + $0x1a0] sm:$0xff]
    %v3688 = vld [vmem:[%s3 + $0x1a8] sm:$0xff]
    %v3689 = vld [vmem:[%s3 + $0x1b0] sm:$0xff]
    %v3690 = vld [vmem:[%s3 + $0x1b8] sm:$0xff]
    %v3691 = vld [vmem:[%s3 + $0x1c0] sm:$0xff]
    %v3692 = vld [vmem:[%s3 + $0x1c8] sm:$0xff]
    %v3693 = vld [vmem:[%s3 + $0x1d0] sm:$0xff]
    %v3694 = vld [vmem:[%s3 + $0x1d8] sm:$0xff]
    %v3695 = vld [vmem:[%s3 + $0x1e0] sm:$0xff]
    %v3696 = vld [vmem:[%s3 + $0x1e8] sm:$0xff]
    %v3697 = vld [vmem:[%s3 + $0x1f0] sm:$0xff]
    %v3698 = vld [vmem:[%s3 + $0x1f8] sm:$0xff]
    %v3699 = vld [vmem:[%s3 + $0x200] sm:$0xff]
    %v3700 = vld [vmem:[%s3 + $0x208] sm:$0xff]
    %v3701 = vld [vmem:[%s3 + $0x210] sm:$0xff]
    %v3702 = vld [vmem:[%s3 + $0x218] sm:$0xff]
    %v3703 = vld [vmem:[%s3 + $0x220] sm:$0xff]
    %v3704 = vld [vmem:[%s3 + $0x228] sm:$0xff]
    %v3705 = vld [vmem:[%s3 + $0x230] sm:$0xff]
    %v3706 = vld [vmem:[%s3 + $0x238] sm:$0xff]
    %v3707 = vld [vmem:[#allocation5] sm:$0x1]
    %v3804 = vrot.slane %v3527, 1
    %v3805 = vrot.slane %v3528, 1
    %v3806 = vsel %vm275, %v3804, %v3805
    %v3807 = vrot.slane %v3529, 1
    %v3808 = vsel %vm275, %v3805, %v3807
    %v3809 = vrot.slane %v3530, 1
    %v3810 = vrot.slane %v3531, 1
    %v3811 = vsel %vm275, %v3809, %v3810
    %v3812 = vrot.slane %v3532, 1
    %v3813 = vsel %vm275, %v3810, %v3812
    %v3814 = vrot.slane %v3533, 1
    %v3815 = vrot.slane %v3534, 1
    %v3816 = vsel %vm275, %v3814, %v3815
    %v3817 = vrot.slane %v3535, 1
    %v3818 = vsel %vm275, %v3815, %v3817
    %v3819 = vrot.slane %v3536, 1
    %v3820 = vrot.slane %v3537, 1
    %v3821 = vsel %vm275, %v3819, %v3820
    %v3822 = vrot.slane %v3538, 1
    %v3823 = vsel %vm275, %v3820, %v3822
    %v3824 = vrot.slane %v3539, 1
    %v3825 = vrot.slane %v3540, 1
    %v3826 = vsel %vm275, %v3824, %v3825
    %v3827 = vrot.slane %v3541, 1
    %v3828 = vsel %vm275, %v3825, %v3827
    %v3829 = vrot.slane %v3542, 1
    %v3830 = vrot.slane %v3543, 1
    %v3831 = vsel %vm275, %v3829, %v3830
    %v3832 = vrot.slane %v3544, 1
    %v3833 = vsel %vm275, %v3830, %v3832
    %v3834 = vrot.slane %v3545, 1
    %v3835 = vrot.slane %v3546, 1
    %v3836 = vsel %vm275, %v3834, %v3835
    %v3837 = vrot.slane %v3547, 1
    %v3838 = vsel %vm275, %v3835, %v3837
    %v3839 = vrot.slane %v3548, 1
    %v3840 = vrot.slane %v3549, 1
    %v3841 = vsel %vm275, %v3839, %v3840
    %v3842 = vrot.slane %v3550, 1
    %v3843 = vsel %vm275, %v3840, %v3842
    %v3844 = vrot.slane %v3551, 1
    %v3845 = vrot.slane %v3552, 1
    %v3846 = vsel %vm275, %v3844, %v3845
    %v3847 = vrot.slane %v3553, 1
    %v3848 = vsel %vm275, %v3845, %v3847
    %v3849 = vrot.slane %v3554, 1
    %v3850 = vrot.slane %v3555, 1
    %v3851 = vsel %vm275, %v3849, %v3850
    %v3852 = vrot.slane %v3556, 1
    %v3853 = vsel %vm275, %v3850, %v3852
    %v3854 = vrot.slane %v3557, 1
    %v3855 = vrot.slane %v3558, 1
    %v3856 = vsel %vm275, %v3854, %v3855
    %v3857 = vrot.slane %v3559, 1
    %v3858 = vsel %vm275, %v3855, %v3857
    %v3859 = vrot.slane %v3560, 1
    %v3860 = vrot.slane %v3561, 1
    %v3861 = vsel %vm275, %v3859, %v3860
    %v3862 = vrot.slane %v3562, 1
    %v3863 = vsel %vm275, %v3860, %v3862
    %v3864 = vrot.slane %v3563, 1
    %v3865 = vrot.slane %v3564, 1
    %v3866 = vsel %vm275, %v3864, %v3865
    %v3867 = vrot.slane %v3565, 1
    %v3868 = vsel %vm275, %v3865, %v3867
    %v3869 = vrot.slane %v3566, 1
    %v3870 = vrot.slane %v3567, 1
    %v3871 = vsel %vm275, %v3869, %v3870
    %v3872 = vrot.slane %v3568, 1
    %v3873 = vsel %vm275, %v3870, %v3872
    %v3874 = vrot.slane %v3569, 1
    %v3875 = vrot.slane %v3570, 1
    %v3876 = vsel %vm275, %v3874, %v3875
    %v3877 = vrot.slane %v3571, 1
    %v3878 = vsel %vm275, %v3875, %v3877
    %v3879 = vrot.slane %v3572, 1
    %v3880 = vrot.slane %v3573, 1
    %v3881 = vsel %vm275, %v3879, %v3880
    %v3882 = vrot.slane %v3574, 1
    %v3883 = vsel %vm275, %v3880, %v3882
    %v3884 = vrot.slane %v3581, 1
    %v3885 = vrot.slane %v3582, 1
    %v3886 = vsel %vm275, %v3884, %v3885
    %v3887 = vrot.slane %v3583, 1
    %v3888 = vsel %vm275, %v3885, %v3887
    %v3889 = vrot.slane %v3584, 1
    %v3890 = vrot.slane %v3585, 1
    %v3891 = vsel %vm275, %v3889, %v3890
    %v3892 = vrot.slane %v3586, 1
    %v3893 = vsel %vm275, %v3890, %v3892
    %v3894 = vrot.slane %v3587, 1
    %v3895 = vrot.slane %v3588, 1
    %v3896 = vsel %vm275, %v3894, %v3895
    %v3897 = vrot.slane %v3589, 1
    %v3898 = vsel %vm275, %v3895, %v3897
    %v3899 = vrot.slane %v3590, 1
    %v3900 = vrot.slane %v3591, 1
    %v3901 = vsel %vm275, %v3899, %v3900
    %v3902 = vrot.slane %v3592, 1
    %v3903 = vsel %vm275, %v3900, %v3902
    %v3904 = vrot.slane %v3593, 1
    %v3905 = vrot.slane %v3594, 1
    %v3906 = vsel %vm275, %v3904, %v3905
    %v3907 = vrot.slane %v3595, 1
    %v3908 = vsel %vm275, %v3905, %v3907
    %v3909 = vrot.slane %v3596, 1
    %v3910 = vrot.slane %v3597, 1
    %v3911 = vsel %vm275, %v3909, %v3910
    %v3912 = vrot.slane %v3598, 1
    %v3913 = vsel %vm275, %v3910, %v3912
    %v3914 = vrot.slane %v3599, 1
    %v3915 = vrot.slane %v3600, 1
    %v3916 = vsel %vm275, %v3914, %v3915
    %v3917 = vrot.slane %v3601, 1
    %v3918 = vsel %vm275, %v3915, %v3917
    %v3919 = vrot.slane %v3602, 1
    %v3920 = vrot.slane %v3603, 1
    %v3921 = vsel %vm275, %v3919, %v3920
    %v3922 = vrot.slane %v3604, 1
    %v3923 = vsel %vm275, %v3920, %v3922
    %v3924 = vrot.slane %v3605, 1
    %v3925 = vrot.slane %v3606, 1
    %v3926 = vsel %vm275, %v3924, %v3925
    %v3927 = vrot.slane %v3607, 1
    %v3928 = vsel %vm275, %v3925, %v3927
    %v3929 = vrot.slane %v3608, 1
    %v3930 = vrot.slane %v3609, 1
    %v3931 = vsel %vm275, %v3929, %v3930
    %v3932 = vrot.slane %v3610, 1
    %v3933 = vsel %vm275, %v3930, %v3932
    %v3934 = vrot.slane %v3611, 1
    %v3935 = vrot.slane %v3612, 1
    %v3936 = vsel %vm275, %v3934, %v3935
    %v3937 = vrot.slane %v3613, 1
    %v3938 = vsel %vm275, %v3935, %v3937
    %v3939 = vrot.slane %v3614, 1
    %v3940 = vrot.slane %v3615, 1
    %v3941 = vsel %vm275, %v3939, %v3940
    %v3942 = vrot.slane %v3616, 1
    %v3943 = vsel %vm275, %v3940, %v3942
    %v3944 = vrot.slane %v3617, 1
    %v3945 = vrot.slane %v3618, 1
    %v3946 = vsel %vm275, %v3944, %v3945
    %v3947 = vrot.slane %v3619, 1
    %v3948 = vsel %vm275, %v3945, %v3947
    %v3949 = vrot.slane %v3620, 1
    %v3950 = vrot.slane %v3621, 1
    %v3951 = vsel %vm275, %v3949, %v3950
    %v3952 = vrot.slane %v3622, 1
    %v3953 = vsel %vm275, %v3950, %v3952
    %v3954 = vrot.slane %v3623, 1
    %v3955 = vrot.slane %v3624, 1
    %v3956 = vsel %vm275, %v3954, %v3955
    %v3957 = vrot.slane %v3625, 1
    %v3958 = vsel %vm275, %v3955, %v3957
    %v3959 = vrot.slane %v3626, 1
    %v3960 = vrot.slane %v3627, 1
    %v3961 = vsel %vm275, %v3959, %v3960
    %v3962 = vrot.slane %v3628, 1
    %v3963 = vsel %vm275, %v3960, %v3962
    %v3964 = vrot.slane %v3527, 2
    %v3965 = vrot.slane %v3528, 2
    %v3966 = vsel %vm436, %v3964, %v3965
    %v3967 = vrot.slane %v3529, 2
    %v3968 = vsel %vm436, %v3965, %v3967
    %v3969 = vrot.slane %v3530, 2
    %v3970 = vrot.slane %v3531, 2
    %v3971 = vsel %vm436, %v3969, %v3970
    %v3972 = vrot.slane %v3532, 2
    %v3973 = vsel %vm436, %v3970, %v3972
    %v3974 = vrot.slane %v3533, 2
    %v3975 = vrot.slane %v3534, 2
    %v3976 = vsel %vm436, %v3974, %v3975
    %v3977 = vrot.slane %v3535, 2
    %v3978 = vsel %vm436, %v3975, %v3977
    %v3979 = vrot.slane %v3536, 2
    %v3980 = vrot.slane %v3537, 2
    %v3981 = vsel %vm436, %v3979, %v3980
    %v3982 = vrot.slane %v3538, 2
    %v3983 = vsel %vm436, %v3980, %v3982
    %v3984 = vrot.slane %v3539, 2
    %v3985 = vrot.slane %v3540, 2
    %v3986 = vsel %vm436, %v3984, %v3985
    %v3987 = vrot.slane %v3541, 2
    %v3988 = vsel %vm436, %v3985, %v3987
    %v3989 = vrot.slane %v3542, 2
    %v3990 = vrot.slane %v3543, 2
    %v3991 = vsel %vm436, %v3989, %v3990
    %v3992 = vrot.slane %v3544, 2
    %v3993 = vsel %vm436, %v3990, %v3992
    %v3994 = vrot.slane %v3545, 2
    %v3995 = vrot.slane %v3546, 2
    %v3996 = vsel %vm436, %v3994, %v3995
    %v3997 = vrot.slane %v3547, 2
    %v3998 = vsel %vm436, %v3995, %v3997
    %v3999 = vrot.slane %v3548, 2
    %v4000 = vrot.slane %v3549, 2
    %v4001 = vsel %vm436, %v3999, %v4000
    %v4002 = vrot.slane %v3550, 2
    %v4003 = vsel %vm436, %v4000, %v4002
    %v4004 = vrot.slane %v3551, 2
    %v4005 = vrot.slane %v3552, 2
    %v4006 = vsel %vm436, %v4004, %v4005
    %v4007 = vrot.slane %v3553, 2
    %v4008 = vsel %vm436, %v4005, %v4007
    %v4009 = vrot.slane %v3554, 2
    %v4010 = vrot.slane %v3555, 2
    %v4011 = vsel %vm436, %v4009, %v4010
    %v4012 = vrot.slane %v3556, 2
    %v4013 = vsel %vm436, %v4010, %v4012
    %v4014 = vrot.slane %v3557, 2
    %v4015 = vrot.slane %v3558, 2
    %v4016 = vsel %vm436, %v4014, %v4015
    %v4017 = vrot.slane %v3559, 2
    %v4018 = vsel %vm436, %v4015, %v4017
    %v4019 = vrot.slane %v3560, 2
    %v4020 = vrot.slane %v3561, 2
    %v4021 = vsel %vm436, %v4019, %v4020
    %v4022 = vrot.slane %v3562, 2
    %v4023 = vsel %vm436, %v4020, %v4022
    %v4024 = vrot.slane %v3563, 2
    %v4025 = vrot.slane %v3564, 2
    %v4026 = vsel %vm436, %v4024, %v4025
    %v4027 = vrot.slane %v3565, 2
    %v4028 = vsel %vm436, %v4025, %v4027
    %v4029 = vrot.slane %v3566, 2
    %v4030 = vrot.slane %v3567, 2
    %v4031 = vsel %vm436, %v4029, %v4030
    %v4032 = vrot.slane %v3568, 2
    %v4033 = vsel %vm436, %v4030, %v4032
    %v4034 = vrot.slane %v3569, 2
    %v4035 = vrot.slane %v3570, 2
    %v4036 = vsel %vm436, %v4034, %v4035
    %v4037 = vrot.slane %v3571, 2
    %v4038 = vsel %vm436, %v4035, %v4037
    %v4039 = vrot.slane %v3572, 2
    %v4040 = vrot.slane %v3573, 2
    %v4041 = vsel %vm436, %v4039, %v4040
    %v4042 = vrot.slane %v3574, 2
    %v4043 = vsel %vm436, %v4040, %v4042
    %v4044 = vrot.slane %v3581, 2
    %v4045 = vrot.slane %v3582, 2
    %v4046 = vsel %vm436, %v4044, %v4045
    %v4047 = vrot.slane %v3583, 2
    %v4048 = vsel %vm436, %v4045, %v4047
    %v4049 = vrot.slane %v3584, 2
    %v4050 = vrot.slane %v3585, 2
    %v4051 = vsel %vm436, %v4049, %v4050
    %v4052 = vrot.slane %v3586, 2
    %v4053 = vsel %vm436, %v4050, %v4052
    %v4054 = vrot.slane %v3587, 2
    %v4055 = vrot.slane %v3588, 2
    %v4056 = vsel %vm436, %v4054, %v4055
    %v4057 = vrot.slane %v3589, 2
    %v4058 = vsel %vm436, %v4055, %v4057
    %v4059 = vrot.slane %v3590, 2
    %v4060 = vrot.slane %v3591, 2
    %v4061 = vsel %vm436, %v4059, %v4060
    %v4062 = vrot.slane %v3592, 2
    %v4063 = vsel %vm436, %v4060, %v4062
    %v4064 = vrot.slane %v3593, 2
    %v4065 = vrot.slane %v3594, 2
    %v4066 = vsel %vm436, %v4064, %v4065
    %v4067 = vrot.slane %v3595, 2
    %v4068 = vsel %vm436, %v4065, %v4067
    %v4069 = vrot.slane %v3596, 2
    %v4070 = vrot.slane %v3597, 2
    %v4071 = vsel %vm436, %v4069, %v4070
    %v4072 = vrot.slane %v3598, 2
    %v4073 = vsel %vm436, %v4070, %v4072
    %v4074 = vrot.slane %v3599, 2
    %v4075 = vrot.slane %v3600, 2
    %v4076 = vsel %vm436, %v4074, %v4075
    %v4077 = vrot.slane %v3601, 2
    %v4078 = vsel %vm436, %v4075, %v4077
    %v4079 = vrot.slane %v3602, 2
    %v4080 = vrot.slane %v3603, 2
    %v4081 = vsel %vm436, %v4079, %v4080
    %v4082 = vrot.slane %v3604, 2
    %v4083 = vsel %vm436, %v4080, %v4082
    %v4084 = vrot.slane %v3605, 2
    %v4085 = vrot.slane %v3606, 2
    %v4086 = vsel %vm436, %v4084, %v4085
    %v4087 = vrot.slane %v3607, 2
    %v4088 = vsel %vm436, %v4085, %v4087
    %v4089 = vrot.slane %v3608, 2
    %v4090 = vrot.slane %v3609, 2
    %v4091 = vsel %vm436, %v4089, %v4090
    %v4092 = vrot.slane %v3610, 2
    %v4093 = vsel %vm436, %v4090, %v4092
    %v4094 = vrot.slane %v3611, 2
    %v4095 = vrot.slane %v3612, 2
    %v4096 = vsel %vm436, %v4094, %v4095
    %v4097 = vrot.slane %v3613, 2
    %v4098 = vsel %vm436, %v4095, %v4097
    %v4099 = vrot.slane %v3614, 2
    %v4100 = vrot.slane %v3615, 2
    %v4101 = vsel %vm436, %v4099, %v4100
    %v4102 = vrot.slane %v3616, 2
    %v4103 = vsel %vm436, %v4100, %v4102
    %v4104 = vrot.slane %v3617, 2
    %v4105 = vrot.slane %v3618, 2
    %v4106 = vsel %vm436, %v4104, %v4105
    %v4107 = vrot.slane %v3619, 2
    %v4108 = vsel %vm436, %v4105, %v4107
    %v4109 = vrot.slane %v3620, 2
    %v4110 = vrot.slane %v3621, 2
    %v4111 = vsel %vm436, %v4109, %v4110
    %v4112 = vrot.slane %v3622, 2
    %v4113 = vsel %vm436, %v4110, %v4112
    %v4114 = vrot.slane %v3623, 2
    %v4115 = vrot.slane %v3624, 2
    %v4116 = vsel %vm436, %v4114, %v4115
    %v4117 = vrot.slane %v3625, 2
    %v4118 = vsel %vm436, %v4115, %v4117
    %v4119 = vrot.slane %v3626, 2
    %v4120 = vrot.slane %v3627, 2
    %v4121 = vsel %vm436, %v4119, %v4120
    %v4122 = vrot.slane %v3628, 2
    %v4123 = vsel %vm436, %v4120, %v4122
    %v4194 = vrot.slane %v3575, 1
    %v4195 = vrot.slane %v3576, 1
    %v4196 = vsel %vm275, %v4194, %v4195
    %v4197 = vrot.slane %v3577, 1
    %v4198 = vsel %vm275, %v4195, %v4197
    %v4199 = vrot.slane %v3629, 1
    %v4200 = vrot.slane %v3630, 1
    %v4201 = vsel %vm275, %v4199, %v4200
    %v4202 = vrot.slane %v3631, 1
    %v4203 = vsel %vm275, %v4200, %v4202
    %v4268 = vrot.slane %v3575, 2
    %v4269 = vrot.slane %v3576, 2
    %v4270 = vsel %vm436, %v4268, %v4269
    %v4271 = vrot.slane %v3577, 2
    %v4272 = vsel %vm436, %v4269, %v4271
    %v4273 = vrot.slane %v3629, 2
    %v4274 = vrot.slane %v3630, 2
    %v4275 = vsel %vm436, %v4273, %v4274
    %v4276 = vrot.slane %v3631, 2
    %v4277 = vsel %vm436, %v4274, %v4276
    %v4284 = vrot.slane %v3578, 1
    %v4285 = vrot.slane %v3579, 1
    %v4286 = vsel %vm275, %v4284, %v4285
    %v4287 = vrot.slane %v3580, 1
    %v4288 = vsel %vm275, %v4285, %v4287
    %v4289 = vrot.slane %v3632, 1
    %v4290 = vrot.slane %v3633, 1
    %v4291 = vsel %vm275, %v4289, %v4290
    %v4292 = vrot.slane %v3634, 1
    %v4293 = vsel %vm275, %v4290, %v4292
    %v4294 = vrot.slane %v3578, 2
    %v4295 = vrot.slane %v3579, 2
    %v4296 = vsel %vm436, %v4294, %v4295
    %v4297 = vrot.slane %v3580, 2
    %v4298 = vsel %vm436, %v4295, %v4297
    %v4299 = vrot.slane %v3632, 2
    %v4300 = vrot.slane %v3633, 2
    %v4301 = vsel %vm436, %v4299, %v4300
    %v4302 = vrot.slane %v3634, 2
    %v4303 = vsel %vm436, %v4300, %v4302
    %4304 = vrot.lane.b32.xlu0 %v3806, 64
    %v4305 = vpop.permute.xlu0 %4304
    %4306 = vrot.lane.b32.xlu0 %v3808, 64
    %v4307 = vpop.permute.xlu0 %4306
    %4308 = vrot.lane.b32.xlu0 %v3811, 64
    %v4309 = vpop.permute.xlu0 %4308
    %4310 = vrot.lane.b32.xlu0 %v3813, 64
    %v4311 = vpop.permute.xlu0 %4310
    %4312 = vrot.lane.b32.xlu0 %v3816, 64
    %v4313 = vpop.permute.xlu0 %4312
    %4314 = vrot.lane.b32.xlu0 %v3818, 64
    %v4315 = vpop.permute.xlu0 %4314
    %4316 = vrot.lane.b32.xlu0 %v3821, 64
    %v4317 = vpop.permute.xlu0 %4316
    %4318 = vrot.lane.b32.xlu0 %v3823, 64
    %v4319 = vpop.permute.xlu0 %4318
    %4320 = vrot.lane.b32.xlu0 %v3826, 64
    %v4321 = vpop.permute.xlu0 %4320
    %4322 = vrot.lane.b32.xlu0 %v3828, 64
    %v4323 = vpop.permute.xlu0 %4322
    %4324 = vrot.lane.b32.xlu0 %v3831, 64
    %v4325 = vpop.permute.xlu0 %4324
    %4326 = vrot.lane.b32.xlu0 %v3833, 64
    %v4327 = vpop.permute.xlu0 %4326
    %4328 = vrot.lane.b32.xlu0 %v3836, 64
    %v4329 = vpop.permute.xlu0 %4328
    %4330 = vrot.lane.b32.xlu0 %v3838, 64
    %v4331 = vpop.permute.xlu0 %4330
    %4332 = vrot.lane.b32.xlu0 %v3841, 64
    %v4333 = vpop.permute.xlu0 %4332
    %4334 = vrot.lane.b32.xlu0 %v3843, 64
    %v4335 = vpop.permute.xlu0 %4334
    %4336 = vrot.lane.b32.xlu0 %v3846, 64
    %v4337 = vpop.permute.xlu0 %4336
    %4338 = vrot.lane.b32.xlu0 %v3848, 64
    %v4339 = vpop.permute.xlu0 %4338
    %4340 = vrot.lane.b32.xlu0 %v3851, 64
    %v4341 = vpop.permute.xlu0 %4340
    %4342 = vrot.lane.b32.xlu0 %v3853, 64
    %v4343 = vpop.permute.xlu0 %4342
    %4344 = vrot.lane.b32.xlu0 %v3856, 64
    %v4345 = vpop.permute.xlu0 %4344
    %4346 = vrot.lane.b32.xlu0 %v3858, 64
    %v4347 = vpop.permute.xlu0 %4346
    %4348 = vrot.lane.b32.xlu0 %v3861, 64
    %v4349 = vpop.permute.xlu0 %4348
    %4350 = vrot.lane.b32.xlu0 %v3863, 64
    %v4351 = vpop.permute.xlu0 %4350
    %4352 = vrot.lane.b32.xlu0 %v3866, 64
    %v4353 = vpop.permute.xlu0 %4352
    %4354 = vrot.lane.b32.xlu0 %v3868, 64
    %v4355 = vpop.permute.xlu0 %4354
    %4356 = vrot.lane.b32.xlu0 %v3871, 64
    %v4357 = vpop.permute.xlu0 %4356
    %4358 = vrot.lane.b32.xlu0 %v3873, 64
    %v4359 = vpop.permute.xlu0 %4358
    %4360 = vrot.lane.b32.xlu0 %v3876, 64
    %v4361 = vpop.permute.xlu0 %4360
    %4362 = vrot.lane.b32.xlu0 %v3878, 64
    %v4363 = vpop.permute.xlu0 %4362
    %4364 = vrot.lane.b32.xlu0 %v3881, 64
    %v4365 = vpop.permute.xlu0 %4364
    %4366 = vrot.lane.b32.xlu0 %v3883, 64
    %v4367 = vpop.permute.xlu0 %4366
    %4368 = vrot.lane.b32.xlu0 %v3886, 64
    %v4369 = vpop.permute.xlu0 %4368
    %4370 = vrot.lane.b32.xlu0 %v3888, 64
    %v4371 = vpop.permute.xlu0 %4370
    %4372 = vrot.lane.b32.xlu0 %v3891, 64
    %v4373 = vpop.permute.xlu0 %4372
    %4374 = vrot.lane.b32.xlu0 %v3893, 64
    %v4375 = vpop.permute.xlu0 %4374
    %4376 = vrot.lane.b32.xlu0 %v3896, 64
    %v4377 = vpop.permute.xlu0 %4376
    %4378 = vrot.lane.b32.xlu0 %v3898, 64
    %v4379 = vpop.permute.xlu0 %4378
    %4380 = vrot.lane.b32.xlu0 %v3901, 64
    %v4381 = vpop.permute.xlu0 %4380
    %4382 = vrot.lane.b32.xlu0 %v3903, 64
    %v4383 = vpop.permute.xlu0 %4382
    %4384 = vrot.lane.b32.xlu0 %v3906, 64
    %v4385 = vpop.permute.xlu0 %4384
    %4386 = vrot.lane.b32.xlu0 %v3908, 64
    %v4387 = vpop.permute.xlu0 %4386
    %4388 = vrot.lane.b32.xlu0 %v3911, 64
    %v4389 = vpop.permute.xlu0 %4388
    %4390 = vrot.lane.b32.xlu0 %v3913, 64
    %v4391 = vpop.permute.xlu0 %4390
    %4392 = vrot.lane.b32.xlu0 %v3916, 64
    %v4393 = vpop.permute.xlu0 %4392
    %4394 = vrot.lane.b32.xlu0 %v3918, 64
    %v4395 = vpop.permute.xlu0 %4394
    %4396 = vrot.lane.b32.xlu0 %v3921, 64
    %v4397 = vpop.permute.xlu0 %4396
    %4398 = vrot.lane.b32.xlu0 %v3923, 64
    %v4399 = vpop.permute.xlu0 %4398
    %4400 = vrot.lane.b32.xlu0 %v3926, 64
    %v4401 = vpop.permute.xlu0 %4400
    %4402 = vrot.lane.b32.xlu0 %v3928, 64
    %v4403 = vpop.permute.xlu0 %4402
    %4404 = vrot.lane.b32.xlu0 %v3931, 64
    %v4405 = vpop.permute.xlu0 %4404
    %4406 = vrot.lane.b32.xlu0 %v3933, 64
    %v4407 = vpop.permute.xlu0 %4406
    %4408 = vrot.lane.b32.xlu0 %v3936, 64
    %v4409 = vpop.permute.xlu0 %4408
    %4410 = vrot.lane.b32.xlu0 %v3938, 64
    %v4411 = vpop.permute.xlu0 %4410
    %4412 = vrot.lane.b32.xlu0 %v3941, 64
    %v4413 = vpop.permute.xlu0 %4412
    %4414 = vrot.lane.b32.xlu0 %v3943, 64
    %v4415 = vpop.permute.xlu0 %4414
    %4416 = vrot.lane.b32.xlu0 %v3946, 64
    %v4417 = vpop.permute.xlu0 %4416
    %4418 = vrot.lane.b32.xlu0 %v3948, 64
    %v4419 = vpop.permute.xlu0 %4418
    %4420 = vrot.lane.b32.xlu0 %v3951, 64
    %v4421 = vpop.permute.xlu0 %4420
    %4422 = vrot.lane.b32.xlu0 %v3953, 64
    %v4423 = vpop.permute.xlu0 %4422
    %4424 = vrot.lane.b32.xlu0 %v3956, 64
    %v4425 = vpop.permute.xlu0 %4424
    %4426 = vrot.lane.b32.xlu0 %v3958, 64
    %v4427 = vpop.permute.xlu0 %4426
    %4428 = vrot.lane.b32.xlu0 %v3961, 64
    %v4429 = vpop.permute.xlu0 %4428
    %4430 = vrot.lane.b32.xlu0 %v3963, 64
    %v4431 = vpop.permute.xlu0 %4430
    %4496 = vrot.lane.b32.xlu0 %v3530, 64
    %v4497 = vpop.permute.xlu0 %4496
    %4498 = vrot.lane.b32.xlu0 %v3531, 64
    %v4499 = vpop.permute.xlu0 %4498
    %4500 = vrot.lane.b32.xlu0 %v3533, 64
    %v4501 = vpop.permute.xlu0 %4500
    %4502 = vrot.lane.b32.xlu0 %v3534, 64
    %v4503 = vpop.permute.xlu0 %4502
    %4504 = vrot.lane.b32.xlu0 %v3536, 64
    %v4505 = vpop.permute.xlu0 %4504
    %4506 = vrot.lane.b32.xlu0 %v3537, 64
    %v4507 = vpop.permute.xlu0 %4506
    %4508 = vrot.lane.b32.xlu0 %v3539, 64
    %v4509 = vpop.permute.xlu0 %4508
    %4510 = vrot.lane.b32.xlu0 %v3540, 64
    %v4511 = vpop.permute.xlu0 %4510
    %4512 = vrot.lane.b32.xlu0 %v3542, 64
    %v4513 = vpop.permute.xlu0 %4512
    %4514 = vrot.lane.b32.xlu0 %v3543, 64
    %v4515 = vpop.permute.xlu0 %4514
    %4516 = vrot.lane.b32.xlu0 %v3545, 64
    %v4517 = vpop.permute.xlu0 %4516
    %4518 = vrot.lane.b32.xlu0 %v3546, 64
    %v4519 = vpop.permute.xlu0 %4518
    %4520 = vrot.lane.b32.xlu0 %v3548, 64
    %v4521 = vpop.permute.xlu0 %4520
    %4522 = vrot.lane.b32.xlu0 %v3549, 64
    %v4523 = vpop.permute.xlu0 %4522
    %4524 = vrot.lane.b32.xlu0 %v3551, 64
    %v4525 = vpop.permute.xlu0 %4524
    %4526 = vrot.lane.b32.xlu0 %v3552, 64
    %v4527 = vpop.permute.xlu0 %4526
    %4528 = vrot.lane.b32.xlu0 %v3554, 64
    %v4529 = vpop.permute.xlu0 %4528
    %4530 = vrot.lane.b32.xlu0 %v3555, 64
    %v4531 = vpop.permute.xlu0 %4530
    %4532 = vrot.lane.b32.xlu0 %v3557, 64
    %v4533 = vpop.permute.xlu0 %4532
    %4534 = vrot.lane.b32.xlu0 %v3558, 64
    %v4535 = vpop.permute.xlu0 %4534
    %4536 = vrot.lane.b32.xlu0 %v3560, 64
    %v4537 = vpop.permute.xlu0 %4536
    %4538 = vrot.lane.b32.xlu0 %v3561, 64
    %v4539 = vpop.permute.xlu0 %4538
    %4540 = vrot.lane.b32.xlu0 %v3563, 64
    %v4541 = vpop.permute.xlu0 %4540
    %4542 = vrot.lane.b32.xlu0 %v3564, 64
    %v4543 = vpop.permute.xlu0 %4542
    %4544 = vrot.lane.b32.xlu0 %v3566, 64
    %v4545 = vpop.permute.xlu0 %4544
    %4546 = vrot.lane.b32.xlu0 %v3567, 64
    %v4547 = vpop.permute.xlu0 %4546
    %4548 = vrot.lane.b32.xlu0 %v3569, 64
    %v4549 = vpop.permute.xlu0 %4548
    %4550 = vrot.lane.b32.xlu0 %v3570, 64
    %v4551 = vpop.permute.xlu0 %4550
    %4552 = vrot.lane.b32.xlu0 %v3572, 64
    %v4553 = vpop.permute.xlu0 %4552
    %4554 = vrot.lane.b32.xlu0 %v3573, 64
    %v4555 = vpop.permute.xlu0 %4554
    %4556 = vrot.lane.b32.xlu0 %v3575, 64
    %v4557 = vpop.permute.xlu0 %4556
    %4558 = vrot.lane.b32.xlu0 %v3576, 64
    %v4559 = vpop.permute.xlu0 %4558
    %4560 = vrot.lane.b32.xlu0 %v3584, 64
    %v4561 = vpop.permute.xlu0 %4560
    %4562 = vrot.lane.b32.xlu0 %v3585, 64
    %v4563 = vpop.permute.xlu0 %4562
    %4564 = vrot.lane.b32.xlu0 %v3587, 64
    %v4565 = vpop.permute.xlu0 %4564
    %4566 = vrot.lane.b32.xlu0 %v3588, 64
    %v4567 = vpop.permute.xlu0 %4566
    %4568 = vrot.lane.b32.xlu0 %v3590, 64
    %v4569 = vpop.permute.xlu0 %4568
    %4570 = vrot.lane.b32.xlu0 %v3591, 64
    %v4571 = vpop.permute.xlu0 %4570
    %4572 = vrot.lane.b32.xlu0 %v3593, 64
    %v4573 = vpop.permute.xlu0 %4572
    %4574 = vrot.lane.b32.xlu0 %v3594, 64
    %v4575 = vpop.permute.xlu0 %4574
    %4576 = vrot.lane.b32.xlu0 %v3596, 64
    %v4577 = vpop.permute.xlu0 %4576
    %4578 = vrot.lane.b32.xlu0 %v3597, 64
    %v4579 = vpop.permute.xlu0 %4578
    %4580 = vrot.lane.b32.xlu0 %v3599, 64
    %v4581 = vpop.permute.xlu0 %4580
    %4582 = vrot.lane.b32.xlu0 %v3600, 64
    %v4583 = vpop.permute.xlu0 %4582
    %4584 = vrot.lane.b32.xlu0 %v3602, 64
    %v4585 = vpop.permute.xlu0 %4584
    %4586 = vrot.lane.b32.xlu0 %v3603, 64
    %v4587 = vpop.permute.xlu0 %4586
    %4588 = vrot.lane.b32.xlu0 %v3605, 64
    %v4589 = vpop.permute.xlu0 %4588
    %4590 = vrot.lane.b32.xlu0 %v3606, 64
    %v4591 = vpop.permute.xlu0 %4590
    %4592 = vrot.lane.b32.xlu0 %v3608, 64
    %v4593 = vpop.permute.xlu0 %4592
    %4594 = vrot.lane.b32.xlu0 %v3609, 64
    %v4595 = vpop.permute.xlu0 %4594
    %4596 = vrot.lane.b32.xlu0 %v3611, 64
    %v4597 = vpop.permute.xlu0 %4596
    %4598 = vrot.lane.b32.xlu0 %v3612, 64
    %v4599 = vpop.permute.xlu0 %4598
    %4600 = vrot.lane.b32.xlu0 %v3614, 64
    %v4601 = vpop.permute.xlu0 %4600
    %4602 = vrot.lane.b32.xlu0 %v3615, 64
    %v4603 = vpop.permute.xlu0 %4602
    %4604 = vrot.lane.b32.xlu0 %v3617, 64
    %v4605 = vpop.permute.xlu0 %4604
    %4606 = vrot.lane.b32.xlu0 %v3618, 64
    %v4607 = vpop.permute.xlu0 %4606
    %4608 = vrot.lane.b32.xlu0 %v3620, 64
    %v4609 = vpop.permute.xlu0 %4608
    %4610 = vrot.lane.b32.xlu0 %v3621, 64
    %v4611 = vpop.permute.xlu0 %4610
    %4612 = vrot.lane.b32.xlu0 %v3623, 64
    %v4613 = vpop.permute.xlu0 %4612
    %4614 = vrot.lane.b32.xlu0 %v3624, 64
    %v4615 = vpop.permute.xlu0 %4614
    %4616 = vrot.lane.b32.xlu0 %v3626, 64
    %v4617 = vpop.permute.xlu0 %4616
    %4618 = vrot.lane.b32.xlu0 %v3627, 64
    %v4619 = vpop.permute.xlu0 %4618
    %4620 = vrot.lane.b32.xlu0 %v3629, 64
    %v4621 = vpop.permute.xlu0 %4620
    %4622 = vrot.lane.b32.xlu0 %v3630, 64
    %v4623 = vpop.permute.xlu0 %4622
    %4688 = vrot.lane.b32.xlu0 %v3971, 64
    %v4689 = vpop.permute.xlu0 %4688
    %4690 = vrot.lane.b32.xlu0 %v3973, 64
    %v4691 = vpop.permute.xlu0 %4690
    %4692 = vrot.lane.b32.xlu0 %v3976, 64
    %v4693 = vpop.permute.xlu0 %4692
    %4694 = vrot.lane.b32.xlu0 %v3978, 64
    %v4695 = vpop.permute.xlu0 %4694
    %4696 = vrot.lane.b32.xlu0 %v3981, 64
    %v4697 = vpop.permute.xlu0 %4696
    %4698 = vrot.lane.b32.xlu0 %v3983, 64
    %v4699 = vpop.permute.xlu0 %4698
    %4700 = vrot.lane.b32.xlu0 %v3986, 64
    %v4701 = vpop.permute.xlu0 %4700
    %4702 = vrot.lane.b32.xlu0 %v3988, 64
    %v4703 = vpop.permute.xlu0 %4702
    %4704 = vrot.lane.b32.xlu0 %v3991, 64
    %v4705 = vpop.permute.xlu0 %4704
    %4706 = vrot.lane.b32.xlu0 %v3993, 64
    %v4707 = vpop.permute.xlu0 %4706
    %4708 = vrot.lane.b32.xlu0 %v3996, 64
    %v4709 = vpop.permute.xlu0 %4708
    %4710 = vrot.lane.b32.xlu0 %v3998, 64
    %v4711 = vpop.permute.xlu0 %4710
    %4712 = vrot.lane.b32.xlu0 %v4001, 64
    %v4713 = vpop.permute.xlu0 %4712
    %4714 = vrot.lane.b32.xlu0 %v4003, 64
    %v4715 = vpop.permute.xlu0 %4714
    %4716 = vrot.lane.b32.xlu0 %v4006, 64
    %v4717 = vpop.permute.xlu0 %4716
    %4718 = vrot.lane.b32.xlu0 %v4008, 64
    %v4719 = vpop.permute.xlu0 %4718
    %4720 = vrot.lane.b32.xlu0 %v4011, 64
    %v4721 = vpop.permute.xlu0 %4720
    %4722 = vrot.lane.b32.xlu0 %v4013, 64
    %v4723 = vpop.permute.xlu0 %4722
    %4724 = vrot.lane.b32.xlu0 %v4016, 64
    %v4725 = vpop.permute.xlu0 %4724
    %4726 = vrot.lane.b32.xlu0 %v4018, 64
    %v4727 = vpop.permute.xlu0 %4726
    %4728 = vrot.lane.b32.xlu0 %v4021, 64
    %v4729 = vpop.permute.xlu0 %4728
    %4730 = vrot.lane.b32.xlu0 %v4023, 64
    %v4731 = vpop.permute.xlu0 %4730
    %4732 = vrot.lane.b32.xlu0 %v4026, 64
    %v4733 = vpop.permute.xlu0 %4732
    %4734 = vrot.lane.b32.xlu0 %v4028, 64
    %v4735 = vpop.permute.xlu0 %4734
    %4736 = vrot.lane.b32.xlu0 %v4031, 64
    %v4737 = vpop.permute.xlu0 %4736
    %4738 = vrot.lane.b32.xlu0 %v4033, 64
    %v4739 = vpop.permute.xlu0 %4738
    %4740 = vrot.lane.b32.xlu0 %v4036, 64
    %v4741 = vpop.permute.xlu0 %4740
    %4742 = vrot.lane.b32.xlu0 %v4038, 64
    %v4743 = vpop.permute.xlu0 %4742
    %4744 = vrot.lane.b32.xlu0 %v4041, 64
    %v4745 = vpop.permute.xlu0 %4744
    %4746 = vrot.lane.b32.xlu0 %v4043, 64
    %v4747 = vpop.permute.xlu0 %4746
    %4748 = vrot.lane.b32.xlu0 %v4270, 64
    %v4749 = vpop.permute.xlu0 %4748
    %4750 = vrot.lane.b32.xlu0 %v4272, 64
    %v4751 = vpop.permute.xlu0 %4750
    %4752 = vrot.lane.b32.xlu0 %v4051, 64
    %v4753 = vpop.permute.xlu0 %4752
    %4754 = vrot.lane.b32.xlu0 %v4053, 64
    %v4755 = vpop.permute.xlu0 %4754
    %4756 = vrot.lane.b32.xlu0 %v4056, 64
    %v4757 = vpop.permute.xlu0 %4756
    %4758 = vrot.lane.b32.xlu0 %v4058, 64
    %v4759 = vpop.permute.xlu0 %4758
    %4760 = vrot.lane.b32.xlu0 %v4061, 64
    %v4761 = vpop.permute.xlu0 %4760
    %4762 = vrot.lane.b32.xlu0 %v4063, 64
    %v4763 = vpop.permute.xlu0 %4762
    %4764 = vrot.lane.b32.xlu0 %v4066, 64
    %v4765 = vpop.permute.xlu0 %4764
    %4766 = vrot.lane.b32.xlu0 %v4068, 64
    %v4767 = vpop.permute.xlu0 %4766
    %4768 = vrot.lane.b32.xlu0 %v4071, 64
    %v4769 = vpop.permute.xlu0 %4768
    %4770 = vrot.lane.b32.xlu0 %v4073, 64
    %v4771 = vpop.permute.xlu0 %4770
    %4772 = vrot.lane.b32.xlu0 %v4076, 64
    %v4773 = vpop.permute.xlu0 %4772
    %4774 = vrot.lane.b32.xlu0 %v4078, 64
    %v4775 = vpop.permute.xlu0 %4774
    %4776 = vrot.lane.b32.xlu0 %v4081, 64
    %v4777 = vpop.permute.xlu0 %4776
    %4778 = vrot.lane.b32.xlu0 %v4083, 64
    %v4779 = vpop.permute.xlu0 %4778
    %4780 = vrot.lane.b32.xlu0 %v4086, 64
    %v4781 = vpop.permute.xlu0 %4780
    %4782 = vrot.lane.b32.xlu0 %v4088, 64
    %v4783 = vpop.permute.xlu0 %4782
    %4784 = vrot.lane.b32.xlu0 %v4091, 64
    %v4785 = vpop.permute.xlu0 %4784
    %4786 = vrot.lane.b32.xlu0 %v4093, 64
    %v4787 = vpop.permute.xlu0 %4786
    %4788 = vrot.lane.b32.xlu0 %v4096, 64
    %v4789 = vpop.permute.xlu0 %4788
    %4790 = vrot.lane.b32.xlu0 %v4098, 64
    %v4791 = vpop.permute.xlu0 %4790
    %4792 = vrot.lane.b32.xlu0 %v4101, 64
    %v4793 = vpop.permute.xlu0 %4792
    %4794 = vrot.lane.b32.xlu0 %v4103, 64
    %v4795 = vpop.permute.xlu0 %4794
    %4796 = vrot.lane.b32.xlu0 %v4106, 64
    %v4797 = vpop.permute.xlu0 %4796
    %4798 = vrot.lane.b32.xlu0 %v4108, 64
    %v4799 = vpop.permute.xlu0 %4798
    %4800 = vrot.lane.b32.xlu0 %v4111, 64
    %v4801 = vpop.permute.xlu0 %4800
    %4802 = vrot.lane.b32.xlu0 %v4113, 64
    %v4803 = vpop.permute.xlu0 %4802
    %4804 = vrot.lane.b32.xlu0 %v4116, 64
    %v4805 = vpop.permute.xlu0 %4804
    %4806 = vrot.lane.b32.xlu0 %v4118, 64
    %v4807 = vpop.permute.xlu0 %4806
    %4808 = vrot.lane.b32.xlu0 %v4121, 64
    %v4809 = vpop.permute.xlu0 %4808
    %4810 = vrot.lane.b32.xlu0 %v4123, 64
    %v4811 = vpop.permute.xlu0 %4810
    %4812 = vrot.lane.b32.xlu0 %v4275, 64
    %v4813 = vpop.permute.xlu0 %4812
    %4814 = vrot.lane.b32.xlu0 %v4277, 64
    %v4815 = vpop.permute.xlu0 %4814
    %4880 = vrot.lane.b32.xlu0 %v4196, 64
    %v4881 = vpop.permute.xlu0 %4880
    %4882 = vrot.lane.b32.xlu0 %v4198, 64
    %v4883 = vpop.permute.xlu0 %4882
    %4884 = vrot.lane.b32.xlu0 %v4286, 64
    %v4885 = vpop.permute.xlu0 %4884
    %4886 = vrot.lane.b32.xlu0 %v4288, 64
    %v4887 = vpop.permute.xlu0 %4886
    %4888 = vrot.lane.b32.xlu0 %v4201, 64
    %v4889 = vpop.permute.xlu0 %4888
    %4890 = vrot.lane.b32.xlu0 %v4203, 64
    %v4891 = vpop.permute.xlu0 %4890
    %4892 = vrot.lane.b32.xlu0 %v4291, 64
    %v4893 = vpop.permute.xlu0 %4892
    %4894 = vrot.lane.b32.xlu0 %v4293, 64
    %v4895 = vpop.permute.xlu0 %4894
    %v4904 = vsel %vm2640, %v3527, %v4305
    %v4905 = vsel %vm2640, %v3528, %v4307
    %v4906 = vsel %vm2640, %v3530, %v4309
    %v4907 = vsel %vm2640, %v3531, %v4311
    %v4908 = vsel %vm2640, %v3533, %v4313
    %v4909 = vsel %vm2640, %v3534, %v4315
    %v4910 = vsel %vm2640, %v3536, %v4317
    %v4911 = vsel %vm2640, %v3537, %v4319
    %v4912 = vsel %vm2640, %v3539, %v4321
    %v4913 = vsel %vm2640, %v3540, %v4323
    %v4914 = vsel %vm2640, %v3542, %v4325
    %v4915 = vsel %vm2640, %v3543, %v4327
    %v4916 = vsel %vm2640, %v3545, %v4329
    %v4917 = vsel %vm2640, %v3546, %v4331
    %v4918 = vsel %vm2640, %v3548, %v4333
    %v4919 = vsel %vm2640, %v3549, %v4335
    %v4920 = vsel %vm2640, %v3551, %v4337
    %v4921 = vsel %vm2640, %v3552, %v4339
    %v4922 = vsel %vm2640, %v3554, %v4341
    %v4923 = vsel %vm2640, %v3555, %v4343
    %v4924 = vsel %vm2640, %v3557, %v4345
    %v4925 = vsel %vm2640, %v3558, %v4347
    %v4926 = vsel %vm2640, %v3560, %v4349
    %v4927 = vsel %vm2640, %v3561, %v4351
    %v4928 = vsel %vm2640, %v3563, %v4353
    %v4929 = vsel %vm2640, %v3564, %v4355
    %v4930 = vsel %vm2640, %v3566, %v4357
    %v4931 = vsel %vm2640, %v3567, %v4359
    %v4932 = vsel %vm2640, %v3569, %v4361
    %v4933 = vsel %vm2640, %v3570, %v4363
    %v4934 = vsel %vm2640, %v3572, %v4365
    %v4935 = vsel %vm2640, %v3573, %v4367
    %v4936 = vsel %vm2640, %v3581, %v4369
    %v4937 = vsel %vm2640, %v3582, %v4371
    %v4938 = vsel %vm2640, %v3584, %v4373
    %v4939 = vsel %vm2640, %v3585, %v4375
    %v4940 = vsel %vm2640, %v3587, %v4377
    %v4941 = vsel %vm2640, %v3588, %v4379
    %v4942 = vsel %vm2640, %v3590, %v4381
    %v4943 = vsel %vm2640, %v3591, %v4383
    %v4944 = vsel %vm2640, %v3593, %v4385
    %v4945 = vsel %vm2640, %v3594, %v4387
    %v4946 = vsel %vm2640, %v3596, %v4389
    %v4947 = vsel %vm2640, %v3597, %v4391
    %v4948 = vsel %vm2640, %v3599, %v4393
    %v4949 = vsel %vm2640, %v3600, %v4395
    %v4950 = vsel %vm2640, %v3602, %v4397
    %v4951 = vsel %vm2640, %v3603, %v4399
    %v4952 = vsel %vm2640, %v3605, %v4401
    %v4953 = vsel %vm2640, %v3606, %v4403
    %v4954 = vsel %vm2640, %v3608, %v4405
    %v4955 = vsel %vm2640, %v3609, %v4407
    %v4956 = vsel %vm2640, %v3611, %v4409
    %v4957 = vsel %vm2640, %v3612, %v4411
    %v4958 = vsel %vm2640, %v3614, %v4413
    %v4959 = vsel %vm2640, %v3615, %v4415
    %v4960 = vsel %vm2640, %v3617, %v4417
    %v4961 = vsel %vm2640, %v3618, %v4419
    %v4962 = vsel %vm2640, %v3620, %v4421
    %v4963 = vsel %vm2640, %v3621, %v4423
    %v4964 = vsel %vm2640, %v3623, %v4425
    %v4965 = vsel %vm2640, %v3624, %v4427
    %v4966 = vsel %vm2640, %v3626, %v4429
    %v4967 = vsel %vm2640, %v3627, %v4431
    %v4968 = vsel %vm2640, %v3966, %v4497
    %v4969 = vsel %vm2640, %v3968, %v4499
    %v4970 = vsel %vm2640, %v3971, %v4501
    %v4971 = vsel %vm2640, %v3973, %v4503
    %v4972 = vsel %vm2640, %v3976, %v4505
    %v4973 = vsel %vm2640, %v3978, %v4507
    %v4974 = vsel %vm2640, %v3981, %v4509
    %v4975 = vsel %vm2640, %v3983, %v4511
    %v4976 = vsel %vm2640, %v3986, %v4513
    %v4977 = vsel %vm2640, %v3988, %v4515
    %v4978 = vsel %vm2640, %v3991, %v4517
    %v4979 = vsel %vm2640, %v3993, %v4519
    %v4980 = vsel %vm2640, %v3996, %v4521
    %v4981 = vsel %vm2640, %v3998, %v4523
    %v4982 = vsel %vm2640, %v4001, %v4525
    %v4983 = vsel %vm2640, %v4003, %v4527
    %v4984 = vsel %vm2640, %v4006, %v4529
    %v4985 = vsel %vm2640, %v4008, %v4531
    %v4986 = vsel %vm2640, %v4011, %v4533
    %v4987 = vsel %vm2640, %v4013, %v4535
    %v4988 = vsel %vm2640, %v4016, %v4537
    %v4989 = vsel %vm2640, %v4018, %v4539
    %v4990 = vsel %vm2640, %v4021, %v4541
    %v4991 = vsel %vm2640, %v4023, %v4543
    %v4992 = vsel %vm2640, %v4026, %v4545
    %v4993 = vsel %vm2640, %v4028, %v4547
    %v4994 = vsel %vm2640, %v4031, %v4549
    %v4995 = vsel %vm2640, %v4033, %v4551
    %v4996 = vsel %vm2640, %v4036, %v4553
    %v4997 = vsel %vm2640, %v4038, %v4555
    %v4998 = vsel %vm2640, %v4041, %v4557
    %v4999 = vsel %vm2640, %v4043, %v4559
    %v5000 = vsel %vm2640, %v4046, %v4561
    %v5001 = vsel %vm2640, %v4048, %v4563
    %v5002 = vsel %vm2640, %v4051, %v4565
    %v5003 = vsel %vm2640, %v4053, %v4567
    %v5004 = vsel %vm2640, %v4056, %v4569
    %v5005 = vsel %vm2640, %v4058, %v4571
    %v5006 = vsel %vm2640, %v4061, %v4573
    %v5007 = vsel %vm2640, %v4063, %v4575
    %v5008 = vsel %vm2640, %v4066, %v4577
    %v5009 = vsel %vm2640, %v4068, %v4579
    %v5010 = vsel %vm2640, %v4071, %v4581
    %v5011 = vsel %vm2640, %v4073, %v4583
    %v5012 = vsel %vm2640, %v4076, %v4585
    %v5013 = vsel %vm2640, %v4078, %v4587
    %v5014 = vsel %vm2640, %v4081, %v4589
    %v5015 = vsel %vm2640, %v4083, %v4591
    %v5016 = vsel %vm2640, %v4086, %v4593
    %v5017 = vsel %vm2640, %v4088, %v4595
    %v5018 = vsel %vm2640, %v4091, %v4597
    %v5019 = vsel %vm2640, %v4093, %v4599
    %v5020 = vsel %vm2640, %v4096, %v4601
    %v5021 = vsel %vm2640, %v4098, %v4603
    %v5022 = vsel %vm2640, %v4101, %v4605
    %v5023 = vsel %vm2640, %v4103, %v4607
    %v5024 = vsel %vm2640, %v4106, %v4609
    %v5025 = vsel %vm2640, %v4108, %v4611
    %v5026 = vsel %vm2640, %v4111, %v4613
    %v5027 = vsel %vm2640, %v4113, %v4615
    %v5028 = vsel %vm2640, %v4116, %v4617
    %v5029 = vsel %vm2640, %v4118, %v4619
    %v5030 = vsel %vm2640, %v4121, %v4621
    %v5031 = vsel %vm2640, %v4123, %v4623
    %v5032 = vsel %vm2640, %v3811, %v4689
    %v5033 = vsel %vm2640, %v3813, %v4691
    %v5034 = vsel %vm2640, %v3816, %v4693
    %v5035 = vsel %vm2640, %v3818, %v4695
    %v5036 = vsel %vm2640, %v3821, %v4697
    %v5037 = vsel %vm2640, %v3823, %v4699
    %v5038 = vsel %vm2640, %v3826, %v4701
    %v5039 = vsel %vm2640, %v3828, %v4703
    %v5040 = vsel %vm2640, %v3831, %v4705
    %v5041 = vsel %vm2640, %v3833, %v4707
    %v5042 = vsel %vm2640, %v3836, %v4709
    %v5043 = vsel %vm2640, %v3838, %v4711
    %v5044 = vsel %vm2640, %v3841, %v4713
    %v5045 = vsel %vm2640, %v3843, %v4715
    %v5046 = vsel %vm2640, %v3846, %v4717
    %v5047 = vsel %vm2640, %v3848, %v4719
    %v5048 = vsel %vm2640, %v3851, %v4721
    %v5049 = vsel %vm2640, %v3853, %v4723
    %v5050 = vsel %vm2640, %v3856, %v4725
    %v5051 = vsel %vm2640, %v3858, %v4727
    %v5052 = vsel %vm2640, %v3861, %v4729
    %v5053 = vsel %vm2640, %v3863, %v4731
    %v5054 = vsel %vm2640, %v3866, %v4733
    %v5055 = vsel %vm2640, %v3868, %v4735
    %v5056 = vsel %vm2640, %v3871, %v4737
    %v5057 = vsel %vm2640, %v3873, %v4739
    %v5058 = vsel %vm2640, %v3876, %v4741
    %v5059 = vsel %vm2640, %v3878, %v4743
    %v5060 = vsel %vm2640, %v3881, %v4745
    %v5061 = vsel %vm2640, %v3883, %v4747
    %v5062 = vsel %vm2640, %v4196, %v4749
    %v5063 = vsel %vm2640, %v4198, %v4751
    %v5064 = vsel %vm2640, %v3891, %v4753
    %v5065 = vsel %vm2640, %v3893, %v4755
    %v5066 = vsel %vm2640, %v3896, %v4757
    %v5067 = vsel %vm2640, %v3898, %v4759
    %v5068 = vsel %vm2640, %v3901, %v4761
    %v5069 = vsel %vm2640, %v3903, %v4763
    %v5070 = vsel %vm2640, %v3906, %v4765
    %v5071 = vsel %vm2640, %v3908, %v4767
    %v5072 = vsel %vm2640, %v3911, %v4769
    %v5073 = vsel %vm2640, %v3913, %v4771
    %v5074 = vsel %vm2640, %v3916, %v4773
    %v5075 = vsel %vm2640, %v3918, %v4775
    %v5076 = vsel %vm2640, %v3921, %v4777
    %v5077 = vsel %vm2640, %v3923, %v4779
    %v5078 = vsel %vm2640, %v3926, %v4781
    %v5079 = vsel %vm2640, %v3928, %v4783
    %v5080 = vsel %vm2640, %v3931, %v4785
    %v5081 = vsel %vm2640, %v3933, %v4787
    %v5082 = vsel %vm2640, %v3936, %v4789
    %v5083 = vsel %vm2640, %v3938, %v4791
    %v5084 = vsel %vm2640, %v3941, %v4793
    %v5085 = vsel %vm2640, %v3943, %v4795
    %v5086 = vsel %vm2640, %v3946, %v4797
    %v5087 = vsel %vm2640, %v3948, %v4799
    %v5088 = vsel %vm2640, %v3951, %v4801
    %v5089 = vsel %vm2640, %v3953, %v4803
    %v5090 = vsel %vm2640, %v3956, %v4805
    %v5091 = vsel %vm2640, %v3958, %v4807
    %v5092 = vsel %vm2640, %v3961, %v4809
    %v5093 = vsel %vm2640, %v3963, %v4811
    %v5094 = vsel %vm2640, %v4201, %v4813
    %v5095 = vsel %vm2640, %v4203, %v4815
    %v5096 = vsel %vm2640, %v3575, %v4881
    %v5097 = vsel %vm2640, %v3576, %v4883
    %v5098 = vsel %vm2640, %v3578, %v4885
    %v5099 = vsel %vm2640, %v3579, %v4887
    %v5100 = vsel %vm2640, %v3629, %v4889
    %v5101 = vsel %vm2640, %v3630, %v4891
    %v5102 = vsel %vm2640, %v3632, %v4893
    %v5103 = vsel %vm2640, %v3633, %v4895
    %v5105 = vlaneseq
    %v5106 = vshrl.u32 %v5105, 7
    %v5107 = vsub.s32 0, %v5106
    %v5108 = vrot.slane %v3707, %v5107
    %v5110 = vsel %vm2640, %v3976, 0
    %v5112 = vsel %vm2640, %v3978, 0
    %v5114 = vsel %vm2640, %v3981, 0
    %v5116 = vsel %vm2640, %v3983, 0
    %v5118 = vsel %vm2640, %v3986, 0
    %v5120 = vsel %vm2640, %v3988, 0
    %v5122 = vsel %vm2640, %v3991, 0
    %v5124 = vsel %vm2640, %v3993, 0
    %v5126 = vsel %vm2640, %v3996, 0
    %v5128 = vsel %vm2640, %v3998, 0
    %v5130 = vsel %vm2640, %v4001, 0
    %v5132 = vsel %vm2640, %v4003, 0
    %v5134 = vsel %vm2640, %v4006, 0
    %v5136 = vsel %vm2640, %v4008, 0
    %v5138 = vsel %vm2640, %v4011, 0
    %v5140 = vsel %vm2640, %v4013, 0
    %v5142 = vsel %vm2640, %v4016, 0
    %v5144 = vsel %vm2640, %v4018, 0
    %v5146 = vsel %vm2640, %v4021, 0
    %v5148 = vsel %vm2640, %v4023, 0
    %v5150 = vsel %vm2640, %v4026, 0
    %v5152 = vsel %vm2640, %v4028, 0
    %v5154 = vsel %vm2640, %v4031, 0
    %v5156 = vsel %vm2640, %v4033, 0
    %v5158 = vsel %vm2640, %v4036, 0
    %v5160 = vsel %vm2640, %v4038, 0
    %v5162 = vsel %vm2640, %v4041, 0
    %v5164 = vsel %vm2640, %v4043, 0
    %v5166 = vsel %vm2640, %v4270, 0
    %v5168 = vsel %vm2640, %v4272, 0
    %v5170 = vsel %vm2640, %v4296, 0
    %v5172 = vsel %vm2640, %v4298, 0
    %v5174 = vsel %vm2640, %v4056, 0
    %v5176 = vsel %vm2640, %v4058, 0
    %v5178 = vsel %vm2640, %v4061, 0
    %v5180 = vsel %vm2640, %v4063, 0
    %v5182 = vsel %vm2640, %v4066, 0
    %v5184 = vsel %vm2640, %v4068, 0
    %v5186 = vsel %vm2640, %v4071, 0
    %v5188 = vsel %vm2640, %v4073, 0
    %v5190 = vsel %vm2640, %v4076, 0
    %v5192 = vsel %vm2640, %v4078, 0
    %v5194 = vsel %vm2640, %v4081, 0
    %v5196 = vsel %vm2640, %v4083, 0
    %v5198 = vsel %vm2640, %v4086, 0
    %v5200 = vsel %vm2640, %v4088, 0
    %v5202 = vsel %vm2640, %v4091, 0
    %v5204 = vsel %vm2640, %v4093, 0
    %v5206 = vsel %vm2640, %v4096, 0
    %v5208 = vsel %vm2640, %v4098, 0
    %v5210 = vsel %vm2640, %v4101, 0
    %v5212 = vsel %vm2640, %v4103, 0
    %v5214 = vsel %vm2640, %v4106, 0
    %v5216 = vsel %vm2640, %v4108, 0
    %v5218 = vsel %vm2640, %v4111, 0
    %v5220 = vsel %vm2640, %v4113, 0
    %v5222 = vsel %vm2640, %v4116, 0
    %v5224 = vsel %vm2640, %v4118, 0
    %v5226 = vsel %vm2640, %v4121, 0
    %v5228 = vsel %vm2640, %v4123, 0
    %v5230 = vsel %vm2640, %v4275, 0
    %v5232 = vsel %vm2640, %v4277, 0
    %v5234 = vsel %vm2640, %v4301, 0
    %v5236 = vsel %vm2640, %v4303, 0
    %5238 = vmatprep.subr.mxu0 0.0
    %5239 = vmatpush1.msra.mxu0 %v3635
    %5240 = vmatprep.subr.mxu0 0.0
    %5241 = vmatpush1.msra.mxu0 %v3636
    %5242 = vmatprep.subr.mxu0 0.0
    %5243 = vmatpush1.msra.mxu0 %v3637
    %5244 = vmatprep.subr.mxu0 0.0
    %5245 = vmatpush1.msra.mxu0 %v3638
    %5246 = vmatprep.subr.mxu0 0.0
    %5247 = vmatpush1.msra.mxu0 %v3639
    %5248 = vmatprep.subr.mxu0 0.0
    %5249 = vmatpush1.msra.mxu0 %v3640
    %5250 = vmatprep.subr.mxu0 0.0
    %5251 = vmatpush1.msra.mxu0 %v3641
    %5252 = vmatprep.subr.mxu0 0.0
    %5253 = vmatpush1.msra.mxu0 %v3642
    %5254 = vmatprep.subr.mxu0 0.0
    %5255 = vmatpush1.msra.mxu0 %v3643
    %5256 = vmatprep.subr.mxu0 0.0
    %5257 = vmatpush1.msra.mxu0 %v3644
    %5258 = vmatprep.subr.mxu0 0.0
    %5259 = vmatpush1.msra.mxu0 %v3645
    %5260 = vmatprep.subr.mxu0 0.0
    %5261 = vmatpush1.msra.mxu0 %v3646
    %5262 = vmatprep.subr.mxu0 0.0
    %5263 = vmatpush1.msra.mxu0 %v3647
    %5264 = vmatprep.subr.mxu0 0.0
    %5265 = vmatpush1.msra.mxu0 %v3648
    %5266 = vmatprep.subr.mxu0 0.0
    %5267 = vmatpush1.msra.mxu0 %v3649
    %5268 = vmatprep.subr.mxu0 0.0
    %5269 = vmatpush1.msra.mxu0 %v3650
    %5270 = vmatprep.subr.mxu0 0.0
    %5271 = vmatpush1.msra.mxu0 %v3651
    %5272 = vmatprep.subr.mxu0 0.0
    %5273 = vmatpush1.msra.mxu0 %v3652
    %5274 = vmatprep.subr.mxu0 0.0
    %5275 = vmatpush1.msra.mxu0 %v3653
    %5276 = vmatprep.subr.mxu0 0.0
    %5277 = vmatpush1.msra.mxu0 %v3654
    %5278 = vmatprep.subr.mxu0 0.0
    %5279 = vmatpush1.msra.mxu0 %v3655
    %5280 = vmatprep.subr.mxu0 0.0
    %5281 = vmatpush1.msra.mxu0 %v3656
    %5282 = vmatprep.subr.mxu0 0.0
    %5283 = vmatpush1.msra.mxu0 %v3657
    %5284 = vmatprep.subr.mxu0 0.0
    %5285 = vmatpush1.msra.mxu0 %v3658
    %5286 = vmatprep.subr.mxu0 0.0
    %5287 = vmatpush1.msra.mxu0 %v3659
    %5288 = vmatprep.subr.mxu0 0.0
    %5289 = vmatpush1.msra.mxu0 %v3660
    %5290 = vmatprep.subr.mxu0 0.0
    %5291 = vmatpush1.msra.mxu0 %v3661
    %5292 = vmatprep.subr.mxu0 0.0
    %5293 = vmatpush1.msra.mxu0 %v3662
    %5294 = vmatprep.subr.mxu0 0.0
    %5295 = vmatpush1.msra.mxu0 %v3663
    %5296 = vmatprep.subr.mxu0 0.0
    %5297 = vmatpush1.msra.mxu0 %v3664
    %5298 = vmatprep.subr.mxu0 0.0
    %5299 = vmatpush1.msra.mxu0 %v3665
    %5300 = vmatprep.subr.mxu0 0.0
    %5301 = vmatpush1.msra.mxu0 %v3666
    %5302 = vmatprep.mubr.f32.mxu0 %v4968
    %5303 = vmatmul.mubr.f32.gmra.mrb[0].mxu0 %v4904
    %v5304 = vpop.f32.mrb[0].mxu0
    %v5305 = vadd.f32 %v5108, %v5304
    %v5306 = vpop.f32.mrb[0].mxu0
    %5307 = vmatprep.mubr.f32.mxu0 %v4969
    %5308 = vmatmul.mubr.f32.gmra.mrb[0].mxu0 %v4905
    %v5309 = vpop.f32.mrb[0].mxu0
    %v5310 = vadd.f32 %v5108, %v5309
    %v5311 = vpop.f32.mrb[0].mxu0
    %5312 = vmatprep.mubr.f32.mxu0 %v4970
    %5313 = vmatmul.mubr.f32.gmra.mrb[0].mxu0 %v4906
    %v5314 = vpop.f32.mrb[0].mxu0
    %v5315 = vadd.f32 %v5108, %v5314
    %v5316 = vpop.f32.mrb[0].mxu0
    %5317 = vmatprep.mubr.f32.mxu0 %v4971
    %5318 = vmatmul.mubr.f32.gmra.mrb[0].mxu0 %v4907
    %v5319 = vpop.f32.mrb[0].mxu0
    %v5320 = vadd.f32 %v5108, %v5319
    %v5321 = vpop.f32.mrb[0].mxu0
    %5322 = vmatprep.mubr.f32.mxu0 %v4972
    %5323 = vmatmul.mubr.f32.gmra.mrb[0].mxu0 %v4908
    %v5324 = vpop.f32.mrb[0].mxu0
    %v5325 = vadd.f32 %v5108, %v5324
    %v5326 = vpop.f32.mrb[0].mxu0
    %5327 = vmatprep.mubr.f32.mxu0 %v4973
    %5328 = vmatmul.mubr.f32.gmra.mrb[0].mxu0 %v4909
    %v5329 = vpop.f32.mrb[0].mxu0
    %v5330 = vadd.f32 %v5108, %v5329
    %v5331 = vpop.f32.mrb[0].mxu0
    %5332 = vmatprep.mubr.f32.mxu0 %v4974
    %5333 = vmatmul.mubr.f32.gmra.mrb[0].mxu0 %v4910
    %v5334 = vpop.f32.mrb[0].mxu0
    %v5335 = vadd.f32 %v5108, %v5334
    %v5336 = vpop.f32.mrb[0].mxu0
    %5337 = vmatprep.mubr.f32.mxu0 %v4975
    %5338 = vmatmul.mubr.f32.gmra.mrb[0].mxu0 %v4911
    %v5339 = vpop.f32.mrb[0].mxu0
    %v5340 = vadd.f32 %v5108, %v5339
    %v5341 = vpop.f32.mrb[0].mxu0
    %5342 = vmatprep.mubr.f32.mxu0 %v4976
    %5343 = vmatmul.mubr.f32.gmra.mrb[0].mxu0 %v4912
    %v5344 = vpop.f32.mrb[0].mxu0
    %v5345 = vadd.f32 %v5108, %v5344
    %v5346 = vpop.f32.mrb[0].mxu0
    %5347 = vmatprep.mubr.f32.mxu0 %v4977
    %5348 = vmatmul.mubr.f32.gmra.mrb[0].mxu0 %v4913
    %v5349 = vpop.f32.mrb[0].mxu0
    %v5350 = vadd.f32 %v5108, %v5349
    %v5351 = vpop.f32.mrb[0].mxu0
    %5352 = vmatprep.mubr.f32.mxu0 %v4978
    %5353 = vmatmul.mubr.f32.gmra.mrb[0].mxu0 %v4914
    %v5354 = vpop.f32.mrb[0].mxu0
    %v5355 = vadd.f32 %v5108, %v5354
    %v5356 = vpop.f32.mrb[0].mxu0
    %5357 = vmatprep.mubr.f32.mxu0 %v4979
    %5358 = vmatmul.mubr.f32.gmra.mrb[0].mxu0 %v4915
    %v5359 = vpop.f32.mrb[0].mxu0
    %v5360 = vadd.f32 %v5108, %v5359
    %v5361 = vpop.f32.mrb[0].mxu0
    %5362 = vmatprep.mubr.f32.mxu0 %v4980
    %5363 = vmatmul.mubr.f32.gmra.mrb[0].mxu0 %v4916
    %v5364 = vpop.f32.mrb[0].mxu0
    %v5365 = vadd.f32 %v5108, %v5364
    %v5366 = vpop.f32.mrb[0].mxu0
    %5367 = vmatprep.mubr.f32.mxu0 %v4981
    %5368 = vmatmul.mubr.f32.gmra.mrb[0].mxu0 %v4917
    %v5369 = vpop.f32.mrb[0].mxu0
    %v5370 = vadd.f32 %v5108, %v5369
    %v5371 = vpop.f32.mrb[0].mxu0
    %5372 = vmatprep.mubr.f32.mxu0 %v4982
    %5373 = vmatmul.mubr.f32.gmra.mrb[0].mxu0 %v4918
    %v5374 = vpop.f32.mrb[0].mxu0
    %v5375 = vadd.f32 %v5108, %v5374
    %v5376 = vpop.f32.mrb[0].mxu0
    %5377 = vmatprep.mubr.f32.mxu0 %v4983
    %5378 = vmatmul.mubr.f32.gmra.mrb[0].mxu0 %v4919
    %v5379 = vpop.f32.mrb[0].mxu0
    %v5380 = vadd.f32 %v5108, %v5379
    %v5381 = vpop.f32.mrb[0].mxu0
    %5382 = vmatprep.mubr.f32.mxu0 %v4984
    %5383 = vmatmul.mubr.f32.gmra.mrb[0].mxu0 %v4920
    %v5384 = vpop.f32.mrb[0].mxu0
    %v5385 = vadd.f32 %v5108, %v5384
    %v5386 = vpop.f32.mrb[0].mxu0
    %5387 = vmatprep.mubr.f32.mxu0 %v4985
    %5388 = vmatmul.mubr.f32.gmra.mrb[0].mxu0 %v4921
    %v5389 = vpop.f32.mrb[0].mxu0
    %v5390 = vadd.f32 %v5108, %v5389
    %v5391 = vpop.f32.mrb[0].mxu0
    %5392 = vmatprep.mubr.f32.mxu0 %v4986
    %5393 = vmatmul.mubr.f32.gmra.mrb[0].mxu0 %v4922
    %v5394 = vpop.f32.mrb[0].mxu0
    %v5395 = vadd.f32 %v5108, %v5394
    %v5396 = vpop.f32.mrb[0].mxu0
    %5397 = vmatprep.mubr.f32.mxu0 %v4987
    %5398 = vmatmul.mubr.f32.gmra.mrb[0].mxu0 %v4923
    %v5399 = vpop.f32.mrb[0].mxu0
    %v5400 = vadd.f32 %v5108, %v5399
    %v5401 = vpop.f32.mrb[0].mxu0
    %5402 = vmatprep.mubr.f32.mxu0 %v4988
    %5403 = vmatmul.mubr.f32.gmra.mrb[0].mxu0 %v4924
    %v5404 = vpop.f32.mrb[0].mxu0
    %v5405 = vadd.f32 %v5108, %v5404
    %v5406 = vpop.f32.mrb[0].mxu0
    %5407 = vmatprep.mubr.f32.mxu0 %v4989
    %5408 = vmatmul.mubr.f32.gmra.mrb[0].mxu0 %v4925
    %v5409 = vpop.f32.mrb[0].mxu0
    %v5410 = vadd.f32 %v5108, %v5409
    %v5411 = vpop.f32.mrb[0].mxu0
    %5412 = vmatprep.mubr.f32.mxu0 %v4990
    %5413 = vmatmul.mubr.f32.gmra.mrb[0].mxu0 %v4926
    %v5414 = vpop.f32.mrb[0].mxu0
    %v5415 = vadd.f32 %v5108, %v5414
    %v5416 = vpop.f32.mrb[0].mxu0
    %5417 = vmatprep.mubr.f32.mxu0 %v4991
    %5418 = vmatmul.mubr.f32.gmra.mrb[0].mxu0 %v4927
    %v5419 = vpop.f32.mrb[0].mxu0
    %v5420 = vadd.f32 %v5108, %v5419
    %v5421 = vpop.f32.mrb[0].mxu0
    %5422 = vmatprep.mubr.f32.mxu0 %v4992
    %5423 = vmatmul.mubr.f32.gmra.mrb[0].mxu0 %v4928
    %v5424 = vpop.f32.mrb[0].mxu0
    %v5425 = vadd.f32 %v5108, %v5424
    %v5426 = vpop.f32.mrb[0].mxu0
    %5427 = vmatprep.mubr.f32.mxu0 %v4993
    %5428 = vmatmul.mubr.f32.gmra.mrb[0].mxu0 %v4929
    %v5429 = vpop.f32.mrb[0].mxu0
    %v5430 = vadd.f32 %v5108, %v5429
    %v5431 = vpop.f32.mrb[0].mxu0
    %5432 = vmatprep.mubr.f32.mxu0 %v4994
    %5433 = vmatmul.mubr.f32.gmra.mrb[0].mxu0 %v4930
    %v5434 = vpop.f32.mrb[0].mxu0
    %v5435 = vadd.f32 %v5108, %v5434
    %v5436 = vpop.f32.mrb[0].mxu0
    %5437 = vmatprep.mubr.f32.mxu0 %v4995
    %5438 = vmatmul.mubr.f32.gmra.mrb[0].mxu0 %v4931
    %v5439 = vpop.f32.mrb[0].mxu0
    %v5440 = vadd.f32 %v5108, %v5439
    %v5441 = vpop.f32.mrb[0].mxu0
    %5442 = vmatprep.mubr.f32.mxu0 %v4996
    %5443 = vmatmul.mubr.f32.gmra.mrb[0].mxu0 %v4932
    %v5444 = vpop.f32.mrb[0].mxu0
    %v5445 = vadd.f32 %v5108, %v5444
    %v5446 = vpop.f32.mrb[0].mxu0
    %5447 = vmatprep.mubr.f32.mxu0 %v4997
    %5448 = vmatmul.mubr.f32.gmra.mrb[0].mxu0 %v4933
    %v5449 = vpop.f32.mrb[0].mxu0
    %v5450 = vadd.f32 %v5108, %v5449
    %v5451 = vpop.f32.mrb[0].mxu0
    %5452 = vmatprep.mubr.f32.mxu0 %v4998
    %5453 = vmatmul.mubr.f32.gmra.mrb[0].mxu0 %v4934
    %v5454 = vpop.f32.mrb[0].mxu0
    %v5455 = vadd.f32 %v5108, %v5454
    %v5456 = vpop.f32.mrb[0].mxu0
    %5457 = vmatprep.mubr.f32.mxu0 %v4999
    %5458 = vmatmul.mubr.f32.gmra.mrb[0].mxu0 %v4935
    %v5459 = vpop.f32.mrb[0].mxu0
    %v5460 = vadd.f32 %v5108, %v5459
    %v5461 = vpop.f32.mrb[0].mxu0
    %5462 = vmatprep.mubr.f32.mxu0 %v5000
    %5463 = vmatmul.mubr.f32.gmra.mrb[0].mxu0 %v4936
    %v5464 = vpop.f32.mrb[0].mxu0
    %v5465 = vadd.f32 %v5108, %v5464
    %v5466 = vpop.f32.mrb[0].mxu0
    %5467 = vmatprep.mubr.f32.mxu0 %v5001
    %5468 = vmatmul.mubr.f32.gmra.mrb[0].mxu0 %v4937
    %v5469 = vpop.f32.mrb[0].mxu0
    %v5470 = vadd.f32 %v5108, %v5469
    %v5471 = vpop.f32.mrb[0].mxu0
    %5472 = vmatprep.mubr.f32.mxu0 %v5002
    %5473 = vmatmul.mubr.f32.gmra.mrb[0].mxu0 %v4938
    %v5474 = vpop.f32.mrb[0].mxu0
    %v5475 = vadd.f32 %v5108, %v5474
    %v5476 = vpop.f32.mrb[0].mxu0
    %5477 = vmatprep.mubr.f32.mxu0 %v5003
    %5478 = vmatmul.mubr.f32.gmra.mrb[0].mxu0 %v4939
    %v5479 = vpop.f32.mrb[0].mxu0
    %v5480 = vadd.f32 %v5108, %v5479
    %v5481 = vpop.f32.mrb[0].mxu0
    %5482 = vmatprep.mubr.f32.mxu0 %v5004
    %5483 = vmatmul.mubr.f32.gmra.mrb[0].mxu0 %v4940
    %v5484 = vpop.f32.mrb[0].mxu0
    %v5485 = vadd.f32 %v5108, %v5484
    %v5486 = vpop.f32.mrb[0].mxu0
    %5487 = vmatprep.mubr.f32.mxu0 %v5005
    %5488 = vmatmul.mubr.f32.gmra.mrb[0].mxu0 %v4941
    %v5489 = vpop.f32.mrb[0].mxu0
    %v5490 = vadd.f32 %v5108, %v5489
    %v5491 = vpop.f32.mrb[0].mxu0
    %5492 = vmatprep.mubr.f32.mxu0 %v5006
    %5493 = vmatmul.mubr.f32.gmra.mrb[0].mxu0 %v4942
    %v5494 = vpop.f32.mrb[0].mxu0
    %v5495 = vadd.f32 %v5108, %v5494
    %v5496 = vpop.f32.mrb[0].mxu0
    %5497 = vmatprep.mubr.f32.mxu0 %v5007
    %5498 = vmatmul.mubr.f32.gmra.mrb[0].mxu0 %v4943
    %v5499 = vpop.f32.mrb[0].mxu0
    %v5500 = vadd.f32 %v5108, %v5499
    %v5501 = vpop.f32.mrb[0].mxu0
    %5502 = vmatprep.mubr.f32.mxu0 %v5008
    %5503 = vmatmul.mubr.f32.gmra.mrb[0].mxu0 %v4944
    %v5504 = vpop.f32.mrb[0].mxu0
    %v5505 = vadd.f32 %v5108, %v5504
    %v5506 = vpop.f32.mrb[0].mxu0
    %5507 = vmatprep.mubr.f32.mxu0 %v5009
    %5508 = vmatmul.mubr.f32.gmra.mrb[0].mxu0 %v4945
    %v5509 = vpop.f32.mrb[0].mxu0
    %v5510 = vadd.f32 %v5108, %v5509
    %v5511 = vpop.f32.mrb[0].mxu0
    %5512 = vmatprep.mubr.f32.mxu0 %v5010
    %5513 = vmatmul.mubr.f32.gmra.mrb[0].mxu0 %v4946
    %v5514 = vpop.f32.mrb[0].mxu0
    %v5515 = vadd.f32 %v5108, %v5514
    %v5516 = vpop.f32.mrb[0].mxu0
    %5517 = vmatprep.mubr.f32.mxu0 %v5011
    %5518 = vmatmul.mubr.f32.gmra.mrb[0].mxu0 %v4947
    %v5519 = vpop.f32.mrb[0].mxu0
    %v5520 = vadd.f32 %v5108, %v5519
    %v5521 = vpop.f32.mrb[0].mxu0
    %5522 = vmatprep.mubr.f32.mxu0 %v5012
    %5523 = vmatmul.mubr.f32.gmra.mrb[0].mxu0 %v4948
    %v5524 = vpop.f32.mrb[0].mxu0
    %v5525 = vadd.f32 %v5108, %v5524
    %v5526 = vpop.f32.mrb[0].mxu0
    %5527 = vmatprep.mubr.f32.mxu0 %v5013
    %5528 = vmatmul.mubr.f32.gmra.mrb[0].mxu0 %v4949
    %v5529 = vpop.f32.mrb[0].mxu0
    %v5530 = vadd.f32 %v5108, %v5529
    %v5531 = vpop.f32.mrb[0].mxu0
    %5532 = vmatprep.mubr.f32.mxu0 %v5014
    %5533 = vmatmul.mubr.f32.gmra.mrb[0].mxu0 %v4950
    %v5534 = vpop.f32.mrb[0].mxu0
    %v5535 = vadd.f32 %v5108, %v5534
    %v5536 = vpop.f32.mrb[0].mxu0
    %5537 = vmatprep.mubr.f32.mxu0 %v5015
    %5538 = vmatmul.mubr.f32.gmra.mrb[0].mxu0 %v4951
    %v5539 = vpop.f32.mrb[0].mxu0
    %v5540 = vadd.f32 %v5108, %v5539
    %v5541 = vpop.f32.mrb[0].mxu0
    %5542 = vmatprep.mubr.f32.mxu0 %v5016
    %5543 = vmatmul.mubr.f32.gmra.mrb[0].mxu0 %v4952
    %v5544 = vpop.f32.mrb[0].mxu0
    %v5545 = vadd.f32 %v5108, %v5544
    %v5546 = vpop.f32.mrb[0].mxu0
    %5547 = vmatprep.mubr.f32.mxu0 %v5017
    %5548 = vmatmul.mubr.f32.gmra.mrb[0].mxu0 %v4953
    %v5549 = vpop.f32.mrb[0].mxu0
    %v5550 = vadd.f32 %v5108, %v5549
    %v5551 = vpop.f32.mrb[0].mxu0
    %5552 = vmatprep.mubr.f32.mxu0 %v5018
    %5553 = vmatmul.mubr.f32.gmra.mrb[0].mxu0 %v4954
    %v5554 = vpop.f32.mrb[0].mxu0
    %v5555 = vadd.f32 %v5108, %v5554
    %v5556 = vpop.f32.mrb[0].mxu0
    %5557 = vmatprep.mubr.f32.mxu0 %v5019
    %5558 = vmatmul.mubr.f32.gmra.mrb[0].mxu0 %v4955
    %v5559 = vpop.f32.mrb[0].mxu0
    %v5560 = vadd.f32 %v5108, %v5559
    %v5561 = vpop.f32.mrb[0].mxu0
    %5562 = vmatprep.mubr.f32.mxu0 %v5020
    %5563 = vmatmul.mubr.f32.gmra.mrb[0].mxu0 %v4956
    %v5564 = vpop.f32.mrb[0].mxu0
    %v5565 = vadd.f32 %v5108, %v5564
    %v5566 = vpop.f32.mrb[0].mxu0
    %5567 = vmatprep.mubr.f32.mxu0 %v5021
    %5568 = vmatmul.mubr.f32.gmra.mrb[0].mxu0 %v4957
    %v5569 = vpop.f32.mrb[0].mxu0
    %v5570 = vadd.f32 %v5108, %v5569
    %v5571 = vpop.f32.mrb[0].mxu0
    %5572 = vmatprep.mubr.f32.mxu0 %v5022
    %5573 = vmatmul.mubr.f32.gmra.mrb[0].mxu0 %v4958
    %v5574 = vpop.f32.mrb[0].mxu0
    %v5575 = vadd.f32 %v5108, %v5574
    %v5576 = vpop.f32.mrb[0].mxu0
    %5577 = vmatprep.mubr.f32.mxu0 %v5023
    %5578 = vmatmul.mubr.f32.gmra.mrb[0].mxu0 %v4959
    %v5579 = vpop.f32.mrb[0].mxu0
    %v5580 = vadd.f32 %v5108, %v5579
    %v5581 = vpop.f32.mrb[0].mxu0
    %5582 = vmatprep.mubr.f32.mxu0 %v5024
    %5583 = vmatmul.mubr.f32.gmra.mrb[0].mxu0 %v4960
    %v5584 = vpop.f32.mrb[0].mxu0
    %v5585 = vadd.f32 %v5108, %v5584
    %v5586 = vpop.f32.mrb[0].mxu0
    %5587 = vmatprep.mubr.f32.mxu0 %v5025
    %5588 = vmatmul.mubr.f32.gmra.mrb[0].mxu0 %v4961
    %v5589 = vpop.f32.mrb[0].mxu0
    %v5590 = vadd.f32 %v5108, %v5589
    %v5591 = vpop.f32.mrb[0].mxu0
    %5592 = vmatprep.mubr.f32.mxu0 %v5026
    %5593 = vmatmul.mubr.f32.gmra.mrb[0].mxu0 %v4962
    %v5594 = vpop.f32.mrb[0].mxu0
    %v5595 = vadd.f32 %v5108, %v5594
    %v5596 = vpop.f32.mrb[0].mxu0
    %5597 = vmatprep.mubr.f32.mxu0 %v5027
    %5598 = vmatmul.mubr.f32.gmra.mrb[0].mxu0 %v4963
    %v5599 = vpop.f32.mrb[0].mxu0
    %v5600 = vadd.f32 %v5108, %v5599
    %v5601 = vpop.f32.mrb[0].mxu0
    %5602 = vmatprep.mubr.f32.mxu0 %v5028
    %5603 = vmatmul.mubr.f32.gmra.mrb[0].mxu0 %v4964
    %v5604 = vpop.f32.mrb[0].mxu0
    %v5605 = vadd.f32 %v5108, %v5604
    %v5606 = vpop.f32.mrb[0].mxu0
    %5607 = vmatprep.mubr.f32.mxu0 %v5029
    %5608 = vmatmul.mubr.f32.gmra.mrb[0].mxu0 %v4965
    %v5609 = vpop.f32.mrb[0].mxu0
    %v5610 = vadd.f32 %v5108, %v5609
    %v5611 = vpop.f32.mrb[0].mxu0
    %5612 = vmatprep.mubr.f32.mxu0 %v5030
    %5613 = vmatmul.mubr.f32.gmra.mrb[0].mxu0 %v4966
    %v5614 = vpop.f32.mrb[0].mxu0
    %v5615 = vadd.f32 %v5108, %v5614
    %v5616 = vpop.f32.mrb[0].mxu0
    %5617 = vmatprep.mubr.f32.mxu0 %v5031
    %5618 = vmatmul.mubr.f32.gmra.mrb[0].mxu0 %v4967
    %v5619 = vpop.f32.mrb[0].mxu0
    %v5620 = vadd.f32 %v5108, %v5619
    %v5621 = vpop.f32.mrb[0].mxu0
    %5622 = vdwg.mxu0
    %5623 = vmatprep.subr.mxu0 0.0
    %5624 = vmatpush1.msra.mxu0 %v3667
    %5625 = vmatprep.subr.mxu0 0.0
    %5626 = vmatpush1.msra.mxu0 %v3668
    %5627 = vmatprep.subr.mxu0 0.0
    %5628 = vmatpush1.msra.mxu0 %v3669
    %5629 = vmatprep.subr.mxu0 0.0
    %5630 = vmatpush1.msra.mxu0 %v3670
    %5631 = vmatprep.subr.mxu0 0.0
    %5632 = vmatpush1.msra.mxu0 %v3671
    %5633 = vmatprep.subr.mxu0 0.0
    %5634 = vmatpush1.msra.mxu0 %v3672
    %5635 = vmatprep.subr.mxu0 0.0
    %5636 = vmatpush1.msra.mxu0 %v3673
    %5637 = vmatprep.subr.mxu0 0.0
    %5638 = vmatpush1.msra.mxu0 %v3674
    %5639 = vmatprep.subr.mxu0 0.0
    %5640 = vmatpush1.msra.mxu0 %v3675
    %5641 = vmatprep.subr.mxu0 0.0
    %5642 = vmatpush1.msra.mxu0 %v3676
    %5643 = vmatprep.subr.mxu0 0.0
    %5644 = vmatpush1.msra.mxu0 %v3677
    %5645 = vmatprep.subr.mxu0 0.0
    %5646 = vmatpush1.msra.mxu0 %v3678
    %5647 = vmatprep.subr.mxu0 0.0
    %5648 = vmatpush1.msra.mxu0 %v3679
    %5649 = vmatprep.subr.mxu0 0.0
    %5650 = vmatpush1.msra.mxu0 %v3680
    %5651 = vmatprep.subr.mxu0 0.0
    %5652 = vmatpush1.msra.mxu0 %v3681
    %5653 = vmatprep.subr.mxu0 0.0
    %5654 = vmatpush1.msra.mxu0 %v3682
    %5655 = vmatprep.subr.mxu0 0.0
    %5656 = vmatpush1.msra.mxu0 %v3683
    %5657 = vmatprep.subr.mxu0 0.0
    %5658 = vmatpush1.msra.mxu0 %v3684
    %5659 = vmatprep.subr.mxu0 0.0
    %5660 = vmatpush1.msra.mxu0 %v3685
    %5661 = vmatprep.subr.mxu0 0.0
    %5662 = vmatpush1.msra.mxu0 %v3686
    %5663 = vmatprep.subr.mxu0 0.0
    %5664 = vmatpush1.msra.mxu0 %v3687
    %5665 = vmatprep.subr.mxu0 0.0
    %5666 = vmatpush1.msra.mxu0 %v3688
    %5667 = vmatprep.subr.mxu0 0.0
    %5668 = vmatpush1.msra.mxu0 %v3689
    %5669 = vmatprep.subr.mxu0 0.0
    %5670 = vmatpush1.msra.mxu0 %v3690
    %5671 = vmatprep.subr.mxu0 0.0
    %5672 = vmatpush1.msra.mxu0 %v3691
    %5673 = vmatprep.subr.mxu0 0.0
    %5674 = vmatpush1.msra.mxu0 %v3692
    %5675 = vmatprep.subr.mxu0 0.0
    %5676 = vmatpush1.msra.mxu0 %v3693
    %5677 = vmatprep.subr.mxu0 0.0
    %5678 = vmatpush1.msra.mxu0 %v3694
    %5679 = vmatprep.subr.mxu0 0.0
    %5680 = vmatpush1.msra.mxu0 %v3695
    %5681 = vmatprep.subr.mxu0 0.0
    %5682 = vmatpush1.msra.mxu0 %v3696
    %5683 = vmatprep.subr.mxu0 0.0
    %5684 = vmatpush1.msra.mxu0 %v3697
    %5685 = vmatprep.subr.mxu0 0.0
    %5686 = vmatpush1.msra.mxu0 %v3698
    %5687 = vmatprep.mubr.f32.mxu0 %v4908
    %5688 = vmatmul.mubr.f32.gmra.mrb[0].mxu0 %v5032
    %v5689 = vpop.f32.mrb[0].mxu0
    %v5690 = vadd.f32 %v5305, %v5689
    %v5691 = vpop.f32.mrb[0].mxu0
    %5692 = vmatprep.mubr.f32.mxu0 %v4909
    %5693 = vmatmul.mubr.f32.gmra.mrb[0].mxu0 %v5033
    %v5694 = vpop.f32.mrb[0].mxu0
    %v5695 = vadd.f32 %v5310, %v5694
    %v5696 = vpop.f32.mrb[0].mxu0
    %5697 = vmatprep.mubr.f32.mxu0 %v4910
    %5698 = vmatmul.mubr.f32.gmra.mrb[0].mxu0 %v5034
    %v5699 = vpop.f32.mrb[0].mxu0
    %v5700 = vadd.f32 %v5315, %v5699
    %v5701 = vpop.f32.mrb[0].mxu0
    %5702 = vmatprep.mubr.f32.mxu0 %v4911
    %5703 = vmatmul.mubr.f32.gmra.mrb[0].mxu0 %v5035
    %v5704 = vpop.f32.mrb[0].mxu0
    %v5705 = vadd.f32 %v5320, %v5704
    %v5706 = vpop.f32.mrb[0].mxu0
    %5707 = vmatprep.mubr.f32.mxu0 %v4912
    %5708 = vmatmul.mubr.f32.gmra.mrb[0].mxu0 %v5036
    %v5709 = vpop.f32.mrb[0].mxu0
    %v5710 = vadd.f32 %v5325, %v5709
    %v5711 = vpop.f32.mrb[0].mxu0
    %5712 = vmatprep.mubr.f32.mxu0 %v4913
    %5713 = vmatmul.mubr.f32.gmra.mrb[0].mxu0 %v5037
    %v5714 = vpop.f32.mrb[0].mxu0
    %v5715 = vadd.f32 %v5330, %v5714
    %v5716 = vpop.f32.mrb[0].mxu0
    %5717 = vmatprep.mubr.f32.mxu0 %v4914
    %5718 = vmatmul.mubr.f32.gmra.mrb[0].mxu0 %v5038
    %v5719 = vpop.f32.mrb[0].mxu0
    %v5720 = vadd.f32 %v5335, %v5719
    %v5721 = vpop.f32.mrb[0].mxu0
    %5722 = vmatprep.mubr.f32.mxu0 %v4915
    %5723 = vmatmul.mubr.f32.gmra.mrb[0].mxu0 %v5039
    %v5724 = vpop.f32.mrb[0].mxu0
    %v5725 = vadd.f32 %v5340, %v5724
    %v5726 = vpop.f32.mrb[0].mxu0
    %5727 = vmatprep.mubr.f32.mxu0 %v4916
    %5728 = vmatmul.mubr.f32.gmra.mrb[0].mxu0 %v5040
    %v5729 = vpop.f32.mrb[0].mxu0
    %v5730 = vadd.f32 %v5345, %v5729
    %v5731 = vpop.f32.mrb[0].mxu0
    %5732 = vmatprep.mubr.f32.mxu0 %v4917
    %5733 = vmatmul.mubr.f32.gmra.mrb[0].mxu0 %v5041
    %v5734 = vpop.f32.mrb[0].mxu0
    %v5735 = vadd.f32 %v5350, %v5734
    %v5736 = vpop.f32.mrb[0].mxu0
    %5737 = vmatprep.mubr.f32.mxu0 %v4918
    %5738 = vmatmul.mubr.f32.gmra.mrb[0].mxu0 %v5042
    %v5739 = vpop.f32.mrb[0].mxu0
    %v5740 = vadd.f32 %v5355, %v5739
    %v5741 = vpop.f32.mrb[0].mxu0
    %5742 = vmatprep.mubr.f32.mxu0 %v4919
    %5743 = vmatmul.mubr.f32.gmra.mrb[0].mxu0 %v5043
    %v5744 = vpop.f32.mrb[0].mxu0
    %v5745 = vadd.f32 %v5360, %v5744
    %v5746 = vpop.f32.mrb[0].mxu0
    %5747 = vmatprep.mubr.f32.mxu0 %v4920
    %5748 = vmatmul.mubr.f32.gmra.mrb[0].mxu0 %v5044
    %v5749 = vpop.f32.mrb[0].mxu0
    %v5750 = vadd.f32 %v5365, %v5749
    %v5751 = vpop.f32.mrb[0].mxu0
    %5752 = vmatprep.mubr.f32.mxu0 %v4921
    %5753 = vmatmul.mubr.f32.gmra.mrb[0].mxu0 %v5045
    %v5754 = vpop.f32.mrb[0].mxu0
    %v5755 = vadd.f32 %v5370, %v5754
    %v5756 = vpop.f32.mrb[0].mxu0
    %5757 = vmatprep.mubr.f32.mxu0 %v4922
    %5758 = vmatmul.mubr.f32.gmra.mrb[0].mxu0 %v5046
    %v5759 = vpop.f32.mrb[0].mxu0
    %v5760 = vadd.f32 %v5375, %v5759
    %v5761 = vpop.f32.mrb[0].mxu0
    %5762 = vmatprep.mubr.f32.mxu0 %v4923
    %5763 = vmatmul.mubr.f32.gmra.mrb[0].mxu0 %v5047
    %v5764 = vpop.f32.mrb[0].mxu0
    %v5765 = vadd.f32 %v5380, %v5764
    %v5766 = vpop.f32.mrb[0].mxu0
    %5767 = vmatprep.mubr.f32.mxu0 %v4924
    %5768 = vmatmul.mubr.f32.gmra.mrb[0].mxu0 %v5048
    %v5769 = vpop.f32.mrb[0].mxu0
    %v5770 = vadd.f32 %v5385, %v5769
    %v5771 = vpop.f32.mrb[0].mxu0
    %5772 = vmatprep.mubr.f32.mxu0 %v4925
    %5773 = vmatmul.mubr.f32.gmra.mrb[0].mxu0 %v5049
    %v5774 = vpop.f32.mrb[0].mxu0
    %v5775 = vadd.f32 %v5390, %v5774
    %v5776 = vpop.f32.mrb[0].mxu0
    %5777 = vmatprep.mubr.f32.mxu0 %v4926
    %5778 = vmatmul.mubr.f32.gmra.mrb[0].mxu0 %v5050
    %v5779 = vpop.f32.mrb[0].mxu0
    %v5780 = vadd.f32 %v5395, %v5779
    %v5781 = vpop.f32.mrb[0].mxu0
    %5782 = vmatprep.mubr.f32.mxu0 %v4927
    %5783 = vmatmul.mubr.f32.gmra.mrb[0].mxu0 %v5051
    %v5784 = vpop.f32.mrb[0].mxu0
    %v5785 = vadd.f32 %v5400, %v5784
    %v5786 = vpop.f32.mrb[0].mxu0
    %5787 = vmatprep.mubr.f32.mxu0 %v4928
    %5788 = vmatmul.mubr.f32.gmra.mrb[0].mxu0 %v5052
    %v5789 = vpop.f32.mrb[0].mxu0
    %v5790 = vadd.f32 %v5405, %v5789
    %v5791 = vpop.f32.mrb[0].mxu0
    %5792 = vmatprep.mubr.f32.mxu0 %v4929
    %5793 = vmatmul.mubr.f32.gmra.mrb[0].mxu0 %v5053
    %v5794 = vpop.f32.mrb[0].mxu0
    %v5795 = vadd.f32 %v5410, %v5794
    %v5796 = vpop.f32.mrb[0].mxu0
    %5797 = vmatprep.mubr.f32.mxu0 %v4930
    %5798 = vmatmul.mubr.f32.gmra.mrb[0].mxu0 %v5054
    %v5799 = vpop.f32.mrb[0].mxu0
    %v5800 = vadd.f32 %v5415, %v5799
    %v5801 = vpop.f32.mrb[0].mxu0
    %5802 = vmatprep.mubr.f32.mxu0 %v4931
    %5803 = vmatmul.mubr.f32.gmra.mrb[0].mxu0 %v5055
    %v5804 = vpop.f32.mrb[0].mxu0
    %v5805 = vadd.f32 %v5420, %v5804
    %v5806 = vpop.f32.mrb[0].mxu0
    %5807 = vmatprep.mubr.f32.mxu0 %v4932
    %5808 = vmatmul.mubr.f32.gmra.mrb[0].mxu0 %v5056
    %v5809 = vpop.f32.mrb[0].mxu0
    %v5810 = vadd.f32 %v5425, %v5809
    %v5811 = vpop.f32.mrb[0].mxu0
    %5812 = vmatprep.mubr.f32.mxu0 %v4933
    %5813 = vmatmul.mubr.f32.gmra.mrb[0].mxu0 %v5057
    %v5814 = vpop.f32.mrb[0].mxu0
    %v5815 = vadd.f32 %v5430, %v5814
    %v5816 = vpop.f32.mrb[0].mxu0
    %5817 = vmatprep.mubr.f32.mxu0 %v4934
    %5818 = vmatmul.mubr.f32.gmra.mrb[0].mxu0 %v5058
    %v5819 = vpop.f32.mrb[0].mxu0
    %v5820 = vadd.f32 %v5435, %v5819
    %v5821 = vpop.f32.mrb[0].mxu0
    %5822 = vmatprep.mubr.f32.mxu0 %v4935
    %5823 = vmatmul.mubr.f32.gmra.mrb[0].mxu0 %v5059
    %v5824 = vpop.f32.mrb[0].mxu0
    %v5825 = vadd.f32 %v5440, %v5824
    %v5826 = vpop.f32.mrb[0].mxu0
    %5827 = vmatprep.mubr.f32.mxu0 %v5096
    %5828 = vmatmul.mubr.f32.gmra.mrb[0].mxu0 %v5060
    %v5829 = vpop.f32.mrb[0].mxu0
    %v5830 = vadd.f32 %v5445, %v5829
    %v5831 = vpop.f32.mrb[0].mxu0
    %5832 = vmatprep.mubr.f32.mxu0 %v5097
    %5833 = vmatmul.mubr.f32.gmra.mrb[0].mxu0 %v5061
    %v5834 = vpop.f32.mrb[0].mxu0
    %v5835 = vadd.f32 %v5450, %v5834
    %v5836 = vpop.f32.mrb[0].mxu0
    %5837 = vmatprep.mubr.f32.mxu0 %v5098
    %5838 = vmatmul.mubr.f32.gmra.mrb[0].mxu0 %v5062
    %v5839 = vpop.f32.mrb[0].mxu0
    %v5840 = vadd.f32 %v5455, %v5839
    %v5841 = vpop.f32.mrb[0].mxu0
    %5842 = vmatprep.mubr.f32.mxu0 %v5099
    %5843 = vmatmul.mubr.f32.gmra.mrb[0].mxu0 %v5063
    %v5844 = vpop.f32.mrb[0].mxu0
    %v5845 = vadd.f32 %v5460, %v5844
    %v5846 = vpop.f32.mrb[0].mxu0
    %5847 = vmatprep.mubr.f32.mxu0 %v4940
    %5848 = vmatmul.mubr.f32.gmra.mrb[0].mxu0 %v5064
    %v5849 = vpop.f32.mrb[0].mxu0
    %v5850 = vadd.f32 %v5465, %v5849
    %v5851 = vpop.f32.mrb[0].mxu0
    %5852 = vmatprep.mubr.f32.mxu0 %v4941
    %5853 = vmatmul.mubr.f32.gmra.mrb[0].mxu0 %v5065
    %v5854 = vpop.f32.mrb[0].mxu0
    %v5855 = vadd.f32 %v5470, %v5854
    %v5856 = vpop.f32.mrb[0].mxu0
    %5857 = vmatprep.mubr.f32.mxu0 %v4942
    %5858 = vmatmul.mubr.f32.gmra.mrb[0].mxu0 %v5066
    %v5859 = vpop.f32.mrb[0].mxu0
    %v5860 = vadd.f32 %v5475, %v5859
    %v5861 = vpop.f32.mrb[0].mxu0
    %5862 = vmatprep.mubr.f32.mxu0 %v4943
    %5863 = vmatmul.mubr.f32.gmra.mrb[0].mxu0 %v5067
    %v5864 = vpop.f32.mrb[0].mxu0
    %v5865 = vadd.f32 %v5480, %v5864
    %v5866 = vpop.f32.mrb[0].mxu0
    %5867 = vmatprep.mubr.f32.mxu0 %v4944
    %5868 = vmatmul.mubr.f32.gmra.mrb[0].mxu0 %v5068
    %v5869 = vpop.f32.mrb[0].mxu0
    %v5870 = vadd.f32 %v5485, %v5869
    %v5871 = vpop.f32.mrb[0].mxu0
    %5872 = vmatprep.mubr.f32.mxu0 %v4945
    %5873 = vmatmul.mubr.f32.gmra.mrb[0].mxu0 %v5069
    %v5874 = vpop.f32.mrb[0].mxu0
    %v5875 = vadd.f32 %v5490, %v5874
    %v5876 = vpop.f32.mrb[0].mxu0
    %5877 = vmatprep.mubr.f32.mxu0 %v4946
    %5878 = vmatmul.mubr.f32.gmra.mrb[0].mxu0 %v5070
    %v5879 = vpop.f32.mrb[0].mxu0
    %v5880 = vadd.f32 %v5495, %v5879
    %v5881 = vpop.f32.mrb[0].mxu0
    %5882 = vmatprep.mubr.f32.mxu0 %v4947
    %5883 = vmatmul.mubr.f32.gmra.mrb[0].mxu0 %v5071
    %v5884 = vpop.f32.mrb[0].mxu0
    %v5885 = vadd.f32 %v5500, %v5884
    %v5886 = vpop.f32.mrb[0].mxu0
    %5887 = vmatprep.mubr.f32.mxu0 %v4948
    %5888 = vmatmul.mubr.f32.gmra.mrb[0].mxu0 %v5072
    %v5889 = vpop.f32.mrb[0].mxu0
    %v5890 = vadd.f32 %v5505, %v5889
    %v5891 = vpop.f32.mrb[0].mxu0
    %5892 = vmatprep.mubr.f32.mxu0 %v4949
    %5893 = vmatmul.mubr.f32.gmra.mrb[0].mxu0 %v5073
    %v5894 = vpop.f32.mrb[0].mxu0
    %v5895 = vadd.f32 %v5510, %v5894
    %v5896 = vpop.f32.mrb[0].mxu0
    %5897 = vmatprep.mubr.f32.mxu0 %v4950
    %5898 = vmatmul.mubr.f32.gmra.mrb[0].mxu0 %v5074
    %v5899 = vpop.f32.mrb[0].mxu0
    %v5900 = vadd.f32 %v5515, %v5899
    %v5901 = vpop.f32.mrb[0].mxu0
    %5902 = vmatprep.mubr.f32.mxu0 %v4951
    %5903 = vmatmul.mubr.f32.gmra.mrb[0].mxu0 %v5075
    %v5904 = vpop.f32.mrb[0].mxu0
    %v5905 = vadd.f32 %v5520, %v5904
    %v5906 = vpop.f32.mrb[0].mxu0
    %5907 = vmatprep.mubr.f32.mxu0 %v4952
    %5908 = vmatmul.mubr.f32.gmra.mrb[0].mxu0 %v5076
    %v5909 = vpop.f32.mrb[0].mxu0
    %v5910 = vadd.f32 %v5525, %v5909
    %v5911 = vpop.f32.mrb[0].mxu0
    %5912 = vmatprep.mubr.f32.mxu0 %v4953
    %5913 = vmatmul.mubr.f32.gmra.mrb[0].mxu0 %v5077
    %v5914 = vpop.f32.mrb[0].mxu0
    %v5915 = vadd.f32 %v5530, %v5914
    %v5916 = vpop.f32.mrb[0].mxu0
    %5917 = vmatprep.mubr.f32.mxu0 %v4954
    %5918 = vmatmul.mubr.f32.gmra.mrb[0].mxu0 %v5078
    %v5919 = vpop.f32.mrb[0].mxu0
    %v5920 = vadd.f32 %v5535, %v5919
    %v5921 = vpop.f32.mrb[0].mxu0
    %5922 = vmatprep.mubr.f32.mxu0 %v4955
    %5923 = vmatmul.mubr.f32.gmra.mrb[0].mxu0 %v5079
    %v5924 = vpop.f32.mrb[0].mxu0
    %v5925 = vadd.f32 %v5540, %v5924
    %v5926 = vpop.f32.mrb[0].mxu0
    %5927 = vmatprep.mubr.f32.mxu0 %v4956
    %5928 = vmatmul.mubr.f32.gmra.mrb[0].mxu0 %v5080
    %v5929 = vpop.f32.mrb[0].mxu0
    %v5930 = vadd.f32 %v5545, %v5929
    %v5931 = vpop.f32.mrb[0].mxu0
    %5932 = vmatprep.mubr.f32.mxu0 %v4957
    %5933 = vmatmul.mubr.f32.gmra.mrb[0].mxu0 %v5081
    %v5934 = vpop.f32.mrb[0].mxu0
    %v5935 = vadd.f32 %v5550, %v5934
    %v5936 = vpop.f32.mrb[0].mxu0
    %5937 = vmatprep.mubr.f32.mxu0 %v4958
    %5938 = vmatmul.mubr.f32.gmra.mrb[0].mxu0 %v5082
    %v5939 = vpop.f32.mrb[0].mxu0
    %v5940 = vadd.f32 %v5555, %v5939
    %v5941 = vpop.f32.mrb[0].mxu0
    %5942 = vmatprep.mubr.f32.mxu0 %v4959
    %5943 = vmatmul.mubr.f32.gmra.mrb[0].mxu0 %v5083
    %v5944 = vpop.f32.mrb[0].mxu0
    %v5945 = vadd.f32 %v5560, %v5944
    %v5946 = vpop.f32.mrb[0].mxu0
    %5947 = vmatprep.mubr.f32.mxu0 %v4960
    %5948 = vmatmul.mubr.f32.gmra.mrb[0].mxu0 %v5084
    %v5949 = vpop.f32.mrb[0].mxu0
    %v5950 = vadd.f32 %v5565, %v5949
    %v5951 = vpop.f32.mrb[0].mxu0
    %5952 = vmatprep.mubr.f32.mxu0 %v4961
    %5953 = vmatmul.mubr.f32.gmra.mrb[0].mxu0 %v5085
    %v5954 = vpop.f32.mrb[0].mxu0
    %v5955 = vadd.f32 %v5570, %v5954
    %v5956 = vpop.f32.mrb[0].mxu0
    %5957 = vmatprep.mubr.f32.mxu0 %v4962
    %5958 = vmatmul.mubr.f32.gmra.mrb[0].mxu0 %v5086
    %v5959 = vpop.f32.mrb[0].mxu0
    %v5960 = vadd.f32 %v5575, %v5959
    %v5961 = vpop.f32.mrb[0].mxu0
    %5962 = vmatprep.mubr.f32.mxu0 %v4963
    %5963 = vmatmul.mubr.f32.gmra.mrb[0].mxu0 %v5087
    %v5964 = vpop.f32.mrb[0].mxu0
    %v5965 = vadd.f32 %v5580, %v5964
    %v5966 = vpop.f32.mrb[0].mxu0
    %5967 = vmatprep.mubr.f32.mxu0 %v4964
    %5968 = vmatmul.mubr.f32.gmra.mrb[0].mxu0 %v5088
    %v5969 = vpop.f32.mrb[0].mxu0
    %v5970 = vadd.f32 %v5585, %v5969
    %v5971 = vpop.f32.mrb[0].mxu0
    %5972 = vmatprep.mubr.f32.mxu0 %v4965
    %5973 = vmatmul.mubr.f32.gmra.mrb[0].mxu0 %v5089
    %v5974 = vpop.f32.mrb[0].mxu0
    %v5975 = vadd.f32 %v5590, %v5974
    %v5976 = vpop.f32.mrb[0].mxu0
    %5977 = vmatprep.mubr.f32.mxu0 %v4966
    %5978 = vmatmul.mubr.f32.gmra.mrb[0].mxu0 %v5090
    %v5979 = vpop.f32.mrb[0].mxu0
    %v5980 = vadd.f32 %v5595, %v5979
    %v5981 = vpop.f32.mrb[0].mxu0
    %5982 = vmatprep.mubr.f32.mxu0 %v4967
    %5983 = vmatmul.mubr.f32.gmra.mrb[0].mxu0 %v5091
    %v5984 = vpop.f32.mrb[0].mxu0
    %v5985 = vadd.f32 %v5600, %v5984
    %v5986 = vpop.f32.mrb[0].mxu0
    %5987 = vmatprep.mubr.f32.mxu0 %v5100
    %5988 = vmatmul.mubr.f32.gmra.mrb[0].mxu0 %v5092
    %v5989 = vpop.f32.mrb[0].mxu0
    %v5990 = vadd.f32 %v5605, %v5989
    %v5991 = vpop.f32.mrb[0].mxu0
    %5992 = vmatprep.mubr.f32.mxu0 %v5101
    %5993 = vmatmul.mubr.f32.gmra.mrb[0].mxu0 %v5093
    %v5994 = vpop.f32.mrb[0].mxu0
    %v5995 = vadd.f32 %v5610, %v5994
    %v5996 = vpop.f32.mrb[0].mxu0
    %5997 = vmatprep.mubr.f32.mxu0 %v5102
    %5998 = vmatmul.mubr.f32.gmra.mrb[0].mxu0 %v5094
    %v5999 = vpop.f32.mrb[0].mxu0
    %v6000 = vadd.f32 %v5615, %v5999
    %v6001 = vpop.f32.mrb[0].mxu0
    %6002 = vmatprep.mubr.f32.mxu0 %v5103
    %6003 = vmatmul.mubr.f32.gmra.mrb[0].mxu0 %v5095
    %v6004 = vpop.f32.mrb[0].mxu0
    %v6005 = vadd.f32 %v5620, %v6004
    %v6006 = vpop.f32.mrb[0].mxu0
    %6007 = vdwg.mxu0
    %6008 = vmatprep.subr.mxu0 0.0
    %6009 = vmatpush1.msra.mxu0 %v3699
    %6010 = vmatprep.subr.mxu0 0.0
    %6011 = vmatpush1.msra.mxu0 %v3700
    %6012 = vmatprep.subr.mxu0 0.0
    %6013 = vmatpush1.msra.mxu0 %v3701
    %6014 = vmatprep.subr.mxu0 0.0
    %6015 = vmatpush1.msra.mxu0 %v3702
    %6016 = vmatprep.subr.mxu0 0.0
    %6017 = vmatpush1.msra.mxu0 %v3703
    %6018 = vmatprep.subr.mxu0 0.0
    %6019 = vmatpush1.msra.mxu0 %v3704
    %6020 = vmatprep.subr.mxu0 0.0
    %6021 = vmatpush1.msra.mxu0 %v3705
    %6022 = vmatprep.subr.mxu0 0.0
    %6023 = vmatpush1.msra.mxu0 %v3706
    %6024 = vmatprep.subr.mxu0 0.0
    %6025 = vmatpush1.msra.mxu0 0.0
    %6026 = vmatprep.subr.mxu0 0.0
    %6027 = vmatpush1.msra.mxu0 0.0
    %6028 = vmatprep.subr.mxu0 0.0
    %6029 = vmatpush1.msra.mxu0 0.0
    %6030 = vmatprep.subr.mxu0 0.0
    %6031 = vmatpush1.msra.mxu0 0.0
    %6032 = vmatprep.subr.mxu0 0.0
    %6033 = vmatpush1.msra.mxu0 0.0
    %6034 = vmatprep.subr.mxu0 0.0
    %6035 = vmatpush1.msra.mxu0 0.0
    %6036 = vmatprep.subr.mxu0 0.0
    %6037 = vmatpush1.msra.mxu0 0.0
    %6038 = vmatprep.subr.mxu0 0.0
    %6039 = vmatpush1.msra.mxu0 0.0
    %6040 = vmatprep.subr.mxu0 0.0
    %6041 = vmatpush1.msra.mxu0 0.0
    %6042 = vmatprep.subr.mxu0 0.0
    %6043 = vmatpush1.msra.mxu0 0.0
    %6044 = vmatprep.subr.mxu0 0.0
    %6045 = vmatpush1.msra.mxu0 0.0
    %6046 = vmatprep.subr.mxu0 0.0
    %6047 = vmatpush1.msra.mxu0 0.0
    %6048 = vmatprep.subr.mxu0 0.0
    %6049 = vmatpush1.msra.mxu0 0.0
    %6050 = vmatprep.subr.mxu0 0.0
    %6051 = vmatpush1.msra.mxu0 0.0
    %6052 = vmatprep.subr.mxu0 0.0
    %6053 = vmatpush1.msra.mxu0 0.0
    %6054 = vmatprep.subr.mxu0 0.0
    %6055 = vmatpush1.msra.mxu0 0.0
    %6056 = vmatprep.subr.mxu0 0.0
    %6057 = vmatpush1.msra.mxu0 0.0
    %6058 = vmatprep.subr.mxu0 0.0
    %6059 = vmatpush1.msra.mxu0 0.0
    %6060 = vmatprep.subr.mxu0 0.0
    %6061 = vmatpush1.msra.mxu0 0.0
    %6062 = vmatprep.subr.mxu0 0.0
    %6063 = vmatpush1.msra.mxu0 0.0
    %6064 = vmatprep.subr.mxu0 0.0
    %6065 = vmatpush1.msra.mxu0 0.0
    %6066 = vmatprep.subr.mxu0 0.0
    %6067 = vmatpush1.msra.mxu0 0.0
    %6068 = vmatprep.subr.mxu0 0.0
    %6069 = vmatpush1.msra.mxu0 0.0
    %6070 = vmatprep.subr.mxu0 0.0
    %6071 = vmatpush1.msra.mxu0 0.0
    %6072 = vmatprep.mubr.f32.mxu0 0.0
    %6073 = vmatmul.mubr.f32.gmra.mrb[0].mxu0 %v5110
    %v6074 = vpop.f32.mrb[0].mxu0
    %v6075 = vadd.f32 %v5690, %v6074
    %v6076 = vpop.f32.mrb[0].mxu0
    %6077 = vmatprep.mubr.f32.mxu0 0.0
    %6078 = vmatmul.mubr.f32.gmra.mrb[0].mxu0 %v5112
    %v6079 = vpop.f32.mrb[0].mxu0
    %v6080 = vadd.f32 %v5695, %v6079
    %v6081 = vpop.f32.mrb[0].mxu0
    %6082 = vmatprep.mubr.f32.mxu0 0.0
    %6083 = vmatmul.mubr.f32.gmra.mrb[0].mxu0 %v5114
    %v6084 = vpop.f32.mrb[0].mxu0
    %v6085 = vadd.f32 %v5700, %v6084
    %v6086 = vpop.f32.mrb[0].mxu0
    %6087 = vmatprep.mubr.f32.mxu0 0.0
    %6088 = vmatmul.mubr.f32.gmra.mrb[0].mxu0 %v5116
    %v6089 = vpop.f32.mrb[0].mxu0
    %v6090 = vadd.f32 %v5705, %v6089
    %v6091 = vpop.f32.mrb[0].mxu0
    %6092 = vmatprep.mubr.f32.mxu0 0.0
    %6093 = vmatmul.mubr.f32.gmra.mrb[0].mxu0 %v5118
    %v6094 = vpop.f32.mrb[0].mxu0
    %v6095 = vadd.f32 %v5710, %v6094
    %v6096 = vpop.f32.mrb[0].mxu0
    %6097 = vmatprep.mubr.f32.mxu0 0.0
    %6098 = vmatmul.mubr.f32.gmra.mrb[0].mxu0 %v5120
    %v6099 = vpop.f32.mrb[0].mxu0
    %v6100 = vadd.f32 %v5715, %v6099
    %v6101 = vpop.f32.mrb[0].mxu0
    %6102 = vmatprep.mubr.f32.mxu0 0.0
    %6103 = vmatmul.mubr.f32.gmra.mrb[0].mxu0 %v5122
    %v6104 = vpop.f32.mrb[0].mxu0
    %v6105 = vadd.f32 %v5720, %v6104
    %v6106 = vpop.f32.mrb[0].mxu0
    %6107 = vmatprep.mubr.f32.mxu0 0.0
    %6108 = vmatmul.mubr.f32.gmra.mrb[0].mxu0 %v5124
    %v6109 = vpop.f32.mrb[0].mxu0
    %v6110 = vadd.f32 %v5725, %v6109
    %v6111 = vpop.f32.mrb[0].mxu0
    %6112 = vmatprep.mubr.f32.mxu0 0.0
    %6113 = vmatmul.mubr.f32.gmra.mrb[0].mxu0 %v5126
    %v6114 = vpop.f32.mrb[0].mxu0
    %v6115 = vadd.f32 %v5730, %v6114
    %v6116 = vpop.f32.mrb[0].mxu0
    %6117 = vmatprep.mubr.f32.mxu0 0.0
    %6118 = vmatmul.mubr.f32.gmra.mrb[0].mxu0 %v5128
    %v6119 = vpop.f32.mrb[0].mxu0
    %v6120 = vadd.f32 %v5735, %v6119
    %v6121 = vpop.f32.mrb[0].mxu0
    %6122 = vmatprep.mubr.f32.mxu0 0.0
    %6123 = vmatmul.mubr.f32.gmra.mrb[0].mxu0 %v5130
    %v6124 = vpop.f32.mrb[0].mxu0
    %v6125 = vadd.f32 %v5740, %v6124
    %v6126 = vpop.f32.mrb[0].mxu0
    %6127 = vmatprep.mubr.f32.mxu0 0.0
    %6128 = vmatmul.mubr.f32.gmra.mrb[0].mxu0 %v5132
    %v6129 = vpop.f32.mrb[0].mxu0
    %v6130 = vadd.f32 %v5745, %v6129
    %v6131 = vpop.f32.mrb[0].mxu0
    %6132 = vmatprep.mubr.f32.mxu0 0.0
    %6133 = vmatmul.mubr.f32.gmra.mrb[0].mxu0 %v5134
    %v6134 = vpop.f32.mrb[0].mxu0
    %v6135 = vadd.f32 %v5750, %v6134
    %v6136 = vpop.f32.mrb[0].mxu0
    %6137 = vmatprep.mubr.f32.mxu0 0.0
    %6138 = vmatmul.mubr.f32.gmra.mrb[0].mxu0 %v5136
    %v6139 = vpop.f32.mrb[0].mxu0
    %v6140 = vadd.f32 %v5755, %v6139
    %v6141 = vpop.f32.mrb[0].mxu0
    %6142 = vmatprep.mubr.f32.mxu0 0.0
    %6143 = vmatmul.mubr.f32.gmra.mrb[0].mxu0 %v5138
    %v6144 = vpop.f32.mrb[0].mxu0
    %v6145 = vadd.f32 %v5760, %v6144
    %v6146 = vpop.f32.mrb[0].mxu0
    %6147 = vmatprep.mubr.f32.mxu0 0.0
    %6148 = vmatmul.mubr.f32.gmra.mrb[0].mxu0 %v5140
    %v6149 = vpop.f32.mrb[0].mxu0
    %v6150 = vadd.f32 %v5765, %v6149
    %v6151 = vpop.f32.mrb[0].mxu0
    %6152 = vmatprep.mubr.f32.mxu0 0.0
    %6153 = vmatmul.mubr.f32.gmra.mrb[0].mxu0 %v5142
    %v6154 = vpop.f32.mrb[0].mxu0
    %v6155 = vadd.f32 %v5770, %v6154
    %v6156 = vpop.f32.mrb[0].mxu0
    %6157 = vmatprep.mubr.f32.mxu0 0.0
    %6158 = vmatmul.mubr.f32.gmra.mrb[0].mxu0 %v5144
    %v6159 = vpop.f32.mrb[0].mxu0
    %v6160 = vadd.f32 %v5775, %v6159
    %v6161 = vpop.f32.mrb[0].mxu0
    %6162 = vmatprep.mubr.f32.mxu0 0.0
    %6163 = vmatmul.mubr.f32.gmra.mrb[0].mxu0 %v5146
    %v6164 = vpop.f32.mrb[0].mxu0
    %v6165 = vadd.f32 %v5780, %v6164
    %v6166 = vpop.f32.mrb[0].mxu0
    %6167 = vmatprep.mubr.f32.mxu0 0.0
    %6168 = vmatmul.mubr.f32.gmra.mrb[0].mxu0 %v5148
    %v6169 = vpop.f32.mrb[0].mxu0
    %v6170 = vadd.f32 %v5785, %v6169
    %v6171 = vpop.f32.mrb[0].mxu0
    %6172 = vmatprep.mubr.f32.mxu0 0.0
    %6173 = vmatmul.mubr.f32.gmra.mrb[0].mxu0 %v5150
    %v6174 = vpop.f32.mrb[0].mxu0
    %v6175 = vadd.f32 %v5790, %v6174
    %v6176 = vpop.f32.mrb[0].mxu0
    %6177 = vmatprep.mubr.f32.mxu0 0.0
    %6178 = vmatmul.mubr.f32.gmra.mrb[0].mxu0 %v5152
    %v6179 = vpop.f32.mrb[0].mxu0
    %v6180 = vadd.f32 %v5795, %v6179
    %v6181 = vpop.f32.mrb[0].mxu0
    %6182 = vmatprep.mubr.f32.mxu0 0.0
    %6183 = vmatmul.mubr.f32.gmra.mrb[0].mxu0 %v5154
    %v6184 = vpop.f32.mrb[0].mxu0
    %v6185 = vadd.f32 %v5800, %v6184
    %v6186 = vpop.f32.mrb[0].mxu0
    %6187 = vmatprep.mubr.f32.mxu0 0.0
    %6188 = vmatmul.mubr.f32.gmra.mrb[0].mxu0 %v5156
    %v6189 = vpop.f32.mrb[0].mxu0
    %v6190 = vadd.f32 %v5805, %v6189
    %v6191 = vpop.f32.mrb[0].mxu0
    %6192 = vmatprep.mubr.f32.mxu0 0.0
    %6193 = vmatmul.mubr.f32.gmra.mrb[0].mxu0 %v5158
    %v6194 = vpop.f32.mrb[0].mxu0
    %v6195 = vadd.f32 %v5810, %v6194
    %v6196 = vpop.f32.mrb[0].mxu0
    %6197 = vmatprep.mubr.f32.mxu0 0.0
    %6198 = vmatmul.mubr.f32.gmra.mrb[0].mxu0 %v5160
    %v6199 = vpop.f32.mrb[0].mxu0
    %v6200 = vadd.f32 %v5815, %v6199
    %v6201 = vpop.f32.mrb[0].mxu0
    %6202 = vmatprep.mubr.f32.mxu0 0.0
    %6203 = vmatmul.mubr.f32.gmra.mrb[0].mxu0 %v5162
    %v6204 = vpop.f32.mrb[0].mxu0
    %v6205 = vadd.f32 %v5820, %v6204
    %v6206 = vpop.f32.mrb[0].mxu0
    %6207 = vmatprep.mubr.f32.mxu0 0.0
    %6208 = vmatmul.mubr.f32.gmra.mrb[0].mxu0 %v5164
    %v6209 = vpop.f32.mrb[0].mxu0
    %v6210 = vadd.f32 %v5825, %v6209
    %v6211 = vpop.f32.mrb[0].mxu0
    %6212 = vmatprep.mubr.f32.mxu0 0.0
    %6213 = vmatmul.mubr.f32.gmra.mrb[0].mxu0 %v5166
    %v6214 = vpop.f32.mrb[0].mxu0
    %v6215 = vadd.f32 %v5830, %v6214
    %v6216 = vpop.f32.mrb[0].mxu0
    %6217 = vmatprep.mubr.f32.mxu0 0.0
    %6218 = vmatmul.mubr.f32.gmra.mrb[0].mxu0 %v5168
    %v6219 = vpop.f32.mrb[0].mxu0
    %v6220 = vadd.f32 %v5835, %v6219
    %v6221 = vpop.f32.mrb[0].mxu0
    %6222 = vmatprep.mubr.f32.mxu0 0.0
    %6223 = vmatmul.mubr.f32.gmra.mrb[0].mxu0 %v5170
    %v6224 = vpop.f32.mrb[0].mxu0
    %v6225 = vadd.f32 %v5840, %v6224
    %v6226 = vpop.f32.mrb[0].mxu0
    %6227 = vmatprep.mubr.f32.mxu0 0.0
    %6228 = vmatmul.mubr.f32.gmra.mrb[0].mxu0 %v5172
    %v6229 = vpop.f32.mrb[0].mxu0
    %v6230 = vadd.f32 %v5845, %v6229
    %v6231 = vpop.f32.mrb[0].mxu0
    %6232 = vmatprep.mubr.f32.mxu0 0.0
    %6233 = vmatmul.mubr.f32.gmra.mrb[0].mxu0 %v5174
    %v6234 = vpop.f32.mrb[0].mxu0
    %v6235 = vadd.f32 %v5850, %v6234
    %v6236 = vpop.f32.mrb[0].mxu0
    %6237 = vmatprep.mubr.f32.mxu0 0.0
    %6238 = vmatmul.mubr.f32.gmra.mrb[0].mxu0 %v5176
    %v6239 = vpop.f32.mrb[0].mxu0
    %v6240 = vadd.f32 %v5855, %v6239
    %v6241 = vpop.f32.mrb[0].mxu0
    %6242 = vmatprep.mubr.f32.mxu0 0.0
    %6243 = vmatmul.mubr.f32.gmra.mrb[0].mxu0 %v5178
    %v6244 = vpop.f32.mrb[0].mxu0
    %v6245 = vadd.f32 %v5860, %v6244
    %v6246 = vpop.f32.mrb[0].mxu0
    %6247 = vmatprep.mubr.f32.mxu0 0.0
    %6248 = vmatmul.mubr.f32.gmra.mrb[0].mxu0 %v5180
    %v6249 = vpop.f32.mrb[0].mxu0
    %v6250 = vadd.f32 %v5865, %v6249
    %v6251 = vpop.f32.mrb[0].mxu0
    %6252 = vmatprep.mubr.f32.mxu0 0.0
    %6253 = vmatmul.mubr.f32.gmra.mrb[0].mxu0 %v5182
    %v6254 = vpop.f32.mrb[0].mxu0
    %v6255 = vadd.f32 %v5870, %v6254
    %v6256 = vpop.f32.mrb[0].mxu0
    %6257 = vmatprep.mubr.f32.mxu0 0.0
    %6258 = vmatmul.mubr.f32.gmra.mrb[0].mxu0 %v5184
    %v6259 = vpop.f32.mrb[0].mxu0
    %v6260 = vadd.f32 %v5875, %v6259
    %v6261 = vpop.f32.mrb[0].mxu0
    %6262 = vmatprep.mubr.f32.mxu0 0.0
    %6263 = vmatmul.mubr.f32.gmra.mrb[0].mxu0 %v5186
    %v6264 = vpop.f32.mrb[0].mxu0
    %v6265 = vadd.f32 %v5880, %v6264
    %v6266 = vpop.f32.mrb[0].mxu0
    %6267 = vmatprep.mubr.f32.mxu0 0.0
    %6268 = vmatmul.mubr.f32.gmra.mrb[0].mxu0 %v5188
    %v6269 = vpop.f32.mrb[0].mxu0
    %v6270 = vadd.f32 %v5885, %v6269
    %v6271 = vpop.f32.mrb[0].mxu0
    %6272 = vmatprep.mubr.f32.mxu0 0.0
    %6273 = vmatmul.mubr.f32.gmra.mrb[0].mxu0 %v5190
    %v6274 = vpop.f32.mrb[0].mxu0
    %v6275 = vadd.f32 %v5890, %v6274
    %v6276 = vpop.f32.mrb[0].mxu0
    %6277 = vmatprep.mubr.f32.mxu0 0.0
    %6278 = vmatmul.mubr.f32.gmra.mrb[0].mxu0 %v5192
    %v6279 = vpop.f32.mrb[0].mxu0
    %v6280 = vadd.f32 %v5895, %v6279
    %v6281 = vpop.f32.mrb[0].mxu0
    %6282 = vmatprep.mubr.f32.mxu0 0.0
    %6283 = vmatmul.mubr.f32.gmra.mrb[0].mxu0 %v5194
    %v6284 = vpop.f32.mrb[0].mxu0
    %v6285 = vadd.f32 %v5900, %v6284
    %v6286 = vpop.f32.mrb[0].mxu0
    %6287 = vmatprep.mubr.f32.mxu0 0.0
    %6288 = vmatmul.mubr.f32.gmra.mrb[0].mxu0 %v5196
    %v6289 = vpop.f32.mrb[0].mxu0
    %v6290 = vadd.f32 %v5905, %v6289
    %v6291 = vpop.f32.mrb[0].mxu0
    %6292 = vmatprep.mubr.f32.mxu0 0.0
    %6293 = vmatmul.mubr.f32.gmra.mrb[0].mxu0 %v5198
    %v6294 = vpop.f32.mrb[0].mxu0
    %v6295 = vadd.f32 %v5910, %v6294
    %v6296 = vpop.f32.mrb[0].mxu0
    %6297 = vmatprep.mubr.f32.mxu0 0.0
    %6298 = vmatmul.mubr.f32.gmra.mrb[0].mxu0 %v5200
    %v6299 = vpop.f32.mrb[0].mxu0
    %v6300 = vadd.f32 %v5915, %v6299
    %v6301 = vpop.f32.mrb[0].mxu0
    %6302 = vmatprep.mubr.f32.mxu0 0.0
    %6303 = vmatmul.mubr.f32.gmra.mrb[0].mxu0 %v5202
    %v6304 = vpop.f32.mrb[0].mxu0
    %v6305 = vadd.f32 %v5920, %v6304
    %v6306 = vpop.f32.mrb[0].mxu0
    %6307 = vmatprep.mubr.f32.mxu0 0.0
    %6308 = vmatmul.mubr.f32.gmra.mrb[0].mxu0 %v5204
    %v6309 = vpop.f32.mrb[0].mxu0
    %v6310 = vadd.f32 %v5925, %v6309
    %v6311 = vpop.f32.mrb[0].mxu0
    %6312 = vmatprep.mubr.f32.mxu0 0.0
    %6313 = vmatmul.mubr.f32.gmra.mrb[0].mxu0 %v5206
    %v6314 = vpop.f32.mrb[0].mxu0
    %v6315 = vadd.f32 %v5930, %v6314
    %v6316 = vpop.f32.mrb[0].mxu0
    %6317 = vmatprep.mubr.f32.mxu0 0.0
    %6318 = vmatmul.mubr.f32.gmra.mrb[0].mxu0 %v5208
    %v6319 = vpop.f32.mrb[0].mxu0
    %v6320 = vadd.f32 %v5935, %v6319
    %v6321 = vpop.f32.mrb[0].mxu0
    %6322 = vmatprep.mubr.f32.mxu0 0.0
    %6323 = vmatmul.mubr.f32.gmra.mrb[0].mxu0 %v5210
    %v6324 = vpop.f32.mrb[0].mxu0
    %v6325 = vadd.f32 %v5940, %v6324
    %v6326 = vpop.f32.mrb[0].mxu0
    %6327 = vmatprep.mubr.f32.mxu0 0.0
    %6328 = vmatmul.mubr.f32.gmra.mrb[0].mxu0 %v5212
    %v6329 = vpop.f32.mrb[0].mxu0
    %v6330 = vadd.f32 %v5945, %v6329
    %v6331 = vpop.f32.mrb[0].mxu0
    %6332 = vmatprep.mubr.f32.mxu0 0.0
    %6333 = vmatmul.mubr.f32.gmra.mrb[0].mxu0 %v5214
    %v6334 = vpop.f32.mrb[0].mxu0
    %v6335 = vadd.f32 %v5950, %v6334
    %v6336 = vpop.f32.mrb[0].mxu0
    %6337 = vmatprep.mubr.f32.mxu0 0.0
    %6338 = vmatmul.mubr.f32.gmra.mrb[0].mxu0 %v5216
    %v6339 = vpop.f32.mrb[0].mxu0
    %v6340 = vadd.f32 %v5955, %v6339
    %v6341 = vpop.f32.mrb[0].mxu0
    %6342 = vmatprep.mubr.f32.mxu0 0.0
    %6343 = vmatmul.mubr.f32.gmra.mrb[0].mxu0 %v5218
    %v6344 = vpop.f32.mrb[0].mxu0
    %v6345 = vadd.f32 %v5960, %v6344
    %v6346 = vpop.f32.mrb[0].mxu0
    %6347 = vmatprep.mubr.f32.mxu0 0.0
    %6348 = vmatmul.mubr.f32.gmra.mrb[0].mxu0 %v5220
    %v6349 = vpop.f32.mrb[0].mxu0
    %v6350 = vadd.f32 %v5965, %v6349
    %v6351 = vpop.f32.mrb[0].mxu0
    %6352 = vmatprep.mubr.f32.mxu0 0.0
    %6353 = vmatmul.mubr.f32.gmra.mrb[0].mxu0 %v5222
    %v6354 = vpop.f32.mrb[0].mxu0
    %v6355 = vadd.f32 %v5970, %v6354
    %v6356 = vpop.f32.mrb[0].mxu0
    %6357 = vmatprep.mubr.f32.mxu0 0.0
    %6358 = vmatmul.mubr.f32.gmra.mrb[0].mxu0 %v5224
    %v6359 = vpop.f32.mrb[0].mxu0
    %v6360 = vadd.f32 %v5975, %v6359
    %v6361 = vpop.f32.mrb[0].mxu0
    %6362 = vmatprep.mubr.f32.mxu0 0.0
    %6363 = vmatmul.mubr.f32.gmra.mrb[0].mxu0 %v5226
    %v6364 = vpop.f32.mrb[0].mxu0
    %v6365 = vadd.f32 %v5980, %v6364
    %v6366 = vpop.f32.mrb[0].mxu0
    %6367 = vmatprep.mubr.f32.mxu0 0.0
    %6368 = vmatmul.mubr.f32.gmra.mrb[0].mxu0 %v5228
    %v6369 = vpop.f32.mrb[0].mxu0
    %v6370 = vadd.f32 %v5985, %v6369
    %v6371 = vpop.f32.mrb[0].mxu0
    %6372 = vmatprep.mubr.f32.mxu0 0.0
    %6373 = vmatmul.mubr.f32.gmra.mrb[0].mxu0 %v5230
    %v6374 = vpop.f32.mrb[0].mxu0
    %v6375 = vadd.f32 %v5990, %v6374
    %v6376 = vpop.f32.mrb[0].mxu0
    %6377 = vmatprep.mubr.f32.mxu0 0.0
    %6378 = vmatmul.mubr.f32.gmra.mrb[0].mxu0 %v5232
    %v6379 = vpop.f32.mrb[0].mxu0
    %v6380 = vadd.f32 %v5995, %v6379
    %v6381 = vpop.f32.mrb[0].mxu0
    %6382 = vmatprep.mubr.f32.mxu0 0.0
    %6383 = vmatmul.mubr.f32.gmra.mrb[0].mxu0 %v5234
    %v6384 = vpop.f32.mrb[0].mxu0
    %v6385 = vadd.f32 %v6000, %v6384
    %v6386 = vpop.f32.mrb[0].mxu0
    %6387 = vmatprep.mubr.f32.mxu0 0.0
    %6388 = vmatmul.mubr.f32.gmra.mrb[0].mxu0 %v5236
    %v6389 = vpop.f32.mrb[0].mxu0
    %v6390 = vadd.f32 %v6005, %v6389
    %v6391 = vpop.f32.mrb[0].mxu0
    %6392 = vdwg.mxu0
    %v6393 = vmax.f32 %v6075, 0.0
    %v6394 = vmax.f32 %v6080, 0.0
    %v6395 = vmax.f32 %v6085, 0.0
    %v6396 = vmax.f32 %v6090, 0.0
    %v6397 = vmax.f32 %v6095, 0.0
    %v6398 = vmax.f32 %v6100, 0.0
    %v6399 = vmax.f32 %v6105, 0.0
    %v6400 = vmax.f32 %v6110, 0.0
    %v6401 = vmax.f32 %v6115, 0.0
    %v6402 = vmax.f32 %v6120, 0.0
    %v6403 = vmax.f32 %v6125, 0.0
    %v6404 = vmax.f32 %v6130, 0.0
    %v6405 = vmax.f32 %v6135, 0.0
    %v6406 = vmax.f32 %v6140, 0.0
    %v6407 = vmax.f32 %v6145, 0.0
    %v6408 = vmax.f32 %v6150, 0.0
    %v6409 = vmax.f32 %v6155, 0.0
    %v6410 = vmax.f32 %v6160, 0.0
    %v6411 = vmax.f32 %v6165, 0.0
    %v6412 = vmax.f32 %v6170, 0.0
    %v6413 = vmax.f32 %v6175, 0.0
    %v6414 = vmax.f32 %v6180, 0.0
    %v6415 = vmax.f32 %v6185, 0.0
    %v6416 = vmax.f32 %v6190, 0.0
    %v6417 = vmax.f32 %v6195, 0.0
    %v6418 = vmax.f32 %v6200, 0.0
    %v6419 = vmax.f32 %v6205, 0.0
    %v6420 = vmax.f32 %v6210, 0.0
    %v6421 = vmax.f32 %v6215, 0.0
    %v6422 = vmax.f32 %v6220, 0.0
    %v6423 = vmax.f32 %v6225, 0.0
    %v6424 = vmax.f32 %v6230, 0.0
    %v6425 = vmax.f32 %v6235, 0.0
    %v6426 = vmax.f32 %v6240, 0.0
    %v6427 = vmax.f32 %v6245, 0.0
    %v6428 = vmax.f32 %v6250, 0.0
    %v6429 = vmax.f32 %v6255, 0.0
    %v6430 = vmax.f32 %v6260, 0.0
    %v6431 = vmax.f32 %v6265, 0.0
    %v6432 = vmax.f32 %v6270, 0.0
    %v6433 = vmax.f32 %v6275, 0.0
    %v6434 = vmax.f32 %v6280, 0.0
    %v6435 = vmax.f32 %v6285, 0.0
    %v6436 = vmax.f32 %v6290, 0.0
    %v6437 = vmax.f32 %v6295, 0.0
    %v6438 = vmax.f32 %v6300, 0.0
    %v6439 = vmax.f32 %v6305, 0.0
    %v6440 = vmax.f32 %v6310, 0.0
    %v6441 = vmax.f32 %v6315, 0.0
    %v6442 = vmax.f32 %v6320, 0.0
    %v6443 = vmax.f32 %v6325, 0.0
    %v6444 = vmax.f32 %v6330, 0.0
    %v6445 = vmax.f32 %v6335, 0.0
    %v6446 = vmax.f32 %v6340, 0.0
    %v6447 = vmax.f32 %v6345, 0.0
    %v6448 = vmax.f32 %v6350, 0.0
    %v6449 = vmax.f32 %v6355, 0.0
    %v6450 = vmax.f32 %v6360, 0.0
    %v6451 = vmax.f32 %v6365, 0.0
    %v6452 = vmax.f32 %v6370, 0.0
    %v6453 = vmax.f32 %v6375, 0.0
    %v6454 = vmax.f32 %v6380, 0.0
    %v6455 = vmax.f32 %v6385, 0.0
    %v6456 = vmax.f32 %v6390, 0.0
    %6457 = vst.msk [vmem:[%s3462 + $0x1] sm:$0xff] %vm2640, %v6393
    %6458 = vst.msk [vmem:[%s3462 + $0x9] sm:$0xff] %vm2640, %v6394
    %6459 = vst.msk [vmem:[%s3462 + $0x19] sm:$0xff] %vm2640, %v6395
    %6460 = vst.msk [vmem:[%s3462 + $0x21] sm:$0xff] %vm2640, %v6396
    %6461 = vst.msk [vmem:[%s3462 + $0x31] sm:$0xff] %vm2640, %v6397
    %6462 = vst.msk [vmem:[%s3462 + $0x39] sm:$0xff] %vm2640, %v6398
    %6463 = vst.msk [vmem:[%s3462 + $0x49] sm:$0xff] %vm2640, %v6399
    %6464 = vst.msk [vmem:[%s3462 + $0x51] sm:$0xff] %vm2640, %v6400
    %6465 = vst.msk [vmem:[%s3462 + $0x61] sm:$0xff] %vm2640, %v6401
    %6466 = vst.msk [vmem:[%s3462 + $0x69] sm:$0xff] %vm2640, %v6402
    %6467 = vst.msk [vmem:[%s3462 + $0x79] sm:$0xff] %vm2640, %v6403
    %6468 = vst.msk [vmem:[%s3462 + $0x81] sm:$0xff] %vm2640, %v6404
    %6469 = vst.msk [vmem:[%s3462 + $0x91] sm:$0xff] %vm2640, %v6405
    %6470 = vst.msk [vmem:[%s3462 + $0x99] sm:$0xff] %vm2640, %v6406
    %6471 = vst.msk [vmem:[%s3462 + $0xa9] sm:$0xff] %vm2640, %v6407
    %6472 = vst.msk [vmem:[%s3462 + $0xb1] sm:$0xff] %vm2640, %v6408
    %6473 = vst.msk [vmem:[%s3462 + $0xc1] sm:$0xff] %vm2640, %v6409
    %6474 = vst.msk [vmem:[%s3462 + $0xc9] sm:$0xff] %vm2640, %v6410
    %6475 = vst.msk [vmem:[%s3462 + $0xd9] sm:$0xff] %vm2640, %v6411
    %6476 = vst.msk [vmem:[%s3462 + $0xe1] sm:$0xff] %vm2640, %v6412
    %6477 = vst.msk [vmem:[%s3462 + $0xf1] sm:$0xff] %vm2640, %v6413
    %6478 = vst.msk [vmem:[%s3462 + $0xf9] sm:$0xff] %vm2640, %v6414
    %6479 = vst.msk [vmem:[%s3462 + $0x109] sm:$0xff] %vm2640, %v6415
    %6480 = vst.msk [vmem:[%s3462 + $0x111] sm:$0xff] %vm2640, %v6416
    %6481 = vst.msk [vmem:[%s3462 + $0x121] sm:$0xff] %vm2640, %v6417
    %6482 = vst.msk [vmem:[%s3462 + $0x129] sm:$0xff] %vm2640, %v6418
    %6483 = vst.msk [vmem:[%s3462 + $0x139] sm:$0xff] %vm2640, %v6419
    %6484 = vst.msk [vmem:[%s3462 + $0x141] sm:$0xff] %vm2640, %v6420
    %6485 = vst.msk [vmem:[%s3462 + $0x151] sm:$0xff] %vm2640, %v6421
    %6486 = vst.msk [vmem:[%s3462 + $0x159] sm:$0xff] %vm2640, %v6422
    %6487 = vst.msk [vmem:[%s3462 + $0x169] sm:$0xff] %vm2640, %v6423
    %6488 = vst.msk [vmem:[%s3462 + $0x171] sm:$0xff] %vm2640, %v6424
    %6489 = vst.msk [vmem:[%s3462 + $0x1b1] sm:$0xff] %vm2640, %v6425
    %6490 = vst.msk [vmem:[%s3462 + $0x1b9] sm:$0xff] %vm2640, %v6426
    %6491 = vst.msk [vmem:[%s3462 + $0x1c9] sm:$0xff] %vm2640, %v6427
    %6492 = vst.msk [vmem:[%s3462 + $0x1d1] sm:$0xff] %vm2640, %v6428
    %6493 = vst.msk [vmem:[%s3462 + $0x1e1] sm:$0xff] %vm2640, %v6429
    %6494 = vst.msk [vmem:[%s3462 + $0x1e9] sm:$0xff] %vm2640, %v6430
    %6495 = vst.msk [vmem:[%s3462 + $0x1f9] sm:$0xff] %vm2640, %v6431
    %6496 = vst.msk [vmem:[%s3462 + $0x201] sm:$0xff] %vm2640, %v6432
    %6497 = vst.msk [vmem:[%s3462 + $0x211] sm:$0xff] %vm2640, %v6433
    %6498 = vst.msk [vmem:[%s3462 + $0x219] sm:$0xff] %vm2640, %v6434
    %6499 = vst.msk [vmem:[%s3462 + $0x229] sm:$0xff] %vm2640, %v6435
    %6500 = vst.msk [vmem:[%s3462 + $0x231] sm:$0xff] %vm2640, %v6436
    %6501 = vst.msk [vmem:[%s3462 + $0x241] sm:$0xff] %vm2640, %v6437
    %6502 = vst.msk [vmem:[%s3462 + $0x249] sm:$0xff] %vm2640, %v6438
    %6503 = vst.msk [vmem:[%s3462 + $0x259] sm:$0xff] %vm2640, %v6439
    %6504 = vst.msk [vmem:[%s3462 + $0x261] sm:$0xff] %vm2640, %v6440
    %6505 = vst.msk [vmem:[%s3462 + $0x271] sm:$0xff] %vm2640, %v6441
    %6506 = vst.msk [vmem:[%s3462 + $0x279] sm:$0xff] %vm2640, %v6442
    %6507 = vst.msk [vmem:[%s3462 + $0x289] sm:$0xff] %vm2640, %v6443
    %6508 = vst.msk [vmem:[%s3462 + $0x291] sm:$0xff] %vm2640, %v6444
    %6509 = vst.msk [vmem:[%s3462 + $0x2a1] sm:$0xff] %vm2640, %v6445
    %6510 = vst.msk [vmem:[%s3462 + $0x2a9] sm:$0xff] %vm2640, %v6446
    %6511 = vst.msk [vmem:[%s3462 + $0x2b9] sm:$0xff] %vm2640, %v6447
    %6512 = vst.msk [vmem:[%s3462 + $0x2c1] sm:$0xff] %vm2640, %v6448
    %6513 = vst.msk [vmem:[%s3462 + $0x2d1] sm:$0xff] %vm2640, %v6449
    %6514 = vst.msk [vmem:[%s3462 + $0x2d9] sm:$0xff] %vm2640, %v6450
    %6515 = vst.msk [vmem:[%s3462 + $0x2e9] sm:$0xff] %vm2640, %v6451
    %6516 = vst.msk [vmem:[%s3462 + $0x2f1] sm:$0xff] %vm2640, %v6452
    %6517 = vst.msk [vmem:[%s3462 + $0x301] sm:$0xff] %vm2640, %v6453
    %6518 = vst.msk [vmem:[%s3462 + $0x309] sm:$0xff] %vm2640, %v6454
    %6519 = vst.msk [vmem:[%s3462 + $0x319] sm:$0xff] %vm2640, %v6455
    %6520 = vst.msk [vmem:[%s3462 + $0x321] sm:$0xff] %vm2640, %v6456
    %v6521 = vld [vmem:[#allocation2] sm:$0xff]
    %v6522 = vld [vmem:[#allocation2 + $0x8] sm:$0xff]
    %v6523 = vld [vmem:[#allocation2 + $0x10] sm:$0x3]
    %v6524 = vld [vmem:[#allocation2 + $0x18] sm:$0xff]
    %v6525 = vld [vmem:[#allocation2 + $0x20] sm:$0xff]
    %v6526 = vld [vmem:[#allocation2 + $0x28] sm:$0x3]
    %v6527 = vld [vmem:[#allocation2 + $0x30] sm:$0xff]
    %v6528 = vld [vmem:[#allocation2 + $0x38] sm:$0xff]
    %v6529 = vld [vmem:[#allocation2 + $0x40] sm:$0x3]
    %v6530 = vld [vmem:[#allocation2 + $0x48] sm:$0xff]
    %v6531 = vld [vmem:[#allocation2 + $0x50] sm:$0xff]
    %v6532 = vld [vmem:[#allocation2 + $0x58] sm:$0x3]
    %v6533 = vld [vmem:[#allocation2 + $0x60] sm:$0xff]
    %v6534 = vld [vmem:[#allocation2 + $0x68] sm:$0xff]
    %v6535 = vld [vmem:[#allocation2 + $0x70] sm:$0x3]
    %v6536 = vld [vmem:[#allocation2 + $0x78] sm:$0xff]
    %v6537 = vld [vmem:[#allocation2 + $0x80] sm:$0xff]
    %v6538 = vld [vmem:[#allocation2 + $0x88] sm:$0x3]
    %v6539 = vld [vmem:[#allocation2 + $0x90] sm:$0xff]
    %v6540 = vld [vmem:[#allocation2 + $0x98] sm:$0xff]
    %v6541 = vld [vmem:[#allocation2 + $0xa0] sm:$0x3]
    %v6542 = vld [vmem:[#allocation2 + $0xa8] sm:$0xff]
    %v6543 = vld [vmem:[#allocation2 + $0xb0] sm:$0xff]
    %v6544 = vld [vmem:[#allocation2 + $0xb8] sm:$0x3]
    %v6545 = vld [vmem:[#allocation2 + $0xc0] sm:$0xff]
    %v6546 = vld [vmem:[#allocation2 + $0xc8] sm:$0xff]
    %v6547 = vld [vmem:[#allocation2 + $0xd0] sm:$0x3]
    %v6548 = vld [vmem:[#allocation2 + $0xd8] sm:$0xff]
    %v6549 = vld [vmem:[#allocation2 + $0xe0] sm:$0xff]
    %v6550 = vld [vmem:[#allocation2 + $0xe8] sm:$0x3]
    %v6551 = vld [vmem:[#allocation2 + $0xf0] sm:$0xff]
    %v6552 = vld [vmem:[#allocation2 + $0xf8] sm:$0xff]
    %v6553 = vld [vmem:[#allocation2 + $0x100] sm:$0x3]
    %v6554 = vld [vmem:[#allocation2 + $0x108] sm:$0xff]
    %v6555 = vld [vmem:[#allocation2 + $0x110] sm:$0xff]
    %v6556 = vld [vmem:[#allocation2 + $0x118] sm:$0x3]
    %v6557 = vld [vmem:[#allocation2 + $0x120] sm:$0xff]
    %v6558 = vld [vmem:[#allocation2 + $0x128] sm:$0xff]
    %v6559 = vld [vmem:[#allocation2 + $0x130] sm:$0x3]
    %v6560 = vld [vmem:[#allocation2 + $0x138] sm:$0xff]
    %v6561 = vld [vmem:[#allocation2 + $0x140] sm:$0xff]
    %v6562 = vld [vmem:[#allocation2 + $0x148] sm:$0x3]
    %v6563 = vld [vmem:[#allocation2 + $0x150] sm:$0xff]
    %v6564 = vld [vmem:[#allocation2 + $0x158] sm:$0xff]
    %v6565 = vld [vmem:[#allocation2 + $0x160] sm:$0x3]
    %v6566 = vld [vmem:[#allocation2 + $0x168] sm:$0xff]
    %v6567 = vld [vmem:[#allocation2 + $0x170] sm:$0xff]
    %v6568 = vld [vmem:[#allocation2 + $0x178] sm:$0x3]
    %v6569 = vld [vmem:[#allocation2 + $0x180] sm:$0xff]
    %v6570 = vld [vmem:[#allocation2 + $0x188] sm:$0xff]
    %v6571 = vld [vmem:[#allocation2 + $0x190] sm:$0x3]
    %v6572 = vld [vmem:[#allocation2 + $0x198] sm:$0xff]
    %v6573 = vld [vmem:[#allocation2 + $0x1a0] sm:$0xff]
    %v6574 = vld [vmem:[#allocation2 + $0x1a8] sm:$0x3]
    %v6575 = vld [vmem:[#allocation2 + $0x1b0] sm:$0xff]
    %v6576 = vld [vmem:[#allocation2 + $0x1b8] sm:$0xff]
    %v6577 = vld [vmem:[#allocation2 + $0x1c0] sm:$0x3]
    %v6578 = vld [vmem:[#allocation2 + $0x1c8] sm:$0xff]
    %v6579 = vld [vmem:[#allocation2 + $0x1d0] sm:$0xff]
    %v6580 = vld [vmem:[#allocation2 + $0x1d8] sm:$0x3]
    %v6581 = vld [vmem:[#allocation2 + $0x1e0] sm:$0xff]
    %v6582 = vld [vmem:[#allocation2 + $0x1e8] sm:$0xff]
    %v6583 = vld [vmem:[#allocation2 + $0x1f0] sm:$0x3]
    %v6584 = vld [vmem:[#allocation2 + $0x1f8] sm:$0xff]
    %v6585 = vld [vmem:[#allocation2 + $0x200] sm:$0xff]
    %v6586 = vld [vmem:[#allocation2 + $0x208] sm:$0x3]
    %v6587 = vld [vmem:[#allocation2 + $0x210] sm:$0xff]
    %v6588 = vld [vmem:[#allocation2 + $0x218] sm:$0xff]
    %v6589 = vld [vmem:[#allocation2 + $0x220] sm:$0x3]
    %v6590 = vld [vmem:[#allocation2 + $0x228] sm:$0xff]
    %v6591 = vld [vmem:[#allocation2 + $0x230] sm:$0xff]
    %v6592 = vld [vmem:[#allocation2 + $0x238] sm:$0x3]
    %v6593 = vld [vmem:[#allocation2 + $0x240] sm:$0xff]
    %v6594 = vld [vmem:[#allocation2 + $0x248] sm:$0xff]
    %v6595 = vld [vmem:[#allocation2 + $0x250] sm:$0x3]
    %v6596 = vld [vmem:[#allocation2 + $0x258] sm:$0xff]
    %v6597 = vld [vmem:[#allocation2 + $0x260] sm:$0xff]
    %v6598 = vld [vmem:[#allocation2 + $0x268] sm:$0x3]
    %v6599 = vld [vmem:[#allocation2 + $0x270] sm:$0xff]
    %v6600 = vld [vmem:[#allocation2 + $0x278] sm:$0xff]
    %v6601 = vld [vmem:[#allocation2 + $0x280] sm:$0x3]
    %v6602 = vld [vmem:[#allocation2 + $0x288] sm:$0xff]
    %v6603 = vld [vmem:[#allocation2 + $0x290] sm:$0xff]
    %v6604 = vld [vmem:[#allocation2 + $0x298] sm:$0x3]
    %v6605 = vld [vmem:[#allocation2 + $0x2a0] sm:$0xff]
    %v6606 = vld [vmem:[#allocation2 + $0x2a8] sm:$0xff]
    %v6607 = vld [vmem:[#allocation2 + $0x2b0] sm:$0x3]
    %v6608 = vld [vmem:[#allocation2 + $0x2b8] sm:$0xff]
    %v6609 = vld [vmem:[#allocation2 + $0x2c0] sm:$0xff]
    %v6610 = vld [vmem:[#allocation2 + $0x2c8] sm:$0x3]
    %v6611 = vld [vmem:[#allocation2 + $0x2d0] sm:$0xff]
    %v6612 = vld [vmem:[#allocation2 + $0x2d8] sm:$0xff]
    %v6613 = vld [vmem:[#allocation2 + $0x2e0] sm:$0x3]
    %v6614 = vld [vmem:[#allocation2 + $0x2e8] sm:$0xff]
    %v6615 = vld [vmem:[#allocation2 + $0x2f0] sm:$0xff]
    %v6616 = vld [vmem:[#allocation2 + $0x2f8] sm:$0x3]
    %v6617 = vld [vmem:[#allocation2 + $0x300] sm:$0xff]
    %v6618 = vld [vmem:[#allocation2 + $0x308] sm:$0xff]
    %v6619 = vld [vmem:[#allocation2 + $0x310] sm:$0x3]
    %v6620 = vld [vmem:[#allocation2 + $0x318] sm:$0xff]
    %v6621 = vld [vmem:[#allocation2 + $0x320] sm:$0xff]
    %v6622 = vld [vmem:[#allocation2 + $0x328] sm:$0x3]
    %v6623 = vld [vmem:[#allocation2 + $0x330] sm:$0xff]
    %v6624 = vld [vmem:[#allocation2 + $0x338] sm:$0xff]
    %v6625 = vld [vmem:[#allocation2 + $0x340] sm:$0x3]
    %v6626 = vld [vmem:[#allocation2 + $0x348] sm:$0xff]
    %v6627 = vld [vmem:[#allocation2 + $0x350] sm:$0xff]
    %v6628 = vld [vmem:[#allocation2 + $0x358] sm:$0x3]
    %v6629 = vld [vmem:[%s5] sm:$0xff]
    %v6630 = vld [vmem:[%s5 + $0x8] sm:$0xff]
    %v6631 = vld [vmem:[%s5 + $0x10] sm:$0xff]
    %v6632 = vld [vmem:[%s5 + $0x18] sm:$0xff]
    %v6633 = vld [vmem:[%s5 + $0x20] sm:$0xff]
    %v6634 = vld [vmem:[%s5 + $0x28] sm:$0xff]
    %v6635 = vld [vmem:[%s5 + $0x30] sm:$0xff]
    %v6636 = vld [vmem:[%s5 + $0x38] sm:$0xff]
    %v6637 = vld [vmem:[%s5 + $0x40] sm:$0xff]
    %v6638 = vld [vmem:[%s5 + $0x48] sm:$0xff]
    %v6639 = vld [vmem:[%s5 + $0x50] sm:$0xff]
    %v6640 = vld [vmem:[%s5 + $0x58] sm:$0xff]
    %v6641 = vld [vmem:[%s5 + $0x60] sm:$0xff]
    %v6642 = vld [vmem:[%s5 + $0x68] sm:$0xff]
    %v6643 = vld [vmem:[%s5 + $0x70] sm:$0xff]
    %v6644 = vld [vmem:[%s5 + $0x78] sm:$0xff]
    %v6645 = vld [vmem:[%s5 + $0x80] sm:$0xff]
    %v6646 = vld [vmem:[%s5 + $0x88] sm:$0xff]
    %v6647 = vld [vmem:[%s5 + $0x90] sm:$0xff]
    %v6648 = vld [vmem:[%s5 + $0x98] sm:$0xff]
    %v6649 = vld [vmem:[%s5 + $0xa0] sm:$0xff]
    %v6650 = vld [vmem:[%s5 + $0xa8] sm:$0xff]
    %v6651 = vld [vmem:[%s5 + $0xb0] sm:$0xff]
    %v6652 = vld [vmem:[%s5 + $0xb8] sm:$0xff]
    %v6653 = vld [vmem:[%s5 + $0xc0] sm:$0xff]
    %v6654 = vld [vmem:[%s5 + $0xc8] sm:$0xff]
    %v6655 = vld [vmem:[%s5 + $0xd0] sm:$0xff]
    %v6656 = vld [vmem:[%s5 + $0xd8] sm:$0xff]
    %v6657 = vld [vmem:[%s5 + $0xe0] sm:$0xff]
    %v6658 = vld [vmem:[%s5 + $0xe8] sm:$0xff]
    %v6659 = vld [vmem:[%s5 + $0xf0] sm:$0xff]
    %v6660 = vld [vmem:[%s5 + $0xf8] sm:$0xff]
    %v6661 = vld [vmem:[%s5 + $0x100] sm:$0xff]
    %v6662 = vld [vmem:[%s5 + $0x108] sm:$0xff]
    %v6663 = vld [vmem:[%s5 + $0x110] sm:$0xff]
    %v6664 = vld [vmem:[%s5 + $0x118] sm:$0xff]
    %v6665 = vld [vmem:[%s5 + $0x120] sm:$0xff]
    %v6666 = vld [vmem:[%s5 + $0x128] sm:$0xff]
    %v6667 = vld [vmem:[%s5 + $0x130] sm:$0xff]
    %v6668 = vld [vmem:[%s5 + $0x138] sm:$0xff]
    %v6669 = vld [vmem:[%s5 + $0x140] sm:$0xff]
    %v6670 = vld [vmem:[%s5 + $0x148] sm:$0xff]
    %v6671 = vld [vmem:[%s5 + $0x150] sm:$0xff]
    %v6672 = vld [vmem:[%s5 + $0x158] sm:$0xff]
    %v6673 = vld [vmem:[%s5 + $0x160] sm:$0xff]
    %v6674 = vld [vmem:[%s5 + $0x168] sm:$0xff]
    %v6675 = vld [vmem:[%s5 + $0x170] sm:$0xff]
    %v6676 = vld [vmem:[%s5 + $0x178] sm:$0xff]
    %v6677 = vld [vmem:[%s5 + $0x180] sm:$0xff]
    %v6678 = vld [vmem:[%s5 + $0x188] sm:$0xff]
    %v6679 = vld [vmem:[%s5 + $0x190] sm:$0xff]
    %v6680 = vld [vmem:[%s5 + $0x198] sm:$0xff]
    %v6681 = vld [vmem:[%s5 + $0x1a0] sm:$0xff]
    %v6682 = vld [vmem:[%s5 + $0x1a8] sm:$0xff]
    %v6683 = vld [vmem:[%s5 + $0x1b0] sm:$0xff]
    %v6684 = vld [vmem:[%s5 + $0x1b8] sm:$0xff]
    %v6685 = vld [vmem:[%s5 + $0x1c0] sm:$0xff]
    %v6686 = vld [vmem:[%s5 + $0x1c8] sm:$0xff]
    %v6687 = vld [vmem:[%s5 + $0x1d0] sm:$0xff]
    %v6688 = vld [vmem:[%s5 + $0x1d8] sm:$0xff]
    %v6689 = vld [vmem:[%s5 + $0x1e0] sm:$0xff]
    %v6690 = vld [vmem:[%s5 + $0x1e8] sm:$0xff]
    %v6691 = vld [vmem:[%s5 + $0x1f0] sm:$0xff]
    %v6692 = vld [vmem:[%s5 + $0x1f8] sm:$0xff]
    %v6693 = vld [vmem:[%s5 + $0x200] sm:$0xff]
    %v6694 = vld [vmem:[%s5 + $0x208] sm:$0xff]
    %v6695 = vld [vmem:[%s5 + $0x210] sm:$0xff]
    %v6696 = vld [vmem:[%s5 + $0x218] sm:$0xff]
    %v6697 = vld [vmem:[%s5 + $0x220] sm:$0xff]
    %v6698 = vld [vmem:[%s5 + $0x228] sm:$0xff]
    %v6699 = vld [vmem:[%s5 + $0x230] sm:$0xff]
    %v6700 = vld [vmem:[%s5 + $0x238] sm:$0xff]
    %v6701 = vld [vmem:[#allocation7] sm:$0x1]
    %v6798 = vrot.slane %v6521, 1
    %v6799 = vrot.slane %v6522, 1
    %v6800 = vsel %vm275, %v6798, %v6799
    %v6801 = vrot.slane %v6523, 1
    %v6802 = vsel %vm275, %v6799, %v6801
    %v6803 = vrot.slane %v6524, 1
    %v6804 = vrot.slane %v6525, 1
    %v6805 = vsel %vm275, %v6803, %v6804
    %v6806 = vrot.slane %v6526, 1
    %v6807 = vsel %vm275, %v6804, %v6806
    %v6808 = vrot.slane %v6527, 1
    %v6809 = vrot.slane %v6528, 1
    %v6810 = vsel %vm275, %v6808, %v6809
    %v6811 = vrot.slane %v6529, 1
    %v6812 = vsel %vm275, %v6809, %v6811
    %v6813 = vrot.slane %v6530, 1
    %v6814 = vrot.slane %v6531, 1
    %v6815 = vsel %vm275, %v6813, %v6814
    %v6816 = vrot.slane %v6532, 1
    %v6817 = vsel %vm275, %v6814, %v6816
    %v6818 = vrot.slane %v6533, 1
    %v6819 = vrot.slane %v6534, 1
    %v6820 = vsel %vm275, %v6818, %v6819
    %v6821 = vrot.slane %v6535, 1
    %v6822 = vsel %vm275, %v6819, %v6821
    %v6823 = vrot.slane %v6536, 1
    %v6824 = vrot.slane %v6537, 1
    %v6825 = vsel %vm275, %v6823, %v6824
    %v6826 = vrot.slane %v6538, 1
    %v6827 = vsel %vm275, %v6824, %v6826
    %v6828 = vrot.slane %v6539, 1
    %v6829 = vrot.slane %v6540, 1
    %v6830 = vsel %vm275, %v6828, %v6829
    %v6831 = vrot.slane %v6541, 1
    %v6832 = vsel %vm275, %v6829, %v6831
    %v6833 = vrot.slane %v6542, 1
    %v6834 = vrot.slane %v6543, 1
    %v6835 = vsel %vm275, %v6833, %v6834
    %v6836 = vrot.slane %v6544, 1
    %v6837 = vsel %vm275, %v6834, %v6836
    %v6838 = vrot.slane %v6545, 1
    %v6839 = vrot.slane %v6546, 1
    %v6840 = vsel %vm275, %v6838, %v6839
    %v6841 = vrot.slane %v6547, 1
    %v6842 = vsel %vm275, %v6839, %v6841
    %v6843 = vrot.slane %v6548, 1
    %v6844 = vrot.slane %v6549, 1
    %v6845 = vsel %vm275, %v6843, %v6844
    %v6846 = vrot.slane %v6550, 1
    %v6847 = vsel %vm275, %v6844, %v6846
    %v6848 = vrot.slane %v6551, 1
    %v6849 = vrot.slane %v6552, 1
    %v6850 = vsel %vm275, %v6848, %v6849
    %v6851 = vrot.slane %v6553, 1
    %v6852 = vsel %vm275, %v6849, %v6851
    %v6853 = vrot.slane %v6554, 1
    %v6854 = vrot.slane %v6555, 1
    %v6855 = vsel %vm275, %v6853, %v6854
    %v6856 = vrot.slane %v6556, 1
    %v6857 = vsel %vm275, %v6854, %v6856
    %v6858 = vrot.slane %v6557, 1
    %v6859 = vrot.slane %v6558, 1
    %v6860 = vsel %vm275, %v6858, %v6859
    %v6861 = vrot.slane %v6559, 1
    %v6862 = vsel %vm275, %v6859, %v6861
    %v6863 = vrot.slane %v6560, 1
    %v6864 = vrot.slane %v6561, 1
    %v6865 = vsel %vm275, %v6863, %v6864
    %v6866 = vrot.slane %v6562, 1
    %v6867 = vsel %vm275, %v6864, %v6866
    %v6868 = vrot.slane %v6563, 1
    %v6869 = vrot.slane %v6564, 1
    %v6870 = vsel %vm275, %v6868, %v6869
    %v6871 = vrot.slane %v6565, 1
    %v6872 = vsel %vm275, %v6869, %v6871
    %v6873 = vrot.slane %v6566, 1
    %v6874 = vrot.slane %v6567, 1
    %v6875 = vsel %vm275, %v6873, %v6874
    %v6876 = vrot.slane %v6568, 1
    %v6877 = vsel %vm275, %v6874, %v6876
    %v6878 = vrot.slane %v6575, 1
    %v6879 = vrot.slane %v6576, 1
    %v6880 = vsel %vm275, %v6878, %v6879
    %v6881 = vrot.slane %v6577, 1
    %v6882 = vsel %vm275, %v6879, %v6881
    %v6883 = vrot.slane %v6578, 1
    %v6884 = vrot.slane %v6579, 1
    %v6885 = vsel %vm275, %v6883, %v6884
    %v6886 = vrot.slane %v6580, 1
    %v6887 = vsel %vm275, %v6884, %v6886
    %v6888 = vrot.slane %v6581, 1
    %v6889 = vrot.slane %v6582, 1
    %v6890 = vsel %vm275, %v6888, %v6889
    %v6891 = vrot.slane %v6583, 1
    %v6892 = vsel %vm275, %v6889, %v6891
    %v6893 = vrot.slane %v6584, 1
    %v6894 = vrot.slane %v6585, 1
    %v6895 = vsel %vm275, %v6893, %v6894
    %v6896 = vrot.slane %v6586, 1
    %v6897 = vsel %vm275, %v6894, %v6896
    %v6898 = vrot.slane %v6587, 1
    %v6899 = vrot.slane %v6588, 1
    %v6900 = vsel %vm275, %v6898, %v6899
    %v6901 = vrot.slane %v6589, 1
    %v6902 = vsel %vm275, %v6899, %v6901
    %v6903 = vrot.slane %v6590, 1
    %v6904 = vrot.slane %v6591, 1
    %v6905 = vsel %vm275, %v6903, %v6904
    %v6906 = vrot.slane %v6592, 1
    %v6907 = vsel %vm275, %v6904, %v6906
    %v6908 = vrot.slane %v6593, 1
    %v6909 = vrot.slane %v6594, 1
    %v6910 = vsel %vm275, %v6908, %v6909
    %v6911 = vrot.slane %v6595, 1
    %v6912 = vsel %vm275, %v6909, %v6911
    %v6913 = vrot.slane %v6596, 1
    %v6914 = vrot.slane %v6597, 1
    %v6915 = vsel %vm275, %v6913, %v6914
    %v6916 = vrot.slane %v6598, 1
    %v6917 = vsel %vm275, %v6914, %v6916
    %v6918 = vrot.slane %v6599, 1
    %v6919 = vrot.slane %v6600, 1
    %v6920 = vsel %vm275, %v6918, %v6919
    %v6921 = vrot.slane %v6601, 1
    %v6922 = vsel %vm275, %v6919, %v6921
    %v6923 = vrot.slane %v6602, 1
    %v6924 = vrot.slane %v6603, 1
    %v6925 = vsel %vm275, %v6923, %v6924
    %v6926 = vrot.slane %v6604, 1
    %v6927 = vsel %vm275, %v6924, %v6926
    %v6928 = vrot.slane %v6605, 1
    %v6929 = vrot.slane %v6606, 1
    %v6930 = vsel %vm275, %v6928, %v6929
    %v6931 = vrot.slane %v6607, 1
    %v6932 = vsel %vm275, %v6929, %v6931
    %v6933 = vrot.slane %v6608, 1
    %v6934 = vrot.slane %v6609, 1
    %v6935 = vsel %vm275, %v6933, %v6934
    %v6936 = vrot.slane %v6610, 1
    %v6937 = vsel %vm275, %v6934, %v6936
    %v6938 = vrot.slane %v6611, 1
    %v6939 = vrot.slane %v6612, 1
    %v6940 = vsel %vm275, %v6938, %v6939
    %v6941 = vrot.slane %v6613, 1
    %v6942 = vsel %vm275, %v6939, %v6941
    %v6943 = vrot.slane %v6614, 1
    %v6944 = vrot.slane %v6615, 1
    %v6945 = vsel %vm275, %v6943, %v6944
    %v6946 = vrot.slane %v6616, 1
    %v6947 = vsel %vm275, %v6944, %v6946
    %v6948 = vrot.slane %v6617, 1
    %v6949 = vrot.slane %v6618, 1
    %v6950 = vsel %vm275, %v6948, %v6949
    %v6951 = vrot.slane %v6619, 1
    %v6952 = vsel %vm275, %v6949, %v6951
    %v6953 = vrot.slane %v6620, 1
    %v6954 = vrot.slane %v6621, 1
    %v6955 = vsel %vm275, %v6953, %v6954
    %v6956 = vrot.slane %v6622, 1
    %v6957 = vsel %vm275, %v6954, %v6956
    %v6958 = vrot.slane %v6521, 2
    %v6959 = vrot.slane %v6522, 2
    %v6960 = vsel %vm436, %v6958, %v6959
    %v6961 = vrot.slane %v6523, 2
    %v6962 = vsel %vm436, %v6959, %v6961
    %v6963 = vrot.slane %v6524, 2
    %v6964 = vrot.slane %v6525, 2
    %v6965 = vsel %vm436, %v6963, %v6964
    %v6966 = vrot.slane %v6526, 2
    %v6967 = vsel %vm436, %v6964, %v6966
    %v6968 = vrot.slane %v6527, 2
    %v6969 = vrot.slane %v6528, 2
    %v6970 = vsel %vm436, %v6968, %v6969
    %v6971 = vrot.slane %v6529, 2
    %v6972 = vsel %vm436, %v6969, %v6971
    %v6973 = vrot.slane %v6530, 2
    %v6974 = vrot.slane %v6531, 2
    %v6975 = vsel %vm436, %v6973, %v6974
    %v6976 = vrot.slane %v6532, 2
    %v6977 = vsel %vm436, %v6974, %v6976
    %v6978 = vrot.slane %v6533, 2
    %v6979 = vrot.slane %v6534, 2
    %v6980 = vsel %vm436, %v6978, %v6979
    %v6981 = vrot.slane %v6535, 2
    %v6982 = vsel %vm436, %v6979, %v6981
    %v6983 = vrot.slane %v6536, 2
    %v6984 = vrot.slane %v6537, 2
    %v6985 = vsel %vm436, %v6983, %v6984
    %v6986 = vrot.slane %v6538, 2
    %v6987 = vsel %vm436, %v6984, %v6986
    %v6988 = vrot.slane %v6539, 2
    %v6989 = vrot.slane %v6540, 2
    %v6990 = vsel %vm436, %v6988, %v6989
    %v6991 = vrot.slane %v6541, 2
    %v6992 = vsel %vm436, %v6989, %v6991
    %v6993 = vrot.slane %v6542, 2
    %v6994 = vrot.slane %v6543, 2
    %v6995 = vsel %vm436, %v6993, %v6994
    %v6996 = vrot.slane %v6544, 2
    %v6997 = vsel %vm436, %v6994, %v6996
    %v6998 = vrot.slane %v6545, 2
    %v6999 = vrot.slane %v6546, 2
    %v7000 = vsel %vm436, %v6998, %v6999
    %v7001 = vrot.slane %v6547, 2
    %v7002 = vsel %vm436, %v6999, %v7001
    %v7003 = vrot.slane %v6548, 2
    %v7004 = vrot.slane %v6549, 2
    %v7005 = vsel %vm436, %v7003, %v7004
    %v7006 = vrot.slane %v6550, 2
    %v7007 = vsel %vm436, %v7004, %v7006
    %v7008 = vrot.slane %v6551, 2
    %v7009 = vrot.slane %v6552, 2
    %v7010 = vsel %vm436, %v7008, %v7009
    %v7011 = vrot.slane %v6553, 2
    %v7012 = vsel %vm436, %v7009, %v7011
    %v7013 = vrot.slane %v6554, 2
    %v7014 = vrot.slane %v6555, 2
    %v7015 = vsel %vm436, %v7013, %v7014
    %v7016 = vrot.slane %v6556, 2
    %v7017 = vsel %vm436, %v7014, %v7016
    %v7018 = vrot.slane %v6557, 2
    %v7019 = vrot.slane %v6558, 2
    %v7020 = vsel %vm436, %v7018, %v7019
    %v7021 = vrot.slane %v6559, 2
    %v7022 = vsel %vm436, %v7019, %v7021
    %v7023 = vrot.slane %v6560, 2
    %v7024 = vrot.slane %v6561, 2
    %v7025 = vsel %vm436, %v7023, %v7024
    %v7026 = vrot.slane %v6562, 2
    %v7027 = vsel %vm436, %v7024, %v7026
    %v7028 = vrot.slane %v6563, 2
    %v7029 = vrot.slane %v6564, 2
    %v7030 = vsel %vm436, %v7028, %v7029
    %v7031 = vrot.slane %v6565, 2
    %v7032 = vsel %vm436, %v7029, %v7031
    %v7033 = vrot.slane %v6566, 2
    %v7034 = vrot.slane %v6567, 2
    %v7035 = vsel %vm436, %v7033, %v7034
    %v7036 = vrot.slane %v6568, 2
    %v7037 = vsel %vm436, %v7034, %v7036
    %v7038 = vrot.slane %v6575, 2
    %v7039 = vrot.slane %v6576, 2
    %v7040 = vsel %vm436, %v7038, %v7039
    %v7041 = vrot.slane %v6577, 2
    %v7042 = vsel %vm436, %v7039, %v7041
    %v7043 = vrot.slane %v6578, 2
    %v7044 = vrot.slane %v6579, 2
    %v7045 = vsel %vm436, %v7043, %v7044
    %v7046 = vrot.slane %v6580, 2
    %v7047 = vsel %vm436, %v7044, %v7046
    %v7048 = vrot.slane %v6581, 2
    %v7049 = vrot.slane %v6582, 2
    %v7050 = vsel %vm436, %v7048, %v7049
    %v7051 = vrot.slane %v6583, 2
    %v7052 = vsel %vm436, %v7049, %v7051
    %v7053 = vrot.slane %v6584, 2
    %v7054 = vrot.slane %v6585, 2
    %v7055 = vsel %vm436, %v7053, %v7054
    %v7056 = vrot.slane %v6586, 2
    %v7057 = vsel %vm436, %v7054, %v7056
    %v7058 = vrot.slane %v6587, 2
    %v7059 = vrot.slane %v6588, 2
    %v7060 = vsel %vm436, %v7058, %v7059
    %v7061 = vrot.slane %v6589, 2
    %v7062 = vsel %vm436, %v7059, %v7061
    %v7063 = vrot.slane %v6590, 2
    %v7064 = vrot.slane %v6591, 2
    %v7065 = vsel %vm436, %v7063, %v7064
    %v7066 = vrot.slane %v6592, 2
    %v7067 = vsel %vm436, %v7064, %v7066
    %v7068 = vrot.slane %v6593, 2
    %v7069 = vrot.slane %v6594, 2
    %v7070 = vsel %vm436, %v7068, %v7069
    %v7071 = vrot.slane %v6595, 2
    %v7072 = vsel %vm436, %v7069, %v7071
    %v7073 = vrot.slane %v6596, 2
    %v7074 = vrot.slane %v6597, 2
    %v7075 = vsel %vm436, %v7073, %v7074
    %v7076 = vrot.slane %v6598, 2
    %v7077 = vsel %vm436, %v7074, %v7076
    %v7078 = vrot.slane %v6599, 2
    %v7079 = vrot.slane %v6600, 2
    %v7080 = vsel %vm436, %v7078, %v7079
    %v7081 = vrot.slane %v6601, 2
    %v7082 = vsel %vm436, %v7079, %v7081
    %v7083 = vrot.slane %v6602, 2
    %v7084 = vrot.slane %v6603, 2
    %v7085 = vsel %vm436, %v7083, %v7084
    %v7086 = vrot.slane %v6604, 2
    %v7087 = vsel %vm436, %v7084, %v7086
    %v7088 = vrot.slane %v6605, 2
    %v7089 = vrot.slane %v6606, 2
    %v7090 = vsel %vm436, %v7088, %v7089
    %v7091 = vrot.slane %v6607, 2
    %v7092 = vsel %vm436, %v7089, %v7091
    %v7093 = vrot.slane %v6608, 2
    %v7094 = vrot.slane %v6609, 2
    %v7095 = vsel %vm436, %v7093, %v7094
    %v7096 = vrot.slane %v6610, 2
    %v7097 = vsel %vm436, %v7094, %v7096
    %v7098 = vrot.slane %v6611, 2
    %v7099 = vrot.slane %v6612, 2
    %v7100 = vsel %vm436, %v7098, %v7099
    %v7101 = vrot.slane %v6613, 2
    %v7102 = vsel %vm436, %v7099, %v7101
    %v7103 = vrot.slane %v6614, 2
    %v7104 = vrot.slane %v6615, 2
    %v7105 = vsel %vm436, %v7103, %v7104
    %v7106 = vrot.slane %v6616, 2
    %v7107 = vsel %vm436, %v7104, %v7106
    %v7108 = vrot.slane %v6617, 2
    %v7109 = vrot.slane %v6618, 2
    %v7110 = vsel %vm436, %v7108, %v7109
    %v7111 = vrot.slane %v6619, 2
    %v7112 = vsel %vm436, %v7109, %v7111
    %v7113 = vrot.slane %v6620, 2
    %v7114 = vrot.slane %v6621, 2
    %v7115 = vsel %vm436, %v7113, %v7114
    %v7116 = vrot.slane %v6622, 2
    %v7117 = vsel %vm436, %v7114, %v7116
    %v7188 = vrot.slane %v6569, 1
    %v7189 = vrot.slane %v6570, 1
    %v7190 = vsel %vm275, %v7188, %v7189
    %v7191 = vrot.slane %v6571, 1
    %v7192 = vsel %vm275, %v7189, %v7191
    %v7193 = vrot.slane %v6623, 1
    %v7194 = vrot.slane %v6624, 1
    %v7195 = vsel %vm275, %v7193, %v7194
    %v7196 = vrot.slane %v6625, 1
    %v7197 = vsel %vm275, %v7194, %v7196
    %v7262 = vrot.slane %v6569, 2
    %v7263 = vrot.slane %v6570, 2
    %v7264 = vsel %vm436, %v7262, %v7263
    %v7265 = vrot.slane %v6571, 2
    %v7266 = vsel %vm436, %v7263, %v7265
    %v7267 = vrot.slane %v6623, 2
    %v7268 = vrot.slane %v6624, 2
    %v7269 = vsel %vm436, %v7267, %v7268
    %v7270 = vrot.slane %v6625, 2
    %v7271 = vsel %vm436, %v7268, %v7270
    %v7278 = vrot.slane %v6572, 1
    %v7279 = vrot.slane %v6573, 1
    %v7280 = vsel %vm275, %v7278, %v7279
    %v7281 = vrot.slane %v6574, 1
    %v7282 = vsel %vm275, %v7279, %v7281
    %v7283 = vrot.slane %v6626, 1
    %v7284 = vrot.slane %v6627, 1
    %v7285 = vsel %vm275, %v7283, %v7284
    %v7286 = vrot.slane %v6628, 1
    %v7287 = vsel %vm275, %v7284, %v7286
    %v7288 = vrot.slane %v6572, 2
    %v7289 = vrot.slane %v6573, 2
    %v7290 = vsel %vm436, %v7288, %v7289
    %v7291 = vrot.slane %v6574, 2
    %v7292 = vsel %vm436, %v7289, %v7291
    %v7293 = vrot.slane %v6626, 2
    %v7294 = vrot.slane %v6627, 2
    %v7295 = vsel %vm436, %v7293, %v7294
    %v7296 = vrot.slane %v6628, 2
    %v7297 = vsel %vm436, %v7294, %v7296
    %7298 = vrot.lane.b32.xlu0 %v6800, 64
    %v7299 = vpop.permute.xlu0 %7298
    %7300 = vrot.lane.b32.xlu0 %v6802, 64
    %v7301 = vpop.permute.xlu0 %7300
    %7302 = vrot.lane.b32.xlu0 %v6805, 64
    %v7303 = vpop.permute.xlu0 %7302
    %7304 = vrot.lane.b32.xlu0 %v6807, 64
    %v7305 = vpop.permute.xlu0 %7304
    %7306 = vrot.lane.b32.xlu0 %v6810, 64
    %v7307 = vpop.permute.xlu0 %7306
    %7308 = vrot.lane.b32.xlu0 %v6812, 64
    %v7309 = vpop.permute.xlu0 %7308
    %7310 = vrot.lane.b32.xlu0 %v6815, 64
    %v7311 = vpop.permute.xlu0 %7310
    %7312 = vrot.lane.b32.xlu0 %v6817, 64
    %v7313 = vpop.permute.xlu0 %7312
    %7314 = vrot.lane.b32.xlu0 %v6820, 64
    %v7315 = vpop.permute.xlu0 %7314
    %7316 = vrot.lane.b32.xlu0 %v6822, 64
    %v7317 = vpop.permute.xlu0 %7316
    %7318 = vrot.lane.b32.xlu0 %v6825, 64
    %v7319 = vpop.permute.xlu0 %7318
    %7320 = vrot.lane.b32.xlu0 %v6827, 64
    %v7321 = vpop.permute.xlu0 %7320
    %7322 = vrot.lane.b32.xlu0 %v6830, 64
    %v7323 = vpop.permute.xlu0 %7322
    %7324 = vrot.lane.b32.xlu0 %v6832, 64
    %v7325 = vpop.permute.xlu0 %7324
    %7326 = vrot.lane.b32.xlu0 %v6835, 64
    %v7327 = vpop.permute.xlu0 %7326
    %7328 = vrot.lane.b32.xlu0 %v6837, 64
    %v7329 = vpop.permute.xlu0 %7328
    %7330 = vrot.lane.b32.xlu0 %v6840, 64
    %v7331 = vpop.permute.xlu0 %7330
    %7332 = vrot.lane.b32.xlu0 %v6842, 64
    %v7333 = vpop.permute.xlu0 %7332
    %7334 = vrot.lane.b32.xlu0 %v6845, 64
    %v7335 = vpop.permute.xlu0 %7334
    %7336 = vrot.lane.b32.xlu0 %v6847, 64
    %v7337 = vpop.permute.xlu0 %7336
    %7338 = vrot.lane.b32.xlu0 %v6850, 64
    %v7339 = vpop.permute.xlu0 %7338
    %7340 = vrot.lane.b32.xlu0 %v6852, 64
    %v7341 = vpop.permute.xlu0 %7340
    %7342 = vrot.lane.b32.xlu0 %v6855, 64
    %v7343 = vpop.permute.xlu0 %7342
    %7344 = vrot.lane.b32.xlu0 %v6857, 64
    %v7345 = vpop.permute.xlu0 %7344
    %7346 = vrot.lane.b32.xlu0 %v6860, 64
    %v7347 = vpop.permute.xlu0 %7346
    %7348 = vrot.lane.b32.xlu0 %v6862, 64
    %v7349 = vpop.permute.xlu0 %7348
    %7350 = vrot.lane.b32.xlu0 %v6865, 64
    %v7351 = vpop.permute.xlu0 %7350
    %7352 = vrot.lane.b32.xlu0 %v6867, 64
    %v7353 = vpop.permute.xlu0 %7352
    %7354 = vrot.lane.b32.xlu0 %v6870, 64
    %v7355 = vpop.permute.xlu0 %7354
    %7356 = vrot.lane.b32.xlu0 %v6872, 64
    %v7357 = vpop.permute.xlu0 %7356
    %7358 = vrot.lane.b32.xlu0 %v6875, 64
    %v7359 = vpop.permute.xlu0 %7358
    %7360 = vrot.lane.b32.xlu0 %v6877, 64
    %v7361 = vpop.permute.xlu0 %7360
    %7362 = vrot.lane.b32.xlu0 %v6880, 64
    %v7363 = vpop.permute.xlu0 %7362
    %7364 = vrot.lane.b32.xlu0 %v6882, 64
    %v7365 = vpop.permute.xlu0 %7364
    %7366 = vrot.lane.b32.xlu0 %v6885, 64
    %v7367 = vpop.permute.xlu0 %7366
    %7368 = vrot.lane.b32.xlu0 %v6887, 64
    %v7369 = vpop.permute.xlu0 %7368
    %7370 = vrot.lane.b32.xlu0 %v6890, 64
    %v7371 = vpop.permute.xlu0 %7370
    %7372 = vrot.lane.b32.xlu0 %v6892, 64
    %v7373 = vpop.permute.xlu0 %7372
    %7374 = vrot.lane.b32.xlu0 %v6895, 64
    %v7375 = vpop.permute.xlu0 %7374
    %7376 = vrot.lane.b32.xlu0 %v6897, 64
    %v7377 = vpop.permute.xlu0 %7376
    %7378 = vrot.lane.b32.xlu0 %v6900, 64
    %v7379 = vpop.permute.xlu0 %7378
    %7380 = vrot.lane.b32.xlu0 %v6902, 64
    %v7381 = vpop.permute.xlu0 %7380
    %7382 = vrot.lane.b32.xlu0 %v6905, 64
    %v7383 = vpop.permute.xlu0 %7382
    %7384 = vrot.lane.b32.xlu0 %v6907, 64
    %v7385 = vpop.permute.xlu0 %7384
    %7386 = vrot.lane.b32.xlu0 %v6910, 64
    %v7387 = vpop.permute.xlu0 %7386
    %7388 = vrot.lane.b32.xlu0 %v6912, 64
    %v7389 = vpop.permute.xlu0 %7388
    %7390 = vrot.lane.b32.xlu0 %v6915, 64
    %v7391 = vpop.permute.xlu0 %7390
    %7392 = vrot.lane.b32.xlu0 %v6917, 64
    %v7393 = vpop.permute.xlu0 %7392
    %7394 = vrot.lane.b32.xlu0 %v6920, 64
    %v7395 = vpop.permute.xlu0 %7394
    %7396 = vrot.lane.b32.xlu0 %v6922, 64
    %v7397 = vpop.permute.xlu0 %7396
    %7398 = vrot.lane.b32.xlu0 %v6925, 64
    %v7399 = vpop.permute.xlu0 %7398
    %7400 = vrot.lane.b32.xlu0 %v6927, 64
    %v7401 = vpop.permute.xlu0 %7400
    %7402 = vrot.lane.b32.xlu0 %v6930, 64
    %v7403 = vpop.permute.xlu0 %7402
    %7404 = vrot.lane.b32.xlu0 %v6932, 64
    %v7405 = vpop.permute.xlu0 %7404
    %7406 = vrot.lane.b32.xlu0 %v6935, 64
    %v7407 = vpop.permute.xlu0 %7406
    %7408 = vrot.lane.b32.xlu0 %v6937, 64
    %v7409 = vpop.permute.xlu0 %7408
    %7410 = vrot.lane.b32.xlu0 %v6940, 64
    %v7411 = vpop.permute.xlu0 %7410
    %7412 = vrot.lane.b32.xlu0 %v6942, 64
    %v7413 = vpop.permute.xlu0 %7412
    %7414 = vrot.lane.b32.xlu0 %v6945, 64
    %v7415 = vpop.permute.xlu0 %7414
    %7416 = vrot.lane.b32.xlu0 %v6947, 64
    %v7417 = vpop.permute.xlu0 %7416
    %7418 = vrot.lane.b32.xlu0 %v6950, 64
    %v7419 = vpop.permute.xlu0 %7418
    %7420 = vrot.lane.b32.xlu0 %v6952, 64
    %v7421 = vpop.permute.xlu0 %7420
    %7422 = vrot.lane.b32.xlu0 %v6955, 64
    %v7423 = vpop.permute.xlu0 %7422
    %7424 = vrot.lane.b32.xlu0 %v6957, 64
    %v7425 = vpop.permute.xlu0 %7424
    %7490 = vrot.lane.b32.xlu0 %v6524, 64
    %v7491 = vpop.permute.xlu0 %7490
    %7492 = vrot.lane.b32.xlu0 %v6525, 64
    %v7493 = vpop.permute.xlu0 %7492
    %7494 = vrot.lane.b32.xlu0 %v6527, 64
    %v7495 = vpop.permute.xlu0 %7494
    %7496 = vrot.lane.b32.xlu0 %v6528, 64
    %v7497 = vpop.permute.xlu0 %7496
    %7498 = vrot.lane.b32.xlu0 %v6530, 64
    %v7499 = vpop.permute.xlu0 %7498
    %7500 = vrot.lane.b32.xlu0 %v6531, 64
    %v7501 = vpop.permute.xlu0 %7500
    %7502 = vrot.lane.b32.xlu0 %v6533, 64
    %v7503 = vpop.permute.xlu0 %7502
    %7504 = vrot.lane.b32.xlu0 %v6534, 64
    %v7505 = vpop.permute.xlu0 %7504
    %7506 = vrot.lane.b32.xlu0 %v6536, 64
    %v7507 = vpop.permute.xlu0 %7506
    %7508 = vrot.lane.b32.xlu0 %v6537, 64
    %v7509 = vpop.permute.xlu0 %7508
    %7510 = vrot.lane.b32.xlu0 %v6539, 64
    %v7511 = vpop.permute.xlu0 %7510
    %7512 = vrot.lane.b32.xlu0 %v6540, 64
    %v7513 = vpop.permute.xlu0 %7512
    %7514 = vrot.lane.b32.xlu0 %v6542, 64
    %v7515 = vpop.permute.xlu0 %7514
    %7516 = vrot.lane.b32.xlu0 %v6543, 64
    %v7517 = vpop.permute.xlu0 %7516
    %7518 = vrot.lane.b32.xlu0 %v6545, 64
    %v7519 = vpop.permute.xlu0 %7518
    %7520 = vrot.lane.b32.xlu0 %v6546, 64
    %v7521 = vpop.permute.xlu0 %7520
    %7522 = vrot.lane.b32.xlu0 %v6548, 64
    %v7523 = vpop.permute.xlu0 %7522
    %7524 = vrot.lane.b32.xlu0 %v6549, 64
    %v7525 = vpop.permute.xlu0 %7524
    %7526 = vrot.lane.b32.xlu0 %v6551, 64
    %v7527 = vpop.permute.xlu0 %7526
    %7528 = vrot.lane.b32.xlu0 %v6552, 64
    %v7529 = vpop.permute.xlu0 %7528
    %7530 = vrot.lane.b32.xlu0 %v6554, 64
    %v7531 = vpop.permute.xlu0 %7530
    %7532 = vrot.lane.b32.xlu0 %v6555, 64
    %v7533 = vpop.permute.xlu0 %7532
    %7534 = vrot.lane.b32.xlu0 %v6557, 64
    %v7535 = vpop.permute.xlu0 %7534
    %7536 = vrot.lane.b32.xlu0 %v6558, 64
    %v7537 = vpop.permute.xlu0 %7536
    %7538 = vrot.lane.b32.xlu0 %v6560, 64
    %v7539 = vpop.permute.xlu0 %7538
    %7540 = vrot.lane.b32.xlu0 %v6561, 64
    %v7541 = vpop.permute.xlu0 %7540
    %7542 = vrot.lane.b32.xlu0 %v6563, 64
    %v7543 = vpop.permute.xlu0 %7542
    %7544 = vrot.lane.b32.xlu0 %v6564, 64
    %v7545 = vpop.permute.xlu0 %7544
    %7546 = vrot.lane.b32.xlu0 %v6566, 64
    %v7547 = vpop.permute.xlu0 %7546
    %7548 = vrot.lane.b32.xlu0 %v6567, 64
    %v7549 = vpop.permute.xlu0 %7548
    %7550 = vrot.lane.b32.xlu0 %v6569, 64
    %v7551 = vpop.permute.xlu0 %7550
    %7552 = vrot.lane.b32.xlu0 %v6570, 64
    %v7553 = vpop.permute.xlu0 %7552
    %7554 = vrot.lane.b32.xlu0 %v6578, 64
    %v7555 = vpop.permute.xlu0 %7554
    %7556 = vrot.lane.b32.xlu0 %v6579, 64
    %v7557 = vpop.permute.xlu0 %7556
    %7558 = vrot.lane.b32.xlu0 %v6581, 64
    %v7559 = vpop.permute.xlu0 %7558
    %7560 = vrot.lane.b32.xlu0 %v6582, 64
    %v7561 = vpop.permute.xlu0 %7560
    %7562 = vrot.lane.b32.xlu0 %v6584, 64
    %v7563 = vpop.permute.xlu0 %7562
    %7564 = vrot.lane.b32.xlu0 %v6585, 64
    %v7565 = vpop.permute.xlu0 %7564
    %7566 = vrot.lane.b32.xlu0 %v6587, 64
    %v7567 = vpop.permute.xlu0 %7566
    %7568 = vrot.lane.b32.xlu0 %v6588, 64
    %v7569 = vpop.permute.xlu0 %7568
    %7570 = vrot.lane.b32.xlu0 %v6590, 64
    %v7571 = vpop.permute.xlu0 %7570
    %7572 = vrot.lane.b32.xlu0 %v6591, 64
    %v7573 = vpop.permute.xlu0 %7572
    %7574 = vrot.lane.b32.xlu0 %v6593, 64
    %v7575 = vpop.permute.xlu0 %7574
    %7576 = vrot.lane.b32.xlu0 %v6594, 64
    %v7577 = vpop.permute.xlu0 %7576
    %7578 = vrot.lane.b32.xlu0 %v6596, 64
    %v7579 = vpop.permute.xlu0 %7578
    %7580 = vrot.lane.b32.xlu0 %v6597, 64
    %v7581 = vpop.permute.xlu0 %7580
    %7582 = vrot.lane.b32.xlu0 %v6599, 64
    %v7583 = vpop.permute.xlu0 %7582
    %7584 = vrot.lane.b32.xlu0 %v6600, 64
    %v7585 = vpop.permute.xlu0 %7584
    %7586 = vrot.lane.b32.xlu0 %v6602, 64
    %v7587 = vpop.permute.xlu0 %7586
    %7588 = vrot.lane.b32.xlu0 %v6603, 64
    %v7589 = vpop.permute.xlu0 %7588
    %7590 = vrot.lane.b32.xlu0 %v6605, 64
    %v7591 = vpop.permute.xlu0 %7590
    %7592 = vrot.lane.b32.xlu0 %v6606, 64
    %v7593 = vpop.permute.xlu0 %7592
    %7594 = vrot.lane.b32.xlu0 %v6608, 64
    %v7595 = vpop.permute.xlu0 %7594
    %7596 = vrot.lane.b32.xlu0 %v6609, 64
    %v7597 = vpop.permute.xlu0 %7596
    %7598 = vrot.lane.b32.xlu0 %v6611, 64
    %v7599 = vpop.permute.xlu0 %7598
    %7600 = vrot.lane.b32.xlu0 %v6612, 64
    %v7601 = vpop.permute.xlu0 %7600
    %7602 = vrot.lane.b32.xlu0 %v6614, 64
    %v7603 = vpop.permute.xlu0 %7602
    %7604 = vrot.lane.b32.xlu0 %v6615, 64
    %v7605 = vpop.permute.xlu0 %7604
    %7606 = vrot.lane.b32.xlu0 %v6617, 64
    %v7607 = vpop.permute.xlu0 %7606
    %7608 = vrot.lane.b32.xlu0 %v6618, 64
    %v7609 = vpop.permute.xlu0 %7608
    %7610 = vrot.lane.b32.xlu0 %v6620, 64
    %v7611 = vpop.permute.xlu0 %7610
    %7612 = vrot.lane.b32.xlu0 %v6621, 64
    %v7613 = vpop.permute.xlu0 %7612
    %7614 = vrot.lane.b32.xlu0 %v6623, 64
    %v7615 = vpop.permute.xlu0 %7614
    %7616 = vrot.lane.b32.xlu0 %v6624, 64
    %v7617 = vpop.permute.xlu0 %7616
    %7682 = vrot.lane.b32.xlu0 %v6965, 64
    %v7683 = vpop.permute.xlu0 %7682
    %7684 = vrot.lane.b32.xlu0 %v6967, 64
    %v7685 = vpop.permute.xlu0 %7684
    %7686 = vrot.lane.b32.xlu0 %v6970, 64
    %v7687 = vpop.permute.xlu0 %7686
    %7688 = vrot.lane.b32.xlu0 %v6972, 64
    %v7689 = vpop.permute.xlu0 %7688
    %7690 = vrot.lane.b32.xlu0 %v6975, 64
    %v7691 = vpop.permute.xlu0 %7690
    %7692 = vrot.lane.b32.xlu0 %v6977, 64
    %v7693 = vpop.permute.xlu0 %7692
    %7694 = vrot.lane.b32.xlu0 %v6980, 64
    %v7695 = vpop.permute.xlu0 %7694
    %7696 = vrot.lane.b32.xlu0 %v6982, 64
    %v7697 = vpop.permute.xlu0 %7696
    %7698 = vrot.lane.b32.xlu0 %v6985, 64
    %v7699 = vpop.permute.xlu0 %7698
    %7700 = vrot.lane.b32.xlu0 %v6987, 64
    %v7701 = vpop.permute.xlu0 %7700
    %7702 = vrot.lane.b32.xlu0 %v6990, 64
    %v7703 = vpop.permute.xlu0 %7702
    %7704 = vrot.lane.b32.xlu0 %v6992, 64
    %v7705 = vpop.permute.xlu0 %7704
    %7706 = vrot.lane.b32.xlu0 %v6995, 64
    %v7707 = vpop.permute.xlu0 %7706
    %7708 = vrot.lane.b32.xlu0 %v6997, 64
    %v7709 = vpop.permute.xlu0 %7708
    %7710 = vrot.lane.b32.xlu0 %v7000, 64
    %v7711 = vpop.permute.xlu0 %7710
    %7712 = vrot.lane.b32.xlu0 %v7002, 64
    %v7713 = vpop.permute.xlu0 %7712
    %7714 = vrot.lane.b32.xlu0 %v7005, 64
    %v7715 = vpop.permute.xlu0 %7714
    %7716 = vrot.lane.b32.xlu0 %v7007, 64
    %v7717 = vpop.permute.xlu0 %7716
    %7718 = vrot.lane.b32.xlu0 %v7010, 64
    %v7719 = vpop.permute.xlu0 %7718
    %7720 = vrot.lane.b32.xlu0 %v7012, 64
    %v7721 = vpop.permute.xlu0 %7720
    %7722 = vrot.lane.b32.xlu0 %v7015, 64
    %v7723 = vpop.permute.xlu0 %7722
    %7724 = vrot.lane.b32.xlu0 %v7017, 64
    %v7725 = vpop.permute.xlu0 %7724
    %7726 = vrot.lane.b32.xlu0 %v7020, 64
    %v7727 = vpop.permute.xlu0 %7726
    %7728 = vrot.lane.b32.xlu0 %v7022, 64
    %v7729 = vpop.permute.xlu0 %7728
    %7730 = vrot.lane.b32.xlu0 %v7025, 64
    %v7731 = vpop.permute.xlu0 %7730
    %7732 = vrot.lane.b32.xlu0 %v7027, 64
    %v7733 = vpop.permute.xlu0 %7732
    %7734 = vrot.lane.b32.xlu0 %v7030, 64
    %v7735 = vpop.permute.xlu0 %7734
    %7736 = vrot.lane.b32.xlu0 %v7032, 64
    %v7737 = vpop.permute.xlu0 %7736
    %7738 = vrot.lane.b32.xlu0 %v7035, 64
    %v7739 = vpop.permute.xlu0 %7738
    %7740 = vrot.lane.b32.xlu0 %v7037, 64
    %v7741 = vpop.permute.xlu0 %7740
    %7742 = vrot.lane.b32.xlu0 %v7264, 64
    %v7743 = vpop.permute.xlu0 %7742
    %7744 = vrot.lane.b32.xlu0 %v7266, 64
    %v7745 = vpop.permute.xlu0 %7744
    %7746 = vrot.lane.b32.xlu0 %v7045, 64
    %v7747 = vpop.permute.xlu0 %7746
    %7748 = vrot.lane.b32.xlu0 %v7047, 64
    %v7749 = vpop.permute.xlu0 %7748
    %7750 = vrot.lane.b32.xlu0 %v7050, 64
    %v7751 = vpop.permute.xlu0 %7750
    %7752 = vrot.lane.b32.xlu0 %v7052, 64
    %v7753 = vpop.permute.xlu0 %7752
    %7754 = vrot.lane.b32.xlu0 %v7055, 64
    %v7755 = vpop.permute.xlu0 %7754
    %7756 = vrot.lane.b32.xlu0 %v7057, 64
    %v7757 = vpop.permute.xlu0 %7756
    %7758 = vrot.lane.b32.xlu0 %v7060, 64
    %v7759 = vpop.permute.xlu0 %7758
    %7760 = vrot.lane.b32.xlu0 %v7062, 64
    %v7761 = vpop.permute.xlu0 %7760
    %7762 = vrot.lane.b32.xlu0 %v7065, 64
    %v7763 = vpop.permute.xlu0 %7762
    %7764 = vrot.lane.b32.xlu0 %v7067, 64
    %v7765 = vpop.permute.xlu0 %7764
    %7766 = vrot.lane.b32.xlu0 %v7070, 64
    %v7767 = vpop.permute.xlu0 %7766
    %7768 = vrot.lane.b32.xlu0 %v7072, 64
    %v7769 = vpop.permute.xlu0 %7768
    %7770 = vrot.lane.b32.xlu0 %v7075, 64
    %v7771 = vpop.permute.xlu0 %7770
    %7772 = vrot.lane.b32.xlu0 %v7077, 64
    %v7773 = vpop.permute.xlu0 %7772
    %7774 = vrot.lane.b32.xlu0 %v7080, 64
    %v7775 = vpop.permute.xlu0 %7774
    %7776 = vrot.lane.b32.xlu0 %v7082, 64
    %v7777 = vpop.permute.xlu0 %7776
    %7778 = vrot.lane.b32.xlu0 %v7085, 64
    %v7779 = vpop.permute.xlu0 %7778
    %7780 = vrot.lane.b32.xlu0 %v7087, 64
    %v7781 = vpop.permute.xlu0 %7780
    %7782 = vrot.lane.b32.xlu0 %v7090, 64
    %v7783 = vpop.permute.xlu0 %7782
    %7784 = vrot.lane.b32.xlu0 %v7092, 64
    %v7785 = vpop.permute.xlu0 %7784
    %7786 = vrot.lane.b32.xlu0 %v7095, 64
    %v7787 = vpop.permute.xlu0 %7786
    %7788 = vrot.lane.b32.xlu0 %v7097, 64
    %v7789 = vpop.permute.xlu0 %7788
    %7790 = vrot.lane.b32.xlu0 %v7100, 64
    %v7791 = vpop.permute.xlu0 %7790
    %7792 = vrot.lane.b32.xlu0 %v7102, 64
    %v7793 = vpop.permute.xlu0 %7792
    %7794 = vrot.lane.b32.xlu0 %v7105, 64
    %v7795 = vpop.permute.xlu0 %7794
    %7796 = vrot.lane.b32.xlu0 %v7107, 64
    %v7797 = vpop.permute.xlu0 %7796
    %7798 = vrot.lane.b32.xlu0 %v7110, 64
    %v7799 = vpop.permute.xlu0 %7798
    %7800 = vrot.lane.b32.xlu0 %v7112, 64
    %v7801 = vpop.permute.xlu0 %7800
    %7802 = vrot.lane.b32.xlu0 %v7115, 64
    %v7803 = vpop.permute.xlu0 %7802
    %7804 = vrot.lane.b32.xlu0 %v7117, 64
    %v7805 = vpop.permute.xlu0 %7804
    %7806 = vrot.lane.b32.xlu0 %v7269, 64
    %v7807 = vpop.permute.xlu0 %7806
    %7808 = vrot.lane.b32.xlu0 %v7271, 64
    %v7809 = vpop.permute.xlu0 %7808
    %7874 = vrot.lane.b32.xlu0 %v7190, 64
    %v7875 = vpop.permute.xlu0 %7874
    %7876 = vrot.lane.b32.xlu0 %v7192, 64
    %v7877 = vpop.permute.xlu0 %7876
    %7878 = vrot.lane.b32.xlu0 %v7280, 64
    %v7879 = vpop.permute.xlu0 %7878
    %7880 = vrot.lane.b32.xlu0 %v7282, 64
    %v7881 = vpop.permute.xlu0 %7880
    %7882 = vrot.lane.b32.xlu0 %v7195, 64
    %v7883 = vpop.permute.xlu0 %7882
    %7884 = vrot.lane.b32.xlu0 %v7197, 64
    %v7885 = vpop.permute.xlu0 %7884
    %7886 = vrot.lane.b32.xlu0 %v7285, 64
    %v7887 = vpop.permute.xlu0 %7886
    %7888 = vrot.lane.b32.xlu0 %v7287, 64
    %v7889 = vpop.permute.xlu0 %7888
    %v7898 = vsel %vm2640, %v6521, %v7299
    %v7899 = vsel %vm2640, %v6522, %v7301
    %v7900 = vsel %vm2640, %v6524, %v7303
    %v7901 = vsel %vm2640, %v6525, %v7305
    %v7902 = vsel %vm2640, %v6527, %v7307
    %v7903 = vsel %vm2640, %v6528, %v7309
    %v7904 = vsel %vm2640, %v6530, %v7311
    %v7905 = vsel %vm2640, %v6531, %v7313
    %v7906 = vsel %vm2640, %v6533, %v7315
    %v7907 = vsel %vm2640, %v6534, %v7317
    %v7908 = vsel %vm2640, %v6536, %v7319
    %v7909 = vsel %vm2640, %v6537, %v7321
    %v7910 = vsel %vm2640, %v6539, %v7323
    %v7911 = vsel %vm2640, %v6540, %v7325
    %v7912 = vsel %vm2640, %v6542, %v7327
    %v7913 = vsel %vm2640, %v6543, %v7329
    %v7914 = vsel %vm2640, %v6545, %v7331
    %v7915 = vsel %vm2640, %v6546, %v7333
    %v7916 = vsel %vm2640, %v6548, %v7335
    %v7917 = vsel %vm2640, %v6549, %v7337
    %v7918 = vsel %vm2640, %v6551, %v7339
    %v7919 = vsel %vm2640, %v6552, %v7341
    %v7920 = vsel %vm2640, %v6554, %v7343
    %v7921 = vsel %vm2640, %v6555, %v7345
    %v7922 = vsel %vm2640, %v6557, %v7347
    %v7923 = vsel %vm2640, %v6558, %v7349
    %v7924 = vsel %vm2640, %v6560, %v7351
    %v7925 = vsel %vm2640, %v6561, %v7353
    %v7926 = vsel %vm2640, %v6563, %v7355
    %v7927 = vsel %vm2640, %v6564, %v7357
    %v7928 = vsel %vm2640, %v6566, %v7359
    %v7929 = vsel %vm2640, %v6567, %v7361
    %v7930 = vsel %vm2640, %v6575, %v7363
    %v7931 = vsel %vm2640, %v6576, %v7365
    %v7932 = vsel %vm2640, %v6578, %v7367
    %v7933 = vsel %vm2640, %v6579, %v7369
    %v7934 = vsel %vm2640, %v6581, %v7371
    %v7935 = vsel %vm2640, %v6582, %v7373
    %v7936 = vsel %vm2640, %v6584, %v7375
    %v7937 = vsel %vm2640, %v6585, %v7377
    %v7938 = vsel %vm2640, %v6587, %v7379
    %v7939 = vsel %vm2640, %v6588, %v7381
    %v7940 = vsel %vm2640, %v6590, %v7383
    %v7941 = vsel %vm2640, %v6591, %v7385
    %v7942 = vsel %vm2640, %v6593, %v7387
    %v7943 = vsel %vm2640, %v6594, %v7389
    %v7944 = vsel %vm2640, %v6596, %v7391
    %v7945 = vsel %vm2640, %v6597, %v7393
    %v7946 = vsel %vm2640, %v6599, %v7395
    %v7947 = vsel %vm2640, %v6600, %v7397
    %v7948 = vsel %vm2640, %v6602, %v7399
    %v7949 = vsel %vm2640, %v6603, %v7401
    %v7950 = vsel %vm2640, %v6605, %v7403
    %v7951 = vsel %vm2640, %v6606, %v7405
    %v7952 = vsel %vm2640, %v6608, %v7407
    %v7953 = vsel %vm2640, %v6609, %v7409
    %v7954 = vsel %vm2640, %v6611, %v7411
    %v7955 = vsel %vm2640, %v6612, %v7413
    %v7956 = vsel %vm2640, %v6614, %v7415
    %v7957 = vsel %vm2640, %v6615, %v7417
    %v7958 = vsel %vm2640, %v6617, %v7419
    %v7959 = vsel %vm2640, %v6618, %v7421
    %v7960 = vsel %vm2640, %v6620, %v7423
    %v7961 = vsel %vm2640, %v6621, %v7425
    %v7962 = vsel %vm2640, %v6960, %v7491
    %v7963 = vsel %vm2640, %v6962, %v7493
    %v7964 = vsel %vm2640, %v6965, %v7495
    %v7965 = vsel %vm2640, %v6967, %v7497
    %v7966 = vsel %vm2640, %v6970, %v7499
    %v7967 = vsel %vm2640, %v6972, %v7501
    %v7968 = vsel %vm2640, %v6975, %v7503
    %v7969 = vsel %vm2640, %v6977, %v7505
    %v7970 = vsel %vm2640, %v6980, %v7507
    %v7971 = vsel %vm2640, %v6982, %v7509
    %v7972 = vsel %vm2640, %v6985, %v7511
    %v7973 = vsel %vm2640, %v6987, %v7513
    %v7974 = vsel %vm2640, %v6990, %v7515
    %v7975 = vsel %vm2640, %v6992, %v7517
    %v7976 = vsel %vm2640, %v6995, %v7519
    %v7977 = vsel %vm2640, %v6997, %v7521
    %v7978 = vsel %vm2640, %v7000, %v7523
    %v7979 = vsel %vm2640, %v7002, %v7525
    %v7980 = vsel %vm2640, %v7005, %v7527
    %v7981 = vsel %vm2640, %v7007, %v7529
    %v7982 = vsel %vm2640, %v7010, %v7531
    %v7983 = vsel %vm2640, %v7012, %v7533
    %v7984 = vsel %vm2640, %v7015, %v7535
    %v7985 = vsel %vm2640, %v7017, %v7537
    %v7986 = vsel %vm2640, %v7020, %v7539
    %v7987 = vsel %vm2640, %v7022, %v7541
    %v7988 = vsel %vm2640, %v7025, %v7543
    %v7989 = vsel %vm2640, %v7027, %v7545
    %v7990 = vsel %vm2640, %v7030, %v7547
    %v7991 = vsel %vm2640, %v7032, %v7549
    %v7992 = vsel %vm2640, %v7035, %v7551
    %v7993 = vsel %vm2640, %v7037, %v7553
    %v7994 = vsel %vm2640, %v7040, %v7555
    %v7995 = vsel %vm2640, %v7042, %v7557
    %v7996 = vsel %vm2640, %v7045, %v7559
    %v7997 = vsel %vm2640, %v7047, %v7561
    %v7998 = vsel %vm2640, %v7050, %v7563
    %v7999 = vsel %vm2640, %v7052, %v7565
    %v8000 = vsel %vm2640, %v7055, %v7567
    %v8001 = vsel %vm2640, %v7057, %v7569
    %v8002 = vsel %vm2640, %v7060, %v7571
    %v8003 = vsel %vm2640, %v7062, %v7573
    %v8004 = vsel %vm2640, %v7065, %v7575
    %v8005 = vsel %vm2640, %v7067, %v7577
    %v8006 = vsel %vm2640, %v7070, %v7579
    %v8007 = vsel %vm2640, %v7072, %v7581
    %v8008 = vsel %vm2640, %v7075, %v7583
    %v8009 = vsel %vm2640, %v7077, %v7585
    %v8010 = vsel %vm2640, %v7080, %v7587
    %v8011 = vsel %vm2640, %v7082, %v7589
    %v8012 = vsel %vm2640, %v7085, %v7591
    %v8013 = vsel %vm2640, %v7087, %v7593
    %v8014 = vsel %vm2640, %v7090, %v7595
    %v8015 = vsel %vm2640, %v7092, %v7597
    %v8016 = vsel %vm2640, %v7095, %v7599
    %v8017 = vsel %vm2640, %v7097, %v7601
    %v8018 = vsel %vm2640, %v7100, %v7603
    %v8019 = vsel %vm2640, %v7102, %v7605
    %v8020 = vsel %vm2640, %v7105, %v7607
    %v8021 = vsel %vm2640, %v7107, %v7609
    %v8022 = vsel %vm2640, %v7110, %v7611
    %v8023 = vsel %vm2640, %v7112, %v7613
    %v8024 = vsel %vm2640, %v7115, %v7615
    %v8025 = vsel %vm2640, %v7117, %v7617
    %v8026 = vsel %vm2640, %v6805, %v7683
    %v8027 = vsel %vm2640, %v6807, %v7685
    %v8028 = vsel %vm2640, %v6810, %v7687
    %v8029 = vsel %vm2640, %v6812, %v7689
    %v8030 = vsel %vm2640, %v6815, %v7691
    %v8031 = vsel %vm2640, %v6817, %v7693
    %v8032 = vsel %vm2640, %v6820, %v7695
    %v8033 = vsel %vm2640, %v6822, %v7697
    %v8034 = vsel %vm2640, %v6825, %v7699
    %v8035 = vsel %vm2640, %v6827, %v7701
    %v8036 = vsel %vm2640, %v6830, %v7703
    %v8037 = vsel %vm2640, %v6832, %v7705
    %v8038 = vsel %vm2640, %v6835, %v7707
    %v8039 = vsel %vm2640, %v6837, %v7709
    %v8040 = vsel %vm2640, %v6840, %v7711
    %v8041 = vsel %vm2640, %v6842, %v7713
    %v8042 = vsel %vm2640, %v6845, %v7715
    %v8043 = vsel %vm2640, %v6847, %v7717
    %v8044 = vsel %vm2640, %v6850, %v7719
    %v8045 = vsel %vm2640, %v6852, %v7721
    %v8046 = vsel %vm2640, %v6855, %v7723
    %v8047 = vsel %vm2640, %v6857, %v7725
    %v8048 = vsel %vm2640, %v6860, %v7727
    %v8049 = vsel %vm2640, %v6862, %v7729
    %v8050 = vsel %vm2640, %v6865, %v7731
    %v8051 = vsel %vm2640, %v6867, %v7733
    %v8052 = vsel %vm2640, %v6870, %v7735
    %v8053 = vsel %vm2640, %v6872, %v7737
    %v8054 = vsel %vm2640, %v6875, %v7739
    %v8055 = vsel %vm2640, %v6877, %v7741
    %v8056 = vsel %vm2640, %v7190, %v7743
    %v8057 = vsel %vm2640, %v7192, %v7745
    %v8058 = vsel %vm2640, %v6885, %v7747
    %v8059 = vsel %vm2640, %v6887, %v7749
    %v8060 = vsel %vm2640, %v6890, %v7751
    %v8061 = vsel %vm2640, %v6892, %v7753
    %v8062 = vsel %vm2640, %v6895, %v7755
    %v8063 = vsel %vm2640, %v6897, %v7757
    %v8064 = vsel %vm2640, %v6900, %v7759
    %v8065 = vsel %vm2640, %v6902, %v7761
    %v8066 = vsel %vm2640, %v6905, %v7763
    %v8067 = vsel %vm2640, %v6907, %v7765
    %v8068 = vsel %vm2640, %v6910, %v7767
    %v8069 = vsel %vm2640, %v6912, %v7769
    %v8070 = vsel %vm2640, %v6915, %v7771
    %v8071 = vsel %vm2640, %v6917, %v7773
    %v8072 = vsel %vm2640, %v6920, %v7775
    %v8073 = vsel %vm2640, %v6922, %v7777
    %v8074 = vsel %vm2640, %v6925, %v7779
    %v8075 = vsel %vm2640, %v6927, %v7781
    %v8076 = vsel %vm2640, %v6930, %v7783
    %v8077 = vsel %vm2640, %v6932, %v7785
    %v8078 = vsel %vm2640, %v6935, %v7787
    %v8079 = vsel %vm2640, %v6937, %v7789
    %v8080 = vsel %vm2640, %v6940, %v7791
    %v8081 = vsel %vm2640, %v6942, %v7793
    %v8082 = vsel %vm2640, %v6945, %v7795
    %v8083 = vsel %vm2640, %v6947, %v7797
    %v8084 = vsel %vm2640, %v6950, %v7799
    %v8085 = vsel %vm2640, %v6952, %v7801
    %v8086 = vsel %vm2640, %v6955, %v7803
    %v8087 = vsel %vm2640, %v6957, %v7805
    %v8088 = vsel %vm2640, %v7195, %v7807
    %v8089 = vsel %vm2640, %v7197, %v7809
    %v8090 = vsel %vm2640, %v6569, %v7875
    %v8091 = vsel %vm2640, %v6570, %v7877
    %v8092 = vsel %vm2640, %v6572, %v7879
    %v8093 = vsel %vm2640, %v6573, %v7881
    %v8094 = vsel %vm2640, %v6623, %v7883
    %v8095 = vsel %vm2640, %v6624, %v7885
    %v8096 = vsel %vm2640, %v6626, %v7887
    %v8097 = vsel %vm2640, %v6627, %v7889
    %v8099 = vlaneseq
    %v8100 = vshrl.u32 %v8099, 7
    %v8101 = vsub.s32 0, %v8100
    %v8102 = vrot.slane %v6701, %v8101
    %v8104 = vsel %vm2640, %v6970, 0
    %v8106 = vsel %vm2640, %v6972, 0
    %v8108 = vsel %vm2640, %v6975, 0
    %v8110 = vsel %vm2640, %v6977, 0
    %v8112 = vsel %vm2640, %v6980, 0
    %v8114 = vsel %vm2640, %v6982, 0
    %v8116 = vsel %vm2640, %v6985, 0
    %v8118 = vsel %vm2640, %v6987, 0
    %v8120 = vsel %vm2640, %v6990, 0
    %v8122 = vsel %vm2640, %v6992, 0
    %v8124 = vsel %vm2640, %v6995, 0
    %v8126 = vsel %vm2640, %v6997, 0
    %v8128 = vsel %vm2640, %v7000, 0
    %v8130 = vsel %vm2640, %v7002, 0
    %v8132 = vsel %vm2640, %v7005, 0
    %v8134 = vsel %vm2640, %v7007, 0
    %v8136 = vsel %vm2640, %v7010, 0
    %v8138 = vsel %vm2640, %v7012, 0
    %v8140 = vsel %vm2640, %v7015, 0
    %v8142 = vsel %vm2640, %v7017, 0
    %v8144 = vsel %vm2640, %v7020, 0
    %v8146 = vsel %vm2640, %v7022, 0
    %v8148 = vsel %vm2640, %v7025, 0
    %v8150 = vsel %vm2640, %v7027, 0
    %v8152 = vsel %vm2640, %v7030, 0
    %v8154 = vsel %vm2640, %v7032, 0
    %v8156 = vsel %vm2640, %v7035, 0
    %v8158 = vsel %vm2640, %v7037, 0
    %v8160 = vsel %vm2640, %v7264, 0
    %v8162 = vsel %vm2640, %v7266, 0
    %v8164 = vsel %vm2640, %v7290, 0
    %v8166 = vsel %vm2640, %v7292, 0
    %v8168 = vsel %vm2640, %v7050, 0
    %v8170 = vsel %vm2640, %v7052, 0
    %v8172 = vsel %vm2640, %v7055, 0
    %v8174 = vsel %vm2640, %v7057, 0
    %v8176 = vsel %vm2640, %v7060, 0
    %v8178 = vsel %vm2640, %v7062, 0
    %v8180 = vsel %vm2640, %v7065, 0
    %v8182 = vsel %vm2640, %v7067, 0
    %v8184 = vsel %vm2640, %v7070, 0
    %v8186 = vsel %vm2640, %v7072, 0
    %v8188 = vsel %vm2640, %v7075, 0
    %v8190 = vsel %vm2640, %v7077, 0
    %v8192 = vsel %vm2640, %v7080, 0
    %v8194 = vsel %vm2640, %v7082, 0
    %v8196 = vsel %vm2640, %v7085, 0
    %v8198 = vsel %vm2640, %v7087, 0
    %v8200 = vsel %vm2640, %v7090, 0
    %v8202 = vsel %vm2640, %v7092, 0
    %v8204 = vsel %vm2640, %v7095, 0
    %v8206 = vsel %vm2640, %v7097, 0
    %v8208 = vsel %vm2640, %v7100, 0
    %v8210 = vsel %vm2640, %v7102, 0
    %v8212 = vsel %vm2640, %v7105, 0
    %v8214 = vsel %vm2640, %v7107, 0
    %v8216 = vsel %vm2640, %v7110, 0
    %v8218 = vsel %vm2640, %v7112, 0
    %v8220 = vsel %vm2640, %v7115, 0
    %v8222 = vsel %vm2640, %v7117, 0
    %v8224 = vsel %vm2640, %v7269, 0
    %v8226 = vsel %vm2640, %v7271, 0
    %v8228 = vsel %vm2640, %v7295, 0
    %v8230 = vsel %vm2640, %v7297, 0
    %8232 = vmatprep.subr.mxu0 0.0
    %8233 = vmatpush1.msra.mxu0 %v6629
    %8234 = vmatprep.subr.mxu0 0.0
    %8235 = vmatpush1.msra.mxu0 %v6630
    %8236 = vmatprep.subr.mxu0 0.0
    %8237 = vmatpush1.msra.mxu0 %v6631
    %8238 = vmatprep.subr.mxu0 0.0
    %8239 = vmatpush1.msra.mxu0 %v6632
    %8240 = vmatprep.subr.mxu0 0.0
    %8241 = vmatpush1.msra.mxu0 %v6633
    %8242 = vmatprep.subr.mxu0 0.0
    %8243 = vmatpush1.msra.mxu0 %v6634
    %8244 = vmatprep.subr.mxu0 0.0
    %8245 = vmatpush1.msra.mxu0 %v6635
    %8246 = vmatprep.subr.mxu0 0.0
    %8247 = vmatpush1.msra.mxu0 %v6636
    %8248 = vmatprep.subr.mxu0 0.0
    %8249 = vmatpush1.msra.mxu0 %v6637
    %8250 = vmatprep.subr.mxu0 0.0
    %8251 = vmatpush1.msra.mxu0 %v6638
    %8252 = vmatprep.subr.mxu0 0.0
    %8253 = vmatpush1.msra.mxu0 %v6639
    %8254 = vmatprep.subr.mxu0 0.0
    %8255 = vmatpush1.msra.mxu0 %v6640
    %8256 = vmatprep.subr.mxu0 0.0
    %8257 = vmatpush1.msra.mxu0 %v6641
    %8258 = vmatprep.subr.mxu0 0.0
    %8259 = vmatpush1.msra.mxu0 %v6642
    %8260 = vmatprep.subr.mxu0 0.0
    %8261 = vmatpush1.msra.mxu0 %v6643
    %8262 = vmatprep.subr.mxu0 0.0
    %8263 = vmatpush1.msra.mxu0 %v6644
    %8264 = vmatprep.subr.mxu0 0.0
    %8265 = vmatpush1.msra.mxu0 %v6645
    %8266 = vmatprep.subr.mxu0 0.0
    %8267 = vmatpush1.msra.mxu0 %v6646
    %8268 = vmatprep.subr.mxu0 0.0
    %8269 = vmatpush1.msra.mxu0 %v6647
    %8270 = vmatprep.subr.mxu0 0.0
    %8271 = vmatpush1.msra.mxu0 %v6648
    %8272 = vmatprep.subr.mxu0 0.0
    %8273 = vmatpush1.msra.mxu0 %v6649
    %8274 = vmatprep.subr.mxu0 0.0
    %8275 = vmatpush1.msra.mxu0 %v6650
    %8276 = vmatprep.subr.mxu0 0.0
    %8277 = vmatpush1.msra.mxu0 %v6651
    %8278 = vmatprep.subr.mxu0 0.0
    %8279 = vmatpush1.msra.mxu0 %v6652
    %8280 = vmatprep.subr.mxu0 0.0
    %8281 = vmatpush1.msra.mxu0 %v6653
    %8282 = vmatprep.subr.mxu0 0.0
    %8283 = vmatpush1.msra.mxu0 %v6654
    %8284 = vmatprep.subr.mxu0 0.0
    %8285 = vmatpush1.msra.mxu0 %v6655
    %8286 = vmatprep.subr.mxu0 0.0
    %8287 = vmatpush1.msra.mxu0 %v6656
    %8288 = vmatprep.subr.mxu0 0.0
    %8289 = vmatpush1.msra.mxu0 %v6657
    %8290 = vmatprep.subr.mxu0 0.0
    %8291 = vmatpush1.msra.mxu0 %v6658
    %8292 = vmatprep.subr.mxu0 0.0
    %8293 = vmatpush1.msra.mxu0 %v6659
    %8294 = vmatprep.subr.mxu0 0.0
    %8295 = vmatpush1.msra.mxu0 %v6660
    %8296 = vmatprep.mubr.f32.mxu0 %v7962
    %8297 = vmatmul.mubr.f32.gmra.mrb[0].mxu0 %v7898
    %v8298 = vpop.f32.mrb[0].mxu0
    %v8299 = vadd.f32 %v8102, %v8298
    %v8300 = vpop.f32.mrb[0].mxu0
    %8301 = vmatprep.mubr.f32.mxu0 %v7963
    %8302 = vmatmul.mubr.f32.gmra.mrb[0].mxu0 %v7899
    %v8303 = vpop.f32.mrb[0].mxu0
    %v8304 = vadd.f32 %v8102, %v8303
    %v8305 = vpop.f32.mrb[0].mxu0
    %8306 = vmatprep.mubr.f32.mxu0 %v7964
    %8307 = vmatmul.mubr.f32.gmra.mrb[0].mxu0 %v7900
    %v8308 = vpop.f32.mrb[0].mxu0
    %v8309 = vadd.f32 %v8102, %v8308
    %v8310 = vpop.f32.mrb[0].mxu0
    %8311 = vmatprep.mubr.f32.mxu0 %v7965
    %8312 = vmatmul.mubr.f32.gmra.mrb[0].mxu0 %v7901
    %v8313 = vpop.f32.mrb[0].mxu0
    %v8314 = vadd.f32 %v8102, %v8313
    %v8315 = vpop.f32.mrb[0].mxu0
    %8316 = vmatprep.mubr.f32.mxu0 %v7966
    %8317 = vmatmul.mubr.f32.gmra.mrb[0].mxu0 %v7902
    %v8318 = vpop.f32.mrb[0].mxu0
    %v8319 = vadd.f32 %v8102, %v8318
    %v8320 = vpop.f32.mrb[0].mxu0
    %8321 = vmatprep.mubr.f32.mxu0 %v7967
    %8322 = vmatmul.mubr.f32.gmra.mrb[0].mxu0 %v7903
    %v8323 = vpop.f32.mrb[0].mxu0
    %v8324 = vadd.f32 %v8102, %v8323
    %v8325 = vpop.f32.mrb[0].mxu0
    %8326 = vmatprep.mubr.f32.mxu0 %v7968
    %8327 = vmatmul.mubr.f32.gmra.mrb[0].mxu0 %v7904
    %v8328 = vpop.f32.mrb[0].mxu0
    %v8329 = vadd.f32 %v8102, %v8328
    %v8330 = vpop.f32.mrb[0].mxu0
    %8331 = vmatprep.mubr.f32.mxu0 %v7969
    %8332 = vmatmul.mubr.f32.gmra.mrb[0].mxu0 %v7905
    %v8333 = vpop.f32.mrb[0].mxu0
    %v8334 = vadd.f32 %v8102, %v8333
    %v8335 = vpop.f32.mrb[0].mxu0
    %8336 = vmatprep.mubr.f32.mxu0 %v7970
    %8337 = vmatmul.mubr.f32.gmra.mrb[0].mxu0 %v7906
    %v8338 = vpop.f32.mrb[0].mxu0
    %v8339 = vadd.f32 %v8102, %v8338
    %v8340 = vpop.f32.mrb[0].mxu0
    %8341 = vmatprep.mubr.f32.mxu0 %v7971
    %8342 = vmatmul.mubr.f32.gmra.mrb[0].mxu0 %v7907
    %v8343 = vpop.f32.mrb[0].mxu0
    %v8344 = vadd.f32 %v8102, %v8343
    %v8345 = vpop.f32.mrb[0].mxu0
    %8346 = vmatprep.mubr.f32.mxu0 %v7972
    %8347 = vmatmul.mubr.f32.gmra.mrb[0].mxu0 %v7908
    %v8348 = vpop.f32.mrb[0].mxu0
    %v8349 = vadd.f32 %v8102, %v8348
    %v8350 = vpop.f32.mrb[0].mxu0
    %8351 = vmatprep.mubr.f32.mxu0 %v7973
    %8352 = vmatmul.mubr.f32.gmra.mrb[0].mxu0 %v7909
    %v8353 = vpop.f32.mrb[0].mxu0
    %v8354 = vadd.f32 %v8102, %v8353
    %v8355 = vpop.f32.mrb[0].mxu0
    %8356 = vmatprep.mubr.f32.mxu0 %v7974
    %8357 = vmatmul.mubr.f32.gmra.mrb[0].mxu0 %v7910
    %v8358 = vpop.f32.mrb[0].mxu0
    %v8359 = vadd.f32 %v8102, %v8358
    %v8360 = vpop.f32.mrb[0].mxu0
    %8361 = vmatprep.mubr.f32.mxu0 %v7975
    %8362 = vmatmul.mubr.f32.gmra.mrb[0].mxu0 %v7911
    %v8363 = vpop.f32.mrb[0].mxu0
    %v8364 = vadd.f32 %v8102, %v8363
    %v8365 = vpop.f32.mrb[0].mxu0
    %8366 = vmatprep.mubr.f32.mxu0 %v7976
    %8367 = vmatmul.mubr.f32.gmra.mrb[0].mxu0 %v7912
    %v8368 = vpop.f32.mrb[0].mxu0
    %v8369 = vadd.f32 %v8102, %v8368
    %v8370 = vpop.f32.mrb[0].mxu0
    %8371 = vmatprep.mubr.f32.mxu0 %v7977
    %8372 = vmatmul.mubr.f32.gmra.mrb[0].mxu0 %v7913
    %v8373 = vpop.f32.mrb[0].mxu0
    %v8374 = vadd.f32 %v8102, %v8373
    %v8375 = vpop.f32.mrb[0].mxu0
    %8376 = vmatprep.mubr.f32.mxu0 %v7978
    %8377 = vmatmul.mubr.f32.gmra.mrb[0].mxu0 %v7914
    %v8378 = vpop.f32.mrb[0].mxu0
    %v8379 = vadd.f32 %v8102, %v8378
    %v8380 = vpop.f32.mrb[0].mxu0
    %8381 = vmatprep.mubr.f32.mxu0 %v7979
    %8382 = vmatmul.mubr.f32.gmra.mrb[0].mxu0 %v7915
    %v8383 = vpop.f32.mrb[0].mxu0
    %v8384 = vadd.f32 %v8102, %v8383
    %v8385 = vpop.f32.mrb[0].mxu0
    %8386 = vmatprep.mubr.f32.mxu0 %v7980
    %8387 = vmatmul.mubr.f32.gmra.mrb[0].mxu0 %v7916
    %v8388 = vpop.f32.mrb[0].mxu0
    %v8389 = vadd.f32 %v8102, %v8388
    %v8390 = vpop.f32.mrb[0].mxu0
    %8391 = vmatprep.mubr.f32.mxu0 %v7981
    %8392 = vmatmul.mubr.f32.gmra.mrb[0].mxu0 %v7917
    %v8393 = vpop.f32.mrb[0].mxu0
    %v8394 = vadd.f32 %v8102, %v8393
    %v8395 = vpop.f32.mrb[0].mxu0
    %8396 = vmatprep.mubr.f32.mxu0 %v7982
    %8397 = vmatmul.mubr.f32.gmra.mrb[0].mxu0 %v7918
    %v8398 = vpop.f32.mrb[0].mxu0
    %v8399 = vadd.f32 %v8102, %v8398
    %v8400 = vpop.f32.mrb[0].mxu0
    %8401 = vmatprep.mubr.f32.mxu0 %v7983
    %8402 = vmatmul.mubr.f32.gmra.mrb[0].mxu0 %v7919
    %v8403 = vpop.f32.mrb[0].mxu0
    %v8404 = vadd.f32 %v8102, %v8403
    %v8405 = vpop.f32.mrb[0].mxu0
    %8406 = vmatprep.mubr.f32.mxu0 %v7984
    %8407 = vmatmul.mubr.f32.gmra.mrb[0].mxu0 %v7920
    %v8408 = vpop.f32.mrb[0].mxu0
    %v8409 = vadd.f32 %v8102, %v8408
    %v8410 = vpop.f32.mrb[0].mxu0
    %8411 = vmatprep.mubr.f32.mxu0 %v7985
    %8412 = vmatmul.mubr.f32.gmra.mrb[0].mxu0 %v7921
    %v8413 = vpop.f32.mrb[0].mxu0
    %v8414 = vadd.f32 %v8102, %v8413
    %v8415 = vpop.f32.mrb[0].mxu0
    %8416 = vmatprep.mubr.f32.mxu0 %v7986
    %8417 = vmatmul.mubr.f32.gmra.mrb[0].mxu0 %v7922
    %v8418 = vpop.f32.mrb[0].mxu0
    %v8419 = vadd.f32 %v8102, %v8418
    %v8420 = vpop.f32.mrb[0].mxu0
    %8421 = vmatprep.mubr.f32.mxu0 %v7987
    %8422 = vmatmul.mubr.f32.gmra.mrb[0].mxu0 %v7923
    %v8423 = vpop.f32.mrb[0].mxu0
    %v8424 = vadd.f32 %v8102, %v8423
    %v8425 = vpop.f32.mrb[0].mxu0
    %8426 = vmatprep.mubr.f32.mxu0 %v7988
    %8427 = vmatmul.mubr.f32.gmra.mrb[0].mxu0 %v7924
    %v8428 = vpop.f32.mrb[0].mxu0
    %v8429 = vadd.f32 %v8102, %v8428
    %v8430 = vpop.f32.mrb[0].mxu0
    %8431 = vmatprep.mubr.f32.mxu0 %v7989
    %8432 = vmatmul.mubr.f32.gmra.mrb[0].mxu0 %v7925
    %v8433 = vpop.f32.mrb[0].mxu0
    %v8434 = vadd.f32 %v8102, %v8433
    %v8435 = vpop.f32.mrb[0].mxu0
    %8436 = vmatprep.mubr.f32.mxu0 %v7990
    %8437 = vmatmul.mubr.f32.gmra.mrb[0].mxu0 %v7926
    %v8438 = vpop.f32.mrb[0].mxu0
    %v8439 = vadd.f32 %v8102, %v8438
    %v8440 = vpop.f32.mrb[0].mxu0
    %8441 = vmatprep.mubr.f32.mxu0 %v7991
    %8442 = vmatmul.mubr.f32.gmra.mrb[0].mxu0 %v7927
    %v8443 = vpop.f32.mrb[0].mxu0
    %v8444 = vadd.f32 %v8102, %v8443
    %v8445 = vpop.f32.mrb[0].mxu0
    %8446 = vmatprep.mubr.f32.mxu0 %v7992
    %8447 = vmatmul.mubr.f32.gmra.mrb[0].mxu0 %v7928
    %v8448 = vpop.f32.mrb[0].mxu0
    %v8449 = vadd.f32 %v8102, %v8448
    %v8450 = vpop.f32.mrb[0].mxu0
    %8451 = vmatprep.mubr.f32.mxu0 %v7993
    %8452 = vmatmul.mubr.f32.gmra.mrb[0].mxu0 %v7929
    %v8453 = vpop.f32.mrb[0].mxu0
    %v8454 = vadd.f32 %v8102, %v8453
    %v8455 = vpop.f32.mrb[0].mxu0
    %8456 = vmatprep.mubr.f32.mxu0 %v7994
    %8457 = vmatmul.mubr.f32.gmra.mrb[0].mxu0 %v7930
    %v8458 = vpop.f32.mrb[0].mxu0
    %v8459 = vadd.f32 %v8102, %v8458
    %v8460 = vpop.f32.mrb[0].mxu0
    %8461 = vmatprep.mubr.f32.mxu0 %v7995
    %8462 = vmatmul.mubr.f32.gmra.mrb[0].mxu0 %v7931
    %v8463 = vpop.f32.mrb[0].mxu0
    %v8464 = vadd.f32 %v8102, %v8463
    %v8465 = vpop.f32.mrb[0].mxu0
    %8466 = vmatprep.mubr.f32.mxu0 %v7996
    %8467 = vmatmul.mubr.f32.gmra.mrb[0].mxu0 %v7932
    %v8468 = vpop.f32.mrb[0].mxu0
    %v8469 = vadd.f32 %v8102, %v8468
    %v8470 = vpop.f32.mrb[0].mxu0
    %8471 = vmatprep.mubr.f32.mxu0 %v7997
    %8472 = vmatmul.mubr.f32.gmra.mrb[0].mxu0 %v7933
    %v8473 = vpop.f32.mrb[0].mxu0
    %v8474 = vadd.f32 %v8102, %v8473
    %v8475 = vpop.f32.mrb[0].mxu0
    %8476 = vmatprep.mubr.f32.mxu0 %v7998
    %8477 = vmatmul.mubr.f32.gmra.mrb[0].mxu0 %v7934
    %v8478 = vpop.f32.mrb[0].mxu0
    %v8479 = vadd.f32 %v8102, %v8478
    %v8480 = vpop.f32.mrb[0].mxu0
    %8481 = vmatprep.mubr.f32.mxu0 %v7999
    %8482 = vmatmul.mubr.f32.gmra.mrb[0].mxu0 %v7935
    %v8483 = vpop.f32.mrb[0].mxu0
    %v8484 = vadd.f32 %v8102, %v8483
    %v8485 = vpop.f32.mrb[0].mxu0
    %8486 = vmatprep.mubr.f32.mxu0 %v8000
    %8487 = vmatmul.mubr.f32.gmra.mrb[0].mxu0 %v7936
    %v8488 = vpop.f32.mrb[0].mxu0
    %v8489 = vadd.f32 %v8102, %v8488
    %v8490 = vpop.f32.mrb[0].mxu0
    %8491 = vmatprep.mubr.f32.mxu0 %v8001
    %8492 = vmatmul.mubr.f32.gmra.mrb[0].mxu0 %v7937
    %v8493 = vpop.f32.mrb[0].mxu0
    %v8494 = vadd.f32 %v8102, %v8493
    %v8495 = vpop.f32.mrb[0].mxu0
    %8496 = vmatprep.mubr.f32.mxu0 %v8002
    %8497 = vmatmul.mubr.f32.gmra.mrb[0].mxu0 %v7938
    %v8498 = vpop.f32.mrb[0].mxu0
    %v8499 = vadd.f32 %v8102, %v8498
    %v8500 = vpop.f32.mrb[0].mxu0
    %8501 = vmatprep.mubr.f32.mxu0 %v8003
    %8502 = vmatmul.mubr.f32.gmra.mrb[0].mxu0 %v7939
    %v8503 = vpop.f32.mrb[0].mxu0
    %v8504 = vadd.f32 %v8102, %v8503
    %v8505 = vpop.f32.mrb[0].mxu0
    %8506 = vmatprep.mubr.f32.mxu0 %v8004
    %8507 = vmatmul.mubr.f32.gmra.mrb[0].mxu0 %v7940
    %v8508 = vpop.f32.mrb[0].mxu0
    %v8509 = vadd.f32 %v8102, %v8508
    %v8510 = vpop.f32.mrb[0].mxu0
    %8511 = vmatprep.mubr.f32.mxu0 %v8005
    %8512 = vmatmul.mubr.f32.gmra.mrb[0].mxu0 %v7941
    %v8513 = vpop.f32.mrb[0].mxu0
    %v8514 = vadd.f32 %v8102, %v8513
    %v8515 = vpop.f32.mrb[0].mxu0
    %8516 = vmatprep.mubr.f32.mxu0 %v8006
    %8517 = vmatmul.mubr.f32.gmra.mrb[0].mxu0 %v7942
    %v8518 = vpop.f32.mrb[0].mxu0
    %v8519 = vadd.f32 %v8102, %v8518
    %v8520 = vpop.f32.mrb[0].mxu0
    %8521 = vmatprep.mubr.f32.mxu0 %v8007
    %8522 = vmatmul.mubr.f32.gmra.mrb[0].mxu0 %v7943
    %v8523 = vpop.f32.mrb[0].mxu0
    %v8524 = vadd.f32 %v8102, %v8523
    %v8525 = vpop.f32.mrb[0].mxu0
    %8526 = vmatprep.mubr.f32.mxu0 %v8008
    %8527 = vmatmul.mubr.f32.gmra.mrb[0].mxu0 %v7944
    %v8528 = vpop.f32.mrb[0].mxu0
    %v8529 = vadd.f32 %v8102, %v8528
    %v8530 = vpop.f32.mrb[0].mxu0
    %8531 = vmatprep.mubr.f32.mxu0 %v8009
    %8532 = vmatmul.mubr.f32.gmra.mrb[0].mxu0 %v7945
    %v8533 = vpop.f32.mrb[0].mxu0
    %v8534 = vadd.f32 %v8102, %v8533
    %v8535 = vpop.f32.mrb[0].mxu0
    %8536 = vmatprep.mubr.f32.mxu0 %v8010
    %8537 = vmatmul.mubr.f32.gmra.mrb[0].mxu0 %v7946
    %v8538 = vpop.f32.mrb[0].mxu0
    %v8539 = vadd.f32 %v8102, %v8538
    %v8540 = vpop.f32.mrb[0].mxu0
    %8541 = vmatprep.mubr.f32.mxu0 %v8011
    %8542 = vmatmul.mubr.f32.gmra.mrb[0].mxu0 %v7947
    %v8543 = vpop.f32.mrb[0].mxu0
    %v8544 = vadd.f32 %v8102, %v8543
    %v8545 = vpop.f32.mrb[0].mxu0
    %8546 = vmatprep.mubr.f32.mxu0 %v8012
    %8547 = vmatmul.mubr.f32.gmra.mrb[0].mxu0 %v7948
    %v8548 = vpop.f32.mrb[0].mxu0
    %v8549 = vadd.f32 %v8102, %v8548
    %v8550 = vpop.f32.mrb[0].mxu0
    %8551 = vmatprep.mubr.f32.mxu0 %v8013
    %8552 = vmatmul.mubr.f32.gmra.mrb[0].mxu0 %v7949
    %v8553 = vpop.f32.mrb[0].mxu0
    %v8554 = vadd.f32 %v8102, %v8553
    %v8555 = vpop.f32.mrb[0].mxu0
    %8556 = vmatprep.mubr.f32.mxu0 %v8014
    %8557 = vmatmul.mubr.f32.gmra.mrb[0].mxu0 %v7950
    %v8558 = vpop.f32.mrb[0].mxu0
    %v8559 = vadd.f32 %v8102, %v8558
    %v8560 = vpop.f32.mrb[0].mxu0
    %8561 = vmatprep.mubr.f32.mxu0 %v8015
    %8562 = vmatmul.mubr.f32.gmra.mrb[0].mxu0 %v7951
    %v8563 = vpop.f32.mrb[0].mxu0
    %v8564 = vadd.f32 %v8102, %v8563
    %v8565 = vpop.f32.mrb[0].mxu0
    %8566 = vmatprep.mubr.f32.mxu0 %v8016
    %8567 = vmatmul.mubr.f32.gmra.mrb[0].mxu0 %v7952
    %v8568 = vpop.f32.mrb[0].mxu0
    %v8569 = vadd.f32 %v8102, %v8568
    %v8570 = vpop.f32.mrb[0].mxu0
    %8571 = vmatprep.mubr.f32.mxu0 %v8017
    %8572 = vmatmul.mubr.f32.gmra.mrb[0].mxu0 %v7953
    %v8573 = vpop.f32.mrb[0].mxu0
    %v8574 = vadd.f32 %v8102, %v8573
    %v8575 = vpop.f32.mrb[0].mxu0
    %8576 = vmatprep.mubr.f32.mxu0 %v8018
    %8577 = vmatmul.mubr.f32.gmra.mrb[0].mxu0 %v7954
    %v8578 = vpop.f32.mrb[0].mxu0
    %v8579 = vadd.f32 %v8102, %v8578
    %v8580 = vpop.f32.mrb[0].mxu0
    %8581 = vmatprep.mubr.f32.mxu0 %v8019
    %8582 = vmatmul.mubr.f32.gmra.mrb[0].mxu0 %v7955
    %v8583 = vpop.f32.mrb[0].mxu0
    %v8584 = vadd.f32 %v8102, %v8583
    %v8585 = vpop.f32.mrb[0].mxu0
    %8586 = vmatprep.mubr.f32.mxu0 %v8020
    %8587 = vmatmul.mubr.f32.gmra.mrb[0].mxu0 %v7956
    %v8588 = vpop.f32.mrb[0].mxu0
    %v8589 = vadd.f32 %v8102, %v8588
    %v8590 = vpop.f32.mrb[0].mxu0
    %8591 = vmatprep.mubr.f32.mxu0 %v8021
    %8592 = vmatmul.mubr.f32.gmra.mrb[0].mxu0 %v7957
    %v8593 = vpop.f32.mrb[0].mxu0
    %v8594 = vadd.f32 %v8102, %v8593
    %v8595 = vpop.f32.mrb[0].mxu0
    %8596 = vmatprep.mubr.f32.mxu0 %v8022
    %8597 = vmatmul.mubr.f32.gmra.mrb[0].mxu0 %v7958
    %v8598 = vpop.f32.mrb[0].mxu0
    %v8599 = vadd.f32 %v8102, %v8598
    %v8600 = vpop.f32.mrb[0].mxu0
    %8601 = vmatprep.mubr.f32.mxu0 %v8023
    %8602 = vmatmul.mubr.f32.gmra.mrb[0].mxu0 %v7959
    %v8603 = vpop.f32.mrb[0].mxu0
    %v8604 = vadd.f32 %v8102, %v8603
    %v8605 = vpop.f32.mrb[0].mxu0
    %8606 = vmatprep.mubr.f32.mxu0 %v8024
    %8607 = vmatmul.mubr.f32.gmra.mrb[0].mxu0 %v7960
    %v8608 = vpop.f32.mrb[0].mxu0
    %v8609 = vadd.f32 %v8102, %v8608
    %v8610 = vpop.f32.mrb[0].mxu0
    %8611 = vmatprep.mubr.f32.mxu0 %v8025
    %8612 = vmatmul.mubr.f32.gmra.mrb[0].mxu0 %v7961
    %v8613 = vpop.f32.mrb[0].mxu0
    %v8614 = vadd.f32 %v8102, %v8613
    %v8615 = vpop.f32.mrb[0].mxu0
    %8616 = vdwg.mxu0
    %8617 = vmatprep.subr.mxu0 0.0
    %8618 = vmatpush1.msra.mxu0 %v6661
    %8619 = vmatprep.subr.mxu0 0.0
    %8620 = vmatpush1.msra.mxu0 %v6662
    %8621 = vmatprep.subr.mxu0 0.0
    %8622 = vmatpush1.msra.mxu0 %v6663
    %8623 = vmatprep.subr.mxu0 0.0
    %8624 = vmatpush1.msra.mxu0 %v6664
    %8625 = vmatprep.subr.mxu0 0.0
    %8626 = vmatpush1.msra.mxu0 %v6665
    %8627 = vmatprep.subr.mxu0 0.0
    %8628 = vmatpush1.msra.mxu0 %v6666
    %8629 = vmatprep.subr.mxu0 0.0
    %8630 = vmatpush1.msra.mxu0 %v6667
    %8631 = vmatprep.subr.mxu0 0.0
    %8632 = vmatpush1.msra.mxu0 %v6668
    %8633 = vmatprep.subr.mxu0 0.0
    %8634 = vmatpush1.msra.mxu0 %v6669
    %8635 = vmatprep.subr.mxu0 0.0
    %8636 = vmatpush1.msra.mxu0 %v6670
    %8637 = vmatprep.subr.mxu0 0.0
    %8638 = vmatpush1.msra.mxu0 %v6671
    %8639 = vmatprep.subr.mxu0 0.0
    %8640 = vmatpush1.msra.mxu0 %v6672
    %8641 = vmatprep.subr.mxu0 0.0
    %8642 = vmatpush1.msra.mxu0 %v6673
    %8643 = vmatprep.subr.mxu0 0.0
    %8644 = vmatpush1.msra.mxu0 %v6674
    %8645 = vmatprep.subr.mxu0 0.0
    %8646 = vmatpush1.msra.mxu0 %v6675
    %8647 = vmatprep.subr.mxu0 0.0
    %8648 = vmatpush1.msra.mxu0 %v6676
    %8649 = vmatprep.subr.mxu0 0.0
    %8650 = vmatpush1.msra.mxu0 %v6677
    %8651 = vmatprep.subr.mxu0 0.0
    %8652 = vmatpush1.msra.mxu0 %v6678
    %8653 = vmatprep.subr.mxu0 0.0
    %8654 = vmatpush1.msra.mxu0 %v6679
    %8655 = vmatprep.subr.mxu0 0.0
    %8656 = vmatpush1.msra.mxu0 %v6680
    %8657 = vmatprep.subr.mxu0 0.0
    %8658 = vmatpush1.msra.mxu0 %v6681
    %8659 = vmatprep.subr.mxu0 0.0
    %8660 = vmatpush1.msra.mxu0 %v6682
    %8661 = vmatprep.subr.mxu0 0.0
    %8662 = vmatpush1.msra.mxu0 %v6683
    %8663 = vmatprep.subr.mxu0 0.0
    %8664 = vmatpush1.msra.mxu0 %v6684
    %8665 = vmatprep.subr.mxu0 0.0
    %8666 = vmatpush1.msra.mxu0 %v6685
    %8667 = vmatprep.subr.mxu0 0.0
    %8668 = vmatpush1.msra.mxu0 %v6686
    %8669 = vmatprep.subr.mxu0 0.0
    %8670 = vmatpush1.msra.mxu0 %v6687
    %8671 = vmatprep.subr.mxu0 0.0
    %8672 = vmatpush1.msra.mxu0 %v6688
    %8673 = vmatprep.subr.mxu0 0.0
    %8674 = vmatpush1.msra.mxu0 %v6689
    %8675 = vmatprep.subr.mxu0 0.0
    %8676 = vmatpush1.msra.mxu0 %v6690
    %8677 = vmatprep.subr.mxu0 0.0
    %8678 = vmatpush1.msra.mxu0 %v6691
    %8679 = vmatprep.subr.mxu0 0.0
    %8680 = vmatpush1.msra.mxu0 %v6692
    %8681 = vmatprep.mubr.f32.mxu0 %v7902
    %8682 = vmatmul.mubr.f32.gmra.mrb[0].mxu0 %v8026
    %v8683 = vpop.f32.mrb[0].mxu0
    %v8684 = vadd.f32 %v8299, %v8683
    %v8685 = vpop.f32.mrb[0].mxu0
    %8686 = vmatprep.mubr.f32.mxu0 %v7903
    %8687 = vmatmul.mubr.f32.gmra.mrb[0].mxu0 %v8027
    %v8688 = vpop.f32.mrb[0].mxu0
    %v8689 = vadd.f32 %v8304, %v8688
    %v8690 = vpop.f32.mrb[0].mxu0
    %8691 = vmatprep.mubr.f32.mxu0 %v7904
    %8692 = vmatmul.mubr.f32.gmra.mrb[0].mxu0 %v8028
    %v8693 = vpop.f32.mrb[0].mxu0
    %v8694 = vadd.f32 %v8309, %v8693
    %v8695 = vpop.f32.mrb[0].mxu0
    %8696 = vmatprep.mubr.f32.mxu0 %v7905
    %8697 = vmatmul.mubr.f32.gmra.mrb[0].mxu0 %v8029
    %v8698 = vpop.f32.mrb[0].mxu0
    %v8699 = vadd.f32 %v8314, %v8698
    %v8700 = vpop.f32.mrb[0].mxu0
    %8701 = vmatprep.mubr.f32.mxu0 %v7906
    %8702 = vmatmul.mubr.f32.gmra.mrb[0].mxu0 %v8030
    %v8703 = vpop.f32.mrb[0].mxu0
    %v8704 = vadd.f32 %v8319, %v8703
    %v8705 = vpop.f32.mrb[0].mxu0
    %8706 = vmatprep.mubr.f32.mxu0 %v7907
    %8707 = vmatmul.mubr.f32.gmra.mrb[0].mxu0 %v8031
    %v8708 = vpop.f32.mrb[0].mxu0
    %v8709 = vadd.f32 %v8324, %v8708
    %v8710 = vpop.f32.mrb[0].mxu0
    %8711 = vmatprep.mubr.f32.mxu0 %v7908
    %8712 = vmatmul.mubr.f32.gmra.mrb[0].mxu0 %v8032
    %v8713 = vpop.f32.mrb[0].mxu0
    %v8714 = vadd.f32 %v8329, %v8713
    %v8715 = vpop.f32.mrb[0].mxu0
    %8716 = vmatprep.mubr.f32.mxu0 %v7909
    %8717 = vmatmul.mubr.f32.gmra.mrb[0].mxu0 %v8033
    %v8718 = vpop.f32.mrb[0].mxu0
    %v8719 = vadd.f32 %v8334, %v8718
    %v8720 = vpop.f32.mrb[0].mxu0
    %8721 = vmatprep.mubr.f32.mxu0 %v7910
    %8722 = vmatmul.mubr.f32.gmra.mrb[0].mxu0 %v8034
    %v8723 = vpop.f32.mrb[0].mxu0
    %v8724 = vadd.f32 %v8339, %v8723
    %v8725 = vpop.f32.mrb[0].mxu0
    %8726 = vmatprep.mubr.f32.mxu0 %v7911
    %8727 = vmatmul.mubr.f32.gmra.mrb[0].mxu0 %v8035
    %v8728 = vpop.f32.mrb[0].mxu0
    %v8729 = vadd.f32 %v8344, %v8728
    %v8730 = vpop.f32.mrb[0].mxu0
    %8731 = vmatprep.mubr.f32.mxu0 %v7912
    %8732 = vmatmul.mubr.f32.gmra.mrb[0].mxu0 %v8036
    %v8733 = vpop.f32.mrb[0].mxu0
    %v8734 = vadd.f32 %v8349, %v8733
    %v8735 = vpop.f32.mrb[0].mxu0
    %8736 = vmatprep.mubr.f32.mxu0 %v7913
    %8737 = vmatmul.mubr.f32.gmra.mrb[0].mxu0 %v8037
    %v8738 = vpop.f32.mrb[0].mxu0
    %v8739 = vadd.f32 %v8354, %v8738
    %v8740 = vpop.f32.mrb[0].mxu0
    %8741 = vmatprep.mubr.f32.mxu0 %v7914
    %8742 = vmatmul.mubr.f32.gmra.mrb[0].mxu0 %v8038
    %v8743 = vpop.f32.mrb[0].mxu0
    %v8744 = vadd.f32 %v8359, %v8743
    %v8745 = vpop.f32.mrb[0].mxu0
    %8746 = vmatprep.mubr.f32.mxu0 %v7915
    %8747 = vmatmul.mubr.f32.gmra.mrb[0].mxu0 %v8039
    %v8748 = vpop.f32.mrb[0].mxu0
    %v8749 = vadd.f32 %v8364, %v8748
    %v8750 = vpop.f32.mrb[0].mxu0
    %8751 = vmatprep.mubr.f32.mxu0 %v7916
    %8752 = vmatmul.mubr.f32.gmra.mrb[0].mxu0 %v8040
    %v8753 = vpop.f32.mrb[0].mxu0
    %v8754 = vadd.f32 %v8369, %v8753
    %v8755 = vpop.f32.mrb[0].mxu0
    %8756 = vmatprep.mubr.f32.mxu0 %v7917
    %8757 = vmatmul.mubr.f32.gmra.mrb[0].mxu0 %v8041
    %v8758 = vpop.f32.mrb[0].mxu0
    %v8759 = vadd.f32 %v8374, %v8758
    %v8760 = vpop.f32.mrb[0].mxu0
    %8761 = vmatprep.mubr.f32.mxu0 %v7918
    %8762 = vmatmul.mubr.f32.gmra.mrb[0].mxu0 %v8042
    %v8763 = vpop.f32.mrb[0].mxu0
    %v8764 = vadd.f32 %v8379, %v8763
    %v8765 = vpop.f32.mrb[0].mxu0
    %8766 = vmatprep.mubr.f32.mxu0 %v7919
    %8767 = vmatmul.mubr.f32.gmra.mrb[0].mxu0 %v8043
    %v8768 = vpop.f32.mrb[0].mxu0
    %v8769 = vadd.f32 %v8384, %v8768
    %v8770 = vpop.f32.mrb[0].mxu0
    %8771 = vmatprep.mubr.f32.mxu0 %v7920
    %8772 = vmatmul.mubr.f32.gmra.mrb[0].mxu0 %v8044
    %v8773 = vpop.f32.mrb[0].mxu0
    %v8774 = vadd.f32 %v8389, %v8773
    %v8775 = vpop.f32.mrb[0].mxu0
    %8776 = vmatprep.mubr.f32.mxu0 %v7921
    %8777 = vmatmul.mubr.f32.gmra.mrb[0].mxu0 %v8045
    %v8778 = vpop.f32.mrb[0].mxu0
    %v8779 = vadd.f32 %v8394, %v8778
    %v8780 = vpop.f32.mrb[0].mxu0
    %8781 = vmatprep.mubr.f32.mxu0 %v7922
    %8782 = vmatmul.mubr.f32.gmra.mrb[0].mxu0 %v8046
    %v8783 = vpop.f32.mrb[0].mxu0
    %v8784 = vadd.f32 %v8399, %v8783
    %v8785 = vpop.f32.mrb[0].mxu0
    %8786 = vmatprep.mubr.f32.mxu0 %v7923
    %8787 = vmatmul.mubr.f32.gmra.mrb[0].mxu0 %v8047
    %v8788 = vpop.f32.mrb[0].mxu0
    %v8789 = vadd.f32 %v8404, %v8788
    %v8790 = vpop.f32.mrb[0].mxu0
    %8791 = vmatprep.mubr.f32.mxu0 %v7924
    %8792 = vmatmul.mubr.f32.gmra.mrb[0].mxu0 %v8048
    %v8793 = vpop.f32.mrb[0].mxu0
    %v8794 = vadd.f32 %v8409, %v8793
    %v8795 = vpop.f32.mrb[0].mxu0
    %8796 = vmatprep.mubr.f32.mxu0 %v7925
    %8797 = vmatmul.mubr.f32.gmra.mrb[0].mxu0 %v8049
    %v8798 = vpop.f32.mrb[0].mxu0
    %v8799 = vadd.f32 %v8414, %v8798
    %v8800 = vpop.f32.mrb[0].mxu0
    %8801 = vmatprep.mubr.f32.mxu0 %v7926
    %8802 = vmatmul.mubr.f32.gmra.mrb[0].mxu0 %v8050
    %v8803 = vpop.f32.mrb[0].mxu0
    %v8804 = vadd.f32 %v8419, %v8803
    %v8805 = vpop.f32.mrb[0].mxu0
    %8806 = vmatprep.mubr.f32.mxu0 %v7927
    %8807 = vmatmul.mubr.f32.gmra.mrb[0].mxu0 %v8051
    %v8808 = vpop.f32.mrb[0].mxu0
    %v8809 = vadd.f32 %v8424, %v8808
    %v8810 = vpop.f32.mrb[0].mxu0
    %8811 = vmatprep.mubr.f32.mxu0 %v7928
    %8812 = vmatmul.mubr.f32.gmra.mrb[0].mxu0 %v8052
    %v8813 = vpop.f32.mrb[0].mxu0
    %v8814 = vadd.f32 %v8429, %v8813
    %v8815 = vpop.f32.mrb[0].mxu0
    %8816 = vmatprep.mubr.f32.mxu0 %v7929
    %8817 = vmatmul.mubr.f32.gmra.mrb[0].mxu0 %v8053
    %v8818 = vpop.f32.mrb[0].mxu0
    %v8819 = vadd.f32 %v8434, %v8818
    %v8820 = vpop.f32.mrb[0].mxu0
    %8821 = vmatprep.mubr.f32.mxu0 %v8090
    %8822 = vmatmul.mubr.f32.gmra.mrb[0].mxu0 %v8054
    %v8823 = vpop.f32.mrb[0].mxu0
    %v8824 = vadd.f32 %v8439, %v8823
    %v8825 = vpop.f32.mrb[0].mxu0
    %8826 = vmatprep.mubr.f32.mxu0 %v8091
    %8827 = vmatmul.mubr.f32.gmra.mrb[0].mxu0 %v8055
    %v8828 = vpop.f32.mrb[0].mxu0
    %v8829 = vadd.f32 %v8444, %v8828
    %v8830 = vpop.f32.mrb[0].mxu0
    %8831 = vmatprep.mubr.f32.mxu0 %v8092
    %8832 = vmatmul.mubr.f32.gmra.mrb[0].mxu0 %v8056
    %v8833 = vpop.f32.mrb[0].mxu0
    %v8834 = vadd.f32 %v8449, %v8833
    %v8835 = vpop.f32.mrb[0].mxu0
    %8836 = vmatprep.mubr.f32.mxu0 %v8093
    %8837 = vmatmul.mubr.f32.gmra.mrb[0].mxu0 %v8057
    %v8838 = vpop.f32.mrb[0].mxu0
    %v8839 = vadd.f32 %v8454, %v8838
    %v8840 = vpop.f32.mrb[0].mxu0
    %8841 = vmatprep.mubr.f32.mxu0 %v7934
    %8842 = vmatmul.mubr.f32.gmra.mrb[0].mxu0 %v8058
    %v8843 = vpop.f32.mrb[0].mxu0
    %v8844 = vadd.f32 %v8459, %v8843
    %v8845 = vpop.f32.mrb[0].mxu0
    %8846 = vmatprep.mubr.f32.mxu0 %v7935
    %8847 = vmatmul.mubr.f32.gmra.mrb[0].mxu0 %v8059
    %v8848 = vpop.f32.mrb[0].mxu0
    %v8849 = vadd.f32 %v8464, %v8848
    %v8850 = vpop.f32.mrb[0].mxu0
    %8851 = vmatprep.mubr.f32.mxu0 %v7936
    %8852 = vmatmul.mubr.f32.gmra.mrb[0].mxu0 %v8060
    %v8853 = vpop.f32.mrb[0].mxu0
    %v8854 = vadd.f32 %v8469, %v8853
    %v8855 = vpop.f32.mrb[0].mxu0
    %8856 = vmatprep.mubr.f32.mxu0 %v7937
    %8857 = vmatmul.mubr.f32.gmra.mrb[0].mxu0 %v8061
    %v8858 = vpop.f32.mrb[0].mxu0
    %v8859 = vadd.f32 %v8474, %v8858
    %v8860 = vpop.f32.mrb[0].mxu0
    %8861 = vmatprep.mubr.f32.mxu0 %v7938
    %8862 = vmatmul.mubr.f32.gmra.mrb[0].mxu0 %v8062
    %v8863 = vpop.f32.mrb[0].mxu0
    %v8864 = vadd.f32 %v8479, %v8863
    %v8865 = vpop.f32.mrb[0].mxu0
    %8866 = vmatprep.mubr.f32.mxu0 %v7939
    %8867 = vmatmul.mubr.f32.gmra.mrb[0].mxu0 %v8063
    %v8868 = vpop.f32.mrb[0].mxu0
    %v8869 = vadd.f32 %v8484, %v8868
    %v8870 = vpop.f32.mrb[0].mxu0
    %8871 = vmatprep.mubr.f32.mxu0 %v7940
    %8872 = vmatmul.mubr.f32.gmra.mrb[0].mxu0 %v8064
    %v8873 = vpop.f32.mrb[0].mxu0
    %v8874 = vadd.f32 %v8489, %v8873
    %v8875 = vpop.f32.mrb[0].mxu0
    %8876 = vmatprep.mubr.f32.mxu0 %v7941
    %8877 = vmatmul.mubr.f32.gmra.mrb[0].mxu0 %v8065
    %v8878 = vpop.f32.mrb[0].mxu0
    %v8879 = vadd.f32 %v8494, %v8878
    %v8880 = vpop.f32.mrb[0].mxu0
    %8881 = vmatprep.mubr.f32.mxu0 %v7942
    %8882 = vmatmul.mubr.f32.gmra.mrb[0].mxu0 %v8066
    %v8883 = vpop.f32.mrb[0].mxu0
    %v8884 = vadd.f32 %v8499, %v8883
    %v8885 = vpop.f32.mrb[0].mxu0
    %8886 = vmatprep.mubr.f32.mxu0 %v7943
    %8887 = vmatmul.mubr.f32.gmra.mrb[0].mxu0 %v8067
    %v8888 = vpop.f32.mrb[0].mxu0
    %v8889 = vadd.f32 %v8504, %v8888
    %v8890 = vpop.f32.mrb[0].mxu0
    %8891 = vmatprep.mubr.f32.mxu0 %v7944
    %8892 = vmatmul.mubr.f32.gmra.mrb[0].mxu0 %v8068
    %v8893 = vpop.f32.mrb[0].mxu0
    %v8894 = vadd.f32 %v8509, %v8893
    %v8895 = vpop.f32.mrb[0].mxu0
    %8896 = vmatprep.mubr.f32.mxu0 %v7945
    %8897 = vmatmul.mubr.f32.gmra.mrb[0].mxu0 %v8069
    %v8898 = vpop.f32.mrb[0].mxu0
    %v8899 = vadd.f32 %v8514, %v8898
    %v8900 = vpop.f32.mrb[0].mxu0
    %8901 = vmatprep.mubr.f32.mxu0 %v7946
    %8902 = vmatmul.mubr.f32.gmra.mrb[0].mxu0 %v8070
    %v8903 = vpop.f32.mrb[0].mxu0
    %v8904 = vadd.f32 %v8519, %v8903
    %v8905 = vpop.f32.mrb[0].mxu0
    %8906 = vmatprep.mubr.f32.mxu0 %v7947
    %8907 = vmatmul.mubr.f32.gmra.mrb[0].mxu0 %v8071
    %v8908 = vpop.f32.mrb[0].mxu0
    %v8909 = vadd.f32 %v8524, %v8908
    %v8910 = vpop.f32.mrb[0].mxu0
    %8911 = vmatprep.mubr.f32.mxu0 %v7948
    %8912 = vmatmul.mubr.f32.gmra.mrb[0].mxu0 %v8072
    %v8913 = vpop.f32.mrb[0].mxu0
    %v8914 = vadd.f32 %v8529, %v8913
    %v8915 = vpop.f32.mrb[0].mxu0
    %8916 = vmatprep.mubr.f32.mxu0 %v7949
    %8917 = vmatmul.mubr.f32.gmra.mrb[0].mxu0 %v8073
    %v8918 = vpop.f32.mrb[0].mxu0
    %v8919 = vadd.f32 %v8534, %v8918
    %v8920 = vpop.f32.mrb[0].mxu0
    %8921 = vmatprep.mubr.f32.mxu0 %v7950
    %8922 = vmatmul.mubr.f32.gmra.mrb[0].mxu0 %v8074
    %v8923 = vpop.f32.mrb[0].mxu0
    %v8924 = vadd.f32 %v8539, %v8923
    %v8925 = vpop.f32.mrb[0].mxu0
    %8926 = vmatprep.mubr.f32.mxu0 %v7951
    %8927 = vmatmul.mubr.f32.gmra.mrb[0].mxu0 %v8075
    %v8928 = vpop.f32.mrb[0].mxu0
    %v8929 = vadd.f32 %v8544, %v8928
    %v8930 = vpop.f32.mrb[0].mxu0
    %8931 = vmatprep.mubr.f32.mxu0 %v7952
    %8932 = vmatmul.mubr.f32.gmra.mrb[0].mxu0 %v8076
    %v8933 = vpop.f32.mrb[0].mxu0
    %v8934 = vadd.f32 %v8549, %v8933
    %v8935 = vpop.f32.mrb[0].mxu0
    %8936 = vmatprep.mubr.f32.mxu0 %v7953
    %8937 = vmatmul.mubr.f32.gmra.mrb[0].mxu0 %v8077
    %v8938 = vpop.f32.mrb[0].mxu0
    %v8939 = vadd.f32 %v8554, %v8938
    %v8940 = vpop.f32.mrb[0].mxu0
    %8941 = vmatprep.mubr.f32.mxu0 %v7954
    %8942 = vmatmul.mubr.f32.gmra.mrb[0].mxu0 %v8078
    %v8943 = vpop.f32.mrb[0].mxu0
    %v8944 = vadd.f32 %v8559, %v8943
    %v8945 = vpop.f32.mrb[0].mxu0
    %8946 = vmatprep.mubr.f32.mxu0 %v7955
    %8947 = vmatmul.mubr.f32.gmra.mrb[0].mxu0 %v8079
    %v8948 = vpop.f32.mrb[0].mxu0
    %v8949 = vadd.f32 %v8564, %v8948
    %v8950 = vpop.f32.mrb[0].mxu0
    %8951 = vmatprep.mubr.f32.mxu0 %v7956
    %8952 = vmatmul.mubr.f32.gmra.mrb[0].mxu0 %v8080
    %v8953 = vpop.f32.mrb[0].mxu0
    %v8954 = vadd.f32 %v8569, %v8953
    %v8955 = vpop.f32.mrb[0].mxu0
    %8956 = vmatprep.mubr.f32.mxu0 %v7957
    %8957 = vmatmul.mubr.f32.gmra.mrb[0].mxu0 %v8081
    %v8958 = vpop.f32.mrb[0].mxu0
    %v8959 = vadd.f32 %v8574, %v8958
    %v8960 = vpop.f32.mrb[0].mxu0
    %8961 = vmatprep.mubr.f32.mxu0 %v7958
    %8962 = vmatmul.mubr.f32.gmra.mrb[0].mxu0 %v8082
    %v8963 = vpop.f32.mrb[0].mxu0
    %v8964 = vadd.f32 %v8579, %v8963
    %v8965 = vpop.f32.mrb[0].mxu0
    %8966 = vmatprep.mubr.f32.mxu0 %v7959
    %8967 = vmatmul.mubr.f32.gmra.mrb[0].mxu0 %v8083
    %v8968 = vpop.f32.mrb[0].mxu0
    %v8969 = vadd.f32 %v8584, %v8968
    %v8970 = vpop.f32.mrb[0].mxu0
    %8971 = vmatprep.mubr.f32.mxu0 %v7960
    %8972 = vmatmul.mubr.f32.gmra.mrb[0].mxu0 %v8084
    %v8973 = vpop.f32.mrb[0].mxu0
    %v8974 = vadd.f32 %v8589, %v8973
    %v8975 = vpop.f32.mrb[0].mxu0
    %8976 = vmatprep.mubr.f32.mxu0 %v7961
    %8977 = vmatmul.mubr.f32.gmra.mrb[0].mxu0 %v8085
    %v8978 = vpop.f32.mrb[0].mxu0
    %v8979 = vadd.f32 %v8594, %v8978
    %v8980 = vpop.f32.mrb[0].mxu0
    %8981 = vmatprep.mubr.f32.mxu0 %v8094
    %8982 = vmatmul.mubr.f32.gmra.mrb[0].mxu0 %v8086
    %v8983 = vpop.f32.mrb[0].mxu0
    %v8984 = vadd.f32 %v8599, %v8983
    %v8985 = vpop.f32.mrb[0].mxu0
    %8986 = vmatprep.mubr.f32.mxu0 %v8095
    %8987 = vmatmul.mubr.f32.gmra.mrb[0].mxu0 %v8087
    %v8988 = vpop.f32.mrb[0].mxu0
    %v8989 = vadd.f32 %v8604, %v8988
    %v8990 = vpop.f32.mrb[0].mxu0
    %8991 = vmatprep.mubr.f32.mxu0 %v8096
    %8992 = vmatmul.mubr.f32.gmra.mrb[0].mxu0 %v8088
    %v8993 = vpop.f32.mrb[0].mxu0
    %v8994 = vadd.f32 %v8609, %v8993
    %v8995 = vpop.f32.mrb[0].mxu0
    %8996 = vmatprep.mubr.f32.mxu0 %v8097
    %8997 = vmatmul.mubr.f32.gmra.mrb[0].mxu0 %v8089
    %v8998 = vpop.f32.mrb[0].mxu0
    %v8999 = vadd.f32 %v8614, %v8998
    %v9000 = vpop.f32.mrb[0].mxu0
    %9001 = vdwg.mxu0
    %9002 = vmatprep.subr.mxu0 0.0
    %9003 = vmatpush1.msra.mxu0 %v6693
    %9004 = vmatprep.subr.mxu0 0.0
    %9005 = vmatpush1.msra.mxu0 %v6694
    %9006 = vmatprep.subr.mxu0 0.0
    %9007 = vmatpush1.msra.mxu0 %v6695
    %9008 = vmatprep.subr.mxu0 0.0
    %9009 = vmatpush1.msra.mxu0 %v6696
    %9010 = vmatprep.subr.mxu0 0.0
    %9011 = vmatpush1.msra.mxu0 %v6697
    %9012 = vmatprep.subr.mxu0 0.0
    %9013 = vmatpush1.msra.mxu0 %v6698
    %9014 = vmatprep.subr.mxu0 0.0
    %9015 = vmatpush1.msra.mxu0 %v6699
    %9016 = vmatprep.subr.mxu0 0.0
    %9017 = vmatpush1.msra.mxu0 %v6700
    %9018 = vmatprep.subr.mxu0 0.0
    %9019 = vmatpush1.msra.mxu0 0.0
    %9020 = vmatprep.subr.mxu0 0.0
    %9021 = vmatpush1.msra.mxu0 0.0
    %9022 = vmatprep.subr.mxu0 0.0
    %9023 = vmatpush1.msra.mxu0 0.0
    %9024 = vmatprep.subr.mxu0 0.0
    %9025 = vmatpush1.msra.mxu0 0.0
    %9026 = vmatprep.subr.mxu0 0.0
    %9027 = vmatpush1.msra.mxu0 0.0
    %9028 = vmatprep.subr.mxu0 0.0
    %9029 = vmatpush1.msra.mxu0 0.0
    %9030 = vmatprep.subr.mxu0 0.0
    %9031 = vmatpush1.msra.mxu0 0.0
    %9032 = vmatprep.subr.mxu0 0.0
    %9033 = vmatpush1.msra.mxu0 0.0
    %9034 = vmatprep.subr.mxu0 0.0
    %9035 = vmatpush1.msra.mxu0 0.0
    %9036 = vmatprep.subr.mxu0 0.0
    %9037 = vmatpush1.msra.mxu0 0.0
    %9038 = vmatprep.subr.mxu0 0.0
    %9039 = vmatpush1.msra.mxu0 0.0
    %9040 = vmatprep.subr.mxu0 0.0
    %9041 = vmatpush1.msra.mxu0 0.0
    %9042 = vmatprep.subr.mxu0 0.0
    %9043 = vmatpush1.msra.mxu0 0.0
    %9044 = vmatprep.subr.mxu0 0.0
    %9045 = vmatpush1.msra.mxu0 0.0
    %9046 = vmatprep.subr.mxu0 0.0
    %9047 = vmatpush1.msra.mxu0 0.0
    %9048 = vmatprep.subr.mxu0 0.0
    %9049 = vmatpush1.msra.mxu0 0.0
    %9050 = vmatprep.subr.mxu0 0.0
    %9051 = vmatpush1.msra.mxu0 0.0
    %9052 = vmatprep.subr.mxu0 0.0
    %9053 = vmatpush1.msra.mxu0 0.0
    %9054 = vmatprep.subr.mxu0 0.0
    %9055 = vmatpush1.msra.mxu0 0.0
    %9056 = vmatprep.subr.mxu0 0.0
    %9057 = vmatpush1.msra.mxu0 0.0
    %9058 = vmatprep.subr.mxu0 0.0
    %9059 = vmatpush1.msra.mxu0 0.0
    %9060 = vmatprep.subr.mxu0 0.0
    %9061 = vmatpush1.msra.mxu0 0.0
    %9062 = vmatprep.subr.mxu0 0.0
    %9063 = vmatpush1.msra.mxu0 0.0
    %9064 = vmatprep.subr.mxu0 0.0
    %9065 = vmatpush1.msra.mxu0 0.0
    %9066 = vmatprep.mubr.f32.mxu0 0.0
    %9067 = vmatmul.mubr.f32.gmra.mrb[0].mxu0 %v8104
    %v9068 = vpop.f32.mrb[0].mxu0
    %v9069 = vadd.f32 %v8684, %v9068
    %v9070 = vpop.f32.mrb[0].mxu0
    %9071 = vmatprep.mubr.f32.mxu0 0.0
    %9072 = vmatmul.mubr.f32.gmra.mrb[0].mxu0 %v8106
    %v9073 = vpop.f32.mrb[0].mxu0
    %v9074 = vadd.f32 %v8689, %v9073
    %v9075 = vpop.f32.mrb[0].mxu0
    %9076 = vmatprep.mubr.f32.mxu0 0.0
    %9077 = vmatmul.mubr.f32.gmra.mrb[0].mxu0 %v8108
    %v9078 = vpop.f32.mrb[0].mxu0
    %v9079 = vadd.f32 %v8694, %v9078
    %v9080 = vpop.f32.mrb[0].mxu0
    %9081 = vmatprep.mubr.f32.mxu0 0.0
    %9082 = vmatmul.mubr.f32.gmra.mrb[0].mxu0 %v8110
    %v9083 = vpop.f32.mrb[0].mxu0
    %v9084 = vadd.f32 %v8699, %v9083
    %v9085 = vpop.f32.mrb[0].mxu0
    %9086 = vmatprep.mubr.f32.mxu0 0.0
    %9087 = vmatmul.mubr.f32.gmra.mrb[0].mxu0 %v8112
    %v9088 = vpop.f32.mrb[0].mxu0
    %v9089 = vadd.f32 %v8704, %v9088
    %v9090 = vpop.f32.mrb[0].mxu0
    %9091 = vmatprep.mubr.f32.mxu0 0.0
    %9092 = vmatmul.mubr.f32.gmra.mrb[0].mxu0 %v8114
    %v9093 = vpop.f32.mrb[0].mxu0
    %v9094 = vadd.f32 %v8709, %v9093
    %v9095 = vpop.f32.mrb[0].mxu0
    %9096 = vmatprep.mubr.f32.mxu0 0.0
    %9097 = vmatmul.mubr.f32.gmra.mrb[0].mxu0 %v8116
    %v9098 = vpop.f32.mrb[0].mxu0
    %v9099 = vadd.f32 %v8714, %v9098
    %v9100 = vpop.f32.mrb[0].mxu0
    %9101 = vmatprep.mubr.f32.mxu0 0.0
    %9102 = vmatmul.mubr.f32.gmra.mrb[0].mxu0 %v8118
    %v9103 = vpop.f32.mrb[0].mxu0
    %v9104 = vadd.f32 %v8719, %v9103
    %v9105 = vpop.f32.mrb[0].mxu0
    %9106 = vmatprep.mubr.f32.mxu0 0.0
    %9107 = vmatmul.mubr.f32.gmra.mrb[0].mxu0 %v8120
    %v9108 = vpop.f32.mrb[0].mxu0
    %v9109 = vadd.f32 %v8724, %v9108
    %v9110 = vpop.f32.mrb[0].mxu0
    %9111 = vmatprep.mubr.f32.mxu0 0.0
    %9112 = vmatmul.mubr.f32.gmra.mrb[0].mxu0 %v8122
    %v9113 = vpop.f32.mrb[0].mxu0
    %v9114 = vadd.f32 %v8729, %v9113
    %v9115 = vpop.f32.mrb[0].mxu0
    %9116 = vmatprep.mubr.f32.mxu0 0.0
    %9117 = vmatmul.mubr.f32.gmra.mrb[0].mxu0 %v8124
    %v9118 = vpop.f32.mrb[0].mxu0
    %v9119 = vadd.f32 %v8734, %v9118
    %v9120 = vpop.f32.mrb[0].mxu0
    %9121 = vmatprep.mubr.f32.mxu0 0.0
    %9122 = vmatmul.mubr.f32.gmra.mrb[0].mxu0 %v8126
    %v9123 = vpop.f32.mrb[0].mxu0
    %v9124 = vadd.f32 %v8739, %v9123
    %v9125 = vpop.f32.mrb[0].mxu0
    %9126 = vmatprep.mubr.f32.mxu0 0.0
    %9127 = vmatmul.mubr.f32.gmra.mrb[0].mxu0 %v8128
    %v9128 = vpop.f32.mrb[0].mxu0
    %v9129 = vadd.f32 %v8744, %v9128
    %v9130 = vpop.f32.mrb[0].mxu0
    %9131 = vmatprep.mubr.f32.mxu0 0.0
    %9132 = vmatmul.mubr.f32.gmra.mrb[0].mxu0 %v8130
    %v9133 = vpop.f32.mrb[0].mxu0
    %v9134 = vadd.f32 %v8749, %v9133
    %v9135 = vpop.f32.mrb[0].mxu0
    %9136 = vmatprep.mubr.f32.mxu0 0.0
    %9137 = vmatmul.mubr.f32.gmra.mrb[0].mxu0 %v8132
    %v9138 = vpop.f32.mrb[0].mxu0
    %v9139 = vadd.f32 %v8754, %v9138
    %v9140 = vpop.f32.mrb[0].mxu0
    %9141 = vmatprep.mubr.f32.mxu0 0.0
    %9142 = vmatmul.mubr.f32.gmra.mrb[0].mxu0 %v8134
    %v9143 = vpop.f32.mrb[0].mxu0
    %v9144 = vadd.f32 %v8759, %v9143
    %v9145 = vpop.f32.mrb[0].mxu0
    %9146 = vmatprep.mubr.f32.mxu0 0.0
    %9147 = vmatmul.mubr.f32.gmra.mrb[0].mxu0 %v8136
    %v9148 = vpop.f32.mrb[0].mxu0
    %v9149 = vadd.f32 %v8764, %v9148
    %v9150 = vpop.f32.mrb[0].mxu0
    %9151 = vmatprep.mubr.f32.mxu0 0.0
    %9152 = vmatmul.mubr.f32.gmra.mrb[0].mxu0 %v8138
    %v9153 = vpop.f32.mrb[0].mxu0
    %v9154 = vadd.f32 %v8769, %v9153
    %v9155 = vpop.f32.mrb[0].mxu0
    %9156 = vmatprep.mubr.f32.mxu0 0.0
    %9157 = vmatmul.mubr.f32.gmra.mrb[0].mxu0 %v8140
    %v9158 = vpop.f32.mrb[0].mxu0
    %v9159 = vadd.f32 %v8774, %v9158
    %v9160 = vpop.f32.mrb[0].mxu0
    %9161 = vmatprep.mubr.f32.mxu0 0.0
    %9162 = vmatmul.mubr.f32.gmra.mrb[0].mxu0 %v8142
    %v9163 = vpop.f32.mrb[0].mxu0
    %v9164 = vadd.f32 %v8779, %v9163
    %v9165 = vpop.f32.mrb[0].mxu0
    %9166 = vmatprep.mubr.f32.mxu0 0.0
    %9167 = vmatmul.mubr.f32.gmra.mrb[0].mxu0 %v8144
    %v9168 = vpop.f32.mrb[0].mxu0
    %v9169 = vadd.f32 %v8784, %v9168
    %v9170 = vpop.f32.mrb[0].mxu0
    %9171 = vmatprep.mubr.f32.mxu0 0.0
    %9172 = vmatmul.mubr.f32.gmra.mrb[0].mxu0 %v8146
    %v9173 = vpop.f32.mrb[0].mxu0
    %v9174 = vadd.f32 %v8789, %v9173
    %v9175 = vpop.f32.mrb[0].mxu0
    %9176 = vmatprep.mubr.f32.mxu0 0.0
    %9177 = vmatmul.mubr.f32.gmra.mrb[0].mxu0 %v8148
    %v9178 = vpop.f32.mrb[0].mxu0
    %v9179 = vadd.f32 %v8794, %v9178
    %v9180 = vpop.f32.mrb[0].mxu0
    %9181 = vmatprep.mubr.f32.mxu0 0.0
    %9182 = vmatmul.mubr.f32.gmra.mrb[0].mxu0 %v8150
    %v9183 = vpop.f32.mrb[0].mxu0
    %v9184 = vadd.f32 %v8799, %v9183
    %v9185 = vpop.f32.mrb[0].mxu0
    %9186 = vmatprep.mubr.f32.mxu0 0.0
    %9187 = vmatmul.mubr.f32.gmra.mrb[0].mxu0 %v8152
    %v9188 = vpop.f32.mrb[0].mxu0
    %v9189 = vadd.f32 %v8804, %v9188
    %v9190 = vpop.f32.mrb[0].mxu0
    %9191 = vmatprep.mubr.f32.mxu0 0.0
    %9192 = vmatmul.mubr.f32.gmra.mrb[0].mxu0 %v8154
    %v9193 = vpop.f32.mrb[0].mxu0
    %v9194 = vadd.f32 %v8809, %v9193
    %v9195 = vpop.f32.mrb[0].mxu0
    %9196 = vmatprep.mubr.f32.mxu0 0.0
    %9197 = vmatmul.mubr.f32.gmra.mrb[0].mxu0 %v8156
    %v9198 = vpop.f32.mrb[0].mxu0
    %v9199 = vadd.f32 %v8814, %v9198
    %v9200 = vpop.f32.mrb[0].mxu0
    %9201 = vmatprep.mubr.f32.mxu0 0.0
    %9202 = vmatmul.mubr.f32.gmra.mrb[0].mxu0 %v8158
    %v9203 = vpop.f32.mrb[0].mxu0
    %v9204 = vadd.f32 %v8819, %v9203
    %v9205 = vpop.f32.mrb[0].mxu0
    %9206 = vmatprep.mubr.f32.mxu0 0.0
    %9207 = vmatmul.mubr.f32.gmra.mrb[0].mxu0 %v8160
    %v9208 = vpop.f32.mrb[0].mxu0
    %v9209 = vadd.f32 %v8824, %v9208
    %v9210 = vpop.f32.mrb[0].mxu0
    %9211 = vmatprep.mubr.f32.mxu0 0.0
    %9212 = vmatmul.mubr.f32.gmra.mrb[0].mxu0 %v8162
    %v9213 = vpop.f32.mrb[0].mxu0
    %v9214 = vadd.f32 %v8829, %v9213
    %v9215 = vpop.f32.mrb[0].mxu0
    %9216 = vmatprep.mubr.f32.mxu0 0.0
    %9217 = vmatmul.mubr.f32.gmra.mrb[0].mxu0 %v8164
    %v9218 = vpop.f32.mrb[0].mxu0
    %v9219 = vadd.f32 %v8834, %v9218
    %v9220 = vpop.f32.mrb[0].mxu0
    %9221 = vmatprep.mubr.f32.mxu0 0.0
    %9222 = vmatmul.mubr.f32.gmra.mrb[0].mxu0 %v8166
    %v9223 = vpop.f32.mrb[0].mxu0
    %v9224 = vadd.f32 %v8839, %v9223
    %v9225 = vpop.f32.mrb[0].mxu0
    %9226 = vmatprep.mubr.f32.mxu0 0.0
    %9227 = vmatmul.mubr.f32.gmra.mrb[0].mxu0 %v8168
    %v9228 = vpop.f32.mrb[0].mxu0
    %v9229 = vadd.f32 %v8844, %v9228
    %v9230 = vpop.f32.mrb[0].mxu0
    %9231 = vmatprep.mubr.f32.mxu0 0.0
    %9232 = vmatmul.mubr.f32.gmra.mrb[0].mxu0 %v8170
    %v9233 = vpop.f32.mrb[0].mxu0
    %v9234 = vadd.f32 %v8849, %v9233
    %v9235 = vpop.f32.mrb[0].mxu0
    %9236 = vmatprep.mubr.f32.mxu0 0.0
    %9237 = vmatmul.mubr.f32.gmra.mrb[0].mxu0 %v8172
    %v9238 = vpop.f32.mrb[0].mxu0
    %v9239 = vadd.f32 %v8854, %v9238
    %v9240 = vpop.f32.mrb[0].mxu0
    %9241 = vmatprep.mubr.f32.mxu0 0.0
    %9242 = vmatmul.mubr.f32.gmra.mrb[0].mxu0 %v8174
    %v9243 = vpop.f32.mrb[0].mxu0
    %v9244 = vadd.f32 %v8859, %v9243
    %v9245 = vpop.f32.mrb[0].mxu0
    %9246 = vmatprep.mubr.f32.mxu0 0.0
    %9247 = vmatmul.mubr.f32.gmra.mrb[0].mxu0 %v8176
    %v9248 = vpop.f32.mrb[0].mxu0
    %v9249 = vadd.f32 %v8864, %v9248
    %v9250 = vpop.f32.mrb[0].mxu0
    %9251 = vmatprep.mubr.f32.mxu0 0.0
    %9252 = vmatmul.mubr.f32.gmra.mrb[0].mxu0 %v8178
    %v9253 = vpop.f32.mrb[0].mxu0
    %v9254 = vadd.f32 %v8869, %v9253
    %v9255 = vpop.f32.mrb[0].mxu0
    %9256 = vmatprep.mubr.f32.mxu0 0.0
    %9257 = vmatmul.mubr.f32.gmra.mrb[0].mxu0 %v8180
    %v9258 = vpop.f32.mrb[0].mxu0
    %v9259 = vadd.f32 %v8874, %v9258
    %v9260 = vpop.f32.mrb[0].mxu0
    %9261 = vmatprep.mubr.f32.mxu0 0.0
    %9262 = vmatmul.mubr.f32.gmra.mrb[0].mxu0 %v8182
    %v9263 = vpop.f32.mrb[0].mxu0
    %v9264 = vadd.f32 %v8879, %v9263
    %v9265 = vpop.f32.mrb[0].mxu0
    %9266 = vmatprep.mubr.f32.mxu0 0.0
    %9267 = vmatmul.mubr.f32.gmra.mrb[0].mxu0 %v8184
    %v9268 = vpop.f32.mrb[0].mxu0
    %v9269 = vadd.f32 %v8884, %v9268
    %v9270 = vpop.f32.mrb[0].mxu0
    %9271 = vmatprep.mubr.f32.mxu0 0.0
    %9272 = vmatmul.mubr.f32.gmra.mrb[0].mxu0 %v8186
    %v9273 = vpop.f32.mrb[0].mxu0
    %v9274 = vadd.f32 %v8889, %v9273
    %v9275 = vpop.f32.mrb[0].mxu0
    %9276 = vmatprep.mubr.f32.mxu0 0.0
    %9277 = vmatmul.mubr.f32.gmra.mrb[0].mxu0 %v8188
    %v9278 = vpop.f32.mrb[0].mxu0
    %v9279 = vadd.f32 %v8894, %v9278
    %v9280 = vpop.f32.mrb[0].mxu0
    %9281 = vmatprep.mubr.f32.mxu0 0.0
    %9282 = vmatmul.mubr.f32.gmra.mrb[0].mxu0 %v8190
    %v9283 = vpop.f32.mrb[0].mxu0
    %v9284 = vadd.f32 %v8899, %v9283
    %v9285 = vpop.f32.mrb[0].mxu0
    %9286 = vmatprep.mubr.f32.mxu0 0.0
    %9287 = vmatmul.mubr.f32.gmra.mrb[0].mxu0 %v8192
    %v9288 = vpop.f32.mrb[0].mxu0
    %v9289 = vadd.f32 %v8904, %v9288
    %v9290 = vpop.f32.mrb[0].mxu0
    %9291 = vmatprep.mubr.f32.mxu0 0.0
    %9292 = vmatmul.mubr.f32.gmra.mrb[0].mxu0 %v8194
    %v9293 = vpop.f32.mrb[0].mxu0
    %v9294 = vadd.f32 %v8909, %v9293
    %v9295 = vpop.f32.mrb[0].mxu0
    %9296 = vmatprep.mubr.f32.mxu0 0.0
    %9297 = vmatmul.mubr.f32.gmra.mrb[0].mxu0 %v8196
    %v9298 = vpop.f32.mrb[0].mxu0
    %v9299 = vadd.f32 %v8914, %v9298
    %v9300 = vpop.f32.mrb[0].mxu0
    %9301 = vmatprep.mubr.f32.mxu0 0.0
    %9302 = vmatmul.mubr.f32.gmra.mrb[0].mxu0 %v8198
    %v9303 = vpop.f32.mrb[0].mxu0
    %v9304 = vadd.f32 %v8919, %v9303
    %v9305 = vpop.f32.mrb[0].mxu0
    %9306 = vmatprep.mubr.f32.mxu0 0.0
    %9307 = vmatmul.mubr.f32.gmra.mrb[0].mxu0 %v8200
    %v9308 = vpop.f32.mrb[0].mxu0
    %v9309 = vadd.f32 %v8924, %v9308
    %v9310 = vpop.f32.mrb[0].mxu0
    %9311 = vmatprep.mubr.f32.mxu0 0.0
    %9312 = vmatmul.mubr.f32.gmra.mrb[0].mxu0 %v8202
    %v9313 = vpop.f32.mrb[0].mxu0
    %v9314 = vadd.f32 %v8929, %v9313
    %v9315 = vpop.f32.mrb[0].mxu0
    %9316 = vmatprep.mubr.f32.mxu0 0.0
    %9317 = vmatmul.mubr.f32.gmra.mrb[0].mxu0 %v8204
    %v9318 = vpop.f32.mrb[0].mxu0
    %v9319 = vadd.f32 %v8934, %v9318
    %v9320 = vpop.f32.mrb[0].mxu0
    %9321 = vmatprep.mubr.f32.mxu0 0.0
    %9322 = vmatmul.mubr.f32.gmra.mrb[0].mxu0 %v8206
    %v9323 = vpop.f32.mrb[0].mxu0
    %v9324 = vadd.f32 %v8939, %v9323
    %v9325 = vpop.f32.mrb[0].mxu0
    %9326 = vmatprep.mubr.f32.mxu0 0.0
    %9327 = vmatmul.mubr.f32.gmra.mrb[0].mxu0 %v8208
    %v9328 = vpop.f32.mrb[0].mxu0
    %v9329 = vadd.f32 %v8944, %v9328
    %v9330 = vpop.f32.mrb[0].mxu0
    %9331 = vmatprep.mubr.f32.mxu0 0.0
    %9332 = vmatmul.mubr.f32.gmra.mrb[0].mxu0 %v8210
    %v9333 = vpop.f32.mrb[0].mxu0
    %v9334 = vadd.f32 %v8949, %v9333
    %v9335 = vpop.f32.mrb[0].mxu0
    %9336 = vmatprep.mubr.f32.mxu0 0.0
    %9337 = vmatmul.mubr.f32.gmra.mrb[0].mxu0 %v8212
    %v9338 = vpop.f32.mrb[0].mxu0
    %v9339 = vadd.f32 %v8954, %v9338
    %v9340 = vpop.f32.mrb[0].mxu0
    %9341 = vmatprep.mubr.f32.mxu0 0.0
    %9342 = vmatmul.mubr.f32.gmra.mrb[0].mxu0 %v8214
    %v9343 = vpop.f32.mrb[0].mxu0
    %v9344 = vadd.f32 %v8959, %v9343
    %v9345 = vpop.f32.mrb[0].mxu0
    %9346 = vmatprep.mubr.f32.mxu0 0.0
    %9347 = vmatmul.mubr.f32.gmra.mrb[0].mxu0 %v8216
    %v9348 = vpop.f32.mrb[0].mxu0
    %v9349 = vadd.f32 %v8964, %v9348
    %v9350 = vpop.f32.mrb[0].mxu0
    %9351 = vmatprep.mubr.f32.mxu0 0.0
    %9352 = vmatmul.mubr.f32.gmra.mrb[0].mxu0 %v8218
    %v9353 = vpop.f32.mrb[0].mxu0
    %v9354 = vadd.f32 %v8969, %v9353
    %v9355 = vpop.f32.mrb[0].mxu0
    %9356 = vmatprep.mubr.f32.mxu0 0.0
    %9357 = vmatmul.mubr.f32.gmra.mrb[0].mxu0 %v8220
    %v9358 = vpop.f32.mrb[0].mxu0
    %v9359 = vadd.f32 %v8974, %v9358
    %v9360 = vpop.f32.mrb[0].mxu0
    %9361 = vmatprep.mubr.f32.mxu0 0.0
    %9362 = vmatmul.mubr.f32.gmra.mrb[0].mxu0 %v8222
    %v9363 = vpop.f32.mrb[0].mxu0
    %v9364 = vadd.f32 %v8979, %v9363
    %v9365 = vpop.f32.mrb[0].mxu0
    %9366 = vmatprep.mubr.f32.mxu0 0.0
    %9367 = vmatmul.mubr.f32.gmra.mrb[0].mxu0 %v8224
    %v9368 = vpop.f32.mrb[0].mxu0
    %v9369 = vadd.f32 %v8984, %v9368
    %v9370 = vpop.f32.mrb[0].mxu0
    %9371 = vmatprep.mubr.f32.mxu0 0.0
    %9372 = vmatmul.mubr.f32.gmra.mrb[0].mxu0 %v8226
    %v9373 = vpop.f32.mrb[0].mxu0
    %v9374 = vadd.f32 %v8989, %v9373
    %v9375 = vpop.f32.mrb[0].mxu0
    %9376 = vmatprep.mubr.f32.mxu0 0.0
    %9377 = vmatmul.mubr.f32.gmra.mrb[0].mxu0 %v8228
    %v9378 = vpop.f32.mrb[0].mxu0
    %v9379 = vadd.f32 %v8994, %v9378
    %v9380 = vpop.f32.mrb[0].mxu0
    %9381 = vmatprep.mubr.f32.mxu0 0.0
    %9382 = vmatmul.mubr.f32.gmra.mrb[0].mxu0 %v8230
    %v9383 = vpop.f32.mrb[0].mxu0
    %v9384 = vadd.f32 %v8999, %v9383
    %v9385 = vpop.f32.mrb[0].mxu0
    %9386 = vdwg.mxu0
    %v9387 = vmax.f32 %v9069, 0.0
    %v9388 = vmax.f32 %v9074, 0.0
    %v9389 = vmax.f32 %v9079, 0.0
    %v9390 = vmax.f32 %v9084, 0.0
    %v9391 = vmax.f32 %v9089, 0.0
    %v9392 = vmax.f32 %v9094, 0.0
    %v9393 = vmax.f32 %v9099, 0.0
    %v9394 = vmax.f32 %v9104, 0.0
    %v9395 = vmax.f32 %v9109, 0.0
    %v9396 = vmax.f32 %v9114, 0.0
    %v9397 = vmax.f32 %v9119, 0.0
    %v9398 = vmax.f32 %v9124, 0.0
    %v9399 = vmax.f32 %v9129, 0.0
    %v9400 = vmax.f32 %v9134, 0.0
    %v9401 = vmax.f32 %v9139, 0.0
    %v9402 = vmax.f32 %v9144, 0.0
    %v9403 = vmax.f32 %v9149, 0.0
    %v9404 = vmax.f32 %v9154, 0.0
    %v9405 = vmax.f32 %v9159, 0.0
    %v9406 = vmax.f32 %v9164, 0.0
    %v9407 = vmax.f32 %v9169, 0.0
    %v9408 = vmax.f32 %v9174, 0.0
    %v9409 = vmax.f32 %v9179, 0.0
    %v9410 = vmax.f32 %v9184, 0.0
    %v9411 = vmax.f32 %v9189, 0.0
    %v9412 = vmax.f32 %v9194, 0.0
    %v9413 = vmax.f32 %v9199, 0.0
    %v9414 = vmax.f32 %v9204, 0.0
    %v9415 = vmax.f32 %v9209, 0.0
    %v9416 = vmax.f32 %v9214, 0.0
    %v9417 = vmax.f32 %v9219, 0.0
    %v9418 = vmax.f32 %v9224, 0.0
    %v9419 = vmax.f32 %v9229, 0.0
    %v9420 = vmax.f32 %v9234, 0.0
    %v9421 = vmax.f32 %v9239, 0.0
    %v9422 = vmax.f32 %v9244, 0.0
    %v9423 = vmax.f32 %v9249, 0.0
    %v9424 = vmax.f32 %v9254, 0.0
    %v9425 = vmax.f32 %v9259, 0.0
    %v9426 = vmax.f32 %v9264, 0.0
    %v9427 = vmax.f32 %v9269, 0.0
    %v9428 = vmax.f32 %v9274, 0.0
    %v9429 = vmax.f32 %v9279, 0.0
    %v9430 = vmax.f32 %v9284, 0.0
    %v9431 = vmax.f32 %v9289, 0.0
    %v9432 = vmax.f32 %v9294, 0.0
    %v9433 = vmax.f32 %v9299, 0.0
    %v9434 = vmax.f32 %v9304, 0.0
    %v9435 = vmax.f32 %v9309, 0.0
    %v9436 = vmax.f32 %v9314, 0.0
    %v9437 = vmax.f32 %v9319, 0.0
    %v9438 = vmax.f32 %v9324, 0.0
    %v9439 = vmax.f32 %v9329, 0.0
    %v9440 = vmax.f32 %v9334, 0.0
    %v9441 = vmax.f32 %v9339, 0.0
    %v9442 = vmax.f32 %v9344, 0.0
    %v9443 = vmax.f32 %v9349, 0.0
    %v9444 = vmax.f32 %v9354, 0.0
    %v9445 = vmax.f32 %v9359, 0.0
    %v9446 = vmax.f32 %v9364, 0.0
    %v9447 = vmax.f32 %v9369, 0.0
    %v9448 = vmax.f32 %v9374, 0.0
    %v9449 = vmax.f32 %v9379, 0.0
    %v9450 = vmax.f32 %v9384, 0.0
    %v9451 = vpack.c.bf16 %v9388, %v9387
    %v9452 = vpack.c.bf16 %v9390, %v9389
    %v9453 = vpack.c.bf16 %v9392, %v9391
    %v9454 = vpack.c.bf16 %v9394, %v9393
    %v9455 = vpack.c.bf16 %v9396, %v9395
    %v9456 = vpack.c.bf16 %v9398, %v9397
    %v9457 = vpack.c.bf16 %v9400, %v9399
    %v9458 = vpack.c.bf16 %v9402, %v9401
    %v9459 = vpack.c.bf16 %v9404, %v9403
    %v9460 = vpack.c.bf16 %v9406, %v9405
    %v9461 = vpack.c.bf16 %v9408, %v9407
    %v9462 = vpack.c.bf16 %v9410, %v9409
    %v9463 = vpack.c.bf16 %v9412, %v9411
    %v9464 = vpack.c.bf16 %v9414, %v9413
    %v9465 = vpack.c.bf16 %v9416, %v9415
    %v9466 = vpack.c.bf16 %v9418, %v9417
    %v9467 = vpack.c.bf16 %v9420, %v9419
    %v9468 = vpack.c.bf16 %v9422, %v9421
    %v9469 = vpack.c.bf16 %v9424, %v9423
    %v9470 = vpack.c.bf16 %v9426, %v9425
    %v9471 = vpack.c.bf16 %v9428, %v9427
    %v9472 = vpack.c.bf16 %v9430, %v9429
    %v9473 = vpack.c.bf16 %v9432, %v9431
    %v9474 = vpack.c.bf16 %v9434, %v9433
    %v9475 = vpack.c.bf16 %v9436, %v9435
    %v9476 = vpack.c.bf16 %v9438, %v9437
    %v9477 = vpack.c.bf16 %v9440, %v9439
    %v9478 = vpack.c.bf16 %v9442, %v9441
    %v9479 = vpack.c.bf16 %v9444, %v9443
    %v9480 = vpack.c.bf16 %v9446, %v9445
    %v9481 = vpack.c.bf16 %v9448, %v9447
    %v9482 = vpack.c.bf16 %v9450, %v9449
    %v9515 = vunpack.c.l.b16 %v9451
    %v9516 = vunpack.c.h.b16 %v9451
    %v9517 = vunpack.c.l.b16 %v9452
    %v9518 = vunpack.c.h.b16 %v9452
    %v9519 = vunpack.c.l.b16 %v9453
    %v9520 = vunpack.c.h.b16 %v9453
    %v9521 = vunpack.c.l.b16 %v9454
    %v9522 = vunpack.c.h.b16 %v9454
    %v9523 = vunpack.c.l.b16 %v9455
    %v9524 = vunpack.c.h.b16 %v9455
    %v9525 = vunpack.c.l.b16 %v9456
    %v9526 = vunpack.c.h.b16 %v9456
    %v9527 = vunpack.c.l.b16 %v9457
    %v9528 = vunpack.c.h.b16 %v9457
    %v9529 = vunpack.c.l.b16 %v9458
    %v9530 = vunpack.c.h.b16 %v9458
    %v9531 = vunpack.c.l.b16 %v9459
    %v9532 = vunpack.c.h.b16 %v9459
    %v9533 = vunpack.c.l.b16 %v9460
    %v9534 = vunpack.c.h.b16 %v9460
    %v9535 = vunpack.c.l.b16 %v9461
    %v9536 = vunpack.c.h.b16 %v9461
    %v9537 = vunpack.c.l.b16 %v9462
    %v9538 = vunpack.c.h.b16 %v9462
    %v9539 = vunpack.c.l.b16 %v9463
    %v9540 = vunpack.c.h.b16 %v9463
    %v9541 = vunpack.c.l.b16 %v9464
    %v9542 = vunpack.c.h.b16 %v9464
    %v9543 = vunpack.c.l.b16 %v9465
    %v9544 = vunpack.c.h.b16 %v9465
    %v9545 = vunpack.c.l.b16 %v9466
    %v9546 = vunpack.c.h.b16 %v9466
    %v9547 = vunpack.c.l.b16 %v9467
    %v9548 = vunpack.c.h.b16 %v9467
    %v9549 = vunpack.c.l.b16 %v9468
    %v9550 = vunpack.c.h.b16 %v9468
    %v9551 = vunpack.c.l.b16 %v9469
    %v9552 = vunpack.c.h.b16 %v9469
    %v9553 = vunpack.c.l.b16 %v9470
    %v9554 = vunpack.c.h.b16 %v9470
    %v9555 = vunpack.c.l.b16 %v9471
    %v9556 = vunpack.c.h.b16 %v9471
    %v9557 = vunpack.c.l.b16 %v9472
    %v9558 = vunpack.c.h.b16 %v9472
    %v9559 = vunpack.c.l.b16 %v9473
    %v9560 = vunpack.c.h.b16 %v9473
    %v9561 = vunpack.c.l.b16 %v9474
    %v9562 = vunpack.c.h.b16 %v9474
    %v9563 = vunpack.c.l.b16 %v9475
    %v9564 = vunpack.c.h.b16 %v9475
    %v9565 = vunpack.c.l.b16 %v9476
    %v9566 = vunpack.c.h.b16 %v9476
    %v9567 = vunpack.c.l.b16 %v9477
    %v9568 = vunpack.c.h.b16 %v9477
    %v9569 = vunpack.c.l.b16 %v9478
    %v9570 = vunpack.c.h.b16 %v9478
    %v9571 = vunpack.c.l.b16 %v9479
    %v9572 = vunpack.c.h.b16 %v9479
    %v9573 = vunpack.c.l.b16 %v9480
    %v9574 = vunpack.c.h.b16 %v9480
    %v9575 = vunpack.c.l.b16 %v9481
    %v9576 = vunpack.c.h.b16 %v9481
    %v9577 = vunpack.c.l.b16 %v9482
    %v9578 = vunpack.c.h.b16 %v9482
    %v9579 = vpack.c.b16 %v9515, %v9515
    %v9580 = vpack.c.b16 %v9516, %v9516
    %v9581 = vpack.c.b16 %v9517, %v9517
    %v9582 = vpack.c.b16 %v9518, %v9518
    %v9583 = vpack.c.b16 %v9519, %v9519
    %v9584 = vpack.c.b16 %v9520, %v9520
    %v9585 = vpack.c.b16 %v9521, %v9521
    %v9586 = vpack.c.b16 %v9522, %v9522
    %v9587 = vpack.c.b16 %v9523, %v9523
    %v9588 = vpack.c.b16 %v9524, %v9524
    %v9589 = vpack.c.b16 %v9525, %v9525
    %v9590 = vpack.c.b16 %v9526, %v9526
    %v9591 = vpack.c.b16 %v9527, %v9527
    %v9592 = vpack.c.b16 %v9528, %v9528
    %v9593 = vpack.c.b16 %v9529, %v9529
    %v9594 = vpack.c.b16 %v9530, %v9530
    %v9595 = vpack.c.b16 %v9531, %v9531
    %v9596 = vpack.c.b16 %v9532, %v9532
    %v9597 = vpack.c.b16 %v9533, %v9533
    %v9598 = vpack.c.b16 %v9534, %v9534
    %v9599 = vpack.c.b16 %v9535, %v9535
    %v9600 = vpack.c.b16 %v9536, %v9536
    %v9601 = vpack.c.b16 %v9537, %v9537
    %v9602 = vpack.c.b16 %v9538, %v9538
    %v9603 = vpack.c.b16 %v9539, %v9539
    %v9604 = vpack.c.b16 %v9540, %v9540
    %v9605 = vpack.c.b16 %v9541, %v9541
    %v9606 = vpack.c.b16 %v9542, %v9542
    %v9607 = vpack.c.b16 %v9543, %v9543
    %v9608 = vpack.c.b16 %v9544, %v9544
    %v9609 = vpack.c.b16 %v9545, %v9545
    %v9610 = vpack.c.b16 %v9546, %v9546
    %v9611 = vpack.c.b16 %v9547, %v9547
    %v9612 = vpack.c.b16 %v9548, %v9548
    %v9613 = vpack.c.b16 %v9549, %v9549
    %v9614 = vpack.c.b16 %v9550, %v9550
    %v9615 = vpack.c.b16 %v9551, %v9551
    %v9616 = vpack.c.b16 %v9552, %v9552
    %v9617 = vpack.c.b16 %v9553, %v9553
    %v9618 = vpack.c.b16 %v9554, %v9554
    %v9619 = vpack.c.b16 %v9555, %v9555
    %v9620 = vpack.c.b16 %v9556, %v9556
    %v9621 = vpack.c.b16 %v9557, %v9557
    %v9622 = vpack.c.b16 %v9558, %v9558
    %v9623 = vpack.c.b16 %v9559, %v9559
    %v9624 = vpack.c.b16 %v9560, %v9560
    %v9625 = vpack.c.b16 %v9561, %v9561
    %v9626 = vpack.c.b16 %v9562, %v9562
    %v9627 = vpack.c.b16 %v9563, %v9563
    %v9628 = vpack.c.b16 %v9564, %v9564
    %v9629 = vpack.c.b16 %v9565, %v9565
    %v9630 = vpack.c.b16 %v9566, %v9566
    %v9631 = vpack.c.b16 %v9567, %v9567
    %v9632 = vpack.c.b16 %v9568, %v9568
    %v9633 = vpack.c.b16 %v9569, %v9569
    %v9634 = vpack.c.b16 %v9570, %v9570
    %v9635 = vpack.c.b16 %v9571, %v9571
    %v9636 = vpack.c.b16 %v9572, %v9572
    %v9637 = vpack.c.b16 %v9573, %v9573
    %v9638 = vpack.c.b16 %v9574, %v9574
    %v9639 = vpack.c.b16 %v9575, %v9575
    %v9640 = vpack.c.b16 %v9576, %v9576
    %v9641 = vpack.c.b16 %v9577, %v9577
    %v9642 = vpack.c.b16 %v9578, %v9578
    %vm9707 = vcmask 519168
    %9708 = vst.msk [vmem:[%s7] sm:$0xf] %vm9707, %v9579
    %9709 = vst.msk [vmem:[%s7 + $0x4] sm:$0xf] %vm9707, %v9580
    %9710 = vst.msk [vmem:[%s7 + $0x8] sm:$0xf] %vm9707, %v9581
    %9711 = vst.msk [vmem:[%s7 + $0xc] sm:$0xf] %vm9707, %v9582
    %9712 = vst.msk [vmem:[%s7 + $0x10] sm:$0xf] %vm9707, %v9583
    %9713 = vst.msk [vmem:[%s7 + $0x14] sm:$0xf] %vm9707, %v9584
    %9714 = vst.msk [vmem:[%s7 + $0x18] sm:$0xf] %vm9707, %v9585
    %9715 = vst.msk [vmem:[%s7 + $0x1c] sm:$0xf] %vm9707, %v9586
    %9716 = vst.msk [vmem:[%s7 + $0x20] sm:$0xf] %vm9707, %v9587
    %9717 = vst.msk [vmem:[%s7 + $0x24] sm:$0xf] %vm9707, %v9588
    %9718 = vst.msk [vmem:[%s7 + $0x28] sm:$0xf] %vm9707, %v9589
    %9719 = vst.msk [vmem:[%s7 + $0x2c] sm:$0xf] %vm9707, %v9590
    %9720 = vst.msk [vmem:[%s7 + $0x30] sm:$0xf] %vm9707, %v9591
    %9721 = vst.msk [vmem:[%s7 + $0x34] sm:$0xf] %vm9707, %v9592
    %9722 = vst.msk [vmem:[%s7 + $0x38] sm:$0xf] %vm9707, %v9593
    %9723 = vst.msk [vmem:[%s7 + $0x3c] sm:$0xf] %vm9707, %v9594
    %9724 = vst.msk [vmem:[%s7 + $0x40] sm:$0xf] %vm9707, %v9595
    %9725 = vst.msk [vmem:[%s7 + $0x44] sm:$0xf] %vm9707, %v9596
    %9726 = vst.msk [vmem:[%s7 + $0x48] sm:$0xf] %vm9707, %v9597
    %9727 = vst.msk [vmem:[%s7 + $0x4c] sm:$0xf] %vm9707, %v9598
    %9728 = vst.msk [vmem:[%s7 + $0x50] sm:$0xf] %vm9707, %v9599
    %9729 = vst.msk [vmem:[%s7 + $0x54] sm:$0xf] %vm9707, %v9600
    %9730 = vst.msk [vmem:[%s7 + $0x58] sm:$0xf] %vm9707, %v9601
    %9731 = vst.msk [vmem:[%s7 + $0x5c] sm:$0xf] %vm9707, %v9602
    %9732 = vst.msk [vmem:[%s7 + $0x60] sm:$0xf] %vm9707, %v9603
    %9733 = vst.msk [vmem:[%s7 + $0x64] sm:$0xf] %vm9707, %v9604
    %9734 = vst.msk [vmem:[%s7 + $0x68] sm:$0xf] %vm9707, %v9605
    %9735 = vst.msk [vmem:[%s7 + $0x6c] sm:$0xf] %vm9707, %v9606
    %9736 = vst.msk [vmem:[%s7 + $0x70] sm:$0xf] %vm9707, %v9607
    %9737 = vst.msk [vmem:[%s7 + $0x74] sm:$0xf] %vm9707, %v9608
    %9738 = vst.msk [vmem:[%s7 + $0x78] sm:$0xf] %vm9707, %v9609
    %9739 = vst.msk [vmem:[%s7 + $0x7c] sm:$0xf] %vm9707, %v9610
    %9740 = vst.msk [vmem:[%s7 + $0x80] sm:$0xf] %vm9707, %v9611
    %9741 = vst.msk [vmem:[%s7 + $0x84] sm:$0xf] %vm9707, %v9612
    %9742 = vst.msk [vmem:[%s7 + $0x88] sm:$0xf] %vm9707, %v9613
    %9743 = vst.msk [vmem:[%s7 + $0x8c] sm:$0xf] %vm9707, %v9614
    %9744 = vst.msk [vmem:[%s7 + $0x90] sm:$0xf] %vm9707, %v9615
    %9745 = vst.msk [vmem:[%s7 + $0x94] sm:$0xf] %vm9707, %v9616
    %9746 = vst.msk [vmem:[%s7 + $0x98] sm:$0xf] %vm9707, %v9617
    %9747 = vst.msk [vmem:[%s7 + $0x9c] sm:$0xf] %vm9707, %v9618
    %9748 = vst.msk [vmem:[%s7 + $0xa0] sm:$0xf] %vm9707, %v9619
    %9749 = vst.msk [vmem:[%s7 + $0xa4] sm:$0xf] %vm9707, %v9620
    %9750 = vst.msk [vmem:[%s7 + $0xa8] sm:$0xf] %vm9707, %v9621
    %9751 = vst.msk [vmem:[%s7 + $0xac] sm:$0xf] %vm9707, %v9622
    %9752 = vst.msk [vmem:[%s7 + $0xb0] sm:$0xf] %vm9707, %v9623
    %9753 = vst.msk [vmem:[%s7 + $0xb4] sm:$0xf] %vm9707, %v9624
    %9754 = vst.msk [vmem:[%s7 + $0xb8] sm:$0xf] %vm9707, %v9625
    %9755 = vst.msk [vmem:[%s7 + $0xbc] sm:$0xf] %vm9707, %v9626
    %9756 = vst.msk [vmem:[%s7 + $0xc0] sm:$0xf] %vm9707, %v9627
    %9757 = vst.msk [vmem:[%s7 + $0xc4] sm:$0xf] %vm9707, %v9628
    %9758 = vst.msk [vmem:[%s7 + $0xc8] sm:$0xf] %vm9707, %v9629
    %9759 = vst.msk [vmem:[%s7 + $0xcc] sm:$0xf] %vm9707, %v9630
    %9760 = vst.msk [vmem:[%s7 + $0xd0] sm:$0xf] %vm9707, %v9631
    %9761 = vst.msk [vmem:[%s7 + $0xd4] sm:$0xf] %vm9707, %v9632
    %9762 = vst.msk [vmem:[%s7 + $0xd8] sm:$0xf] %vm9707, %v9633
    %9763 = vst.msk [vmem:[%s7 + $0xdc] sm:$0xf] %vm9707, %v9634
    %9764 = vst.msk [vmem:[%s7 + $0xe0] sm:$0xf] %vm9707, %v9635
    %9765 = vst.msk [vmem:[%s7 + $0xe4] sm:$0xf] %vm9707, %v9636
    %9766 = vst.msk [vmem:[%s7 + $0xe8] sm:$0xf] %vm9707, %v9637
    %9767 = vst.msk [vmem:[%s7 + $0xec] sm:$0xf] %vm9707, %v9638
    %9768 = vst.msk [vmem:[%s7 + $0xf0] sm:$0xf] %vm9707, %v9639
    %9769 = vst.msk [vmem:[%s7 + $0xf4] sm:$0xf] %vm9707, %v9640
    %9770 = vst.msk [vmem:[%s7 + $0xf8] sm:$0xf] %vm9707, %v9641
    %9771 = vst.msk [vmem:[%s7 + $0xfc] sm:$0xf] %vm9707, %v9642
    // Predicated region
    $region42: #{cnn_forward.2} parent=1 // pred_check
      _
    $region43: #{cnn_forward.2} parent=1 // pred_check_branch
      %9773 = sbr.rel (0) target = $region45
    $region44: #{cnn_forward.2} parent=1 // pred_region
      _
    $region45: #{cnn_forward.2} parent=1 // pred_fallthru
      _
    // Predicated region
    $region46: #{cnn_forward.2} parent=1 // pred_check
      _
    $region47: #{cnn_forward.2} parent=1 // pred_check_branch
      %9775 = sbr.rel (0) target = $region49
    $region48: #{cnn_forward.2} parent=1 // pred_region
      _
    $region49: #{cnn_forward.2} parent=1 // pred_fallthru
      _
    %9776 = vsyncpa [#allocation4], 1
    %9777 = vsyncpa [#allocation6], 1

</llo_original>
